<compile_context>
chip_gen: v6e
topology: v6e:2x2x1
jax: 0.10.0
libtpu: 0.0.40
codegen_flags: <defaults>
</compile_context>

<pallas_src>
import functools
import math

import jax
import jax.numpy as jnp
from jax.experimental import pallas as pl
from jax.experimental.pallas import tpu as pltpu


# --------------------------------------------------------------------------
# Fused Pallas kernel: one grid step == one batch element (all tokens in VMEM)
# --------------------------------------------------------------------------

def _fused_swin_block_kernel(
    xp_ref, sp_ref,
    embed_w_ref, embed_b_ref,
    subfuse_w_ref, subfuse_b_ref,
    n0g_ref, n0b_ref,
    ln1g_ref, ln1b_ref,
    wA_ref, rq_ref, wvp_ref, projb_ref,
    bias_ref,
    ln2g_ref, ln2b_ref,
    w1_ref, b1_ref, w2_ref, b2_ref,
    nfg_ref, nfb_ref,
    head_w_ref, head_b_ref,
    o_ref):
  heads = wA_ref.shape[0]
  E = wA_ref.shape[1]
  L = xp_ref.shape[0]
  bf16 = jnp.bfloat16

  def ln(x, g_ref, b_ref):
    x = x.astype(jnp.float32)
    mu = jnp.mean(x, axis=-1, keepdims=True)
    var = jnp.mean(jnp.square(x - mu), axis=-1, keepdims=True)
    return (x - mu) * jax.lax.rsqrt(var + 1e-5) * g_ref[...] + b_ref[...]

  def mm(x, w):
    # bf16 operands on the MXU, f32 accumulation.
    return jnp.dot(x.astype(bf16), w, preferred_element_type=jnp.float32)

  # ---- patch embedding (Conv3d stride=kernel=patch == matmul) + patch_norm --
  tok = mm(xp_ref[...], embed_w_ref[...]) + embed_b_ref[...]
  tok = ln(tok, n0g_ref, n0b_ref)

  # ---- auxiliary sub_x stream: global pool, then the pre-folded
  #      (embed @ fuse) projection, additive fusion.  Exact by linearity.
  # TODO(synk): exact sub_x fusion path of SwinTransformerSys3D is unknown;
  #             using global-pooled additive fusion as a representative stand-in.
  sub_mean = jnp.mean(sp_ref[...].astype(jnp.float32), axis=0, keepdims=True)
  tok = tok + mm(sub_mean, subfuse_w_ref[...]) + subfuse_b_ref[...]

  # ---- one Swin W-MSA block (all windows at once, block-diagonal bias) ------
  shortcut = tok
  t = ln(tok, ln1g_ref, ln1b_ref)
  t_bf = t.astype(bf16)

  acc = jnp.zeros((L, E), jnp.float32)
  for h in range(heads):                                        # static unroll
    # scores: (t A_h + r_h) @ t^T  ==  (scaled q) @ k^T up to row-constant
    # terms that cancel exactly in softmax.  Contraction width E, no hd=8
    # intermediates, no lane sub-slicing.
    xa = jnp.dot(t_bf, wA_ref[h], preferred_element_type=jnp.float32)
    xa = xa + rq_ref[h]
    s = jax.lax.dot_general(xa.astype(bf16), t_bf,
                            (((1,), (1,)), ((), ())),
                            preferred_element_type=jnp.float32)   # (L, L)
    # bias_ref carries the relative-position bias block-diagonally and -1e9
    # for cross-window pairs, so this masked softmax == per-window softmax.
    s = s + bias_ref[h]
    m = jnp.max(s, axis=-1, keepdims=True)
    e = jnp.exp(s - m)
    p = e * pl.reciprocal(jnp.sum(e, axis=-1, keepdims=True), approx=True)
    # value path with the output projection pre-folded per head: (L, E) wide.
    vp = jnp.dot(t_bf, wvp_ref[h], preferred_element_type=jnp.float32)
    acc = acc + jnp.dot(p.astype(bf16), vp.astype(bf16),
                        preferred_element_type=jnp.float32)
  # projb carries proj_b + (v-bias @ proj_w), exact since softmax rows sum to 1.
  tok = shortcut + acc + projb_ref[...]

  # ---- MLP block ------------------------------------------------------------
  shortcut = tok
  t = ln(tok, ln2g_ref, ln2b_ref)
  hmid = mm(t, w1_ref[...]) + b1_ref[...]
  # TODO(synk): PyTorch nn.GELU uses exact erf; tanh approximation used here.
  hmid = jax.nn.gelu(hmid, approximate=True)
  tok = shortcut + mm(hmid, w2_ref[...]) + b2_ref[...]

  # ---- final norm + lane-padded linear head (single lane-dense HBM store) ---
  tok = ln(tok, nfg_ref, nfb_ref)
  out = mm(tok, head_w_ref[...]) + head_b_ref[...]
  o_ref[...] = out.astype(o_ref.dtype)


# --------------------------------------------------------------------------
# Plain-JAX glue (layout plumbing only: patchify, window ordering, bias table,
# per-head weight folding)
# --------------------------------------------------------------------------

def _patchify_windows(v, p, win):
  """NCDHW volume -> (B * NW * WT, p^3*C) rows in window-major token order."""
  B, C, D, H, W = v.shape
  nd, nh, nw = D // (p * win), H // (p * win), W // (p * win)
  v = v.reshape(B, C, nd, win, p, nh, win, p, nw, win, p)
  v = v.transpose(0, 2, 5, 8, 3, 6, 9, 4, 7, 10, 1)
  # -> (B, nd, nh, nw, win, win, win, p, p, p, C)
  return v.reshape(B * nd * nh * nw * win ** 3, p ** 3 * C), (nd, nh, nw)


def _rel_position_bias(table, win):
  coords = jnp.stack(
      jnp.meshgrid(jnp.arange(win), jnp.arange(win), jnp.arange(win),
                   indexing="ij"), 0).reshape(3, -1)            # (3, WT)
  rel = coords[:, :, None] - coords[:, None, :] + (win - 1)
  idx = rel[0] * (2 * win - 1) ** 2 + rel[1] * (2 * win - 1) + rel[2]
  WT = win ** 3
  bias = table[idx.reshape(-1)].reshape(WT, WT, -1)
  return bias.transpose(2, 0, 1)                                # (heads, WT, WT)


def _block_diag_bias(table, win, n_windows):
  """(heads, L, L) = per-window relative bias tiled block-diagonally, with
  -1e9 on cross-window pairs so full-L attention == windowed attention."""
  WT = win ** 3
  L = n_windows * WT
  bwin = _rel_position_bias(table, win)                         # (heads, WT, WT)
  tiled = jnp.tile(bwin, (1, n_windows, n_windows))             # (heads, L, L)
  wi = jnp.arange(L) // WT
  same = (wi[:, None] == wi[None, :])[None]                     # (1, L, L)
  return jnp.where(same, tiled, jnp.float32(-1e9)).astype(jnp.float32)


def init_params(key, *, C=3, p=2, E=32, heads=4, win=2, mlp_ratio=4,
                num_classes=1):
  hidden = int(E * mlp_ratio)
  ks = jax.random.split(key, 9)

  def nrm(k, shape, s=0.02):
    return (s * jax.random.normal(k, shape)).astype(jnp.float32)

  z = lambda n: jnp.zeros((n,), jnp.float32)
  o = lambda n: jnp.ones((n,), jnp.float32)
  pv = p * p * p
  return dict(
      embed_w=nrm(ks[0], (pv * C, E)), embed_b=z(E),
      sub_embed_w=nrm(ks[1], (pv * C, E)), sub_embed_b=z(E),
      fuse_w=nrm(ks[2], (E, E)), fuse_b=z(E),
      norm0_g=o(E), norm0_b=z(E),
      ln1_g=o(E), ln1_b=z(E),
      qkv_w=nrm(ks[3], (E, 3 * E)), qkv_b=z(3 * E),
      proj_w=nrm(ks[4], (E, E)), proj_b=z(E),
      rel_bias_table=nrm(ks[5], ((2 * win - 1) ** 3, heads)),
      ln2_g=o(E), ln2_b=z(E),
      mlp_w1=nrm(ks[6], (E, hidden)), mlp_b1=z(hidden),
      mlp_w2=nrm(ks[7], (hidden, E)), mlp_b2=z(E),
      normf_g=o(E), normf_b=z(E),
      head_w=nrm(ks[8], (E, pv * num_classes)), head_b=z(pv * num_classes),
  )


def _fold_attention_params(params, E, heads):
  """Fold qkv/proj into per-head (E,E) weights (see kernel header for math)."""
  hd = E // heads
  scale = 1.0 / math.sqrt(hd)
  qkv_w, qkv_b = params["qkv_w"], params["qkv_b"]
  Wq, Wk, Wv = qkv_w[:, :E], qkv_w[:, E:2 * E], qkv_w[:, 2 * E:]
  bq, bv = qkv_b[:E], qkv_b[2 * E:]

  def split(w):                                   # (E, E) -> (heads, E, hd)
    return w.reshape(E, heads, hd).transpose(1, 0, 2)

  Wq_h, Wk_h, Wv_h = split(Wq), split(Wk), split(Wv)
  bq_h = bq.reshape(heads, 1, hd)
  Wproj_h = params["proj_w"].reshape(heads, hd, E)

  wA = scale * jnp.einsum("hik,hjk->hij", Wq_h, Wk_h)     # (heads, E, E)
  rq = scale * jnp.einsum("hok,hjk->hoj", bq_h, Wk_h)     # (heads, 1, E)
  wVP = jnp.einsum("hik,hkj->hij", Wv_h, Wproj_h)         # (heads, E, E)
  proj_b_total = params["proj_b"] + bv @ params["proj_w"]  # (E,)
  return wA, rq, wVP, proj_b_total


def swt_jsp_forward(params, x, sub_x, *, p=2, win=2, heads=4, num_classes=1):
  B, C, D, H, W = x.shape
  E = params["embed_w"].shape[1]
  WT = win ** 3
  pv = p ** 3

  # window-major patch rows (layout plumbing only)
  xp, grid3 = _patchify_windows(x, p, win)
  sp, _ = _patchify_windows(sub_x, p, win)
  nd, nh, nw = grid3
  n_windows = nd * nh * nw
  L = n_windows * WT                      # tokens per batch
  Fin = xp.shape[1]

  n_out = pv * num_classes
  n_pad = max(((n_out + 127) // 128) * 128, 128)   # lane-dense head width

  attn_bias = _block_diag_bias(params["rel_bias_table"], win, n_windows)
  wA, rq, wVP, proj_b_total = _fold_attention_params(params, E, heads)

  # sub_x: embed + fuse projections folded into a single linear map.
  subfuse_w = params["sub_embed_w"] @ params["fuse_w"]               # (Fin, E)
  subfuse_b = params["sub_embed_b"] @ params["fuse_w"] + params["fuse_b"]

  bf16 = jnp.bfloat16
  head_w = jnp.zeros((E, n_pad), jnp.float32).at[:, :n_out].set(params["head_w"])
  head_b = jnp.zeros((n_pad,), jnp.float32).at[:n_out].set(params["head_b"])

  def rv(v):  # row-vector form for biases / LN params
    return v.reshape(1, -1).astype(jnp.float32)

  inputs = [
      xp, sp,
      params["embed_w"].astype(bf16), rv(params["embed_b"]),
      subfuse_w.astype(bf16), rv(subfuse_b),
      rv(params["norm0_g"]), rv(params["norm0_b"]),
      rv(params["ln1_g"]), rv(params["ln1_b"]),
      wA.astype(bf16), rq.astype(jnp.float32), wVP.astype(bf16),
      rv(proj_b_total),
      attn_bias,
      rv(params["ln2_g"]), rv(params["ln2_b"]),
      params["mlp_w1"].astype(bf16), rv(params["mlp_b1"]),
      params["mlp_w2"].astype(bf16), rv(params["mlp_b2"]),
      rv(params["normf_g"]), rv(params["normf_b"]),
      head_w.astype(bf16), rv(head_b),
  ]

  def row_spec(cols):
    return pl.BlockSpec((L, cols), lambda b: (b, 0))

  def const_spec(shape):
    zeros = (0,) * len(shape)
    return pl.BlockSpec(shape, lambda b, _z=zeros: _z)

  in_specs = [row_spec(Fin), row_spec(Fin)] + [
      const_spec(a.shape) for a in inputs[2:]
  ]

  out = pl.pallas_call(
      _fused_swin_block_kernel,
      out_shape=jax.ShapeDtypeStruct((B * L, n_pad), jnp.float32),
      grid_spec=pltpu.PrefetchScalarGridSpec(
          num_scalar_prefetch=0,
          grid=(B,),
          in_specs=in_specs,
          out_specs=pl.BlockSpec((L, n_pad), lambda b: (b, 0)),
      ),
      compiler_params=pltpu.CompilerParams(
          dimension_semantics=("parallel",)),
  )(*inputs)

  # strip lane padding, un-window + un-patchify back to (B, nc, D, H, W)
  logits = out[:, :n_out]
  logits = logits.reshape(B, nd, nh, nw, win, win, win, p, p, p, num_classes)
  logits = logits.transpose(0, 10, 1, 4, 7, 2, 5, 8, 3, 6, 9)
  return logits.reshape(B, num_classes, D, H, W)


# --------------------------------------------------------------------------

if __name__ == "__main__":
  key = jax.random.PRNGKey(0)
  kx, ks = jax.random.split(key)
  # small shapes consistent with the module's NCDHW 3D-volume inputs
  x = jax.random.normal(kx, (2, 3, 8, 8, 8), jnp.float32)
  sub_x = jax.random.normal(ks, (2, 3, 8, 8, 8), jnp.float32)

  params = init_params(jax.random.PRNGKey(42))
  fwd = jax.jit(functools.partial(swt_jsp_forward, params))
  logits = fwd(x, sub_x)
  jax.block_until_ready(logits)
  assert logits.shape == (2, 1, 8, 8, 8), logits.shape
  assert jnp.isfinite(logits).all()
  print("KERNEL_OK")
</pallas_src>

<mosaic_0001>
module attributes {stable_mosaic.version = 11 : i64} {
  func.func @_fused_swin_block_kernel(%arg0: i32, %arg1: memref<64x24xf32, #tpu.memory_space<vmem>>, %arg2: memref<64x24xf32, #tpu.memory_space<vmem>>, %arg3: memref<24x32xbf16, #tpu.memory_space<vmem>>, %arg4: memref<1x32xf32, #tpu.memory_space<vmem>>, %arg5: memref<24x32xbf16, #tpu.memory_space<vmem>>, %arg6: memref<1x32xf32, #tpu.memory_space<vmem>>, %arg7: memref<1x32xf32, #tpu.memory_space<vmem>>, %arg8: memref<1x32xf32, #tpu.memory_space<vmem>>, %arg9: memref<1x32xf32, #tpu.memory_space<vmem>>, %arg10: memref<1x32xf32, #tpu.memory_space<vmem>>, %arg11: memref<4x32x32xbf16, #tpu.memory_space<vmem>>, %arg12: memref<4x1x32xf32, #tpu.memory_space<vmem>>, %arg13: memref<4x32x32xbf16, #tpu.memory_space<vmem>>, %arg14: memref<1x32xf32, #tpu.memory_space<vmem>>, %arg15: memref<4x64x64xf32, #tpu.memory_space<vmem>>, %arg16: memref<1x32xf32, #tpu.memory_space<vmem>>, %arg17: memref<1x32xf32, #tpu.memory_space<vmem>>, %arg18: memref<32x128xbf16, #tpu.memory_space<vmem>>, %arg19: memref<1x128xf32, #tpu.memory_space<vmem>>, %arg20: memref<128x32xbf16, #tpu.memory_space<vmem>>, %arg21: memref<1x32xf32, #tpu.memory_space<vmem>>, %arg22: memref<1x32xf32, #tpu.memory_space<vmem>>, %arg23: memref<1x32xf32, #tpu.memory_space<vmem>>, %arg24: memref<32x128xbf16, #tpu.memory_space<vmem>>, %arg25: memref<1x128xf32, #tpu.memory_space<vmem>>, %arg26: memref<64x128xf32, #tpu.memory_space<vmem>>) attributes {dimension_semantics = [#tpu.dimension_semantics<parallel>], iteration_bounds = array<i64: 2>, scalar_prefetch = 0 : i64, scratch_operands = 0 : i64, tpu.core_type = #tpu.core_type<tc>, window_params = [{transform_indices = @transform_0, window_bounds = array<i64: 64, 24>}, {transform_indices = @transform_1, window_bounds = array<i64: 64, 24>}, {pipeline_mode = #tpu.pipeline_mode<synchronous>, transform_indices = @transform_2, window_bounds = array<i64: 24, 32>}, {pipeline_mode = #tpu.pipeline_mode<synchronous>, transform_indices = @transform_3, window_bounds = array<i64: 1, 32>}, {pipeline_mode = #tpu.pipeline_mode<synchronous>, transform_indices = @transform_4, window_bounds = array<i64: 24, 32>}, {pipeline_mode = #tpu.pipeline_mode<synchronous>, transform_indices = @transform_5, window_bounds = array<i64: 1, 32>}, {pipeline_mode = #tpu.pipeline_mode<synchronous>, transform_indices = @transform_6, window_bounds = array<i64: 1, 32>}, {pipeline_mode = #tpu.pipeline_mode<synchronous>, transform_indices = @transform_7, window_bounds = array<i64: 1, 32>}, {pipeline_mode = #tpu.pipeline_mode<synchronous>, transform_indices = @transform_8, window_bounds = array<i64: 1, 32>}, {pipeline_mode = #tpu.pipeline_mode<synchronous>, transform_indices = @transform_9, window_bounds = array<i64: 1, 32>}, {pipeline_mode = #tpu.pipeline_mode<synchronous>, transform_indices = @transform_10, window_bounds = array<i64: 4, 32, 32>}, {pipeline_mode = #tpu.pipeline_mode<synchronous>, transform_indices = @transform_11, window_bounds = array<i64: 4, 1, 32>}, {pipeline_mode = #tpu.pipeline_mode<synchronous>, transform_indices = @transform_12, window_bounds = array<i64: 4, 32, 32>}, {pipeline_mode = #tpu.pipeline_mode<synchronous>, transform_indices = @transform_13, window_bounds = array<i64: 1, 32>}, {pipeline_mode = #tpu.pipeline_mode<synchronous>, transform_indices = @transform_14, window_bounds = array<i64: 4, 64, 64>}, {pipeline_mode = #tpu.pipeline_mode<synchronous>, transform_indices = @transform_15, window_bounds = array<i64: 1, 32>}, {pipeline_mode = #tpu.pipeline_mode<synchronous>, transform_indices = @transform_16, window_bounds = array<i64: 1, 32>}, {pipeline_mode = #tpu.pipeline_mode<synchronous>, transform_indices = @transform_17, window_bounds = array<i64: 32, 128>}, {pipeline_mode = #tpu.pipeline_mode<synchronous>, transform_indices = @transform_18, window_bounds = array<i64: 1, 128>}, {pipeline_mode = #tpu.pipeline_mode<synchronous>, transform_indices = @transform_19, window_bounds = array<i64: 128, 32>}, {pipeline_mode = #tpu.pipeline_mode<synchronous>, transform_indices = @transform_20, window_bounds = array<i64: 1, 32>}, {pipeline_mode = #tpu.pipeline_mode<synchronous>, transform_indices = @transform_21, window_bounds = array<i64: 1, 32>}, {pipeline_mode = #tpu.pipeline_mode<synchronous>, transform_indices = @transform_22, window_bounds = array<i64: 1, 32>}, {pipeline_mode = #tpu.pipeline_mode<synchronous>, transform_indices = @transform_23, window_bounds = array<i64: 32, 128>}, {pipeline_mode = #tpu.pipeline_mode<synchronous>, transform_indices = @transform_24, window_bounds = array<i64: 1, 128>}, {transform_indices = @transform_25, window_bounds = array<i64: 64, 128>}]} {
    %c0 = arith.constant 0 : index
    %c0_0 = arith.constant 0 : index
    %0 = vector.load %arg1[%c0, %c0_0] : memref<64x24xf32, #tpu.memory_space<vmem>>, vector<64x24xf32>
    %c0_1 = arith.constant 0 : index
    %c0_2 = arith.constant 0 : index
    %1 = vector.load %arg3[%c0_1, %c0_2] : memref<24x32xbf16, #tpu.memory_space<vmem>>, vector<24x32xbf16>
    %2 = arith.truncf %0 : vector<64x24xf32> to vector<64x24xbf16>
    %cst = arith.constant dense<0.000000e+00> : vector<64x32xf32>
    %3 = tpu.matmul %2, %1, %cst {dimension_numbers = #tpu.dot_dimension_numbers<[1], [0], [0], [1], [0, 0, 1, 1], [], []>} : vector<64x24xbf16>, vector<24x32xbf16>, vector<64x32xf32> -> vector<64x32xf32>
    %c0_3 = arith.constant 0 : index
    %c0_4 = arith.constant 0 : index
    %4 = vector.load %arg4[%c0_3, %c0_4] : memref<1x32xf32, #tpu.memory_space<vmem>>, vector<1x32xf32>
    %5 = vector.broadcast %4 : vector<1x32xf32> to vector<64x32xf32>
    %6 = arith.addf %3, %5 : vector<64x32xf32>
    %cst_5 = arith.constant dense<0.000000e+00> : vector<64xf32>
    %7 = vector.multi_reduction <add>, %6, %cst_5 [1] : vector<64x32xf32> to vector<64xf32>
    %8 = vector.shape_cast %7 : vector<64xf32> to vector<64x1xf32>
    %cst_6 = arith.constant 3.200000e+01 : f32
    %9 = vector.broadcast %cst_6 : f32 to vector<64x1xf32>
    %10 = arith.divf %8, %9 : vector<64x1xf32>
    %11 = vector.broadcast %10 : vector<64x1xf32> to vector<64x32xf32>
    %12 = arith.subf %6, %11 : vector<64x32xf32>
    %13 = arith.mulf %12, %12 : vector<64x32xf32>
    %cst_7 = arith.constant dense<0.000000e+00> : vector<64xf32>
    %14 = vector.multi_reduction <add>, %13, %cst_7 [1] : vector<64x32xf32> to vector<64xf32>
    %15 = vector.shape_cast %14 : vector<64xf32> to vector<64x1xf32>
    %cst_8 = arith.constant 3.200000e+01 : f32
    %16 = vector.broadcast %cst_8 : f32 to vector<64x1xf32>
    %17 = arith.divf %15, %16 : vector<64x1xf32>
    %18 = vector.broadcast %10 : vector<64x1xf32> to vector<64x32xf32>
    %19 = arith.subf %6, %18 : vector<64x32xf32>
    %cst_9 = arith.constant 9.99999974E-6 : f32
    %20 = vector.broadcast %cst_9 : f32 to vector<64x1xf32>
    %21 = arith.addf %17, %20 : vector<64x1xf32>
    %22 = math.rsqrt %21 : vector<64x1xf32>
    %23 = vector.broadcast %22 : vector<64x1xf32> to vector<64x32xf32>
    %24 = arith.mulf %19, %23 : vector<64x32xf32>
    %c0_10 = arith.constant 0 : index
    %c0_11 = arith.constant 0 : index
    %25 = vector.load %arg7[%c0_10, %c0_11] : memref<1x32xf32, #tpu.memory_space<vmem>>, vector<1x32xf32>
    %26 = vector.broadcast %25 : vector<1x32xf32> to vector<64x32xf32>
    %27 = arith.mulf %24, %26 : vector<64x32xf32>
    %c0_12 = arith.constant 0 : index
    %c0_13 = arith.constant 0 : index
    %28 = vector.load %arg8[%c0_12, %c0_13] : memref<1x32xf32, #tpu.memory_space<vmem>>, vector<1x32xf32>
    %29 = vector.broadcast %28 : vector<1x32xf32> to vector<64x32xf32>
    %30 = arith.addf %27, %29 : vector<64x32xf32>
    %c0_14 = arith.constant 0 : index
    %c0_15 = arith.constant 0 : index
    %31 = vector.load %arg2[%c0_14, %c0_15] : memref<64x24xf32, #tpu.memory_space<vmem>>, vector<64x24xf32>
    %cst_16 = arith.constant dense<0.000000e+00> : vector<24xf32>
    %32 = vector.multi_reduction <add>, %31, %cst_16 [0] : vector<64x24xf32> to vector<24xf32>
    %33 = vector.shape_cast %32 : vector<24xf32> to vector<1x24xf32>
    %cst_17 = arith.constant 6.400000e+01 : f32
    %34 = vector.broadcast %cst_17 : f32 to vector<1x24xf32>
    %35 = arith.divf %33, %34 : vector<1x24xf32>
    %c0_18 = arith.constant 0 : index
    %c0_19 = arith.constant 0 : index
    %36 = vector.load %arg5[%c0_18, %c0_19] : memref<24x32xbf16, #tpu.memory_space<vmem>>, vector<24x32xbf16>
    %37 = arith.truncf %35 : vector<1x24xf32> to vector<1x24xbf16>
    %cst_20 = arith.constant dense<0.000000e+00> : vector<1x32xf32>
    %38 = tpu.matmul %37, %36, %cst_20 {dimension_numbers = #tpu.dot_dimension_numbers<[1], [0], [0], [1], [0, 0, 1, 1], [], []>} : vector<1x24xbf16>, vector<24x32xbf16>, vector<1x32xf32> -> vector<1x32xf32>
    %39 = vector.broadcast %38 : vector<1x32xf32> to vector<64x32xf32>
    %40 = arith.addf %30, %39 : vector<64x32xf32>
    %c0_21 = arith.constant 0 : index
    %c0_22 = arith.constant 0 : index
    %41 = vector.load %arg6[%c0_21, %c0_22] : memref<1x32xf32, #tpu.memory_space<vmem>>, vector<1x32xf32>
    %42 = vector.broadcast %41 : vector<1x32xf32> to vector<64x32xf32>
    %43 = arith.addf %40, %42 : vector<64x32xf32>
    %cst_23 = arith.constant dense<0.000000e+00> : vector<64xf32>
    %44 = vector.multi_reduction <add>, %43, %cst_23 [1] : vector<64x32xf32> to vector<64xf32>
    %45 = vector.shape_cast %44 : vector<64xf32> to vector<64x1xf32>
    %cst_24 = arith.constant 3.200000e+01 : f32
    %46 = vector.broadcast %cst_24 : f32 to vector<64x1xf32>
    %47 = arith.divf %45, %46 : vector<64x1xf32>
    %48 = vector.broadcast %47 : vector<64x1xf32> to vector<64x32xf32>
    %49 = arith.subf %43, %48 : vector<64x32xf32>
    %50 = arith.mulf %49, %49 : vector<64x32xf32>
    %cst_25 = arith.constant dense<0.000000e+00> : vector<64xf32>
    %51 = vector.multi_reduction <add>, %50, %cst_25 [1] : vector<64x32xf32> to vector<64xf32>
    %52 = vector.shape_cast %51 : vector<64xf32> to vector<64x1xf32>
    %cst_26 = arith.constant 3.200000e+01 : f32
    %53 = vector.broadcast %cst_26 : f32 to vector<64x1xf32>
    %54 = arith.divf %52, %53 : vector<64x1xf32>
    %55 = vector.broadcast %47 : vector<64x1xf32> to vector<64x32xf32>
    %56 = arith.subf %43, %55 : vector<64x32xf32>
    %cst_27 = arith.constant 9.99999974E-6 : f32
    %57 = vector.broadcast %cst_27 : f32 to vector<64x1xf32>
    %58 = arith.addf %54, %57 : vector<64x1xf32>
    %59 = math.rsqrt %58 : vector<64x1xf32>
    %60 = vector.broadcast %59 : vector<64x1xf32> to vector<64x32xf32>
    %61 = arith.mulf %56, %60 : vector<64x32xf32>
    %c0_28 = arith.constant 0 : index
    %c0_29 = arith.constant 0 : index
    %62 = vector.load %arg9[%c0_28, %c0_29] : memref<1x32xf32, #tpu.memory_space<vmem>>, vector<1x32xf32>
    %63 = vector.broadcast %62 : vector<1x32xf32> to vector<64x32xf32>
    %64 = arith.mulf %61, %63 : vector<64x32xf32>
    %c0_30 = arith.constant 0 : index
    %c0_31 = arith.constant 0 : index
    %65 = vector.load %arg10[%c0_30, %c0_31] : memref<1x32xf32, #tpu.memory_space<vmem>>, vector<1x32xf32>
    %66 = vector.broadcast %65 : vector<1x32xf32> to vector<64x32xf32>
    %67 = arith.addf %64, %66 : vector<64x32xf32>
    %68 = arith.truncf %67 : vector<64x32xf32> to vector<64x32xbf16>
    %cst_32 = arith.constant 0.000000e+00 : f32
    %69 = vector.broadcast %cst_32 : f32 to vector<64x32xf32>
    %c0_33 = arith.constant 0 : index
    %c0_34 = arith.constant 0 : index
    %c0_35 = arith.constant 0 : index
    %70 = vector.load %arg11[%c0_33, %c0_34, %c0_35] : memref<4x32x32xbf16, #tpu.memory_space<vmem>>, vector<1x32x32xbf16>
    %71 = vector.shape_cast %70 : vector<1x32x32xbf16> to vector<32x32xbf16>
    %cst_36 = arith.constant dense<0.000000e+00> : vector<64x32xf32>
    %72 = tpu.matmul %68, %71, %cst_36 {dimension_numbers = #tpu.dot_dimension_numbers<[1], [0], [0], [1], [0, 0, 1, 1], [], []>} : vector<64x32xbf16>, vector<32x32xbf16>, vector<64x32xf32> -> vector<64x32xf32>
    %c0_37 = arith.constant 0 : index
    %c0_38 = arith.constant 0 : index
    %c0_39 = arith.constant 0 : index
    %73 = vector.load %arg12[%c0_37, %c0_38, %c0_39] : memref<4x1x32xf32, #tpu.memory_space<vmem>>, vector<1x1x32xf32>
    %74 = vector.shape_cast %73 : vector<1x1x32xf32> to vector<1x32xf32>
    %75 = vector.broadcast %74 : vector<1x32xf32> to vector<64x32xf32>
    %76 = arith.addf %72, %75 : vector<64x32xf32>
    %77 = arith.truncf %76 : vector<64x32xf32> to vector<64x32xbf16>
    %cst_40 = arith.constant dense<0.000000e+00> : vector<64x64xf32>
    %78 = tpu.matmul %77, %68, %cst_40 {dimension_numbers = #tpu.dot_dimension_numbers<[1], [1], [0], [0], [0, 0, 1, 0], [], []>} : vector<64x32xbf16>, vector<64x32xbf16>, vector<64x64xf32> -> vector<64x64xf32>
    %c0_41 = arith.constant 0 : index
    %c0_42 = arith.constant 0 : index
    %c0_43 = arith.constant 0 : index
    %79 = vector.load %arg15[%c0_41, %c0_42, %c0_43] : memref<4x64x64xf32, #tpu.memory_space<vmem>>, vector<1x64x64xf32>
    %80 = vector.shape_cast %79 : vector<1x64x64xf32> to vector<64x64xf32>
    %81 = arith.addf %78, %80 : vector<64x64xf32>
    %cst_44 = arith.constant dense<0xFF800000> : vector<64xf32>
    %82 = vector.multi_reduction <maximumf>, %81, %cst_44 [1] : vector<64x64xf32> to vector<64xf32>
    %83 = vector.shape_cast %82 : vector<64xf32> to vector<64x1xf32>
    %84 = vector.broadcast %83 : vector<64x1xf32> to vector<64x64xf32>
    %85 = arith.subf %81, %84 : vector<64x64xf32>
    %86 = math.exp %85 : vector<64x64xf32>
    %cst_45 = arith.constant dense<0.000000e+00> : vector<64xf32>
    %87 = vector.multi_reduction <add>, %86, %cst_45 [1] : vector<64x64xf32> to vector<64xf32>
    %88 = vector.shape_cast %87 : vector<64xf32> to vector<64x1xf32>
    %89 = tpu.reciprocal %88 {approx = true} : vector<64x1xf32> -> vector<64x1xf32>
    %90 = vector.broadcast %89 : vector<64x1xf32> to vector<64x64xf32>
    %91 = arith.mulf %86, %90 : vector<64x64xf32>
    %c0_46 = arith.constant 0 : index
    %c0_47 = arith.constant 0 : index
    %c0_48 = arith.constant 0 : index
    %92 = vector.load %arg13[%c0_46, %c0_47, %c0_48] : memref<4x32x32xbf16, #tpu.memory_space<vmem>>, vector<1x32x32xbf16>
    %93 = vector.shape_cast %92 : vector<1x32x32xbf16> to vector<32x32xbf16>
    %cst_49 = arith.constant dense<0.000000e+00> : vector<64x32xf32>
    %94 = tpu.matmul %68, %93, %cst_49 {dimension_numbers = #tpu.dot_dimension_numbers<[1], [0], [0], [1], [0, 0, 1, 1], [], []>} : vector<64x32xbf16>, vector<32x32xbf16>, vector<64x32xf32> -> vector<64x32xf32>
    %95 = arith.truncf %91 : vector<64x64xf32> to vector<64x64xbf16>
    %96 = arith.truncf %94 : vector<64x32xf32> to vector<64x32xbf16>
    %cst_50 = arith.constant dense<0.000000e+00> : vector<64x32xf32>
    %97 = tpu.matmul %95, %96, %cst_50 {dimension_numbers = #tpu.dot_dimension_numbers<[1], [0], [0], [1], [0, 0, 1, 1], [], []>} : vector<64x64xbf16>, vector<64x32xbf16>, vector<64x32xf32> -> vector<64x32xf32>
    %98 = arith.addf %69, %97 : vector<64x32xf32>
    %c1 = arith.constant 1 : index
    %c0_51 = arith.constant 0 : index
    %c0_52 = arith.constant 0 : index
    %99 = vector.load %arg11[%c1, %c0_51, %c0_52] : memref<4x32x32xbf16, #tpu.memory_space<vmem>>, vector<1x32x32xbf16>
    %100 = vector.shape_cast %99 : vector<1x32x32xbf16> to vector<32x32xbf16>
    %cst_53 = arith.constant dense<0.000000e+00> : vector<64x32xf32>
    %101 = tpu.matmul %68, %100, %cst_53 {dimension_numbers = #tpu.dot_dimension_numbers<[1], [0], [0], [1], [0, 0, 1, 1], [], []>} : vector<64x32xbf16>, vector<32x32xbf16>, vector<64x32xf32> -> vector<64x32xf32>
    %c1_54 = arith.constant 1 : index
    %c0_55 = arith.constant 0 : index
    %c0_56 = arith.constant 0 : index
    %102 = vector.load %arg12[%c1_54, %c0_55, %c0_56] : memref<4x1x32xf32, #tpu.memory_space<vmem>>, vector<1x1x32xf32>
    %103 = vector.shape_cast %102 : vector<1x1x32xf32> to vector<1x32xf32>
    %104 = vector.broadcast %103 : vector<1x32xf32> to vector<64x32xf32>
    %105 = arith.addf %101, %104 : vector<64x32xf32>
    %106 = arith.truncf %105 : vector<64x32xf32> to vector<64x32xbf16>
    %cst_57 = arith.constant dense<0.000000e+00> : vector<64x64xf32>
    %107 = tpu.matmul %106, %68, %cst_57 {dimension_numbers = #tpu.dot_dimension_numbers<[1], [1], [0], [0], [0, 0, 1, 0], [], []>} : vector<64x32xbf16>, vector<64x32xbf16>, vector<64x64xf32> -> vector<64x64xf32>
    %c1_58 = arith.constant 1 : index
    %c0_59 = arith.constant 0 : index
    %c0_60 = arith.constant 0 : index
    %108 = vector.load %arg15[%c1_58, %c0_59, %c0_60] : memref<4x64x64xf32, #tpu.memory_space<vmem>>, vector<1x64x64xf32>
    %109 = vector.shape_cast %108 : vector<1x64x64xf32> to vector<64x64xf32>
    %110 = arith.addf %107, %109 : vector<64x64xf32>
    %cst_61 = arith.constant dense<0xFF800000> : vector<64xf32>
    %111 = vector.multi_reduction <maximumf>, %110, %cst_61 [1] : vector<64x64xf32> to vector<64xf32>
    %112 = vector.shape_cast %111 : vector<64xf32> to vector<64x1xf32>
    %113 = vector.broadcast %112 : vector<64x1xf32> to vector<64x64xf32>
    %114 = arith.subf %110, %113 : vector<64x64xf32>
    %115 = math.exp %114 : vector<64x64xf32>
    %cst_62 = arith.constant dense<0.000000e+00> : vector<64xf32>
    %116 = vector.multi_reduction <add>, %115, %cst_62 [1] : vector<64x64xf32> to vector<64xf32>
    %117 = vector.shape_cast %116 : vector<64xf32> to vector<64x1xf32>
    %118 = tpu.reciprocal %117 {approx = true} : vector<64x1xf32> -> vector<64x1xf32>
    %119 = vector.broadcast %118 : vector<64x1xf32> to vector<64x64xf32>
    %120 = arith.mulf %115, %119 : vector<64x64xf32>
    %c1_63 = arith.constant 1 : index
    %c0_64 = arith.constant 0 : index
    %c0_65 = arith.constant 0 : index
    %121 = vector.load %arg13[%c1_63, %c0_64, %c0_65] : memref<4x32x32xbf16, #tpu.memory_space<vmem>>, vector<1x32x32xbf16>
    %122 = vector.shape_cast %121 : vector<1x32x32xbf16> to vector<32x32xbf16>
    %cst_66 = arith.constant dense<0.000000e+00> : vector<64x32xf32>
    %123 = tpu.matmul %68, %122, %cst_66 {dimension_numbers = #tpu.dot_dimension_numbers<[1], [0], [0], [1], [0, 0, 1, 1], [], []>} : vector<64x32xbf16>, vector<32x32xbf16>, vector<64x32xf32> -> vector<64x32xf32>
    %124 = arith.truncf %120 : vector<64x64xf32> to vector<64x64xbf16>
    %125 = arith.truncf %123 : vector<64x32xf32> to vector<64x32xbf16>
    %cst_67 = arith.constant dense<0.000000e+00> : vector<64x32xf32>
    %126 = tpu.matmul %124, %125, %cst_67 {dimension_numbers = #tpu.dot_dimension_numbers<[1], [0], [0], [1], [0, 0, 1, 1], [], []>} : vector<64x64xbf16>, vector<64x32xbf16>, vector<64x32xf32> -> vector<64x32xf32>
    %127 = arith.addf %98, %126 : vector<64x32xf32>
    %c2 = arith.constant 2 : index
    %c0_68 = arith.constant 0 : index
    %c0_69 = arith.constant 0 : index
    %128 = vector.load %arg11[%c2, %c0_68, %c0_69] : memref<4x32x32xbf16, #tpu.memory_space<vmem>>, vector<1x32x32xbf16>
    %129 = vector.shape_cast %128 : vector<1x32x32xbf16> to vector<32x32xbf16>
    %cst_70 = arith.constant dense<0.000000e+00> : vector<64x32xf32>
    %130 = tpu.matmul %68, %129, %cst_70 {dimension_numbers = #tpu.dot_dimension_numbers<[1], [0], [0], [1], [0, 0, 1, 1], [], []>} : vector<64x32xbf16>, vector<32x32xbf16>, vector<64x32xf32> -> vector<64x32xf32>
    %c2_71 = arith.constant 2 : index
    %c0_72 = arith.constant 0 : index
    %c0_73 = arith.constant 0 : index
    %131 = vector.load %arg12[%c2_71, %c0_72, %c0_73] : memref<4x1x32xf32, #tpu.memory_space<vmem>>, vector<1x1x32xf32>
    %132 = vector.shape_cast %131 : vector<1x1x32xf32> to vector<1x32xf32>
    %133 = vector.broadcast %132 : vector<1x32xf32> to vector<64x32xf32>
    %134 = arith.addf %130, %133 : vector<64x32xf32>
    %135 = arith.truncf %134 : vector<64x32xf32> to vector<64x32xbf16>
    %cst_74 = arith.constant dense<0.000000e+00> : vector<64x64xf32>
    %136 = tpu.matmul %135, %68, %cst_74 {dimension_numbers = #tpu.dot_dimension_numbers<[1], [1], [0], [0], [0, 0, 1, 0], [], []>} : vector<64x32xbf16>, vector<64x32xbf16>, vector<64x64xf32> -> vector<64x64xf32>
    %c2_75 = arith.constant 2 : index
    %c0_76 = arith.constant 0 : index
    %c0_77 = arith.constant 0 : index
    %137 = vector.load %arg15[%c2_75, %c0_76, %c0_77] : memref<4x64x64xf32, #tpu.memory_space<vmem>>, vector<1x64x64xf32>
    %138 = vector.shape_cast %137 : vector<1x64x64xf32> to vector<64x64xf32>
    %139 = arith.addf %136, %138 : vector<64x64xf32>
    %cst_78 = arith.constant dense<0xFF800000> : vector<64xf32>
    %140 = vector.multi_reduction <maximumf>, %139, %cst_78 [1] : vector<64x64xf32> to vector<64xf32>
    %141 = vector.shape_cast %140 : vector<64xf32> to vector<64x1xf32>
    %142 = vector.broadcast %141 : vector<64x1xf32> to vector<64x64xf32>
    %143 = arith.subf %139, %142 : vector<64x64xf32>
    %144 = math.exp %143 : vector<64x64xf32>
    %cst_79 = arith.constant dense<0.000000e+00> : vector<64xf32>
    %145 = vector.multi_reduction <add>, %144, %cst_79 [1] : vector<64x64xf32> to vector<64xf32>
    %146 = vector.shape_cast %145 : vector<64xf32> to vector<64x1xf32>
    %147 = tpu.reciprocal %146 {approx = true} : vector<64x1xf32> -> vector<64x1xf32>
    %148 = vector.broadcast %147 : vector<64x1xf32> to vector<64x64xf32>
    %149 = arith.mulf %144, %148 : vector<64x64xf32>
    %c2_80 = arith.constant 2 : index
    %c0_81 = arith.constant 0 : index
    %c0_82 = arith.constant 0 : index
    %150 = vector.load %arg13[%c2_80, %c0_81, %c0_82] : memref<4x32x32xbf16, #tpu.memory_space<vmem>>, vector<1x32x32xbf16>
    %151 = vector.shape_cast %150 : vector<1x32x32xbf16> to vector<32x32xbf16>
    %cst_83 = arith.constant dense<0.000000e+00> : vector<64x32xf32>
    %152 = tpu.matmul %68, %151, %cst_83 {dimension_numbers = #tpu.dot_dimension_numbers<[1], [0], [0], [1], [0, 0, 1, 1], [], []>} : vector<64x32xbf16>, vector<32x32xbf16>, vector<64x32xf32> -> vector<64x32xf32>
    %153 = arith.truncf %149 : vector<64x64xf32> to vector<64x64xbf16>
    %154 = arith.truncf %152 : vector<64x32xf32> to vector<64x32xbf16>
    %cst_84 = arith.constant dense<0.000000e+00> : vector<64x32xf32>
    %155 = tpu.matmul %153, %154, %cst_84 {dimension_numbers = #tpu.dot_dimension_numbers<[1], [0], [0], [1], [0, 0, 1, 1], [], []>} : vector<64x64xbf16>, vector<64x32xbf16>, vector<64x32xf32> -> vector<64x32xf32>
    %156 = arith.addf %127, %155 : vector<64x32xf32>
    %c3 = arith.constant 3 : index
    %c0_85 = arith.constant 0 : index
    %c0_86 = arith.constant 0 : index
    %157 = vector.load %arg11[%c3, %c0_85, %c0_86] : memref<4x32x32xbf16, #tpu.memory_space<vmem>>, vector<1x32x32xbf16>
    %158 = vector.shape_cast %157 : vector<1x32x32xbf16> to vector<32x32xbf16>
    %cst_87 = arith.constant dense<0.000000e+00> : vector<64x32xf32>
    %159 = tpu.matmul %68, %158, %cst_87 {dimension_numbers = #tpu.dot_dimension_numbers<[1], [0], [0], [1], [0, 0, 1, 1], [], []>} : vector<64x32xbf16>, vector<32x32xbf16>, vector<64x32xf32> -> vector<64x32xf32>
    %c3_88 = arith.constant 3 : index
    %c0_89 = arith.constant 0 : index
    %c0_90 = arith.constant 0 : index
    %160 = vector.load %arg12[%c3_88, %c0_89, %c0_90] : memref<4x1x32xf32, #tpu.memory_space<vmem>>, vector<1x1x32xf32>
    %161 = vector.shape_cast %160 : vector<1x1x32xf32> to vector<1x32xf32>
    %162 = vector.broadcast %161 : vector<1x32xf32> to vector<64x32xf32>
    %163 = arith.addf %159, %162 : vector<64x32xf32>
    %164 = arith.truncf %163 : vector<64x32xf32> to vector<64x32xbf16>
    %cst_91 = arith.constant dense<0.000000e+00> : vector<64x64xf32>
    %165 = tpu.matmul %164, %68, %cst_91 {dimension_numbers = #tpu.dot_dimension_numbers<[1], [1], [0], [0], [0, 0, 1, 0], [], []>} : vector<64x32xbf16>, vector<64x32xbf16>, vector<64x64xf32> -> vector<64x64xf32>
    %c3_92 = arith.constant 3 : index
    %c0_93 = arith.constant 0 : index
    %c0_94 = arith.constant 0 : index
    %166 = vector.load %arg15[%c3_92, %c0_93, %c0_94] : memref<4x64x64xf32, #tpu.memory_space<vmem>>, vector<1x64x64xf32>
    %167 = vector.shape_cast %166 : vector<1x64x64xf32> to vector<64x64xf32>
    %168 = arith.addf %165, %167 : vector<64x64xf32>
    %cst_95 = arith.constant dense<0xFF800000> : vector<64xf32>
    %169 = vector.multi_reduction <maximumf>, %168, %cst_95 [1] : vector<64x64xf32> to vector<64xf32>
    %170 = vector.shape_cast %169 : vector<64xf32> to vector<64x1xf32>
    %171 = vector.broadcast %170 : vector<64x1xf32> to vector<64x64xf32>
    %172 = arith.subf %168, %171 : vector<64x64xf32>
    %173 = math.exp %172 : vector<64x64xf32>
    %cst_96 = arith.constant dense<0.000000e+00> : vector<64xf32>
    %174 = vector.multi_reduction <add>, %173, %cst_96 [1] : vector<64x64xf32> to vector<64xf32>
    %175 = vector.shape_cast %174 : vector<64xf32> to vector<64x1xf32>
    %176 = tpu.reciprocal %175 {approx = true} : vector<64x1xf32> -> vector<64x1xf32>
    %177 = vector.broadcast %176 : vector<64x1xf32> to vector<64x64xf32>
    %178 = arith.mulf %173, %177 : vector<64x64xf32>
    %c3_97 = arith.constant 3 : index
    %c0_98 = arith.constant 0 : index
    %c0_99 = arith.constant 0 : index
    %179 = vector.load %arg13[%c3_97, %c0_98, %c0_99] : memref<4x32x32xbf16, #tpu.memory_space<vmem>>, vector<1x32x32xbf16>
    %180 = vector.shape_cast %179 : vector<1x32x32xbf16> to vector<32x32xbf16>
    %cst_100 = arith.constant dense<0.000000e+00> : vector<64x32xf32>
    %181 = tpu.matmul %68, %180, %cst_100 {dimension_numbers = #tpu.dot_dimension_numbers<[1], [0], [0], [1], [0, 0, 1, 1], [], []>} : vector<64x32xbf16>, vector<32x32xbf16>, vector<64x32xf32> -> vector<64x32xf32>
    %182 = arith.truncf %178 : vector<64x64xf32> to vector<64x64xbf16>
    %183 = arith.truncf %181 : vector<64x32xf32> to vector<64x32xbf16>
    %cst_101 = arith.constant dense<0.000000e+00> : vector<64x32xf32>
    %184 = tpu.matmul %182, %183, %cst_101 {dimension_numbers = #tpu.dot_dimension_numbers<[1], [0], [0], [1], [0, 0, 1, 1], [], []>} : vector<64x64xbf16>, vector<64x32xbf16>, vector<64x32xf32> -> vector<64x32xf32>
    %185 = arith.addf %156, %184 : vector<64x32xf32>
    %186 = arith.addf %43, %185 : vector<64x32xf32>
    %c0_102 = arith.constant 0 : index
    %c0_103 = arith.constant 0 : index
    %187 = vector.load %arg14[%c0_102, %c0_103] : memref<1x32xf32, #tpu.memory_space<vmem>>, vector<1x32xf32>
    %188 = vector.broadcast %187 : vector<1x32xf32> to vector<64x32xf32>
    %189 = arith.addf %186, %188 : vector<64x32xf32>
    %cst_104 = arith.constant dense<0.000000e+00> : vector<64xf32>
    %190 = vector.multi_reduction <add>, %189, %cst_104 [1] : vector<64x32xf32> to vector<64xf32>
    %191 = vector.shape_cast %190 : vector<64xf32> to vector<64x1xf32>
    %cst_105 = arith.constant 3.200000e+01 : f32
    %192 = vector.broadcast %cst_105 : f32 to vector<64x1xf32>
    %193 = arith.divf %191, %192 : vector<64x1xf32>
    %194 = vector.broadcast %193 : vector<64x1xf32> to vector<64x32xf32>
    %195 = arith.subf %189, %194 : vector<64x32xf32>
    %196 = arith.mulf %195, %195 : vector<64x32xf32>
    %cst_106 = arith.constant dense<0.000000e+00> : vector<64xf32>
    %197 = vector.multi_reduction <add>, %196, %cst_106 [1] : vector<64x32xf32> to vector<64xf32>
    %198 = vector.shape_cast %197 : vector<64xf32> to vector<64x1xf32>
    %cst_107 = arith.constant 3.200000e+01 : f32
    %199 = vector.broadcast %cst_107 : f32 to vector<64x1xf32>
    %200 = arith.divf %198, %199 : vector<64x1xf32>
    %201 = vector.broadcast %193 : vector<64x1xf32> to vector<64x32xf32>
    %202 = arith.subf %189, %201 : vector<64x32xf32>
    %cst_108 = arith.constant 9.99999974E-6 : f32
    %203 = vector.broadcast %cst_108 : f32 to vector<64x1xf32>
    %204 = arith.addf %200, %203 : vector<64x1xf32>
    %205 = math.rsqrt %204 : vector<64x1xf32>
    %206 = vector.broadcast %205 : vector<64x1xf32> to vector<64x32xf32>
    %207 = arith.mulf %202, %206 : vector<64x32xf32>
    %c0_109 = arith.constant 0 : index
    %c0_110 = arith.constant 0 : index
    %208 = vector.load %arg16[%c0_109, %c0_110] : memref<1x32xf32, #tpu.memory_space<vmem>>, vector<1x32xf32>
    %209 = vector.broadcast %208 : vector<1x32xf32> to vector<64x32xf32>
    %210 = arith.mulf %207, %209 : vector<64x32xf32>
    %c0_111 = arith.constant 0 : index
    %c0_112 = arith.constant 0 : index
    %211 = vector.load %arg17[%c0_111, %c0_112] : memref<1x32xf32, #tpu.memory_space<vmem>>, vector<1x32xf32>
    %212 = vector.broadcast %211 : vector<1x32xf32> to vector<64x32xf32>
    %213 = arith.addf %210, %212 : vector<64x32xf32>
    %c0_113 = arith.constant 0 : index
    %c0_114 = arith.constant 0 : index
    %214 = vector.load %arg18[%c0_113, %c0_114] : memref<32x128xbf16, #tpu.memory_space<vmem>>, vector<32x128xbf16>
    %215 = arith.truncf %213 : vector<64x32xf32> to vector<64x32xbf16>
    %cst_115 = arith.constant dense<0.000000e+00> : vector<64x128xf32>
    %216 = tpu.matmul %215, %214, %cst_115 {dimension_numbers = #tpu.dot_dimension_numbers<[1], [0], [0], [1], [0, 0, 1, 1], [], []>} : vector<64x32xbf16>, vector<32x128xbf16>, vector<64x128xf32> -> vector<64x128xf32>
    %c0_116 = arith.constant 0 : index
    %c0_117 = arith.constant 0 : index
    %217 = vector.load %arg19[%c0_116, %c0_117] : memref<1x128xf32, #tpu.memory_space<vmem>>, vector<1x128xf32>
    %218 = vector.broadcast %217 : vector<1x128xf32> to vector<64x128xf32>
    %219 = arith.addf %216, %218 : vector<64x128xf32>
    %220 = arith.mulf %219, %219 : vector<64x128xf32>
    %221 = arith.mulf %219, %220 : vector<64x128xf32>
    %cst_118 = arith.constant 4.471500e-02 : f32
    %222 = vector.broadcast %cst_118 : f32 to vector<64x128xf32>
    %223 = arith.mulf %222, %221 : vector<64x128xf32>
    %224 = arith.addf %219, %223 : vector<64x128xf32>
    %cst_119 = arith.constant 0.797884583 : f32
    %225 = vector.broadcast %cst_119 : f32 to vector<64x128xf32>
    %226 = arith.mulf %225, %224 : vector<64x128xf32>
    %227 = math.tanh %226 : vector<64x128xf32>
    %cst_120 = arith.constant 1.000000e+00 : f32
    %228 = vector.broadcast %cst_120 : f32 to vector<64x128xf32>
    %229 = arith.addf %228, %227 : vector<64x128xf32>
    %cst_121 = arith.constant 5.000000e-01 : f32
    %230 = vector.broadcast %cst_121 : f32 to vector<64x128xf32>
    %231 = arith.mulf %230, %229 : vector<64x128xf32>
    %232 = arith.mulf %219, %231 : vector<64x128xf32>
    %c0_122 = arith.constant 0 : index
    %c0_123 = arith.constant 0 : index
    %233 = vector.load %arg20[%c0_122, %c0_123] : memref<128x32xbf16, #tpu.memory_space<vmem>>, vector<128x32xbf16>
    %234 = arith.truncf %232 : vector<64x128xf32> to vector<64x128xbf16>
    %cst_124 = arith.constant dense<0.000000e+00> : vector<64x32xf32>
    %235 = tpu.matmul %234, %233, %cst_124 {dimension_numbers = #tpu.dot_dimension_numbers<[1], [0], [0], [1], [0, 0, 1, 1], [], []>} : vector<64x128xbf16>, vector<128x32xbf16>, vector<64x32xf32> -> vector<64x32xf32>
    %236 = arith.addf %189, %235 : vector<64x32xf32>
    %c0_125 = arith.constant 0 : index
    %c0_126 = arith.constant 0 : index
    %237 = vector.load %arg21[%c0_125, %c0_126] : memref<1x32xf32, #tpu.memory_space<vmem>>, vector<1x32xf32>
    %238 = vector.broadcast %237 : vector<1x32xf32> to vector<64x32xf32>
    %239 = arith.addf %236, %238 : vector<64x32xf32>
    %cst_127 = arith.constant dense<0.000000e+00> : vector<64xf32>
    %240 = vector.multi_reduction <add>, %239, %cst_127 [1] : vector<64x32xf32> to vector<64xf32>
    %241 = vector.shape_cast %240 : vector<64xf32> to vector<64x1xf32>
    %cst_128 = arith.constant 3.200000e+01 : f32
    %242 = vector.broadcast %cst_128 : f32 to vector<64x1xf32>
    %243 = arith.divf %241, %242 : vector<64x1xf32>
    %244 = vector.broadcast %243 : vector<64x1xf32> to vector<64x32xf32>
    %245 = arith.subf %239, %244 : vector<64x32xf32>
    %246 = arith.mulf %245, %245 : vector<64x32xf32>
    %cst_129 = arith.constant dense<0.000000e+00> : vector<64xf32>
    %247 = vector.multi_reduction <add>, %246, %cst_129 [1] : vector<64x32xf32> to vector<64xf32>
    %248 = vector.shape_cast %247 : vector<64xf32> to vector<64x1xf32>
    %cst_130 = arith.constant 3.200000e+01 : f32
    %249 = vector.broadcast %cst_130 : f32 to vector<64x1xf32>
    %250 = arith.divf %248, %249 : vector<64x1xf32>
    %251 = vector.broadcast %243 : vector<64x1xf32> to vector<64x32xf32>
    %252 = arith.subf %239, %251 : vector<64x32xf32>
    %cst_131 = arith.constant 9.99999974E-6 : f32
    %253 = vector.broadcast %cst_131 : f32 to vector<64x1xf32>
    %254 = arith.addf %250, %253 : vector<64x1xf32>
    %255 = math.rsqrt %254 : vector<64x1xf32>
    %256 = vector.broadcast %255 : vector<64x1xf32> to vector<64x32xf32>
    %257 = arith.mulf %252, %256 : vector<64x32xf32>
    %c0_132 = arith.constant 0 : index
    %c0_133 = arith.constant 0 : index
    %258 = vector.load %arg22[%c0_132, %c0_133] : memref<1x32xf32, #tpu.memory_space<vmem>>, vector<1x32xf32>
    %259 = vector.broadcast %258 : vector<1x32xf32> to vector<64x32xf32>
    %260 = arith.mulf %257, %259 : vector<64x32xf32>
    %c0_134 = arith.constant 0 : index
    %c0_135 = arith.constant 0 : index
    %261 = vector.load %arg23[%c0_134, %c0_135] : memref<1x32xf32, #tpu.memory_space<vmem>>, vector<1x32xf32>
    %262 = vector.broadcast %261 : vector<1x32xf32> to vector<64x32xf32>
    %263 = arith.addf %260, %262 : vector<64x32xf32>
    %c0_136 = arith.constant 0 : index
    %c0_137 = arith.constant 0 : index
    %264 = vector.load %arg24[%c0_136, %c0_137] : memref<32x128xbf16, #tpu.memory_space<vmem>>, vector<32x128xbf16>
    %265 = arith.truncf %263 : vector<64x32xf32> to vector<64x32xbf16>
    %cst_138 = arith.constant dense<0.000000e+00> : vector<64x128xf32>
    %266 = tpu.matmul %265, %264, %cst_138 {dimension_numbers = #tpu.dot_dimension_numbers<[1], [0], [0], [1], [0, 0, 1, 1], [], []>} : vector<64x32xbf16>, vector<32x128xbf16>, vector<64x128xf32> -> vector<64x128xf32>
    %c0_139 = arith.constant 0 : index
    %c0_140 = arith.constant 0 : index
    %267 = vector.load %arg25[%c0_139, %c0_140] : memref<1x128xf32, #tpu.memory_space<vmem>>, vector<1x128xf32>
    %268 = vector.broadcast %267 : vector<1x128xf32> to vector<64x128xf32>
    %269 = arith.addf %266, %268 : vector<64x128xf32>
    %c0_141 = arith.constant 0 : index
    %c0_142 = arith.constant 0 : index
    %270 = vector.load %arg26[%c0_141, %c0_142] : memref<64x128xf32, #tpu.memory_space<vmem>>, vector<64x128xf32>
    tpu.vector_store %arg26[%c0_141, %c0_142], %269 {strides = array<i32>} : memref<64x128xf32, #tpu.memory_space<vmem>>, vector<64x128xf32>,
    return
  }
  func.func @transform_0(%arg0: i32) -> (i32, i32) {
    %c0_i32 = arith.constant 0 : i32
    %c0_i32_0 = arith.constant 0 : i32
    return %arg0, %c0_i32 : i32, i32
  }
  func.func @transform_1(%arg0: i32) -> (i32, i32) {
    %c0_i32 = arith.constant 0 : i32
    %c0_i32_0 = arith.constant 0 : i32
    return %arg0, %c0_i32 : i32, i32
  }
  func.func @transform_2(%arg0: i32) -> (i32, i32) {
    %c0_i32 = arith.constant 0 : i32
    %c0_i32_0 = arith.constant 0 : i32
    %c0_i32_1 = arith.constant 0 : i32
    return %c0_i32, %c0_i32_0 : i32, i32
  }
  func.func @transform_3(%arg0: i32) -> (i32, i32) {
    %c0_i32 = arith.constant 0 : i32
    %c0_i32_0 = arith.constant 0 : i32
    %c0_i32_1 = arith.constant 0 : i32
    return %c0_i32, %c0_i32_0 : i32, i32
  }
  func.func @transform_4(%arg0: i32) -> (i32, i32) {
    %c0_i32 = arith.constant 0 : i32
    %c0_i32_0 = arith.constant 0 : i32
    %c0_i32_1 = arith.constant 0 : i32
    return %c0_i32, %c0_i32_0 : i32, i32
  }
  func.func @transform_5(%arg0: i32) -> (i32, i32) {
    %c0_i32 = arith.constant 0 : i32
    %c0_i32_0 = arith.constant 0 : i32
    %c0_i32_1 = arith.constant 0 : i32
    return %c0_i32, %c0_i32_0 : i32, i32
  }
  func.func @transform_6(%arg0: i32) -> (i32, i32) {
    %c0_i32 = arith.constant 0 : i32
    %c0_i32_0 = arith.constant 0 : i32
    %c0_i32_1 = arith.constant 0 : i32
    return %c0_i32, %c0_i32_0 : i32, i32
  }
  func.func @transform_7(%arg0: i32) -> (i32, i32) {
    %c0_i32 = arith.constant 0 : i32
    %c0_i32_0 = arith.constant 0 : i32
    %c0_i32_1 = arith.constant 0 : i32
    return %c0_i32, %c0_i32_0 : i32, i32
  }
  func.func @transform_8(%arg0: i32) -> (i32, i32) {
    %c0_i32 = arith.constant 0 : i32
    %c0_i32_0 = arith.constant 0 : i32
    %c0_i32_1 = arith.constant 0 : i32
    return %c0_i32, %c0_i32_0 : i32, i32
  }
  func.func @transform_9(%arg0: i32) -> (i32, i32) {
    %c0_i32 = arith.constant 0 : i32
    %c0_i32_0 = arith.constant 0 : i32
    %c0_i32_1 = arith.constant 0 : i32
    return %c0_i32, %c0_i32_0 : i32, i32
  }
  func.func @transform_10(%arg0: i32) -> (i32, i32, i32) {
    %c0_i32 = arith.constant 0 : i32
    %c0_i32_0 = arith.constant 0 : i32
    %c0_i32_1 = arith.constant 0 : i32
    %c0_i32_2 = arith.constant 0 : i32
    return %c0_i32, %c0_i32_0, %c0_i32_1 : i32, i32, i32
  }
  func.func @transform_11(%arg0: i32) -> (i32, i32, i32) {
    %c0_i32 = arith.constant 0 : i32
    %c0_i32_0 = arith.constant 0 : i32
    %c0_i32_1 = arith.constant 0 : i32
    %c0_i32_2 = arith.constant 0 : i32
    return %c0_i32, %c0_i32_0, %c0_i32_1 : i32, i32, i32
  }
  func.func @transform_12(%arg0: i32) -> (i32, i32, i32) {
    %c0_i32 = arith.constant 0 : i32
    %c0_i32_0 = arith.constant 0 : i32
    %c0_i32_1 = arith.constant 0 : i32
    %c0_i32_2 = arith.constant 0 : i32
    return %c0_i32, %c0_i32_0, %c0_i32_1 : i32, i32, i32
  }
  func.func @transform_13(%arg0: i32) -> (i32, i32) {
    %c0_i32 = arith.constant 0 : i32
    %c0_i32_0 = arith.constant 0 : i32
    %c0_i32_1 = arith.constant 0 : i32
    return %c0_i32, %c0_i32_0 : i32, i32
  }
  func.func @transform_14(%arg0: i32) -> (i32, i32, i32) {
    %c0_i32 = arith.constant 0 : i32
    %c0_i32_0 = arith.constant 0 : i32
    %c0_i32_1 = arith.constant 0 : i32
    %c0_i32_2 = arith.constant 0 : i32
    return %c0_i32, %c0_i32_0, %c0_i32_1 : i32, i32, i32
  }
  func.func @transform_15(%arg0: i32) -> (i32, i32) {
    %c0_i32 = arith.constant 0 : i32
    %c0_i32_0 = arith.constant 0 : i32
    %c0_i32_1 = arith.constant 0 : i32
    return %c0_i32, %c0_i32_0 : i32, i32
  }
  func.func @transform_16(%arg0: i32) -> (i32, i32) {
    %c0_i32 = arith.constant 0 : i32
    %c0_i32_0 = arith.constant 0 : i32
    %c0_i32_1 = arith.constant 0 : i32
    return %c0_i32, %c0_i32_0 : i32, i32
  }
  func.func @transform_17(%arg0: i32) -> (i32, i32) {
    %c0_i32 = arith.constant 0 : i32
    %c0_i32_0 = arith.constant 0 : i32
    %c0_i32_1 = arith.constant 0 : i32
    return %c0_i32, %c0_i32_0 : i32, i32
  }
  func.func @transform_18(%arg0: i32) -> (i32, i32) {
    %c0_i32 = arith.constant 0 : i32
    %c0_i32_0 = arith.constant 0 : i32
    %c0_i32_1 = arith.constant 0 : i32
    return %c0_i32, %c0_i32_0 : i32, i32
  }
  func.func @transform_19(%arg0: i32) -> (i32, i32) {
    %c0_i32 = arith.constant 0 : i32
    %c0_i32_0 = arith.constant 0 : i32
    %c0_i32_1 = arith.constant 0 : i32
    return %c0_i32, %c0_i32_0 : i32, i32
  }
  func.func @transform_20(%arg0: i32) -> (i32, i32) {
    %c0_i32 = arith.constant 0 : i32
    %c0_i32_0 = arith.constant 0 : i32
    %c0_i32_1 = arith.constant 0 : i32
    return %c0_i32, %c0_i32_0 : i32, i32
  }
  func.func @transform_21(%arg0: i32) -> (i32, i32) {
    %c0_i32 = arith.constant 0 : i32
    %c0_i32_0 = arith.constant 0 : i32
    %c0_i32_1 = arith.constant 0 : i32
    return %c0_i32, %c0_i32_0 : i32, i32
  }
  func.func @transform_22(%arg0: i32) -> (i32, i32) {
    %c0_i32 = arith.constant 0 : i32
    %c0_i32_0 = arith.constant 0 : i32
    %c0_i32_1 = arith.constant 0 : i32
    return %c0_i32, %c0_i32_0 : i32, i32
  }
  func.func @transform_23(%arg0: i32) -> (i32, i32) {
    %c0_i32 = arith.constant 0 : i32
    %c0_i32_0 = arith.constant 0 : i32
    %c0_i32_1 = arith.constant 0 : i32
    return %c0_i32, %c0_i32_0 : i32, i32
  }
  func.func @transform_24(%arg0: i32) -> (i32, i32) {
    %c0_i32 = arith.constant 0 : i32
    %c0_i32_0 = arith.constant 0 : i32
    %c0_i32_1 = arith.constant 0 : i32
    return %c0_i32, %c0_i32_0 : i32, i32
  }
  func.func @transform_25(%arg0: i32) -> (i32, i32) {
    %c0_i32 = arith.constant 0 : i32
    %c0_i32_0 = arith.constant 0 : i32
    return %arg0, %c0_i32 : i32, i32
  }
}

</mosaic_0001>

<llo_original>
// kernel: tile.9
$region0: #{tile.9}
  %s0 = inlined_call_operand.vmem [shape: f32[4,8,8,8,8], index: 0, kind: input, shape index: {}]
  %s1 = inlined_call_operand.vmem [shape: f32[4,64,64], index: 1, kind: output, shape index: {}]
  %v2 = vld [vmem:[%s0] ss:$8 sm:$0xf]
  %v3 = vld [vmem:[%s0] ss:$8 sm:$0xf0]
  %vm4 = vcmask 1047556
  %v5 = vsel %vm4, %v3, %v2
  %vm6 = vcmask 64512
  %7 = vst.msk [vmem:[%s1] sm:$0xff] %vm6, %v5
  %s8 = scalar_lea.vmem %s0, 64
  %v9 = vld [vmem:[%s8] ss:$8 sm:$0xf]
  %s10 = scalar_lea.vmem %s0, 64
  %v11 = vld [vmem:[%s10] ss:$8 sm:$0xf0]
  %vm12 = vcmask 1047556
  %v13 = vsel %vm12, %v11, %v9
  %vm14 = vcmask 64512
  %s15 = scalar_lea.vmem %s1, 8
  %16 = vst.msk [vmem:[%s15] sm:$0xff] %vm14, %v13
  %s17 = scalar_lea.vmem %s0, 128
  %v18 = vld [vmem:[%s17] ss:$8 sm:$0xf]
  %s19 = scalar_lea.vmem %s0, 128
  %v20 = vld [vmem:[%s19] ss:$8 sm:$0xf0]
  %vm21 = vcmask 1047556
  %v22 = vsel %vm21, %v20, %v18
  %vm23 = vcmask 64512
  %s24 = scalar_lea.vmem %s1, 16
  %25 = vst.msk [vmem:[%s24] sm:$0xff] %vm23, %v22
  %s26 = scalar_lea.vmem %s0, 192
  %v27 = vld [vmem:[%s26] ss:$8 sm:$0xf]
  %s28 = scalar_lea.vmem %s0, 192
  %v29 = vld [vmem:[%s28] ss:$8 sm:$0xf0]
  %vm30 = vcmask 1047556
  %v31 = vsel %vm30, %v29, %v27
  %vm32 = vcmask 64512
  %s33 = scalar_lea.vmem %s1, 24
  %34 = vst.msk [vmem:[%s33] sm:$0xff] %vm32, %v31
  %s35 = scalar_lea.vmem %s0, 256
  %v36 = vld [vmem:[%s35] ss:$8 sm:$0xf]
  %s37 = scalar_lea.vmem %s0, 256
  %v38 = vld [vmem:[%s37] ss:$8 sm:$0xf0]
  %vm39 = vcmask 1047556
  %v40 = vsel %vm39, %v38, %v36
  %vm41 = vcmask 64512
  %s42 = scalar_lea.vmem %s1, 32
  %43 = vst.msk [vmem:[%s42] sm:$0xff] %vm41, %v40
  %s44 = scalar_lea.vmem %s0, 320
  %v45 = vld [vmem:[%s44] ss:$8 sm:$0xf]
  %s46 = scalar_lea.vmem %s0, 320
  %v47 = vld [vmem:[%s46] ss:$8 sm:$0xf0]
  %vm48 = vcmask 1047556
  %v49 = vsel %vm48, %v47, %v45
  %vm50 = vcmask 64512
  %s51 = scalar_lea.vmem %s1, 40
  %52 = vst.msk [vmem:[%s51] sm:$0xff] %vm50, %v49
  %s53 = scalar_lea.vmem %s0, 384
  %v54 = vld [vmem:[%s53] ss:$8 sm:$0xf]
  %s55 = scalar_lea.vmem %s0, 384
  %v56 = vld [vmem:[%s55] ss:$8 sm:$0xf0]
  %vm57 = vcmask 1047556
  %v58 = vsel %vm57, %v56, %v54
  %vm59 = vcmask 64512
  %s60 = scalar_lea.vmem %s1, 48
  %61 = vst.msk [vmem:[%s60] sm:$0xff] %vm59, %v58
  %s62 = scalar_lea.vmem %s0, 448
  %v63 = vld [vmem:[%s62] ss:$8 sm:$0xf]
  %s64 = scalar_lea.vmem %s0, 448
  %v65 = vld [vmem:[%s64] ss:$8 sm:$0xf0]
  %vm66 = vcmask 1047556
  %v67 = vsel %vm66, %v65, %v63
  %vm68 = vcmask 64512
  %s69 = scalar_lea.vmem %s1, 56
  %70 = vst.msk [vmem:[%s69] sm:$0xff] %vm68, %v67
  %s71 = scalar_lea.vmem %s0, 512
  %v72 = vld [vmem:[%s71] ss:$8 sm:$0xf]
  %s73 = scalar_lea.vmem %s0, 512
  %v74 = vld [vmem:[%s73] ss:$8 sm:$0xf0]
  %vm75 = vcmask 1047556
  %v76 = vsel %vm75, %v74, %v72
  %vm77 = vcmask 64512
  %s78 = scalar_lea.vmem %s1, 64
  %79 = vst.msk [vmem:[%s78] sm:$0xff] %vm77, %v76
  %s80 = scalar_lea.vmem %s0, 576
  %v81 = vld [vmem:[%s80] ss:$8 sm:$0xf]
  %s82 = scalar_lea.vmem %s0, 576
  %v83 = vld [vmem:[%s82] ss:$8 sm:$0xf0]
  %vm84 = vcmask 1047556
  %v85 = vsel %vm84, %v83, %v81
  %vm86 = vcmask 64512
  %s87 = scalar_lea.vmem %s1, 72
  %88 = vst.msk [vmem:[%s87] sm:$0xff] %vm86, %v85
  %s89 = scalar_lea.vmem %s0, 640
  %v90 = vld [vmem:[%s89] ss:$8 sm:$0xf]
  %s91 = scalar_lea.vmem %s0, 640
  %v92 = vld [vmem:[%s91] ss:$8 sm:$0xf0]
  %vm93 = vcmask 1047556
  %v94 = vsel %vm93, %v92, %v90
  %vm95 = vcmask 64512
  %s96 = scalar_lea.vmem %s1, 80
  %97 = vst.msk [vmem:[%s96] sm:$0xff] %vm95, %v94
  %s98 = scalar_lea.vmem %s0, 704
  %v99 = vld [vmem:[%s98] ss:$8 sm:$0xf]
  %s100 = scalar_lea.vmem %s0, 704
  %v101 = vld [vmem:[%s100] ss:$8 sm:$0xf0]
  %vm102 = vcmask 1047556
  %v103 = vsel %vm102, %v101, %v99
  %vm104 = vcmask 64512
  %s105 = scalar_lea.vmem %s1, 88
  %106 = vst.msk [vmem:[%s105] sm:$0xff] %vm104, %v103
  %s107 = scalar_lea.vmem %s0, 768
  %v108 = vld [vmem:[%s107] ss:$8 sm:$0xf]
  %s109 = scalar_lea.vmem %s0, 768
  %v110 = vld [vmem:[%s109] ss:$8 sm:$0xf0]
  %vm111 = vcmask 1047556
  %v112 = vsel %vm111, %v110, %v108
  %vm113 = vcmask 64512
  %s114 = scalar_lea.vmem %s1, 96
  %115 = vst.msk [vmem:[%s114] sm:$0xff] %vm113, %v112
  %s116 = scalar_lea.vmem %s0, 832
  %v117 = vld [vmem:[%s116] ss:$8 sm:$0xf]
  %s118 = scalar_lea.vmem %s0, 832
  %v119 = vld [vmem:[%s118] ss:$8 sm:$0xf0]
  %vm120 = vcmask 1047556
  %v121 = vsel %vm120, %v119, %v117
  %vm122 = vcmask 64512
  %s123 = scalar_lea.vmem %s1, 104
  %124 = vst.msk [vmem:[%s123] sm:$0xff] %vm122, %v121
  %s125 = scalar_lea.vmem %s0, 896
  %v126 = vld [vmem:[%s125] ss:$8 sm:$0xf]
  %s127 = scalar_lea.vmem %s0, 896
  %v128 = vld [vmem:[%s127] ss:$8 sm:$0xf0]
  %vm129 = vcmask 1047556
  %v130 = vsel %vm129, %v128, %v126
  %vm131 = vcmask 64512
  %s132 = scalar_lea.vmem %s1, 112
  %133 = vst.msk [vmem:[%s132] sm:$0xff] %vm131, %v130
  %s134 = scalar_lea.vmem %s0, 960
  %v135 = vld [vmem:[%s134] ss:$8 sm:$0xf]
  %s136 = scalar_lea.vmem %s0, 960
  %v137 = vld [vmem:[%s136] ss:$8 sm:$0xf0]
  %vm138 = vcmask 1047556
  %v139 = vsel %vm138, %v137, %v135
  %vm140 = vcmask 64512
  %s141 = scalar_lea.vmem %s1, 120
  %142 = vst.msk [vmem:[%s141] sm:$0xff] %vm140, %v139
  %s143 = scalar_lea.vmem %s0, 1024
  %v144 = vld [vmem:[%s143] ss:$8 sm:$0xf]
  %s145 = scalar_lea.vmem %s0, 1024
  %v146 = vld [vmem:[%s145] ss:$8 sm:$0xf0]
  %vm147 = vcmask 1047556
  %v148 = vsel %vm147, %v146, %v144
  %vm149 = vcmask 64512
  %s150 = scalar_lea.vmem %s1, 128
  %151 = vst.msk [vmem:[%s150] sm:$0xff] %vm149, %v148
  %s152 = scalar_lea.vmem %s0, 1088
  %v153 = vld [vmem:[%s152] ss:$8 sm:$0xf]
  %s154 = scalar_lea.vmem %s0, 1088
  %v155 = vld [vmem:[%s154] ss:$8 sm:$0xf0]
  %vm156 = vcmask 1047556
  %v157 = vsel %vm156, %v155, %v153
  %vm158 = vcmask 64512
  %s159 = scalar_lea.vmem %s1, 136
  %160 = vst.msk [vmem:[%s159] sm:$0xff] %vm158, %v157
  %s161 = scalar_lea.vmem %s0, 1152
  %v162 = vld [vmem:[%s161] ss:$8 sm:$0xf]
  %s163 = scalar_lea.vmem %s0, 1152
  %v164 = vld [vmem:[%s163] ss:$8 sm:$0xf0]
  %vm165 = vcmask 1047556
  %v166 = vsel %vm165, %v164, %v162
  %vm167 = vcmask 64512
  %s168 = scalar_lea.vmem %s1, 144
  %169 = vst.msk [vmem:[%s168] sm:$0xff] %vm167, %v166
  %s170 = scalar_lea.vmem %s0, 1216
  %v171 = vld [vmem:[%s170] ss:$8 sm:$0xf]
  %s172 = scalar_lea.vmem %s0, 1216
  %v173 = vld [vmem:[%s172] ss:$8 sm:$0xf0]
  %vm174 = vcmask 1047556
  %v175 = vsel %vm174, %v173, %v171
  %vm176 = vcmask 64512
  %s177 = scalar_lea.vmem %s1, 152
  %178 = vst.msk [vmem:[%s177] sm:$0xff] %vm176, %v175
  %s179 = scalar_lea.vmem %s0, 1280
  %v180 = vld [vmem:[%s179] ss:$8 sm:$0xf]
  %s181 = scalar_lea.vmem %s0, 1280
  %v182 = vld [vmem:[%s181] ss:$8 sm:$0xf0]
  %vm183 = vcmask 1047556
  %v184 = vsel %vm183, %v182, %v180
  %vm185 = vcmask 64512
  %s186 = scalar_lea.vmem %s1, 160
  %187 = vst.msk [vmem:[%s186] sm:$0xff] %vm185, %v184
  %s188 = scalar_lea.vmem %s0, 1344
  %v189 = vld [vmem:[%s188] ss:$8 sm:$0xf]
  %s190 = scalar_lea.vmem %s0, 1344
  %v191 = vld [vmem:[%s190] ss:$8 sm:$0xf0]
  %vm192 = vcmask 1047556
  %v193 = vsel %vm192, %v191, %v189
  %vm194 = vcmask 64512
  %s195 = scalar_lea.vmem %s1, 168
  %196 = vst.msk [vmem:[%s195] sm:$0xff] %vm194, %v193
  %s197 = scalar_lea.vmem %s0, 1408
  %v198 = vld [vmem:[%s197] ss:$8 sm:$0xf]
  %s199 = scalar_lea.vmem %s0, 1408
  %v200 = vld [vmem:[%s199] ss:$8 sm:$0xf0]
  %vm201 = vcmask 1047556
  %v202 = vsel %vm201, %v200, %v198
  %vm203 = vcmask 64512
  %s204 = scalar_lea.vmem %s1, 176
  %205 = vst.msk [vmem:[%s204] sm:$0xff] %vm203, %v202
  %s206 = scalar_lea.vmem %s0, 1472
  %v207 = vld [vmem:[%s206] ss:$8 sm:$0xf]
  %s208 = scalar_lea.vmem %s0, 1472
  %v209 = vld [vmem:[%s208] ss:$8 sm:$0xf0]
  %vm210 = vcmask 1047556
  %v211 = vsel %vm210, %v209, %v207
  %vm212 = vcmask 64512
  %s213 = scalar_lea.vmem %s1, 184
  %214 = vst.msk [vmem:[%s213] sm:$0xff] %vm212, %v211
  %s215 = scalar_lea.vmem %s0, 1536
  %v216 = vld [vmem:[%s215] ss:$8 sm:$0xf]
  %s217 = scalar_lea.vmem %s0, 1536
  %v218 = vld [vmem:[%s217] ss:$8 sm:$0xf0]
  %vm219 = vcmask 1047556
  %v220 = vsel %vm219, %v218, %v216
  %vm221 = vcmask 64512
  %s222 = scalar_lea.vmem %s1, 192
  %223 = vst.msk [vmem:[%s222] sm:$0xff] %vm221, %v220
  %s224 = scalar_lea.vmem %s0, 1600
  %v225 = vld [vmem:[%s224] ss:$8 sm:$0xf]
  %s226 = scalar_lea.vmem %s0, 1600
  %v227 = vld [vmem:[%s226] ss:$8 sm:$0xf0]
  %vm228 = vcmask 1047556
  %v229 = vsel %vm228, %v227, %v225
  %vm230 = vcmask 64512
  %s231 = scalar_lea.vmem %s1, 200
  %232 = vst.msk [vmem:[%s231] sm:$0xff] %vm230, %v229
  %s233 = scalar_lea.vmem %s0, 1664
  %v234 = vld [vmem:[%s233] ss:$8 sm:$0xf]
  %s235 = scalar_lea.vmem %s0, 1664
  %v236 = vld [vmem:[%s235] ss:$8 sm:$0xf0]
  %vm237 = vcmask 1047556
  %v238 = vsel %vm237, %v236, %v234
  %vm239 = vcmask 64512
  %s240 = scalar_lea.vmem %s1, 208
  %241 = vst.msk [vmem:[%s240] sm:$0xff] %vm239, %v238
  %s242 = scalar_lea.vmem %s0, 1728
  %v243 = vld [vmem:[%s242] ss:$8 sm:$0xf]
  %s244 = scalar_lea.vmem %s0, 1728
  %v245 = vld [vmem:[%s244] ss:$8 sm:$0xf0]
  %vm246 = vcmask 1047556
  %v247 = vsel %vm246, %v245, %v243
  %vm248 = vcmask 64512
  %s249 = scalar_lea.vmem %s1, 216
  %250 = vst.msk [vmem:[%s249] sm:$0xff] %vm248, %v247
  %s251 = scalar_lea.vmem %s0, 1792
  %v252 = vld [vmem:[%s251] ss:$8 sm:$0xf]
  %s253 = scalar_lea.vmem %s0, 1792
  %v254 = vld [vmem:[%s253] ss:$8 sm:$0xf0]
  %vm255 = vcmask 1047556
  %v256 = vsel %vm255, %v254, %v252
  %vm257 = vcmask 64512
  %s258 = scalar_lea.vmem %s1, 224
  %259 = vst.msk [vmem:[%s258] sm:$0xff] %vm257, %v256
  %s260 = scalar_lea.vmem %s0, 1856
  %v261 = vld [vmem:[%s260] ss:$8 sm:$0xf]
  %s262 = scalar_lea.vmem %s0, 1856
  %v263 = vld [vmem:[%s262] ss:$8 sm:$0xf0]
  %vm264 = vcmask 1047556
  %v265 = vsel %vm264, %v263, %v261
  %vm266 = vcmask 64512
  %s267 = scalar_lea.vmem %s1, 232
  %268 = vst.msk [vmem:[%s267] sm:$0xff] %vm266, %v265
  %s269 = scalar_lea.vmem %s0, 1920
  %v270 = vld [vmem:[%s269] ss:$8 sm:$0xf]
  %s271 = scalar_lea.vmem %s0, 1920
  %v272 = vld [vmem:[%s271] ss:$8 sm:$0xf0]
  %vm273 = vcmask 1047556
  %v274 = vsel %vm273, %v272, %v270
  %vm275 = vcmask 64512
  %s276 = scalar_lea.vmem %s1, 240
  %277 = vst.msk [vmem:[%s276] sm:$0xff] %vm275, %v274
  %s278 = scalar_lea.vmem %s0, 1984
  %v279 = vld [vmem:[%s278] ss:$8 sm:$0xf]
  %s280 = scalar_lea.vmem %s0, 1984
  %v281 = vld [vmem:[%s280] ss:$8 sm:$0xf0]
  %vm282 = vcmask 1047556
  %v283 = vsel %vm282, %v281, %v279
  %vm284 = vcmask 64512
  %s285 = scalar_lea.vmem %s1, 248
  %286 = vst.msk [vmem:[%s285] sm:$0xff] %vm284, %v283
  %s287 = scalar_lea.vmem %s0, 7
  %v288 = vld [vmem:[%s287] ss:$8 sm:$0xf]
  %s289 = scalar_lea.vmem %s0, 7
  %v290 = vld [vmem:[%s289] ss:$8 sm:$0xf0]
  %vm291 = vcmask 1047556
  %v292 = vsel %vm291, %v290, %v288
  %293 = vrot.lane.b32.xlu0 %v292, 56
  %v294 = vpop.permute.xlu0 %293
  %vm295 = vcmask 523712
  %296 = vst.msk [vmem:[%s1] sm:$0xff] %vm295, %v294
  %s297 = scalar_lea.vmem %s0, 263
  %v298 = vld [vmem:[%s297] ss:$8 sm:$0xf]
  %s299 = scalar_lea.vmem %s0, 263
  %v300 = vld [vmem:[%s299] ss:$8 sm:$0xf0]
  %vm301 = vcmask 1047556
  %v302 = vsel %vm301, %v300, %v298
  %303 = vrot.lane.b32.xlu0 %v302, 56
  %v304 = vpop.permute.xlu0 %303
  %vm305 = vcmask 523712
  %s306 = scalar_lea.vmem %s1, 32
  %307 = vst.msk [vmem:[%s306] sm:$0xff] %vm305, %v304
  %s308 = scalar_lea.vmem %s0, 519
  %v309 = vld [vmem:[%s308] ss:$8 sm:$0xf]
  %s310 = scalar_lea.vmem %s0, 519
  %v311 = vld [vmem:[%s310] ss:$8 sm:$0xf0]
  %vm312 = vcmask 1047556
  %v313 = vsel %vm312, %v311, %v309
  %314 = vrot.lane.b32.xlu0 %v313, 56
  %v315 = vpop.permute.xlu0 %314
  %vm316 = vcmask 523712
  %s317 = scalar_lea.vmem %s1, 64
  %318 = vst.msk [vmem:[%s317] sm:$0xff] %vm316, %v315
  %s319 = scalar_lea.vmem %s0, 775
  %v320 = vld [vmem:[%s319] ss:$8 sm:$0xf]
  %s321 = scalar_lea.vmem %s0, 775
  %v322 = vld [vmem:[%s321] ss:$8 sm:$0xf0]
  %vm323 = vcmask 1047556
  %v324 = vsel %vm323, %v322, %v320
  %325 = vrot.lane.b32.xlu0 %v324, 56
  %v326 = vpop.permute.xlu0 %325
  %vm327 = vcmask 523712
  %s328 = scalar_lea.vmem %s1, 96
  %329 = vst.msk [vmem:[%s328] sm:$0xff] %vm327, %v326
  %s330 = scalar_lea.vmem %s0, 1031
  %v331 = vld [vmem:[%s330] ss:$8 sm:$0xf]
  %s332 = scalar_lea.vmem %s0, 1031
  %v333 = vld [vmem:[%s332] ss:$8 sm:$0xf0]
  %vm334 = vcmask 1047556
  %v335 = vsel %vm334, %v333, %v331
  %336 = vrot.lane.b32.xlu0 %v335, 56
  %v337 = vpop.permute.xlu0 %336
  %vm338 = vcmask 523712
  %s339 = scalar_lea.vmem %s1, 128
  %340 = vst.msk [vmem:[%s339] sm:$0xff] %vm338, %v337
  %s341 = scalar_lea.vmem %s0, 1287
  %v342 = vld [vmem:[%s341] ss:$8 sm:$0xf]
  %s343 = scalar_lea.vmem %s0, 1287
  %v344 = vld [vmem:[%s343] ss:$8 sm:$0xf0]
  %vm345 = vcmask 1047556
  %v346 = vsel %vm345, %v344, %v342
  %347 = vrot.lane.b32.xlu0 %v346, 56
  %v348 = vpop.permute.xlu0 %347
  %vm349 = vcmask 523712
  %s350 = scalar_lea.vmem %s1, 160
  %351 = vst.msk [vmem:[%s350] sm:$0xff] %vm349, %v348
  %s352 = scalar_lea.vmem %s0, 1543
  %v353 = vld [vmem:[%s352] ss:$8 sm:$0xf]
  %s354 = scalar_lea.vmem %s0, 1543
  %v355 = vld [vmem:[%s354] ss:$8 sm:$0xf0]
  %vm356 = vcmask 1047556
  %v357 = vsel %vm356, %v355, %v353
  %358 = vrot.lane.b32.xlu0 %v357, 56
  %v359 = vpop.permute.xlu0 %358
  %vm360 = vcmask 523712
  %s361 = scalar_lea.vmem %s1, 192
  %362 = vst.msk [vmem:[%s361] sm:$0xff] %vm360, %v359
  %s363 = scalar_lea.vmem %s0, 1799
  %v364 = vld [vmem:[%s363] ss:$8 sm:$0xf]
  %s365 = scalar_lea.vmem %s0, 1799
  %v366 = vld [vmem:[%s365] ss:$8 sm:$0xf0]
  %vm367 = vcmask 1047556
  %v368 = vsel %vm367, %v366, %v364
  %369 = vrot.lane.b32.xlu0 %v368, 56
  %v370 = vpop.permute.xlu0 %369
  %vm371 = vcmask 523712
  %s372 = scalar_lea.vmem %s1, 224
  %373 = vst.msk [vmem:[%s372] sm:$0xff] %vm371, %v370
  %s374 = scalar_lea.vmem %s0, 71
  %v375 = vld [vmem:[%s374] ss:$8 sm:$0xf]
  %s376 = scalar_lea.vmem %s0, 71
  %v377 = vld [vmem:[%s376] ss:$8 sm:$0xf0]
  %vm378 = vcmask 1047556
  %v379 = vsel %vm378, %v377, %v375
  %380 = vrot.lane.b32.xlu0 %v379, 56
  %v381 = vpop.permute.xlu0 %380
  %vm382 = vcmask 523712
  %s383 = scalar_lea.vmem %s1, 8
  %384 = vst.msk [vmem:[%s383] sm:$0xff] %vm382, %v381
  %s385 = scalar_lea.vmem %s0, 327
  %v386 = vld [vmem:[%s385] ss:$8 sm:$0xf]
  %s387 = scalar_lea.vmem %s0, 327
  %v388 = vld [vmem:[%s387] ss:$8 sm:$0xf0]
  %vm389 = vcmask 1047556
  %v390 = vsel %vm389, %v388, %v386
  %391 = vrot.lane.b32.xlu0 %v390, 56
  %v392 = vpop.permute.xlu0 %391
  %vm393 = vcmask 523712
  %s394 = scalar_lea.vmem %s1, 40
  %395 = vst.msk [vmem:[%s394] sm:$0xff] %vm393, %v392
  %s396 = scalar_lea.vmem %s0, 583
  %v397 = vld [vmem:[%s396] ss:$8 sm:$0xf]
  %s398 = scalar_lea.vmem %s0, 583
  %v399 = vld [vmem:[%s398] ss:$8 sm:$0xf0]
  %vm400 = vcmask 1047556
  %v401 = vsel %vm400, %v399, %v397
  %402 = vrot.lane.b32.xlu0 %v401, 56
  %v403 = vpop.permute.xlu0 %402
  %vm404 = vcmask 523712
  %s405 = scalar_lea.vmem %s1, 72
  %406 = vst.msk [vmem:[%s405] sm:$0xff] %vm404, %v403
  %s407 = scalar_lea.vmem %s0, 839
  %v408 = vld [vmem:[%s407] ss:$8 sm:$0xf]
  %s409 = scalar_lea.vmem %s0, 839
  %v410 = vld [vmem:[%s409] ss:$8 sm:$0xf0]
  %vm411 = vcmask 1047556
  %v412 = vsel %vm411, %v410, %v408
  %413 = vrot.lane.b32.xlu0 %v412, 56
  %v414 = vpop.permute.xlu0 %413
  %vm415 = vcmask 523712
  %s416 = scalar_lea.vmem %s1, 104
  %417 = vst.msk [vmem:[%s416] sm:$0xff] %vm415, %v414
  %s418 = scalar_lea.vmem %s0, 1095
  %v419 = vld [vmem:[%s418] ss:$8 sm:$0xf]
  %s420 = scalar_lea.vmem %s0, 1095
  %v421 = vld [vmem:[%s420] ss:$8 sm:$0xf0]
  %vm422 = vcmask 1047556
  %v423 = vsel %vm422, %v421, %v419
  %424 = vrot.lane.b32.xlu0 %v423, 56
  %v425 = vpop.permute.xlu0 %424
  %vm426 = vcmask 523712
  %s427 = scalar_lea.vmem %s1, 136
  %428 = vst.msk [vmem:[%s427] sm:$0xff] %vm426, %v425
  %s429 = scalar_lea.vmem %s0, 1351
  %v430 = vld [vmem:[%s429] ss:$8 sm:$0xf]
  %s431 = scalar_lea.vmem %s0, 1351
  %v432 = vld [vmem:[%s431] ss:$8 sm:$0xf0]
  %vm433 = vcmask 1047556
  %v434 = vsel %vm433, %v432, %v430
  %435 = vrot.lane.b32.xlu0 %v434, 56
  %v436 = vpop.permute.xlu0 %435
  %vm437 = vcmask 523712
  %s438 = scalar_lea.vmem %s1, 168
  %439 = vst.msk [vmem:[%s438] sm:$0xff] %vm437, %v436
  %s440 = scalar_lea.vmem %s0, 1607
  %v441 = vld [vmem:[%s440] ss:$8 sm:$0xf]
  %s442 = scalar_lea.vmem %s0, 1607
  %v443 = vld [vmem:[%s442] ss:$8 sm:$0xf0]
  %vm444 = vcmask 1047556
  %v445 = vsel %vm444, %v443, %v441
  %446 = vrot.lane.b32.xlu0 %v445, 56
  %v447 = vpop.permute.xlu0 %446
  %vm448 = vcmask 523712
  %s449 = scalar_lea.vmem %s1, 200
  %450 = vst.msk [vmem:[%s449] sm:$0xff] %vm448, %v447
  %s451 = scalar_lea.vmem %s0, 1863
  %v452 = vld [vmem:[%s451] ss:$8 sm:$0xf]
  %s453 = scalar_lea.vmem %s0, 1863
  %v454 = vld [vmem:[%s453] ss:$8 sm:$0xf0]
  %vm455 = vcmask 1047556
  %v456 = vsel %vm455, %v454, %v452
  %457 = vrot.lane.b32.xlu0 %v456, 56
  %v458 = vpop.permute.xlu0 %457
  %vm459 = vcmask 523712
  %s460 = scalar_lea.vmem %s1, 232
  %461 = vst.msk [vmem:[%s460] sm:$0xff] %vm459, %v458
  %s462 = scalar_lea.vmem %s0, 135
  %v463 = vld [vmem:[%s462] ss:$8 sm:$0xf]
  %s464 = scalar_lea.vmem %s0, 135
  %v465 = vld [vmem:[%s464] ss:$8 sm:$0xf0]
  %vm466 = vcmask 1047556
  %v467 = vsel %vm466, %v465, %v463
  %468 = vrot.lane.b32.xlu0 %v467, 56
  %v469 = vpop.permute.xlu0 %468
  %vm470 = vcmask 523712
  %s471 = scalar_lea.vmem %s1, 16
  %472 = vst.msk [vmem:[%s471] sm:$0xff] %vm470, %v469
  %s473 = scalar_lea.vmem %s0, 391
  %v474 = vld [vmem:[%s473] ss:$8 sm:$0xf]
  %s475 = scalar_lea.vmem %s0, 391
  %v476 = vld [vmem:[%s475] ss:$8 sm:$0xf0]
  %vm477 = vcmask 1047556
  %v478 = vsel %vm477, %v476, %v474
  %479 = vrot.lane.b32.xlu0 %v478, 56
  %v480 = vpop.permute.xlu0 %479
  %vm481 = vcmask 523712
  %s482 = scalar_lea.vmem %s1, 48
  %483 = vst.msk [vmem:[%s482] sm:$0xff] %vm481, %v480
  %s484 = scalar_lea.vmem %s0, 647
  %v485 = vld [vmem:[%s484] ss:$8 sm:$0xf]
  %s486 = scalar_lea.vmem %s0, 647
  %v487 = vld [vmem:[%s486] ss:$8 sm:$0xf0]
  %vm488 = vcmask 1047556
  %v489 = vsel %vm488, %v487, %v485
  %490 = vrot.lane.b32.xlu0 %v489, 56
  %v491 = vpop.permute.xlu0 %490
  %vm492 = vcmask 523712
  %s493 = scalar_lea.vmem %s1, 80
  %494 = vst.msk [vmem:[%s493] sm:$0xff] %vm492, %v491
  %s495 = scalar_lea.vmem %s0, 903
  %v496 = vld [vmem:[%s495] ss:$8 sm:$0xf]
  %s497 = scalar_lea.vmem %s0, 903
  %v498 = vld [vmem:[%s497] ss:$8 sm:$0xf0]
  %vm499 = vcmask 1047556
  %v500 = vsel %vm499, %v498, %v496
  %501 = vrot.lane.b32.xlu0 %v500, 56
  %v502 = vpop.permute.xlu0 %501
  %vm503 = vcmask 523712
  %s504 = scalar_lea.vmem %s1, 112
  %505 = vst.msk [vmem:[%s504] sm:$0xff] %vm503, %v502
  %s506 = scalar_lea.vmem %s0, 1159
  %v507 = vld [vmem:[%s506] ss:$8 sm:$0xf]
  %s508 = scalar_lea.vmem %s0, 1159
  %v509 = vld [vmem:[%s508] ss:$8 sm:$0xf0]
  %vm510 = vcmask 1047556
  %v511 = vsel %vm510, %v509, %v507
  %512 = vrot.lane.b32.xlu0 %v511, 56
  %v513 = vpop.permute.xlu0 %512
  %vm514 = vcmask 523712
  %s515 = scalar_lea.vmem %s1, 144
  %516 = vst.msk [vmem:[%s515] sm:$0xff] %vm514, %v513
  %s517 = scalar_lea.vmem %s0, 1415
  %v518 = vld [vmem:[%s517] ss:$8 sm:$0xf]
  %s519 = scalar_lea.vmem %s0, 1415
  %v520 = vld [vmem:[%s519] ss:$8 sm:$0xf0]
  %vm521 = vcmask 1047556
  %v522 = vsel %vm521, %v520, %v518
  %523 = vrot.lane.b32.xlu0 %v522, 56
  %v524 = vpop.permute.xlu0 %523
  %vm525 = vcmask 523712
  %s526 = scalar_lea.vmem %s1, 176
  %527 = vst.msk [vmem:[%s526] sm:$0xff] %vm525, %v524
  %s528 = scalar_lea.vmem %s0, 1671
  %v529 = vld [vmem:[%s528] ss:$8 sm:$0xf]
  %s530 = scalar_lea.vmem %s0, 1671
  %v531 = vld [vmem:[%s530] ss:$8 sm:$0xf0]
  %vm532 = vcmask 1047556
  %v533 = vsel %vm532, %v531, %v529
  %534 = vrot.lane.b32.xlu0 %v533, 56
  %v535 = vpop.permute.xlu0 %534
  %vm536 = vcmask 523712
  %s537 = scalar_lea.vmem %s1, 208
  %538 = vst.msk [vmem:[%s537] sm:$0xff] %vm536, %v535
  %s539 = scalar_lea.vmem %s0, 1927
  %v540 = vld [vmem:[%s539] ss:$8 sm:$0xf]
  %s541 = scalar_lea.vmem %s0, 1927
  %v542 = vld [vmem:[%s541] ss:$8 sm:$0xf0]
  %vm543 = vcmask 1047556
  %v544 = vsel %vm543, %v542, %v540
  %545 = vrot.lane.b32.xlu0 %v544, 56
  %v546 = vpop.permute.xlu0 %545
  %vm547 = vcmask 523712
  %s548 = scalar_lea.vmem %s1, 240
  %549 = vst.msk [vmem:[%s548] sm:$0xff] %vm547, %v546
  %s550 = scalar_lea.vmem %s0, 199
  %v551 = vld [vmem:[%s550] ss:$8 sm:$0xf]
  %s552 = scalar_lea.vmem %s0, 199
  %v553 = vld [vmem:[%s552] ss:$8 sm:$0xf0]
  %vm554 = vcmask 1047556
  %v555 = vsel %vm554, %v553, %v551
  %556 = vrot.lane.b32.xlu0 %v555, 56
  %v557 = vpop.permute.xlu0 %556
  %vm558 = vcmask 523712
  %s559 = scalar_lea.vmem %s1, 24
  %560 = vst.msk [vmem:[%s559] sm:$0xff] %vm558, %v557
  %s561 = scalar_lea.vmem %s0, 455
  %v562 = vld [vmem:[%s561] ss:$8 sm:$0xf]
  %s563 = scalar_lea.vmem %s0, 455
  %v564 = vld [vmem:[%s563] ss:$8 sm:$0xf0]
  %vm565 = vcmask 1047556
  %v566 = vsel %vm565, %v564, %v562
  %567 = vrot.lane.b32.xlu0 %v566, 56
  %v568 = vpop.permute.xlu0 %567
  %vm569 = vcmask 523712
  %s570 = scalar_lea.vmem %s1, 56
  %571 = vst.msk [vmem:[%s570] sm:$0xff] %vm569, %v568
  %s572 = scalar_lea.vmem %s0, 711
  %v573 = vld [vmem:[%s572] ss:$8 sm:$0xf]
  %s574 = scalar_lea.vmem %s0, 711
  %v575 = vld [vmem:[%s574] ss:$8 sm:$0xf0]
  %vm576 = vcmask 1047556
  %v577 = vsel %vm576, %v575, %v573
  %578 = vrot.lane.b32.xlu0 %v577, 56
  %v579 = vpop.permute.xlu0 %578
  %vm580 = vcmask 523712
  %s581 = scalar_lea.vmem %s1, 88
  %582 = vst.msk [vmem:[%s581] sm:$0xff] %vm580, %v579
  %s583 = scalar_lea.vmem %s0, 967
  %v584 = vld [vmem:[%s583] ss:$8 sm:$0xf]
  %s585 = scalar_lea.vmem %s0, 967
  %v586 = vld [vmem:[%s585] ss:$8 sm:$0xf0]
  %vm587 = vcmask 1047556
  %v588 = vsel %vm587, %v586, %v584
  %589 = vrot.lane.b32.xlu0 %v588, 56
  %v590 = vpop.permute.xlu0 %589
  %vm591 = vcmask 523712
  %s592 = scalar_lea.vmem %s1, 120
  %593 = vst.msk [vmem:[%s592] sm:$0xff] %vm591, %v590
  %s594 = scalar_lea.vmem %s0, 1223
  %v595 = vld [vmem:[%s594] ss:$8 sm:$0xf]
  %s596 = scalar_lea.vmem %s0, 1223
  %v597 = vld [vmem:[%s596] ss:$8 sm:$0xf0]
  %vm598 = vcmask 1047556
  %v599 = vsel %vm598, %v597, %v595
  %600 = vrot.lane.b32.xlu0 %v599, 56
  %v601 = vpop.permute.xlu0 %600
  %vm602 = vcmask 523712
  %s603 = scalar_lea.vmem %s1, 152
  %604 = vst.msk [vmem:[%s603] sm:$0xff] %vm602, %v601
  %s605 = scalar_lea.vmem %s0, 1479
  %v606 = vld [vmem:[%s605] ss:$8 sm:$0xf]
  %s607 = scalar_lea.vmem %s0, 1479
  %v608 = vld [vmem:[%s607] ss:$8 sm:$0xf0]
  %vm609 = vcmask 1047556
  %v610 = vsel %vm609, %v608, %v606
  %611 = vrot.lane.b32.xlu0 %v610, 56
  %v612 = vpop.permute.xlu0 %611
  %vm613 = vcmask 523712
  %s614 = scalar_lea.vmem %s1, 184
  %615 = vst.msk [vmem:[%s614] sm:$0xff] %vm613, %v612
  %s616 = scalar_lea.vmem %s0, 1735
  %v617 = vld [vmem:[%s616] ss:$8 sm:$0xf]
  %s618 = scalar_lea.vmem %s0, 1735
  %v619 = vld [vmem:[%s618] ss:$8 sm:$0xf0]
  %vm620 = vcmask 1047556
  %v621 = vsel %vm620, %v619, %v617
  %622 = vrot.lane.b32.xlu0 %v621, 56
  %v623 = vpop.permute.xlu0 %622
  %vm624 = vcmask 523712
  %s625 = scalar_lea.vmem %s1, 216
  %626 = vst.msk [vmem:[%s625] sm:$0xff] %vm624, %v623
  %s627 = scalar_lea.vmem %s0, 1991
  %v628 = vld [vmem:[%s627] ss:$8 sm:$0xf]
  %s629 = scalar_lea.vmem %s0, 1991
  %v630 = vld [vmem:[%s629] ss:$8 sm:$0xf0]
  %vm631 = vcmask 1047556
  %v632 = vsel %vm631, %v630, %v628
  %633 = vrot.lane.b32.xlu0 %v632, 56
  %v634 = vpop.permute.xlu0 %633
  %vm635 = vcmask 523712
  %s636 = scalar_lea.vmem %s1, 248
  %637 = vst.msk [vmem:[%s636] sm:$0xff] %vm635, %v634
  %s638 = scalar_lea.vmem %s0, 6
  %v639 = vld [vmem:[%s638] ss:$8 sm:$0xf]
  %s640 = scalar_lea.vmem %s0, 6
  %v641 = vld [vmem:[%s640] ss:$8 sm:$0xf0]
  %vm642 = vcmask 1047556
  %v643 = vsel %vm642, %v641, %v639
  %644 = vrot.lane.b32.xlu0 %v643, 48
  %v645 = vpop.permute.xlu0 %644
  %vm646 = vcmask 458112
  %647 = vst.msk [vmem:[%s1] sm:$0xff] %vm646, %v645
  %s648 = scalar_lea.vmem %s0, 262
  %v649 = vld [vmem:[%s648] ss:$8 sm:$0xf]
  %s650 = scalar_lea.vmem %s0, 262
  %v651 = vld [vmem:[%s650] ss:$8 sm:$0xf0]
  %vm652 = vcmask 1047556
  %v653 = vsel %vm652, %v651, %v649
  %654 = vrot.lane.b32.xlu0 %v653, 48
  %v655 = vpop.permute.xlu0 %654
  %vm656 = vcmask 458112
  %s657 = scalar_lea.vmem %s1, 32
  %658 = vst.msk [vmem:[%s657] sm:$0xff] %vm656, %v655
  %s659 = scalar_lea.vmem %s0, 518
  %v660 = vld [vmem:[%s659] ss:$8 sm:$0xf]
  %s661 = scalar_lea.vmem %s0, 518
  %v662 = vld [vmem:[%s661] ss:$8 sm:$0xf0]
  %vm663 = vcmask 1047556
  %v664 = vsel %vm663, %v662, %v660
  %665 = vrot.lane.b32.xlu0 %v664, 48
  %v666 = vpop.permute.xlu0 %665
  %vm667 = vcmask 458112
  %s668 = scalar_lea.vmem %s1, 64
  %669 = vst.msk [vmem:[%s668] sm:$0xff] %vm667, %v666
  %s670 = scalar_lea.vmem %s0, 774
  %v671 = vld [vmem:[%s670] ss:$8 sm:$0xf]
  %s672 = scalar_lea.vmem %s0, 774
  %v673 = vld [vmem:[%s672] ss:$8 sm:$0xf0]
  %vm674 = vcmask 1047556
  %v675 = vsel %vm674, %v673, %v671
  %676 = vrot.lane.b32.xlu0 %v675, 48
  %v677 = vpop.permute.xlu0 %676
  %vm678 = vcmask 458112
  %s679 = scalar_lea.vmem %s1, 96
  %680 = vst.msk [vmem:[%s679] sm:$0xff] %vm678, %v677
  %s681 = scalar_lea.vmem %s0, 1030
  %v682 = vld [vmem:[%s681] ss:$8 sm:$0xf]
  %s683 = scalar_lea.vmem %s0, 1030
  %v684 = vld [vmem:[%s683] ss:$8 sm:$0xf0]
  %vm685 = vcmask 1047556
  %v686 = vsel %vm685, %v684, %v682
  %687 = vrot.lane.b32.xlu0 %v686, 48
  %v688 = vpop.permute.xlu0 %687
  %vm689 = vcmask 458112
  %s690 = scalar_lea.vmem %s1, 128
  %691 = vst.msk [vmem:[%s690] sm:$0xff] %vm689, %v688
  %s692 = scalar_lea.vmem %s0, 1286
  %v693 = vld [vmem:[%s692] ss:$8 sm:$0xf]
  %s694 = scalar_lea.vmem %s0, 1286
  %v695 = vld [vmem:[%s694] ss:$8 sm:$0xf0]
  %vm696 = vcmask 1047556
  %v697 = vsel %vm696, %v695, %v693
  %698 = vrot.lane.b32.xlu0 %v697, 48
  %v699 = vpop.permute.xlu0 %698
  %vm700 = vcmask 458112
  %s701 = scalar_lea.vmem %s1, 160
  %702 = vst.msk [vmem:[%s701] sm:$0xff] %vm700, %v699
  %s703 = scalar_lea.vmem %s0, 1542
  %v704 = vld [vmem:[%s703] ss:$8 sm:$0xf]
  %s705 = scalar_lea.vmem %s0, 1542
  %v706 = vld [vmem:[%s705] ss:$8 sm:$0xf0]
  %vm707 = vcmask 1047556
  %v708 = vsel %vm707, %v706, %v704
  %709 = vrot.lane.b32.xlu0 %v708, 48
  %v710 = vpop.permute.xlu0 %709
  %vm711 = vcmask 458112
  %s712 = scalar_lea.vmem %s1, 192
  %713 = vst.msk [vmem:[%s712] sm:$0xff] %vm711, %v710
  %s714 = scalar_lea.vmem %s0, 1798
  %v715 = vld [vmem:[%s714] ss:$8 sm:$0xf]
  %s716 = scalar_lea.vmem %s0, 1798
  %v717 = vld [vmem:[%s716] ss:$8 sm:$0xf0]
  %vm718 = vcmask 1047556
  %v719 = vsel %vm718, %v717, %v715
  %720 = vrot.lane.b32.xlu0 %v719, 48
  %v721 = vpop.permute.xlu0 %720
  %vm722 = vcmask 458112
  %s723 = scalar_lea.vmem %s1, 224
  %724 = vst.msk [vmem:[%s723] sm:$0xff] %vm722, %v721
  %s725 = scalar_lea.vmem %s0, 70
  %v726 = vld [vmem:[%s725] ss:$8 sm:$0xf]
  %s727 = scalar_lea.vmem %s0, 70
  %v728 = vld [vmem:[%s727] ss:$8 sm:$0xf0]
  %vm729 = vcmask 1047556
  %v730 = vsel %vm729, %v728, %v726
  %731 = vrot.lane.b32.xlu0 %v730, 48
  %v732 = vpop.permute.xlu0 %731
  %vm733 = vcmask 458112
  %s734 = scalar_lea.vmem %s1, 8
  %735 = vst.msk [vmem:[%s734] sm:$0xff] %vm733, %v732
  %s736 = scalar_lea.vmem %s0, 326
  %v737 = vld [vmem:[%s736] ss:$8 sm:$0xf]
  %s738 = scalar_lea.vmem %s0, 326
  %v739 = vld [vmem:[%s738] ss:$8 sm:$0xf0]
  %vm740 = vcmask 1047556
  %v741 = vsel %vm740, %v739, %v737
  %742 = vrot.lane.b32.xlu0 %v741, 48
  %v743 = vpop.permute.xlu0 %742
  %vm744 = vcmask 458112
  %s745 = scalar_lea.vmem %s1, 40
  %746 = vst.msk [vmem:[%s745] sm:$0xff] %vm744, %v743
  %s747 = scalar_lea.vmem %s0, 582
  %v748 = vld [vmem:[%s747] ss:$8 sm:$0xf]
  %s749 = scalar_lea.vmem %s0, 582
  %v750 = vld [vmem:[%s749] ss:$8 sm:$0xf0]
  %vm751 = vcmask 1047556
  %v752 = vsel %vm751, %v750, %v748
  %753 = vrot.lane.b32.xlu0 %v752, 48
  %v754 = vpop.permute.xlu0 %753
  %vm755 = vcmask 458112
  %s756 = scalar_lea.vmem %s1, 72
  %757 = vst.msk [vmem:[%s756] sm:$0xff] %vm755, %v754
  %s758 = scalar_lea.vmem %s0, 838
  %v759 = vld [vmem:[%s758] ss:$8 sm:$0xf]
  %s760 = scalar_lea.vmem %s0, 838
  %v761 = vld [vmem:[%s760] ss:$8 sm:$0xf0]
  %vm762 = vcmask 1047556
  %v763 = vsel %vm762, %v761, %v759
  %764 = vrot.lane.b32.xlu0 %v763, 48
  %v765 = vpop.permute.xlu0 %764
  %vm766 = vcmask 458112
  %s767 = scalar_lea.vmem %s1, 104
  %768 = vst.msk [vmem:[%s767] sm:$0xff] %vm766, %v765
  %s769 = scalar_lea.vmem %s0, 1094
  %v770 = vld [vmem:[%s769] ss:$8 sm:$0xf]
  %s771 = scalar_lea.vmem %s0, 1094
  %v772 = vld [vmem:[%s771] ss:$8 sm:$0xf0]
  %vm773 = vcmask 1047556
  %v774 = vsel %vm773, %v772, %v770
  %775 = vrot.lane.b32.xlu0 %v774, 48
  %v776 = vpop.permute.xlu0 %775
  %vm777 = vcmask 458112
  %s778 = scalar_lea.vmem %s1, 136
  %779 = vst.msk [vmem:[%s778] sm:$0xff] %vm777, %v776
  %s780 = scalar_lea.vmem %s0, 1350
  %v781 = vld [vmem:[%s780] ss:$8 sm:$0xf]
  %s782 = scalar_lea.vmem %s0, 1350
  %v783 = vld [vmem:[%s782] ss:$8 sm:$0xf0]
  %vm784 = vcmask 1047556
  %v785 = vsel %vm784, %v783, %v781
  %786 = vrot.lane.b32.xlu0 %v785, 48
  %v787 = vpop.permute.xlu0 %786
  %vm788 = vcmask 458112
  %s789 = scalar_lea.vmem %s1, 168
  %790 = vst.msk [vmem:[%s789] sm:$0xff] %vm788, %v787
  %s791 = scalar_lea.vmem %s0, 1606
  %v792 = vld [vmem:[%s791] ss:$8 sm:$0xf]
  %s793 = scalar_lea.vmem %s0, 1606
  %v794 = vld [vmem:[%s793] ss:$8 sm:$0xf0]
  %vm795 = vcmask 1047556
  %v796 = vsel %vm795, %v794, %v792
  %797 = vrot.lane.b32.xlu0 %v796, 48
  %v798 = vpop.permute.xlu0 %797
  %vm799 = vcmask 458112
  %s800 = scalar_lea.vmem %s1, 200
  %801 = vst.msk [vmem:[%s800] sm:$0xff] %vm799, %v798
  %s802 = scalar_lea.vmem %s0, 1862
  %v803 = vld [vmem:[%s802] ss:$8 sm:$0xf]
  %s804 = scalar_lea.vmem %s0, 1862
  %v805 = vld [vmem:[%s804] ss:$8 sm:$0xf0]
  %vm806 = vcmask 1047556
  %v807 = vsel %vm806, %v805, %v803
  %808 = vrot.lane.b32.xlu0 %v807, 48
  %v809 = vpop.permute.xlu0 %808
  %vm810 = vcmask 458112
  %s811 = scalar_lea.vmem %s1, 232
  %812 = vst.msk [vmem:[%s811] sm:$0xff] %vm810, %v809
  %s813 = scalar_lea.vmem %s0, 134
  %v814 = vld [vmem:[%s813] ss:$8 sm:$0xf]
  %s815 = scalar_lea.vmem %s0, 134
  %v816 = vld [vmem:[%s815] ss:$8 sm:$0xf0]
  %vm817 = vcmask 1047556
  %v818 = vsel %vm817, %v816, %v814
  %819 = vrot.lane.b32.xlu0 %v818, 48
  %v820 = vpop.permute.xlu0 %819
  %vm821 = vcmask 458112
  %s822 = scalar_lea.vmem %s1, 16
  %823 = vst.msk [vmem:[%s822] sm:$0xff] %vm821, %v820
  %s824 = scalar_lea.vmem %s0, 390
  %v825 = vld [vmem:[%s824] ss:$8 sm:$0xf]
  %s826 = scalar_lea.vmem %s0, 390
  %v827 = vld [vmem:[%s826] ss:$8 sm:$0xf0]
  %vm828 = vcmask 1047556
  %v829 = vsel %vm828, %v827, %v825
  %830 = vrot.lane.b32.xlu0 %v829, 48
  %v831 = vpop.permute.xlu0 %830
  %vm832 = vcmask 458112
  %s833 = scalar_lea.vmem %s1, 48
  %834 = vst.msk [vmem:[%s833] sm:$0xff] %vm832, %v831
  %s835 = scalar_lea.vmem %s0, 646
  %v836 = vld [vmem:[%s835] ss:$8 sm:$0xf]
  %s837 = scalar_lea.vmem %s0, 646
  %v838 = vld [vmem:[%s837] ss:$8 sm:$0xf0]
  %vm839 = vcmask 1047556
  %v840 = vsel %vm839, %v838, %v836
  %841 = vrot.lane.b32.xlu0 %v840, 48
  %v842 = vpop.permute.xlu0 %841
  %vm843 = vcmask 458112
  %s844 = scalar_lea.vmem %s1, 80
  %845 = vst.msk [vmem:[%s844] sm:$0xff] %vm843, %v842
  %s846 = scalar_lea.vmem %s0, 902
  %v847 = vld [vmem:[%s846] ss:$8 sm:$0xf]
  %s848 = scalar_lea.vmem %s0, 902
  %v849 = vld [vmem:[%s848] ss:$8 sm:$0xf0]
  %vm850 = vcmask 1047556
  %v851 = vsel %vm850, %v849, %v847
  %852 = vrot.lane.b32.xlu0 %v851, 48
  %v853 = vpop.permute.xlu0 %852
  %vm854 = vcmask 458112
  %s855 = scalar_lea.vmem %s1, 112
  %856 = vst.msk [vmem:[%s855] sm:$0xff] %vm854, %v853
  %s857 = scalar_lea.vmem %s0, 1158
  %v858 = vld [vmem:[%s857] ss:$8 sm:$0xf]
  %s859 = scalar_lea.vmem %s0, 1158
  %v860 = vld [vmem:[%s859] ss:$8 sm:$0xf0]
  %vm861 = vcmask 1047556
  %v862 = vsel %vm861, %v860, %v858
  %863 = vrot.lane.b32.xlu0 %v862, 48
  %v864 = vpop.permute.xlu0 %863
  %vm865 = vcmask 458112
  %s866 = scalar_lea.vmem %s1, 144
  %867 = vst.msk [vmem:[%s866] sm:$0xff] %vm865, %v864
  %s868 = scalar_lea.vmem %s0, 1414
  %v869 = vld [vmem:[%s868] ss:$8 sm:$0xf]
  %s870 = scalar_lea.vmem %s0, 1414
  %v871 = vld [vmem:[%s870] ss:$8 sm:$0xf0]
  %vm872 = vcmask 1047556
  %v873 = vsel %vm872, %v871, %v869
  %874 = vrot.lane.b32.xlu0 %v873, 48
  %v875 = vpop.permute.xlu0 %874
  %vm876 = vcmask 458112
  %s877 = scalar_lea.vmem %s1, 176
  %878 = vst.msk [vmem:[%s877] sm:$0xff] %vm876, %v875
  %s879 = scalar_lea.vmem %s0, 1670
  %v880 = vld [vmem:[%s879] ss:$8 sm:$0xf]
  %s881 = scalar_lea.vmem %s0, 1670
  %v882 = vld [vmem:[%s881] ss:$8 sm:$0xf0]
  %vm883 = vcmask 1047556
  %v884 = vsel %vm883, %v882, %v880
  %885 = vrot.lane.b32.xlu0 %v884, 48
  %v886 = vpop.permute.xlu0 %885
  %vm887 = vcmask 458112
  %s888 = scalar_lea.vmem %s1, 208
  %889 = vst.msk [vmem:[%s888] sm:$0xff] %vm887, %v886
  %s890 = scalar_lea.vmem %s0, 1926
  %v891 = vld [vmem:[%s890] ss:$8 sm:$0xf]
  %s892 = scalar_lea.vmem %s0, 1926
  %v893 = vld [vmem:[%s892] ss:$8 sm:$0xf0]
  %vm894 = vcmask 1047556
  %v895 = vsel %vm894, %v893, %v891
  %896 = vrot.lane.b32.xlu0 %v895, 48
  %v897 = vpop.permute.xlu0 %896
  %vm898 = vcmask 458112
  %s899 = scalar_lea.vmem %s1, 240
  %900 = vst.msk [vmem:[%s899] sm:$0xff] %vm898, %v897
  %s901 = scalar_lea.vmem %s0, 198
  %v902 = vld [vmem:[%s901] ss:$8 sm:$0xf]
  %s903 = scalar_lea.vmem %s0, 198
  %v904 = vld [vmem:[%s903] ss:$8 sm:$0xf0]
  %vm905 = vcmask 1047556
  %v906 = vsel %vm905, %v904, %v902
  %907 = vrot.lane.b32.xlu0 %v906, 48
  %v908 = vpop.permute.xlu0 %907
  %vm909 = vcmask 458112
  %s910 = scalar_lea.vmem %s1, 24
  %911 = vst.msk [vmem:[%s910] sm:$0xff] %vm909, %v908
  %s912 = scalar_lea.vmem %s0, 454
  %v913 = vld [vmem:[%s912] ss:$8 sm:$0xf]
  %s914 = scalar_lea.vmem %s0, 454
  %v915 = vld [vmem:[%s914] ss:$8 sm:$0xf0]
  %vm916 = vcmask 1047556
  %v917 = vsel %vm916, %v915, %v913
  %918 = vrot.lane.b32.xlu0 %v917, 48
  %v919 = vpop.permute.xlu0 %918
  %vm920 = vcmask 458112
  %s921 = scalar_lea.vmem %s1, 56
  %922 = vst.msk [vmem:[%s921] sm:$0xff] %vm920, %v919
  %s923 = scalar_lea.vmem %s0, 710
  %v924 = vld [vmem:[%s923] ss:$8 sm:$0xf]
  %s925 = scalar_lea.vmem %s0, 710
  %v926 = vld [vmem:[%s925] ss:$8 sm:$0xf0]
  %vm927 = vcmask 1047556
  %v928 = vsel %vm927, %v926, %v924
  %929 = vrot.lane.b32.xlu0 %v928, 48
  %v930 = vpop.permute.xlu0 %929
  %vm931 = vcmask 458112
  %s932 = scalar_lea.vmem %s1, 88
  %933 = vst.msk [vmem:[%s932] sm:$0xff] %vm931, %v930
  %s934 = scalar_lea.vmem %s0, 966
  %v935 = vld [vmem:[%s934] ss:$8 sm:$0xf]
  %s936 = scalar_lea.vmem %s0, 966
  %v937 = vld [vmem:[%s936] ss:$8 sm:$0xf0]
  %vm938 = vcmask 1047556
  %v939 = vsel %vm938, %v937, %v935
  %940 = vrot.lane.b32.xlu0 %v939, 48
  %v941 = vpop.permute.xlu0 %940
  %vm942 = vcmask 458112
  %s943 = scalar_lea.vmem %s1, 120
  %944 = vst.msk [vmem:[%s943] sm:$0xff] %vm942, %v941
  %s945 = scalar_lea.vmem %s0, 1222
  %v946 = vld [vmem:[%s945] ss:$8 sm:$0xf]
  %s947 = scalar_lea.vmem %s0, 1222
  %v948 = vld [vmem:[%s947] ss:$8 sm:$0xf0]
  %vm949 = vcmask 1047556
  %v950 = vsel %vm949, %v948, %v946
  %951 = vrot.lane.b32.xlu0 %v950, 48
  %v952 = vpop.permute.xlu0 %951
  %vm953 = vcmask 458112
  %s954 = scalar_lea.vmem %s1, 152
  %955 = vst.msk [vmem:[%s954] sm:$0xff] %vm953, %v952
  %s956 = scalar_lea.vmem %s0, 1478
  %v957 = vld [vmem:[%s956] ss:$8 sm:$0xf]
  %s958 = scalar_lea.vmem %s0, 1478
  %v959 = vld [vmem:[%s958] ss:$8 sm:$0xf0]
  %vm960 = vcmask 1047556
  %v961 = vsel %vm960, %v959, %v957
  %962 = vrot.lane.b32.xlu0 %v961, 48
  %v963 = vpop.permute.xlu0 %962
  %vm964 = vcmask 458112
  %s965 = scalar_lea.vmem %s1, 184
  %966 = vst.msk [vmem:[%s965] sm:$0xff] %vm964, %v963
  %s967 = scalar_lea.vmem %s0, 1734
  %v968 = vld [vmem:[%s967] ss:$8 sm:$0xf]
  %s969 = scalar_lea.vmem %s0, 1734
  %v970 = vld [vmem:[%s969] ss:$8 sm:$0xf0]
  %vm971 = vcmask 1047556
  %v972 = vsel %vm971, %v970, %v968
  %973 = vrot.lane.b32.xlu0 %v972, 48
  %v974 = vpop.permute.xlu0 %973
  %vm975 = vcmask 458112
  %s976 = scalar_lea.vmem %s1, 216
  %977 = vst.msk [vmem:[%s976] sm:$0xff] %vm975, %v974
  %s978 = scalar_lea.vmem %s0, 1990
  %v979 = vld [vmem:[%s978] ss:$8 sm:$0xf]
  %s980 = scalar_lea.vmem %s0, 1990
  %v981 = vld [vmem:[%s980] ss:$8 sm:$0xf0]
  %vm982 = vcmask 1047556
  %v983 = vsel %vm982, %v981, %v979
  %984 = vrot.lane.b32.xlu0 %v983, 48
  %v985 = vpop.permute.xlu0 %984
  %vm986 = vcmask 458112
  %s987 = scalar_lea.vmem %s1, 248
  %988 = vst.msk [vmem:[%s987] sm:$0xff] %vm986, %v985
  %s989 = scalar_lea.vmem %s0, 5
  %v990 = vld [vmem:[%s989] ss:$8 sm:$0xf]
  %s991 = scalar_lea.vmem %s0, 5
  %v992 = vld [vmem:[%s991] ss:$8 sm:$0xf0]
  %vm993 = vcmask 1047556
  %v994 = vsel %vm993, %v992, %v990
  %995 = vrot.lane.b32.xlu0 %v994, 40
  %v996 = vpop.permute.xlu0 %995
  %vm997 = vcmask 392512
  %998 = vst.msk [vmem:[%s1] sm:$0xff] %vm997, %v996
  %s999 = scalar_lea.vmem %s0, 261
  %v1000 = vld [vmem:[%s999] ss:$8 sm:$0xf]
  %s1001 = scalar_lea.vmem %s0, 261
  %v1002 = vld [vmem:[%s1001] ss:$8 sm:$0xf0]
  %vm1003 = vcmask 1047556
  %v1004 = vsel %vm1003, %v1002, %v1000
  %1005 = vrot.lane.b32.xlu0 %v1004, 40
  %v1006 = vpop.permute.xlu0 %1005
  %vm1007 = vcmask 392512
  %s1008 = scalar_lea.vmem %s1, 32
  %1009 = vst.msk [vmem:[%s1008] sm:$0xff] %vm1007, %v1006
  %s1010 = scalar_lea.vmem %s0, 517
  %v1011 = vld [vmem:[%s1010] ss:$8 sm:$0xf]
  %s1012 = scalar_lea.vmem %s0, 517
  %v1013 = vld [vmem:[%s1012] ss:$8 sm:$0xf0]
  %vm1014 = vcmask 1047556
  %v1015 = vsel %vm1014, %v1013, %v1011
  %1016 = vrot.lane.b32.xlu0 %v1015, 40
  %v1017 = vpop.permute.xlu0 %1016
  %vm1018 = vcmask 392512
  %s1019 = scalar_lea.vmem %s1, 64
  %1020 = vst.msk [vmem:[%s1019] sm:$0xff] %vm1018, %v1017
  %s1021 = scalar_lea.vmem %s0, 773
  %v1022 = vld [vmem:[%s1021] ss:$8 sm:$0xf]
  %s1023 = scalar_lea.vmem %s0, 773
  %v1024 = vld [vmem:[%s1023] ss:$8 sm:$0xf0]
  %vm1025 = vcmask 1047556
  %v1026 = vsel %vm1025, %v1024, %v1022
  %1027 = vrot.lane.b32.xlu0 %v1026, 40
  %v1028 = vpop.permute.xlu0 %1027
  %vm1029 = vcmask 392512
  %s1030 = scalar_lea.vmem %s1, 96
  %1031 = vst.msk [vmem:[%s1030] sm:$0xff] %vm1029, %v1028
  %s1032 = scalar_lea.vmem %s0, 1029
  %v1033 = vld [vmem:[%s1032] ss:$8 sm:$0xf]
  %s1034 = scalar_lea.vmem %s0, 1029
  %v1035 = vld [vmem:[%s1034] ss:$8 sm:$0xf0]
  %vm1036 = vcmask 1047556
  %v1037 = vsel %vm1036, %v1035, %v1033
  %1038 = vrot.lane.b32.xlu0 %v1037, 40
  %v1039 = vpop.permute.xlu0 %1038
  %vm1040 = vcmask 392512
  %s1041 = scalar_lea.vmem %s1, 128
  %1042 = vst.msk [vmem:[%s1041] sm:$0xff] %vm1040, %v1039
  %s1043 = scalar_lea.vmem %s0, 1285
  %v1044 = vld [vmem:[%s1043] ss:$8 sm:$0xf]
  %s1045 = scalar_lea.vmem %s0, 1285
  %v1046 = vld [vmem:[%s1045] ss:$8 sm:$0xf0]
  %vm1047 = vcmask 1047556
  %v1048 = vsel %vm1047, %v1046, %v1044
  %1049 = vrot.lane.b32.xlu0 %v1048, 40
  %v1050 = vpop.permute.xlu0 %1049
  %vm1051 = vcmask 392512
  %s1052 = scalar_lea.vmem %s1, 160
  %1053 = vst.msk [vmem:[%s1052] sm:$0xff] %vm1051, %v1050
  %s1054 = scalar_lea.vmem %s0, 1541
  %v1055 = vld [vmem:[%s1054] ss:$8 sm:$0xf]
  %s1056 = scalar_lea.vmem %s0, 1541
  %v1057 = vld [vmem:[%s1056] ss:$8 sm:$0xf0]
  %vm1058 = vcmask 1047556
  %v1059 = vsel %vm1058, %v1057, %v1055
  %1060 = vrot.lane.b32.xlu0 %v1059, 40
  %v1061 = vpop.permute.xlu0 %1060
  %vm1062 = vcmask 392512
  %s1063 = scalar_lea.vmem %s1, 192
  %1064 = vst.msk [vmem:[%s1063] sm:$0xff] %vm1062, %v1061
  %s1065 = scalar_lea.vmem %s0, 1797
  %v1066 = vld [vmem:[%s1065] ss:$8 sm:$0xf]
  %s1067 = scalar_lea.vmem %s0, 1797
  %v1068 = vld [vmem:[%s1067] ss:$8 sm:$0xf0]
  %vm1069 = vcmask 1047556
  %v1070 = vsel %vm1069, %v1068, %v1066
  %1071 = vrot.lane.b32.xlu0 %v1070, 40
  %v1072 = vpop.permute.xlu0 %1071
  %vm1073 = vcmask 392512
  %s1074 = scalar_lea.vmem %s1, 224
  %1075 = vst.msk [vmem:[%s1074] sm:$0xff] %vm1073, %v1072
  %s1076 = scalar_lea.vmem %s0, 69
  %v1077 = vld [vmem:[%s1076] ss:$8 sm:$0xf]
  %s1078 = scalar_lea.vmem %s0, 69
  %v1079 = vld [vmem:[%s1078] ss:$8 sm:$0xf0]
  %vm1080 = vcmask 1047556
  %v1081 = vsel %vm1080, %v1079, %v1077
  %1082 = vrot.lane.b32.xlu0 %v1081, 40
  %v1083 = vpop.permute.xlu0 %1082
  %vm1084 = vcmask 392512
  %s1085 = scalar_lea.vmem %s1, 8
  %1086 = vst.msk [vmem:[%s1085] sm:$0xff] %vm1084, %v1083
  %s1087 = scalar_lea.vmem %s0, 325
  %v1088 = vld [vmem:[%s1087] ss:$8 sm:$0xf]
  %s1089 = scalar_lea.vmem %s0, 325
  %v1090 = vld [vmem:[%s1089] ss:$8 sm:$0xf0]
  %vm1091 = vcmask 1047556
  %v1092 = vsel %vm1091, %v1090, %v1088
  %1093 = vrot.lane.b32.xlu0 %v1092, 40
  %v1094 = vpop.permute.xlu0 %1093
  %vm1095 = vcmask 392512
  %s1096 = scalar_lea.vmem %s1, 40
  %1097 = vst.msk [vmem:[%s1096] sm:$0xff] %vm1095, %v1094
  %s1098 = scalar_lea.vmem %s0, 581
  %v1099 = vld [vmem:[%s1098] ss:$8 sm:$0xf]
  %s1100 = scalar_lea.vmem %s0, 581
  %v1101 = vld [vmem:[%s1100] ss:$8 sm:$0xf0]
  %vm1102 = vcmask 1047556
  %v1103 = vsel %vm1102, %v1101, %v1099
  %1104 = vrot.lane.b32.xlu0 %v1103, 40
  %v1105 = vpop.permute.xlu0 %1104
  %vm1106 = vcmask 392512
  %s1107 = scalar_lea.vmem %s1, 72
  %1108 = vst.msk [vmem:[%s1107] sm:$0xff] %vm1106, %v1105
  %s1109 = scalar_lea.vmem %s0, 837
  %v1110 = vld [vmem:[%s1109] ss:$8 sm:$0xf]
  %s1111 = scalar_lea.vmem %s0, 837
  %v1112 = vld [vmem:[%s1111] ss:$8 sm:$0xf0]
  %vm1113 = vcmask 1047556
  %v1114 = vsel %vm1113, %v1112, %v1110
  %1115 = vrot.lane.b32.xlu0 %v1114, 40
  %v1116 = vpop.permute.xlu0 %1115
  %vm1117 = vcmask 392512
  %s1118 = scalar_lea.vmem %s1, 104
  %1119 = vst.msk [vmem:[%s1118] sm:$0xff] %vm1117, %v1116
  %s1120 = scalar_lea.vmem %s0, 1093
  %v1121 = vld [vmem:[%s1120] ss:$8 sm:$0xf]
  %s1122 = scalar_lea.vmem %s0, 1093
  %v1123 = vld [vmem:[%s1122] ss:$8 sm:$0xf0]
  %vm1124 = vcmask 1047556
  %v1125 = vsel %vm1124, %v1123, %v1121
  %1126 = vrot.lane.b32.xlu0 %v1125, 40
  %v1127 = vpop.permute.xlu0 %1126
  %vm1128 = vcmask 392512
  %s1129 = scalar_lea.vmem %s1, 136
  %1130 = vst.msk [vmem:[%s1129] sm:$0xff] %vm1128, %v1127
  %s1131 = scalar_lea.vmem %s0, 1349
  %v1132 = vld [vmem:[%s1131] ss:$8 sm:$0xf]
  %s1133 = scalar_lea.vmem %s0, 1349
  %v1134 = vld [vmem:[%s1133] ss:$8 sm:$0xf0]
  %vm1135 = vcmask 1047556
  %v1136 = vsel %vm1135, %v1134, %v1132
  %1137 = vrot.lane.b32.xlu0 %v1136, 40
  %v1138 = vpop.permute.xlu0 %1137
  %vm1139 = vcmask 392512
  %s1140 = scalar_lea.vmem %s1, 168
  %1141 = vst.msk [vmem:[%s1140] sm:$0xff] %vm1139, %v1138
  %s1142 = scalar_lea.vmem %s0, 1605
  %v1143 = vld [vmem:[%s1142] ss:$8 sm:$0xf]
  %s1144 = scalar_lea.vmem %s0, 1605
  %v1145 = vld [vmem:[%s1144] ss:$8 sm:$0xf0]
  %vm1146 = vcmask 1047556
  %v1147 = vsel %vm1146, %v1145, %v1143
  %1148 = vrot.lane.b32.xlu0 %v1147, 40
  %v1149 = vpop.permute.xlu0 %1148
  %vm1150 = vcmask 392512
  %s1151 = scalar_lea.vmem %s1, 200
  %1152 = vst.msk [vmem:[%s1151] sm:$0xff] %vm1150, %v1149
  %s1153 = scalar_lea.vmem %s0, 1861
  %v1154 = vld [vmem:[%s1153] ss:$8 sm:$0xf]
  %s1155 = scalar_lea.vmem %s0, 1861
  %v1156 = vld [vmem:[%s1155] ss:$8 sm:$0xf0]
  %vm1157 = vcmask 1047556
  %v1158 = vsel %vm1157, %v1156, %v1154
  %1159 = vrot.lane.b32.xlu0 %v1158, 40
  %v1160 = vpop.permute.xlu0 %1159
  %vm1161 = vcmask 392512
  %s1162 = scalar_lea.vmem %s1, 232
  %1163 = vst.msk [vmem:[%s1162] sm:$0xff] %vm1161, %v1160
  %s1164 = scalar_lea.vmem %s0, 133
  %v1165 = vld [vmem:[%s1164] ss:$8 sm:$0xf]
  %s1166 = scalar_lea.vmem %s0, 133
  %v1167 = vld [vmem:[%s1166] ss:$8 sm:$0xf0]
  %vm1168 = vcmask 1047556
  %v1169 = vsel %vm1168, %v1167, %v1165
  %1170 = vrot.lane.b32.xlu0 %v1169, 40
  %v1171 = vpop.permute.xlu0 %1170
  %vm1172 = vcmask 392512
  %s1173 = scalar_lea.vmem %s1, 16
  %1174 = vst.msk [vmem:[%s1173] sm:$0xff] %vm1172, %v1171
  %s1175 = scalar_lea.vmem %s0, 389
  %v1176 = vld [vmem:[%s1175] ss:$8 sm:$0xf]
  %s1177 = scalar_lea.vmem %s0, 389
  %v1178 = vld [vmem:[%s1177] ss:$8 sm:$0xf0]
  %vm1179 = vcmask 1047556
  %v1180 = vsel %vm1179, %v1178, %v1176
  %1181 = vrot.lane.b32.xlu0 %v1180, 40
  %v1182 = vpop.permute.xlu0 %1181
  %vm1183 = vcmask 392512
  %s1184 = scalar_lea.vmem %s1, 48
  %1185 = vst.msk [vmem:[%s1184] sm:$0xff] %vm1183, %v1182
  %s1186 = scalar_lea.vmem %s0, 645
  %v1187 = vld [vmem:[%s1186] ss:$8 sm:$0xf]
  %s1188 = scalar_lea.vmem %s0, 645
  %v1189 = vld [vmem:[%s1188] ss:$8 sm:$0xf0]
  %vm1190 = vcmask 1047556
  %v1191 = vsel %vm1190, %v1189, %v1187
  %1192 = vrot.lane.b32.xlu0 %v1191, 40
  %v1193 = vpop.permute.xlu0 %1192
  %vm1194 = vcmask 392512
  %s1195 = scalar_lea.vmem %s1, 80
  %1196 = vst.msk [vmem:[%s1195] sm:$0xff] %vm1194, %v1193
  %s1197 = scalar_lea.vmem %s0, 901
  %v1198 = vld [vmem:[%s1197] ss:$8 sm:$0xf]
  %s1199 = scalar_lea.vmem %s0, 901
  %v1200 = vld [vmem:[%s1199] ss:$8 sm:$0xf0]
  %vm1201 = vcmask 1047556
  %v1202 = vsel %vm1201, %v1200, %v1198
  %1203 = vrot.lane.b32.xlu0 %v1202, 40
  %v1204 = vpop.permute.xlu0 %1203
  %vm1205 = vcmask 392512
  %s1206 = scalar_lea.vmem %s1, 112
  %1207 = vst.msk [vmem:[%s1206] sm:$0xff] %vm1205, %v1204
  %s1208 = scalar_lea.vmem %s0, 1157
  %v1209 = vld [vmem:[%s1208] ss:$8 sm:$0xf]
  %s1210 = scalar_lea.vmem %s0, 1157
  %v1211 = vld [vmem:[%s1210] ss:$8 sm:$0xf0]
  %vm1212 = vcmask 1047556
  %v1213 = vsel %vm1212, %v1211, %v1209
  %1214 = vrot.lane.b32.xlu0 %v1213, 40
  %v1215 = vpop.permute.xlu0 %1214
  %vm1216 = vcmask 392512
  %s1217 = scalar_lea.vmem %s1, 144
  %1218 = vst.msk [vmem:[%s1217] sm:$0xff] %vm1216, %v1215
  %s1219 = scalar_lea.vmem %s0, 1413
  %v1220 = vld [vmem:[%s1219] ss:$8 sm:$0xf]
  %s1221 = scalar_lea.vmem %s0, 1413
  %v1222 = vld [vmem:[%s1221] ss:$8 sm:$0xf0]
  %vm1223 = vcmask 1047556
  %v1224 = vsel %vm1223, %v1222, %v1220
  %1225 = vrot.lane.b32.xlu0 %v1224, 40
  %v1226 = vpop.permute.xlu0 %1225
  %vm1227 = vcmask 392512
  %s1228 = scalar_lea.vmem %s1, 176
  %1229 = vst.msk [vmem:[%s1228] sm:$0xff] %vm1227, %v1226
  %s1230 = scalar_lea.vmem %s0, 1669
  %v1231 = vld [vmem:[%s1230] ss:$8 sm:$0xf]
  %s1232 = scalar_lea.vmem %s0, 1669
  %v1233 = vld [vmem:[%s1232] ss:$8 sm:$0xf0]
  %vm1234 = vcmask 1047556
  %v1235 = vsel %vm1234, %v1233, %v1231
  %1236 = vrot.lane.b32.xlu0 %v1235, 40
  %v1237 = vpop.permute.xlu0 %1236
  %vm1238 = vcmask 392512
  %s1239 = scalar_lea.vmem %s1, 208
  %1240 = vst.msk [vmem:[%s1239] sm:$0xff] %vm1238, %v1237
  %s1241 = scalar_lea.vmem %s0, 1925
  %v1242 = vld [vmem:[%s1241] ss:$8 sm:$0xf]
  %s1243 = scalar_lea.vmem %s0, 1925
  %v1244 = vld [vmem:[%s1243] ss:$8 sm:$0xf0]
  %vm1245 = vcmask 1047556
  %v1246 = vsel %vm1245, %v1244, %v1242
  %1247 = vrot.lane.b32.xlu0 %v1246, 40
  %v1248 = vpop.permute.xlu0 %1247
  %vm1249 = vcmask 392512
  %s1250 = scalar_lea.vmem %s1, 240
  %1251 = vst.msk [vmem:[%s1250] sm:$0xff] %vm1249, %v1248
  %s1252 = scalar_lea.vmem %s0, 197
  %v1253 = vld [vmem:[%s1252] ss:$8 sm:$0xf]
  %s1254 = scalar_lea.vmem %s0, 197
  %v1255 = vld [vmem:[%s1254] ss:$8 sm:$0xf0]
  %vm1256 = vcmask 1047556
  %v1257 = vsel %vm1256, %v1255, %v1253
  %1258 = vrot.lane.b32.xlu0 %v1257, 40
  %v1259 = vpop.permute.xlu0 %1258
  %vm1260 = vcmask 392512
  %s1261 = scalar_lea.vmem %s1, 24
  %1262 = vst.msk [vmem:[%s1261] sm:$0xff] %vm1260, %v1259
  %s1263 = scalar_lea.vmem %s0, 453
  %v1264 = vld [vmem:[%s1263] ss:$8 sm:$0xf]
  %s1265 = scalar_lea.vmem %s0, 453
  %v1266 = vld [vmem:[%s1265] ss:$8 sm:$0xf0]
  %vm1267 = vcmask 1047556
  %v1268 = vsel %vm1267, %v1266, %v1264
  %1269 = vrot.lane.b32.xlu0 %v1268, 40
  %v1270 = vpop.permute.xlu0 %1269
  %vm1271 = vcmask 392512
  %s1272 = scalar_lea.vmem %s1, 56
  %1273 = vst.msk [vmem:[%s1272] sm:$0xff] %vm1271, %v1270
  %s1274 = scalar_lea.vmem %s0, 709
  %v1275 = vld [vmem:[%s1274] ss:$8 sm:$0xf]
  %s1276 = scalar_lea.vmem %s0, 709
  %v1277 = vld [vmem:[%s1276] ss:$8 sm:$0xf0]
  %vm1278 = vcmask 1047556
  %v1279 = vsel %vm1278, %v1277, %v1275
  %1280 = vrot.lane.b32.xlu0 %v1279, 40
  %v1281 = vpop.permute.xlu0 %1280
  %vm1282 = vcmask 392512
  %s1283 = scalar_lea.vmem %s1, 88
  %1284 = vst.msk [vmem:[%s1283] sm:$0xff] %vm1282, %v1281
  %s1285 = scalar_lea.vmem %s0, 965
  %v1286 = vld [vmem:[%s1285] ss:$8 sm:$0xf]
  %s1287 = scalar_lea.vmem %s0, 965
  %v1288 = vld [vmem:[%s1287] ss:$8 sm:$0xf0]
  %vm1289 = vcmask 1047556
  %v1290 = vsel %vm1289, %v1288, %v1286
  %1291 = vrot.lane.b32.xlu0 %v1290, 40
  %v1292 = vpop.permute.xlu0 %1291
  %vm1293 = vcmask 392512
  %s1294 = scalar_lea.vmem %s1, 120
  %1295 = vst.msk [vmem:[%s1294] sm:$0xff] %vm1293, %v1292
  %s1296 = scalar_lea.vmem %s0, 1221
  %v1297 = vld [vmem:[%s1296] ss:$8 sm:$0xf]
  %s1298 = scalar_lea.vmem %s0, 1221
  %v1299 = vld [vmem:[%s1298] ss:$8 sm:$0xf0]
  %vm1300 = vcmask 1047556
  %v1301 = vsel %vm1300, %v1299, %v1297
  %1302 = vrot.lane.b32.xlu0 %v1301, 40
  %v1303 = vpop.permute.xlu0 %1302
  %vm1304 = vcmask 392512
  %s1305 = scalar_lea.vmem %s1, 152
  %1306 = vst.msk [vmem:[%s1305] sm:$0xff] %vm1304, %v1303
  %s1307 = scalar_lea.vmem %s0, 1477
  %v1308 = vld [vmem:[%s1307] ss:$8 sm:$0xf]
  %s1309 = scalar_lea.vmem %s0, 1477
  %v1310 = vld [vmem:[%s1309] ss:$8 sm:$0xf0]
  %vm1311 = vcmask 1047556
  %v1312 = vsel %vm1311, %v1310, %v1308
  %1313 = vrot.lane.b32.xlu0 %v1312, 40
  %v1314 = vpop.permute.xlu0 %1313
  %vm1315 = vcmask 392512
  %s1316 = scalar_lea.vmem %s1, 184
  %1317 = vst.msk [vmem:[%s1316] sm:$0xff] %vm1315, %v1314
  %s1318 = scalar_lea.vmem %s0, 1733
  %v1319 = vld [vmem:[%s1318] ss:$8 sm:$0xf]
  %s1320 = scalar_lea.vmem %s0, 1733
  %v1321 = vld [vmem:[%s1320] ss:$8 sm:$0xf0]
  %vm1322 = vcmask 1047556
  %v1323 = vsel %vm1322, %v1321, %v1319
  %1324 = vrot.lane.b32.xlu0 %v1323, 40
  %v1325 = vpop.permute.xlu0 %1324
  %vm1326 = vcmask 392512
  %s1327 = scalar_lea.vmem %s1, 216
  %1328 = vst.msk [vmem:[%s1327] sm:$0xff] %vm1326, %v1325
  %s1329 = scalar_lea.vmem %s0, 1989
  %v1330 = vld [vmem:[%s1329] ss:$8 sm:$0xf]
  %s1331 = scalar_lea.vmem %s0, 1989
  %v1332 = vld [vmem:[%s1331] ss:$8 sm:$0xf0]
  %vm1333 = vcmask 1047556
  %v1334 = vsel %vm1333, %v1332, %v1330
  %1335 = vrot.lane.b32.xlu0 %v1334, 40
  %v1336 = vpop.permute.xlu0 %1335
  %vm1337 = vcmask 392512
  %s1338 = scalar_lea.vmem %s1, 248
  %1339 = vst.msk [vmem:[%s1338] sm:$0xff] %vm1337, %v1336
  %s1340 = scalar_lea.vmem %s0, 4
  %v1341 = vld [vmem:[%s1340] ss:$8 sm:$0xf]
  %s1342 = scalar_lea.vmem %s0, 4
  %v1343 = vld [vmem:[%s1342] ss:$8 sm:$0xf0]
  %vm1344 = vcmask 1047556
  %v1345 = vsel %vm1344, %v1343, %v1341
  %1346 = vrot.lane.b32.xlu0 %v1345, 32
  %v1347 = vpop.permute.xlu0 %1346
  %vm1348 = vcmask 326912
  %1349 = vst.msk [vmem:[%s1] sm:$0xff] %vm1348, %v1347
  %s1350 = scalar_lea.vmem %s0, 260
  %v1351 = vld [vmem:[%s1350] ss:$8 sm:$0xf]
  %s1352 = scalar_lea.vmem %s0, 260
  %v1353 = vld [vmem:[%s1352] ss:$8 sm:$0xf0]
  %vm1354 = vcmask 1047556
  %v1355 = vsel %vm1354, %v1353, %v1351
  %1356 = vrot.lane.b32.xlu0 %v1355, 32
  %v1357 = vpop.permute.xlu0 %1356
  %vm1358 = vcmask 326912
  %s1359 = scalar_lea.vmem %s1, 32
  %1360 = vst.msk [vmem:[%s1359] sm:$0xff] %vm1358, %v1357
  %s1361 = scalar_lea.vmem %s0, 516
  %v1362 = vld [vmem:[%s1361] ss:$8 sm:$0xf]
  %s1363 = scalar_lea.vmem %s0, 516
  %v1364 = vld [vmem:[%s1363] ss:$8 sm:$0xf0]
  %vm1365 = vcmask 1047556
  %v1366 = vsel %vm1365, %v1364, %v1362
  %1367 = vrot.lane.b32.xlu0 %v1366, 32
  %v1368 = vpop.permute.xlu0 %1367
  %vm1369 = vcmask 326912
  %s1370 = scalar_lea.vmem %s1, 64
  %1371 = vst.msk [vmem:[%s1370] sm:$0xff] %vm1369, %v1368
  %s1372 = scalar_lea.vmem %s0, 772
  %v1373 = vld [vmem:[%s1372] ss:$8 sm:$0xf]
  %s1374 = scalar_lea.vmem %s0, 772
  %v1375 = vld [vmem:[%s1374] ss:$8 sm:$0xf0]
  %vm1376 = vcmask 1047556
  %v1377 = vsel %vm1376, %v1375, %v1373
  %1378 = vrot.lane.b32.xlu0 %v1377, 32
  %v1379 = vpop.permute.xlu0 %1378
  %vm1380 = vcmask 326912
  %s1381 = scalar_lea.vmem %s1, 96
  %1382 = vst.msk [vmem:[%s1381] sm:$0xff] %vm1380, %v1379
  %s1383 = scalar_lea.vmem %s0, 1028
  %v1384 = vld [vmem:[%s1383] ss:$8 sm:$0xf]
  %s1385 = scalar_lea.vmem %s0, 1028
  %v1386 = vld [vmem:[%s1385] ss:$8 sm:$0xf0]
  %vm1387 = vcmask 1047556
  %v1388 = vsel %vm1387, %v1386, %v1384
  %1389 = vrot.lane.b32.xlu0 %v1388, 32
  %v1390 = vpop.permute.xlu0 %1389
  %vm1391 = vcmask 326912
  %s1392 = scalar_lea.vmem %s1, 128
  %1393 = vst.msk [vmem:[%s1392] sm:$0xff] %vm1391, %v1390
  %s1394 = scalar_lea.vmem %s0, 1284
  %v1395 = vld [vmem:[%s1394] ss:$8 sm:$0xf]
  %s1396 = scalar_lea.vmem %s0, 1284
  %v1397 = vld [vmem:[%s1396] ss:$8 sm:$0xf0]
  %vm1398 = vcmask 1047556
  %v1399 = vsel %vm1398, %v1397, %v1395
  %1400 = vrot.lane.b32.xlu0 %v1399, 32
  %v1401 = vpop.permute.xlu0 %1400
  %vm1402 = vcmask 326912
  %s1403 = scalar_lea.vmem %s1, 160
  %1404 = vst.msk [vmem:[%s1403] sm:$0xff] %vm1402, %v1401
  %s1405 = scalar_lea.vmem %s0, 1540
  %v1406 = vld [vmem:[%s1405] ss:$8 sm:$0xf]
  %s1407 = scalar_lea.vmem %s0, 1540
  %v1408 = vld [vmem:[%s1407] ss:$8 sm:$0xf0]
  %vm1409 = vcmask 1047556
  %v1410 = vsel %vm1409, %v1408, %v1406
  %1411 = vrot.lane.b32.xlu0 %v1410, 32
  %v1412 = vpop.permute.xlu0 %1411
  %vm1413 = vcmask 326912
  %s1414 = scalar_lea.vmem %s1, 192
  %1415 = vst.msk [vmem:[%s1414] sm:$0xff] %vm1413, %v1412
  %s1416 = scalar_lea.vmem %s0, 1796
  %v1417 = vld [vmem:[%s1416] ss:$8 sm:$0xf]
  %s1418 = scalar_lea.vmem %s0, 1796
  %v1419 = vld [vmem:[%s1418] ss:$8 sm:$0xf0]
  %vm1420 = vcmask 1047556
  %v1421 = vsel %vm1420, %v1419, %v1417
  %1422 = vrot.lane.b32.xlu0 %v1421, 32
  %v1423 = vpop.permute.xlu0 %1422
  %vm1424 = vcmask 326912
  %s1425 = scalar_lea.vmem %s1, 224
  %1426 = vst.msk [vmem:[%s1425] sm:$0xff] %vm1424, %v1423
  %s1427 = scalar_lea.vmem %s0, 68
  %v1428 = vld [vmem:[%s1427] ss:$8 sm:$0xf]
  %s1429 = scalar_lea.vmem %s0, 68
  %v1430 = vld [vmem:[%s1429] ss:$8 sm:$0xf0]
  %vm1431 = vcmask 1047556
  %v1432 = vsel %vm1431, %v1430, %v1428
  %1433 = vrot.lane.b32.xlu0 %v1432, 32
  %v1434 = vpop.permute.xlu0 %1433
  %vm1435 = vcmask 326912
  %s1436 = scalar_lea.vmem %s1, 8
  %1437 = vst.msk [vmem:[%s1436] sm:$0xff] %vm1435, %v1434
  %s1438 = scalar_lea.vmem %s0, 324
  %v1439 = vld [vmem:[%s1438] ss:$8 sm:$0xf]
  %s1440 = scalar_lea.vmem %s0, 324
  %v1441 = vld [vmem:[%s1440] ss:$8 sm:$0xf0]
  %vm1442 = vcmask 1047556
  %v1443 = vsel %vm1442, %v1441, %v1439
  %1444 = vrot.lane.b32.xlu0 %v1443, 32
  %v1445 = vpop.permute.xlu0 %1444
  %vm1446 = vcmask 326912
  %s1447 = scalar_lea.vmem %s1, 40
  %1448 = vst.msk [vmem:[%s1447] sm:$0xff] %vm1446, %v1445
  %s1449 = scalar_lea.vmem %s0, 580
  %v1450 = vld [vmem:[%s1449] ss:$8 sm:$0xf]
  %s1451 = scalar_lea.vmem %s0, 580
  %v1452 = vld [vmem:[%s1451] ss:$8 sm:$0xf0]
  %vm1453 = vcmask 1047556
  %v1454 = vsel %vm1453, %v1452, %v1450
  %1455 = vrot.lane.b32.xlu0 %v1454, 32
  %v1456 = vpop.permute.xlu0 %1455
  %vm1457 = vcmask 326912
  %s1458 = scalar_lea.vmem %s1, 72
  %1459 = vst.msk [vmem:[%s1458] sm:$0xff] %vm1457, %v1456
  %s1460 = scalar_lea.vmem %s0, 836
  %v1461 = vld [vmem:[%s1460] ss:$8 sm:$0xf]
  %s1462 = scalar_lea.vmem %s0, 836
  %v1463 = vld [vmem:[%s1462] ss:$8 sm:$0xf0]
  %vm1464 = vcmask 1047556
  %v1465 = vsel %vm1464, %v1463, %v1461
  %1466 = vrot.lane.b32.xlu0 %v1465, 32
  %v1467 = vpop.permute.xlu0 %1466
  %vm1468 = vcmask 326912
  %s1469 = scalar_lea.vmem %s1, 104
  %1470 = vst.msk [vmem:[%s1469] sm:$0xff] %vm1468, %v1467
  %s1471 = scalar_lea.vmem %s0, 1092
  %v1472 = vld [vmem:[%s1471] ss:$8 sm:$0xf]
  %s1473 = scalar_lea.vmem %s0, 1092
  %v1474 = vld [vmem:[%s1473] ss:$8 sm:$0xf0]
  %vm1475 = vcmask 1047556
  %v1476 = vsel %vm1475, %v1474, %v1472
  %1477 = vrot.lane.b32.xlu0 %v1476, 32
  %v1478 = vpop.permute.xlu0 %1477
  %vm1479 = vcmask 326912
  %s1480 = scalar_lea.vmem %s1, 136
  %1481 = vst.msk [vmem:[%s1480] sm:$0xff] %vm1479, %v1478
  %s1482 = scalar_lea.vmem %s0, 1348
  %v1483 = vld [vmem:[%s1482] ss:$8 sm:$0xf]
  %s1484 = scalar_lea.vmem %s0, 1348
  %v1485 = vld [vmem:[%s1484] ss:$8 sm:$0xf0]
  %vm1486 = vcmask 1047556
  %v1487 = vsel %vm1486, %v1485, %v1483
  %1488 = vrot.lane.b32.xlu0 %v1487, 32
  %v1489 = vpop.permute.xlu0 %1488
  %vm1490 = vcmask 326912
  %s1491 = scalar_lea.vmem %s1, 168
  %1492 = vst.msk [vmem:[%s1491] sm:$0xff] %vm1490, %v1489
  %s1493 = scalar_lea.vmem %s0, 1604
  %v1494 = vld [vmem:[%s1493] ss:$8 sm:$0xf]
  %s1495 = scalar_lea.vmem %s0, 1604
  %v1496 = vld [vmem:[%s1495] ss:$8 sm:$0xf0]
  %vm1497 = vcmask 1047556
  %v1498 = vsel %vm1497, %v1496, %v1494
  %1499 = vrot.lane.b32.xlu0 %v1498, 32
  %v1500 = vpop.permute.xlu0 %1499
  %vm1501 = vcmask 326912
  %s1502 = scalar_lea.vmem %s1, 200
  %1503 = vst.msk [vmem:[%s1502] sm:$0xff] %vm1501, %v1500
  %s1504 = scalar_lea.vmem %s0, 1860
  %v1505 = vld [vmem:[%s1504] ss:$8 sm:$0xf]
  %s1506 = scalar_lea.vmem %s0, 1860
  %v1507 = vld [vmem:[%s1506] ss:$8 sm:$0xf0]
  %vm1508 = vcmask 1047556
  %v1509 = vsel %vm1508, %v1507, %v1505
  %1510 = vrot.lane.b32.xlu0 %v1509, 32
  %v1511 = vpop.permute.xlu0 %1510
  %vm1512 = vcmask 326912
  %s1513 = scalar_lea.vmem %s1, 232
  %1514 = vst.msk [vmem:[%s1513] sm:$0xff] %vm1512, %v1511
  %s1515 = scalar_lea.vmem %s0, 132
  %v1516 = vld [vmem:[%s1515] ss:$8 sm:$0xf]
  %s1517 = scalar_lea.vmem %s0, 132
  %v1518 = vld [vmem:[%s1517] ss:$8 sm:$0xf0]
  %vm1519 = vcmask 1047556
  %v1520 = vsel %vm1519, %v1518, %v1516
  %1521 = vrot.lane.b32.xlu0 %v1520, 32
  %v1522 = vpop.permute.xlu0 %1521
  %vm1523 = vcmask 326912
  %s1524 = scalar_lea.vmem %s1, 16
  %1525 = vst.msk [vmem:[%s1524] sm:$0xff] %vm1523, %v1522
  %s1526 = scalar_lea.vmem %s0, 388
  %v1527 = vld [vmem:[%s1526] ss:$8 sm:$0xf]
  %s1528 = scalar_lea.vmem %s0, 388
  %v1529 = vld [vmem:[%s1528] ss:$8 sm:$0xf0]
  %vm1530 = vcmask 1047556
  %v1531 = vsel %vm1530, %v1529, %v1527
  %1532 = vrot.lane.b32.xlu0 %v1531, 32
  %v1533 = vpop.permute.xlu0 %1532
  %vm1534 = vcmask 326912
  %s1535 = scalar_lea.vmem %s1, 48
  %1536 = vst.msk [vmem:[%s1535] sm:$0xff] %vm1534, %v1533
  %s1537 = scalar_lea.vmem %s0, 644
  %v1538 = vld [vmem:[%s1537] ss:$8 sm:$0xf]
  %s1539 = scalar_lea.vmem %s0, 644
  %v1540 = vld [vmem:[%s1539] ss:$8 sm:$0xf0]
  %vm1541 = vcmask 1047556
  %v1542 = vsel %vm1541, %v1540, %v1538
  %1543 = vrot.lane.b32.xlu0 %v1542, 32
  %v1544 = vpop.permute.xlu0 %1543
  %vm1545 = vcmask 326912
  %s1546 = scalar_lea.vmem %s1, 80
  %1547 = vst.msk [vmem:[%s1546] sm:$0xff] %vm1545, %v1544
  %s1548 = scalar_lea.vmem %s0, 900
  %v1549 = vld [vmem:[%s1548] ss:$8 sm:$0xf]
  %s1550 = scalar_lea.vmem %s0, 900
  %v1551 = vld [vmem:[%s1550] ss:$8 sm:$0xf0]
  %vm1552 = vcmask 1047556
  %v1553 = vsel %vm1552, %v1551, %v1549
  %1554 = vrot.lane.b32.xlu0 %v1553, 32
  %v1555 = vpop.permute.xlu0 %1554
  %vm1556 = vcmask 326912
  %s1557 = scalar_lea.vmem %s1, 112
  %1558 = vst.msk [vmem:[%s1557] sm:$0xff] %vm1556, %v1555
  %s1559 = scalar_lea.vmem %s0, 1156
  %v1560 = vld [vmem:[%s1559] ss:$8 sm:$0xf]
  %s1561 = scalar_lea.vmem %s0, 1156
  %v1562 = vld [vmem:[%s1561] ss:$8 sm:$0xf0]
  %vm1563 = vcmask 1047556
  %v1564 = vsel %vm1563, %v1562, %v1560
  %1565 = vrot.lane.b32.xlu0 %v1564, 32
  %v1566 = vpop.permute.xlu0 %1565
  %vm1567 = vcmask 326912
  %s1568 = scalar_lea.vmem %s1, 144
  %1569 = vst.msk [vmem:[%s1568] sm:$0xff] %vm1567, %v1566
  %s1570 = scalar_lea.vmem %s0, 1412
  %v1571 = vld [vmem:[%s1570] ss:$8 sm:$0xf]
  %s1572 = scalar_lea.vmem %s0, 1412
  %v1573 = vld [vmem:[%s1572] ss:$8 sm:$0xf0]
  %vm1574 = vcmask 1047556
  %v1575 = vsel %vm1574, %v1573, %v1571
  %1576 = vrot.lane.b32.xlu0 %v1575, 32
  %v1577 = vpop.permute.xlu0 %1576
  %vm1578 = vcmask 326912
  %s1579 = scalar_lea.vmem %s1, 176
  %1580 = vst.msk [vmem:[%s1579] sm:$0xff] %vm1578, %v1577
  %s1581 = scalar_lea.vmem %s0, 1668
  %v1582 = vld [vmem:[%s1581] ss:$8 sm:$0xf]
  %s1583 = scalar_lea.vmem %s0, 1668
  %v1584 = vld [vmem:[%s1583] ss:$8 sm:$0xf0]
  %vm1585 = vcmask 1047556
  %v1586 = vsel %vm1585, %v1584, %v1582
  %1587 = vrot.lane.b32.xlu0 %v1586, 32
  %v1588 = vpop.permute.xlu0 %1587
  %vm1589 = vcmask 326912
  %s1590 = scalar_lea.vmem %s1, 208
  %1591 = vst.msk [vmem:[%s1590] sm:$0xff] %vm1589, %v1588
  %s1592 = scalar_lea.vmem %s0, 1924
  %v1593 = vld [vmem:[%s1592] ss:$8 sm:$0xf]
  %s1594 = scalar_lea.vmem %s0, 1924
  %v1595 = vld [vmem:[%s1594] ss:$8 sm:$0xf0]
  %vm1596 = vcmask 1047556
  %v1597 = vsel %vm1596, %v1595, %v1593
  %1598 = vrot.lane.b32.xlu0 %v1597, 32
  %v1599 = vpop.permute.xlu0 %1598
  %vm1600 = vcmask 326912
  %s1601 = scalar_lea.vmem %s1, 240
  %1602 = vst.msk [vmem:[%s1601] sm:$0xff] %vm1600, %v1599
  %s1603 = scalar_lea.vmem %s0, 196
  %v1604 = vld [vmem:[%s1603] ss:$8 sm:$0xf]
  %s1605 = scalar_lea.vmem %s0, 196
  %v1606 = vld [vmem:[%s1605] ss:$8 sm:$0xf0]
  %vm1607 = vcmask 1047556
  %v1608 = vsel %vm1607, %v1606, %v1604
  %1609 = vrot.lane.b32.xlu0 %v1608, 32
  %v1610 = vpop.permute.xlu0 %1609
  %vm1611 = vcmask 326912
  %s1612 = scalar_lea.vmem %s1, 24
  %1613 = vst.msk [vmem:[%s1612] sm:$0xff] %vm1611, %v1610
  %s1614 = scalar_lea.vmem %s0, 452
  %v1615 = vld [vmem:[%s1614] ss:$8 sm:$0xf]
  %s1616 = scalar_lea.vmem %s0, 452
  %v1617 = vld [vmem:[%s1616] ss:$8 sm:$0xf0]
  %vm1618 = vcmask 1047556
  %v1619 = vsel %vm1618, %v1617, %v1615
  %1620 = vrot.lane.b32.xlu0 %v1619, 32
  %v1621 = vpop.permute.xlu0 %1620
  %vm1622 = vcmask 326912
  %s1623 = scalar_lea.vmem %s1, 56
  %1624 = vst.msk [vmem:[%s1623] sm:$0xff] %vm1622, %v1621
  %s1625 = scalar_lea.vmem %s0, 708
  %v1626 = vld [vmem:[%s1625] ss:$8 sm:$0xf]
  %s1627 = scalar_lea.vmem %s0, 708
  %v1628 = vld [vmem:[%s1627] ss:$8 sm:$0xf0]
  %vm1629 = vcmask 1047556
  %v1630 = vsel %vm1629, %v1628, %v1626
  %1631 = vrot.lane.b32.xlu0 %v1630, 32
  %v1632 = vpop.permute.xlu0 %1631
  %vm1633 = vcmask 326912
  %s1634 = scalar_lea.vmem %s1, 88
  %1635 = vst.msk [vmem:[%s1634] sm:$0xff] %vm1633, %v1632
  %s1636 = scalar_lea.vmem %s0, 964
  %v1637 = vld [vmem:[%s1636] ss:$8 sm:$0xf]
  %s1638 = scalar_lea.vmem %s0, 964
  %v1639 = vld [vmem:[%s1638] ss:$8 sm:$0xf0]
  %vm1640 = vcmask 1047556
  %v1641 = vsel %vm1640, %v1639, %v1637
  %1642 = vrot.lane.b32.xlu0 %v1641, 32
  %v1643 = vpop.permute.xlu0 %1642
  %vm1644 = vcmask 326912
  %s1645 = scalar_lea.vmem %s1, 120
  %1646 = vst.msk [vmem:[%s1645] sm:$0xff] %vm1644, %v1643
  %s1647 = scalar_lea.vmem %s0, 1220
  %v1648 = vld [vmem:[%s1647] ss:$8 sm:$0xf]
  %s1649 = scalar_lea.vmem %s0, 1220
  %v1650 = vld [vmem:[%s1649] ss:$8 sm:$0xf0]
  %vm1651 = vcmask 1047556
  %v1652 = vsel %vm1651, %v1650, %v1648
  %1653 = vrot.lane.b32.xlu0 %v1652, 32
  %v1654 = vpop.permute.xlu0 %1653
  %vm1655 = vcmask 326912
  %s1656 = scalar_lea.vmem %s1, 152
  %1657 = vst.msk [vmem:[%s1656] sm:$0xff] %vm1655, %v1654
  %s1658 = scalar_lea.vmem %s0, 1476
  %v1659 = vld [vmem:[%s1658] ss:$8 sm:$0xf]
  %s1660 = scalar_lea.vmem %s0, 1476
  %v1661 = vld [vmem:[%s1660] ss:$8 sm:$0xf0]
  %vm1662 = vcmask 1047556
  %v1663 = vsel %vm1662, %v1661, %v1659
  %1664 = vrot.lane.b32.xlu0 %v1663, 32
  %v1665 = vpop.permute.xlu0 %1664
  %vm1666 = vcmask 326912
  %s1667 = scalar_lea.vmem %s1, 184
  %1668 = vst.msk [vmem:[%s1667] sm:$0xff] %vm1666, %v1665
  %s1669 = scalar_lea.vmem %s0, 1732
  %v1670 = vld [vmem:[%s1669] ss:$8 sm:$0xf]
  %s1671 = scalar_lea.vmem %s0, 1732
  %v1672 = vld [vmem:[%s1671] ss:$8 sm:$0xf0]
  %vm1673 = vcmask 1047556
  %v1674 = vsel %vm1673, %v1672, %v1670
  %1675 = vrot.lane.b32.xlu0 %v1674, 32
  %v1676 = vpop.permute.xlu0 %1675
  %vm1677 = vcmask 326912
  %s1678 = scalar_lea.vmem %s1, 216
  %1679 = vst.msk [vmem:[%s1678] sm:$0xff] %vm1677, %v1676
  %s1680 = scalar_lea.vmem %s0, 1988
  %v1681 = vld [vmem:[%s1680] ss:$8 sm:$0xf]
  %s1682 = scalar_lea.vmem %s0, 1988
  %v1683 = vld [vmem:[%s1682] ss:$8 sm:$0xf0]
  %vm1684 = vcmask 1047556
  %v1685 = vsel %vm1684, %v1683, %v1681
  %1686 = vrot.lane.b32.xlu0 %v1685, 32
  %v1687 = vpop.permute.xlu0 %1686
  %vm1688 = vcmask 326912
  %s1689 = scalar_lea.vmem %s1, 248
  %1690 = vst.msk [vmem:[%s1689] sm:$0xff] %vm1688, %v1687
  %s1691 = scalar_lea.vmem %s0, 3
  %v1692 = vld [vmem:[%s1691] ss:$8 sm:$0xf]
  %s1693 = scalar_lea.vmem %s0, 3
  %v1694 = vld [vmem:[%s1693] ss:$8 sm:$0xf0]
  %vm1695 = vcmask 1047556
  %v1696 = vsel %vm1695, %v1694, %v1692
  %1697 = vrot.lane.b32.xlu0 %v1696, 24
  %v1698 = vpop.permute.xlu0 %1697
  %vm1699 = vcmask 261312
  %1700 = vst.msk [vmem:[%s1] sm:$0xff] %vm1699, %v1698
  %s1701 = scalar_lea.vmem %s0, 259
  %v1702 = vld [vmem:[%s1701] ss:$8 sm:$0xf]
  %s1703 = scalar_lea.vmem %s0, 259
  %v1704 = vld [vmem:[%s1703] ss:$8 sm:$0xf0]
  %vm1705 = vcmask 1047556
  %v1706 = vsel %vm1705, %v1704, %v1702
  %1707 = vrot.lane.b32.xlu0 %v1706, 24
  %v1708 = vpop.permute.xlu0 %1707
  %vm1709 = vcmask 261312
  %s1710 = scalar_lea.vmem %s1, 32
  %1711 = vst.msk [vmem:[%s1710] sm:$0xff] %vm1709, %v1708
  %s1712 = scalar_lea.vmem %s0, 515
  %v1713 = vld [vmem:[%s1712] ss:$8 sm:$0xf]
  %s1714 = scalar_lea.vmem %s0, 515
  %v1715 = vld [vmem:[%s1714] ss:$8 sm:$0xf0]
  %vm1716 = vcmask 1047556
  %v1717 = vsel %vm1716, %v1715, %v1713
  %1718 = vrot.lane.b32.xlu0 %v1717, 24
  %v1719 = vpop.permute.xlu0 %1718
  %vm1720 = vcmask 261312
  %s1721 = scalar_lea.vmem %s1, 64
  %1722 = vst.msk [vmem:[%s1721] sm:$0xff] %vm1720, %v1719
  %s1723 = scalar_lea.vmem %s0, 771
  %v1724 = vld [vmem:[%s1723] ss:$8 sm:$0xf]
  %s1725 = scalar_lea.vmem %s0, 771
  %v1726 = vld [vmem:[%s1725] ss:$8 sm:$0xf0]
  %vm1727 = vcmask 1047556
  %v1728 = vsel %vm1727, %v1726, %v1724
  %1729 = vrot.lane.b32.xlu0 %v1728, 24
  %v1730 = vpop.permute.xlu0 %1729
  %vm1731 = vcmask 261312
  %s1732 = scalar_lea.vmem %s1, 96
  %1733 = vst.msk [vmem:[%s1732] sm:$0xff] %vm1731, %v1730
  %s1734 = scalar_lea.vmem %s0, 1027
  %v1735 = vld [vmem:[%s1734] ss:$8 sm:$0xf]
  %s1736 = scalar_lea.vmem %s0, 1027
  %v1737 = vld [vmem:[%s1736] ss:$8 sm:$0xf0]
  %vm1738 = vcmask 1047556
  %v1739 = vsel %vm1738, %v1737, %v1735
  %1740 = vrot.lane.b32.xlu0 %v1739, 24
  %v1741 = vpop.permute.xlu0 %1740
  %vm1742 = vcmask 261312
  %s1743 = scalar_lea.vmem %s1, 128
  %1744 = vst.msk [vmem:[%s1743] sm:$0xff] %vm1742, %v1741
  %s1745 = scalar_lea.vmem %s0, 1283
  %v1746 = vld [vmem:[%s1745] ss:$8 sm:$0xf]
  %s1747 = scalar_lea.vmem %s0, 1283
  %v1748 = vld [vmem:[%s1747] ss:$8 sm:$0xf0]
  %vm1749 = vcmask 1047556
  %v1750 = vsel %vm1749, %v1748, %v1746
  %1751 = vrot.lane.b32.xlu0 %v1750, 24
  %v1752 = vpop.permute.xlu0 %1751
  %vm1753 = vcmask 261312
  %s1754 = scalar_lea.vmem %s1, 160
  %1755 = vst.msk [vmem:[%s1754] sm:$0xff] %vm1753, %v1752
  %s1756 = scalar_lea.vmem %s0, 1539
  %v1757 = vld [vmem:[%s1756] ss:$8 sm:$0xf]
  %s1758 = scalar_lea.vmem %s0, 1539
  %v1759 = vld [vmem:[%s1758] ss:$8 sm:$0xf0]
  %vm1760 = vcmask 1047556
  %v1761 = vsel %vm1760, %v1759, %v1757
  %1762 = vrot.lane.b32.xlu0 %v1761, 24
  %v1763 = vpop.permute.xlu0 %1762
  %vm1764 = vcmask 261312
  %s1765 = scalar_lea.vmem %s1, 192
  %1766 = vst.msk [vmem:[%s1765] sm:$0xff] %vm1764, %v1763
  %s1767 = scalar_lea.vmem %s0, 1795
  %v1768 = vld [vmem:[%s1767] ss:$8 sm:$0xf]
  %s1769 = scalar_lea.vmem %s0, 1795
  %v1770 = vld [vmem:[%s1769] ss:$8 sm:$0xf0]
  %vm1771 = vcmask 1047556
  %v1772 = vsel %vm1771, %v1770, %v1768
  %1773 = vrot.lane.b32.xlu0 %v1772, 24
  %v1774 = vpop.permute.xlu0 %1773
  %vm1775 = vcmask 261312
  %s1776 = scalar_lea.vmem %s1, 224
  %1777 = vst.msk [vmem:[%s1776] sm:$0xff] %vm1775, %v1774
  %s1778 = scalar_lea.vmem %s0, 67
  %v1779 = vld [vmem:[%s1778] ss:$8 sm:$0xf]
  %s1780 = scalar_lea.vmem %s0, 67
  %v1781 = vld [vmem:[%s1780] ss:$8 sm:$0xf0]
  %vm1782 = vcmask 1047556
  %v1783 = vsel %vm1782, %v1781, %v1779
  %1784 = vrot.lane.b32.xlu0 %v1783, 24
  %v1785 = vpop.permute.xlu0 %1784
  %vm1786 = vcmask 261312
  %s1787 = scalar_lea.vmem %s1, 8
  %1788 = vst.msk [vmem:[%s1787] sm:$0xff] %vm1786, %v1785
  %s1789 = scalar_lea.vmem %s0, 323
  %v1790 = vld [vmem:[%s1789] ss:$8 sm:$0xf]
  %s1791 = scalar_lea.vmem %s0, 323
  %v1792 = vld [vmem:[%s1791] ss:$8 sm:$0xf0]
  %vm1793 = vcmask 1047556
  %v1794 = vsel %vm1793, %v1792, %v1790
  %1795 = vrot.lane.b32.xlu0 %v1794, 24
  %v1796 = vpop.permute.xlu0 %1795
  %vm1797 = vcmask 261312
  %s1798 = scalar_lea.vmem %s1, 40
  %1799 = vst.msk [vmem:[%s1798] sm:$0xff] %vm1797, %v1796
  %s1800 = scalar_lea.vmem %s0, 579
  %v1801 = vld [vmem:[%s1800] ss:$8 sm:$0xf]
  %s1802 = scalar_lea.vmem %s0, 579
  %v1803 = vld [vmem:[%s1802] ss:$8 sm:$0xf0]
  %vm1804 = vcmask 1047556
  %v1805 = vsel %vm1804, %v1803, %v1801
  %1806 = vrot.lane.b32.xlu0 %v1805, 24
  %v1807 = vpop.permute.xlu0 %1806
  %vm1808 = vcmask 261312
  %s1809 = scalar_lea.vmem %s1, 72
  %1810 = vst.msk [vmem:[%s1809] sm:$0xff] %vm1808, %v1807
  %s1811 = scalar_lea.vmem %s0, 835
  %v1812 = vld [vmem:[%s1811] ss:$8 sm:$0xf]
  %s1813 = scalar_lea.vmem %s0, 835
  %v1814 = vld [vmem:[%s1813] ss:$8 sm:$0xf0]
  %vm1815 = vcmask 1047556
  %v1816 = vsel %vm1815, %v1814, %v1812
  %1817 = vrot.lane.b32.xlu0 %v1816, 24
  %v1818 = vpop.permute.xlu0 %1817
  %vm1819 = vcmask 261312
  %s1820 = scalar_lea.vmem %s1, 104
  %1821 = vst.msk [vmem:[%s1820] sm:$0xff] %vm1819, %v1818
  %s1822 = scalar_lea.vmem %s0, 1091
  %v1823 = vld [vmem:[%s1822] ss:$8 sm:$0xf]
  %s1824 = scalar_lea.vmem %s0, 1091
  %v1825 = vld [vmem:[%s1824] ss:$8 sm:$0xf0]
  %vm1826 = vcmask 1047556
  %v1827 = vsel %vm1826, %v1825, %v1823
  %1828 = vrot.lane.b32.xlu0 %v1827, 24
  %v1829 = vpop.permute.xlu0 %1828
  %vm1830 = vcmask 261312
  %s1831 = scalar_lea.vmem %s1, 136
  %1832 = vst.msk [vmem:[%s1831] sm:$0xff] %vm1830, %v1829
  %s1833 = scalar_lea.vmem %s0, 1347
  %v1834 = vld [vmem:[%s1833] ss:$8 sm:$0xf]
  %s1835 = scalar_lea.vmem %s0, 1347
  %v1836 = vld [vmem:[%s1835] ss:$8 sm:$0xf0]
  %vm1837 = vcmask 1047556
  %v1838 = vsel %vm1837, %v1836, %v1834
  %1839 = vrot.lane.b32.xlu0 %v1838, 24
  %v1840 = vpop.permute.xlu0 %1839
  %vm1841 = vcmask 261312
  %s1842 = scalar_lea.vmem %s1, 168
  %1843 = vst.msk [vmem:[%s1842] sm:$0xff] %vm1841, %v1840
  %s1844 = scalar_lea.vmem %s0, 1603
  %v1845 = vld [vmem:[%s1844] ss:$8 sm:$0xf]
  %s1846 = scalar_lea.vmem %s0, 1603
  %v1847 = vld [vmem:[%s1846] ss:$8 sm:$0xf0]
  %vm1848 = vcmask 1047556
  %v1849 = vsel %vm1848, %v1847, %v1845
  %1850 = vrot.lane.b32.xlu0 %v1849, 24
  %v1851 = vpop.permute.xlu0 %1850
  %vm1852 = vcmask 261312
  %s1853 = scalar_lea.vmem %s1, 200
  %1854 = vst.msk [vmem:[%s1853] sm:$0xff] %vm1852, %v1851
  %s1855 = scalar_lea.vmem %s0, 1859
  %v1856 = vld [vmem:[%s1855] ss:$8 sm:$0xf]
  %s1857 = scalar_lea.vmem %s0, 1859
  %v1858 = vld [vmem:[%s1857] ss:$8 sm:$0xf0]
  %vm1859 = vcmask 1047556
  %v1860 = vsel %vm1859, %v1858, %v1856
  %1861 = vrot.lane.b32.xlu0 %v1860, 24
  %v1862 = vpop.permute.xlu0 %1861
  %vm1863 = vcmask 261312
  %s1864 = scalar_lea.vmem %s1, 232
  %1865 = vst.msk [vmem:[%s1864] sm:$0xff] %vm1863, %v1862
  %s1866 = scalar_lea.vmem %s0, 131
  %v1867 = vld [vmem:[%s1866] ss:$8 sm:$0xf]
  %s1868 = scalar_lea.vmem %s0, 131
  %v1869 = vld [vmem:[%s1868] ss:$8 sm:$0xf0]
  %vm1870 = vcmask 1047556
  %v1871 = vsel %vm1870, %v1869, %v1867
  %1872 = vrot.lane.b32.xlu0 %v1871, 24
  %v1873 = vpop.permute.xlu0 %1872
  %vm1874 = vcmask 261312
  %s1875 = scalar_lea.vmem %s1, 16
  %1876 = vst.msk [vmem:[%s1875] sm:$0xff] %vm1874, %v1873
  %s1877 = scalar_lea.vmem %s0, 387
  %v1878 = vld [vmem:[%s1877] ss:$8 sm:$0xf]
  %s1879 = scalar_lea.vmem %s0, 387
  %v1880 = vld [vmem:[%s1879] ss:$8 sm:$0xf0]
  %vm1881 = vcmask 1047556
  %v1882 = vsel %vm1881, %v1880, %v1878
  %1883 = vrot.lane.b32.xlu0 %v1882, 24
  %v1884 = vpop.permute.xlu0 %1883
  %vm1885 = vcmask 261312
  %s1886 = scalar_lea.vmem %s1, 48
  %1887 = vst.msk [vmem:[%s1886] sm:$0xff] %vm1885, %v1884
  %s1888 = scalar_lea.vmem %s0, 643
  %v1889 = vld [vmem:[%s1888] ss:$8 sm:$0xf]
  %s1890 = scalar_lea.vmem %s0, 643
  %v1891 = vld [vmem:[%s1890] ss:$8 sm:$0xf0]
  %vm1892 = vcmask 1047556
  %v1893 = vsel %vm1892, %v1891, %v1889
  %1894 = vrot.lane.b32.xlu0 %v1893, 24
  %v1895 = vpop.permute.xlu0 %1894
  %vm1896 = vcmask 261312
  %s1897 = scalar_lea.vmem %s1, 80
  %1898 = vst.msk [vmem:[%s1897] sm:$0xff] %vm1896, %v1895
  %s1899 = scalar_lea.vmem %s0, 899
  %v1900 = vld [vmem:[%s1899] ss:$8 sm:$0xf]
  %s1901 = scalar_lea.vmem %s0, 899
  %v1902 = vld [vmem:[%s1901] ss:$8 sm:$0xf0]
  %vm1903 = vcmask 1047556
  %v1904 = vsel %vm1903, %v1902, %v1900
  %1905 = vrot.lane.b32.xlu0 %v1904, 24
  %v1906 = vpop.permute.xlu0 %1905
  %vm1907 = vcmask 261312
  %s1908 = scalar_lea.vmem %s1, 112
  %1909 = vst.msk [vmem:[%s1908] sm:$0xff] %vm1907, %v1906
  %s1910 = scalar_lea.vmem %s0, 1155
  %v1911 = vld [vmem:[%s1910] ss:$8 sm:$0xf]
  %s1912 = scalar_lea.vmem %s0, 1155
  %v1913 = vld [vmem:[%s1912] ss:$8 sm:$0xf0]
  %vm1914 = vcmask 1047556
  %v1915 = vsel %vm1914, %v1913, %v1911
  %1916 = vrot.lane.b32.xlu0 %v1915, 24
  %v1917 = vpop.permute.xlu0 %1916
  %vm1918 = vcmask 261312
  %s1919 = scalar_lea.vmem %s1, 144
  %1920 = vst.msk [vmem:[%s1919] sm:$0xff] %vm1918, %v1917
  %s1921 = scalar_lea.vmem %s0, 1411
  %v1922 = vld [vmem:[%s1921] ss:$8 sm:$0xf]
  %s1923 = scalar_lea.vmem %s0, 1411
  %v1924 = vld [vmem:[%s1923] ss:$8 sm:$0xf0]
  %vm1925 = vcmask 1047556
  %v1926 = vsel %vm1925, %v1924, %v1922
  %1927 = vrot.lane.b32.xlu0 %v1926, 24
  %v1928 = vpop.permute.xlu0 %1927
  %vm1929 = vcmask 261312
  %s1930 = scalar_lea.vmem %s1, 176
  %1931 = vst.msk [vmem:[%s1930] sm:$0xff] %vm1929, %v1928
  %s1932 = scalar_lea.vmem %s0, 1667
  %v1933 = vld [vmem:[%s1932] ss:$8 sm:$0xf]
  %s1934 = scalar_lea.vmem %s0, 1667
  %v1935 = vld [vmem:[%s1934] ss:$8 sm:$0xf0]
  %vm1936 = vcmask 1047556
  %v1937 = vsel %vm1936, %v1935, %v1933
  %1938 = vrot.lane.b32.xlu0 %v1937, 24
  %v1939 = vpop.permute.xlu0 %1938
  %vm1940 = vcmask 261312
  %s1941 = scalar_lea.vmem %s1, 208
  %1942 = vst.msk [vmem:[%s1941] sm:$0xff] %vm1940, %v1939
  %s1943 = scalar_lea.vmem %s0, 1923
  %v1944 = vld [vmem:[%s1943] ss:$8 sm:$0xf]
  %s1945 = scalar_lea.vmem %s0, 1923
  %v1946 = vld [vmem:[%s1945] ss:$8 sm:$0xf0]
  %vm1947 = vcmask 1047556
  %v1948 = vsel %vm1947, %v1946, %v1944
  %1949 = vrot.lane.b32.xlu0 %v1948, 24
  %v1950 = vpop.permute.xlu0 %1949
  %vm1951 = vcmask 261312
  %s1952 = scalar_lea.vmem %s1, 240
  %1953 = vst.msk [vmem:[%s1952] sm:$0xff] %vm1951, %v1950
  %s1954 = scalar_lea.vmem %s0, 195
  %v1955 = vld [vmem:[%s1954] ss:$8 sm:$0xf]
  %s1956 = scalar_lea.vmem %s0, 195
  %v1957 = vld [vmem:[%s1956] ss:$8 sm:$0xf0]
  %vm1958 = vcmask 1047556
  %v1959 = vsel %vm1958, %v1957, %v1955
  %1960 = vrot.lane.b32.xlu0 %v1959, 24
  %v1961 = vpop.permute.xlu0 %1960
  %vm1962 = vcmask 261312
  %s1963 = scalar_lea.vmem %s1, 24
  %1964 = vst.msk [vmem:[%s1963] sm:$0xff] %vm1962, %v1961
  %s1965 = scalar_lea.vmem %s0, 451
  %v1966 = vld [vmem:[%s1965] ss:$8 sm:$0xf]
  %s1967 = scalar_lea.vmem %s0, 451
  %v1968 = vld [vmem:[%s1967] ss:$8 sm:$0xf0]
  %vm1969 = vcmask 1047556
  %v1970 = vsel %vm1969, %v1968, %v1966
  %1971 = vrot.lane.b32.xlu0 %v1970, 24
  %v1972 = vpop.permute.xlu0 %1971
  %vm1973 = vcmask 261312
  %s1974 = scalar_lea.vmem %s1, 56
  %1975 = vst.msk [vmem:[%s1974] sm:$0xff] %vm1973, %v1972
  %s1976 = scalar_lea.vmem %s0, 707
  %v1977 = vld [vmem:[%s1976] ss:$8 sm:$0xf]
  %s1978 = scalar_lea.vmem %s0, 707
  %v1979 = vld [vmem:[%s1978] ss:$8 sm:$0xf0]
  %vm1980 = vcmask 1047556
  %v1981 = vsel %vm1980, %v1979, %v1977
  %1982 = vrot.lane.b32.xlu0 %v1981, 24
  %v1983 = vpop.permute.xlu0 %1982
  %vm1984 = vcmask 261312
  %s1985 = scalar_lea.vmem %s1, 88
  %1986 = vst.msk [vmem:[%s1985] sm:$0xff] %vm1984, %v1983
  %s1987 = scalar_lea.vmem %s0, 963
  %v1988 = vld [vmem:[%s1987] ss:$8 sm:$0xf]
  %s1989 = scalar_lea.vmem %s0, 963
  %v1990 = vld [vmem:[%s1989] ss:$8 sm:$0xf0]
  %vm1991 = vcmask 1047556
  %v1992 = vsel %vm1991, %v1990, %v1988
  %1993 = vrot.lane.b32.xlu0 %v1992, 24
  %v1994 = vpop.permute.xlu0 %1993
  %vm1995 = vcmask 261312
  %s1996 = scalar_lea.vmem %s1, 120
  %1997 = vst.msk [vmem:[%s1996] sm:$0xff] %vm1995, %v1994
  %s1998 = scalar_lea.vmem %s0, 1219
  %v1999 = vld [vmem:[%s1998] ss:$8 sm:$0xf]
  %s2000 = scalar_lea.vmem %s0, 1219
  %v2001 = vld [vmem:[%s2000] ss:$8 sm:$0xf0]
  %vm2002 = vcmask 1047556
  %v2003 = vsel %vm2002, %v2001, %v1999
  %2004 = vrot.lane.b32.xlu0 %v2003, 24
  %v2005 = vpop.permute.xlu0 %2004
  %vm2006 = vcmask 261312
  %s2007 = scalar_lea.vmem %s1, 152
  %2008 = vst.msk [vmem:[%s2007] sm:$0xff] %vm2006, %v2005
  %s2009 = scalar_lea.vmem %s0, 1475
  %v2010 = vld [vmem:[%s2009] ss:$8 sm:$0xf]
  %s2011 = scalar_lea.vmem %s0, 1475
  %v2012 = vld [vmem:[%s2011] ss:$8 sm:$0xf0]
  %vm2013 = vcmask 1047556
  %v2014 = vsel %vm2013, %v2012, %v2010
  %2015 = vrot.lane.b32.xlu0 %v2014, 24
  %v2016 = vpop.permute.xlu0 %2015
  %vm2017 = vcmask 261312
  %s2018 = scalar_lea.vmem %s1, 184
  %2019 = vst.msk [vmem:[%s2018] sm:$0xff] %vm2017, %v2016
  %s2020 = scalar_lea.vmem %s0, 1731
  %v2021 = vld [vmem:[%s2020] ss:$8 sm:$0xf]
  %s2022 = scalar_lea.vmem %s0, 1731
  %v2023 = vld [vmem:[%s2022] ss:$8 sm:$0xf0]
  %vm2024 = vcmask 1047556
  %v2025 = vsel %vm2024, %v2023, %v2021
  %2026 = vrot.lane.b32.xlu0 %v2025, 24
  %v2027 = vpop.permute.xlu0 %2026
  %vm2028 = vcmask 261312
  %s2029 = scalar_lea.vmem %s1, 216
  %2030 = vst.msk [vmem:[%s2029] sm:$0xff] %vm2028, %v2027
  %s2031 = scalar_lea.vmem %s0, 1987
  %v2032 = vld [vmem:[%s2031] ss:$8 sm:$0xf]
  %s2033 = scalar_lea.vmem %s0, 1987
  %v2034 = vld [vmem:[%s2033] ss:$8 sm:$0xf0]
  %vm2035 = vcmask 1047556
  %v2036 = vsel %vm2035, %v2034, %v2032
  %2037 = vrot.lane.b32.xlu0 %v2036, 24
  %v2038 = vpop.permute.xlu0 %2037
  %vm2039 = vcmask 261312
  %s2040 = scalar_lea.vmem %s1, 248
  %2041 = vst.msk [vmem:[%s2040] sm:$0xff] %vm2039, %v2038
  %s2042 = scalar_lea.vmem %s0, 2
  %v2043 = vld [vmem:[%s2042] ss:$8 sm:$0xf]
  %s2044 = scalar_lea.vmem %s0, 2
  %v2045 = vld [vmem:[%s2044] ss:$8 sm:$0xf0]
  %vm2046 = vcmask 1047556
  %v2047 = vsel %vm2046, %v2045, %v2043
  %2048 = vrot.lane.b32.xlu0 %v2047, 16
  %v2049 = vpop.permute.xlu0 %2048
  %vm2050 = vcmask 195712
  %2051 = vst.msk [vmem:[%s1] sm:$0xff] %vm2050, %v2049
  %s2052 = scalar_lea.vmem %s0, 258
  %v2053 = vld [vmem:[%s2052] ss:$8 sm:$0xf]
  %s2054 = scalar_lea.vmem %s0, 258
  %v2055 = vld [vmem:[%s2054] ss:$8 sm:$0xf0]
  %vm2056 = vcmask 1047556
  %v2057 = vsel %vm2056, %v2055, %v2053
  %2058 = vrot.lane.b32.xlu0 %v2057, 16
  %v2059 = vpop.permute.xlu0 %2058
  %vm2060 = vcmask 195712
  %s2061 = scalar_lea.vmem %s1, 32
  %2062 = vst.msk [vmem:[%s2061] sm:$0xff] %vm2060, %v2059
  %s2063 = scalar_lea.vmem %s0, 514
  %v2064 = vld [vmem:[%s2063] ss:$8 sm:$0xf]
  %s2065 = scalar_lea.vmem %s0, 514
  %v2066 = vld [vmem:[%s2065] ss:$8 sm:$0xf0]
  %vm2067 = vcmask 1047556
  %v2068 = vsel %vm2067, %v2066, %v2064
  %2069 = vrot.lane.b32.xlu0 %v2068, 16
  %v2070 = vpop.permute.xlu0 %2069
  %vm2071 = vcmask 195712
  %s2072 = scalar_lea.vmem %s1, 64
  %2073 = vst.msk [vmem:[%s2072] sm:$0xff] %vm2071, %v2070
  %s2074 = scalar_lea.vmem %s0, 770
  %v2075 = vld [vmem:[%s2074] ss:$8 sm:$0xf]
  %s2076 = scalar_lea.vmem %s0, 770
  %v2077 = vld [vmem:[%s2076] ss:$8 sm:$0xf0]
  %vm2078 = vcmask 1047556
  %v2079 = vsel %vm2078, %v2077, %v2075
  %2080 = vrot.lane.b32.xlu0 %v2079, 16
  %v2081 = vpop.permute.xlu0 %2080
  %vm2082 = vcmask 195712
  %s2083 = scalar_lea.vmem %s1, 96
  %2084 = vst.msk [vmem:[%s2083] sm:$0xff] %vm2082, %v2081
  %s2085 = scalar_lea.vmem %s0, 1026
  %v2086 = vld [vmem:[%s2085] ss:$8 sm:$0xf]
  %s2087 = scalar_lea.vmem %s0, 1026
  %v2088 = vld [vmem:[%s2087] ss:$8 sm:$0xf0]
  %vm2089 = vcmask 1047556
  %v2090 = vsel %vm2089, %v2088, %v2086
  %2091 = vrot.lane.b32.xlu0 %v2090, 16
  %v2092 = vpop.permute.xlu0 %2091
  %vm2093 = vcmask 195712
  %s2094 = scalar_lea.vmem %s1, 128
  %2095 = vst.msk [vmem:[%s2094] sm:$0xff] %vm2093, %v2092
  %s2096 = scalar_lea.vmem %s0, 1282
  %v2097 = vld [vmem:[%s2096] ss:$8 sm:$0xf]
  %s2098 = scalar_lea.vmem %s0, 1282
  %v2099 = vld [vmem:[%s2098] ss:$8 sm:$0xf0]
  %vm2100 = vcmask 1047556
  %v2101 = vsel %vm2100, %v2099, %v2097
  %2102 = vrot.lane.b32.xlu0 %v2101, 16
  %v2103 = vpop.permute.xlu0 %2102
  %vm2104 = vcmask 195712
  %s2105 = scalar_lea.vmem %s1, 160
  %2106 = vst.msk [vmem:[%s2105] sm:$0xff] %vm2104, %v2103
  %s2107 = scalar_lea.vmem %s0, 1538
  %v2108 = vld [vmem:[%s2107] ss:$8 sm:$0xf]
  %s2109 = scalar_lea.vmem %s0, 1538
  %v2110 = vld [vmem:[%s2109] ss:$8 sm:$0xf0]
  %vm2111 = vcmask 1047556
  %v2112 = vsel %vm2111, %v2110, %v2108
  %2113 = vrot.lane.b32.xlu0 %v2112, 16
  %v2114 = vpop.permute.xlu0 %2113
  %vm2115 = vcmask 195712
  %s2116 = scalar_lea.vmem %s1, 192
  %2117 = vst.msk [vmem:[%s2116] sm:$0xff] %vm2115, %v2114
  %s2118 = scalar_lea.vmem %s0, 1794
  %v2119 = vld [vmem:[%s2118] ss:$8 sm:$0xf]
  %s2120 = scalar_lea.vmem %s0, 1794
  %v2121 = vld [vmem:[%s2120] ss:$8 sm:$0xf0]
  %vm2122 = vcmask 1047556
  %v2123 = vsel %vm2122, %v2121, %v2119
  %2124 = vrot.lane.b32.xlu0 %v2123, 16
  %v2125 = vpop.permute.xlu0 %2124
  %vm2126 = vcmask 195712
  %s2127 = scalar_lea.vmem %s1, 224
  %2128 = vst.msk [vmem:[%s2127] sm:$0xff] %vm2126, %v2125
  %s2129 = scalar_lea.vmem %s0, 66
  %v2130 = vld [vmem:[%s2129] ss:$8 sm:$0xf]
  %s2131 = scalar_lea.vmem %s0, 66
  %v2132 = vld [vmem:[%s2131] ss:$8 sm:$0xf0]
  %vm2133 = vcmask 1047556
  %v2134 = vsel %vm2133, %v2132, %v2130
  %2135 = vrot.lane.b32.xlu0 %v2134, 16
  %v2136 = vpop.permute.xlu0 %2135
  %vm2137 = vcmask 195712
  %s2138 = scalar_lea.vmem %s1, 8
  %2139 = vst.msk [vmem:[%s2138] sm:$0xff] %vm2137, %v2136
  %s2140 = scalar_lea.vmem %s0, 322
  %v2141 = vld [vmem:[%s2140] ss:$8 sm:$0xf]
  %s2142 = scalar_lea.vmem %s0, 322
  %v2143 = vld [vmem:[%s2142] ss:$8 sm:$0xf0]
  %vm2144 = vcmask 1047556
  %v2145 = vsel %vm2144, %v2143, %v2141
  %2146 = vrot.lane.b32.xlu0 %v2145, 16
  %v2147 = vpop.permute.xlu0 %2146
  %vm2148 = vcmask 195712
  %s2149 = scalar_lea.vmem %s1, 40
  %2150 = vst.msk [vmem:[%s2149] sm:$0xff] %vm2148, %v2147
  %s2151 = scalar_lea.vmem %s0, 578
  %v2152 = vld [vmem:[%s2151] ss:$8 sm:$0xf]
  %s2153 = scalar_lea.vmem %s0, 578
  %v2154 = vld [vmem:[%s2153] ss:$8 sm:$0xf0]
  %vm2155 = vcmask 1047556
  %v2156 = vsel %vm2155, %v2154, %v2152
  %2157 = vrot.lane.b32.xlu0 %v2156, 16
  %v2158 = vpop.permute.xlu0 %2157
  %vm2159 = vcmask 195712
  %s2160 = scalar_lea.vmem %s1, 72
  %2161 = vst.msk [vmem:[%s2160] sm:$0xff] %vm2159, %v2158
  %s2162 = scalar_lea.vmem %s0, 834
  %v2163 = vld [vmem:[%s2162] ss:$8 sm:$0xf]
  %s2164 = scalar_lea.vmem %s0, 834
  %v2165 = vld [vmem:[%s2164] ss:$8 sm:$0xf0]
  %vm2166 = vcmask 1047556
  %v2167 = vsel %vm2166, %v2165, %v2163
  %2168 = vrot.lane.b32.xlu0 %v2167, 16
  %v2169 = vpop.permute.xlu0 %2168
  %vm2170 = vcmask 195712
  %s2171 = scalar_lea.vmem %s1, 104
  %2172 = vst.msk [vmem:[%s2171] sm:$0xff] %vm2170, %v2169
  %s2173 = scalar_lea.vmem %s0, 1090
  %v2174 = vld [vmem:[%s2173] ss:$8 sm:$0xf]
  %s2175 = scalar_lea.vmem %s0, 1090
  %v2176 = vld [vmem:[%s2175] ss:$8 sm:$0xf0]
  %vm2177 = vcmask 1047556
  %v2178 = vsel %vm2177, %v2176, %v2174
  %2179 = vrot.lane.b32.xlu0 %v2178, 16
  %v2180 = vpop.permute.xlu0 %2179
  %vm2181 = vcmask 195712
  %s2182 = scalar_lea.vmem %s1, 136
  %2183 = vst.msk [vmem:[%s2182] sm:$0xff] %vm2181, %v2180
  %s2184 = scalar_lea.vmem %s0, 1346
  %v2185 = vld [vmem:[%s2184] ss:$8 sm:$0xf]
  %s2186 = scalar_lea.vmem %s0, 1346
  %v2187 = vld [vmem:[%s2186] ss:$8 sm:$0xf0]
  %vm2188 = vcmask 1047556
  %v2189 = vsel %vm2188, %v2187, %v2185
  %2190 = vrot.lane.b32.xlu0 %v2189, 16
  %v2191 = vpop.permute.xlu0 %2190
  %vm2192 = vcmask 195712
  %s2193 = scalar_lea.vmem %s1, 168
  %2194 = vst.msk [vmem:[%s2193] sm:$0xff] %vm2192, %v2191
  %s2195 = scalar_lea.vmem %s0, 1602
  %v2196 = vld [vmem:[%s2195] ss:$8 sm:$0xf]
  %s2197 = scalar_lea.vmem %s0, 1602
  %v2198 = vld [vmem:[%s2197] ss:$8 sm:$0xf0]
  %vm2199 = vcmask 1047556
  %v2200 = vsel %vm2199, %v2198, %v2196
  %2201 = vrot.lane.b32.xlu0 %v2200, 16
  %v2202 = vpop.permute.xlu0 %2201
  %vm2203 = vcmask 195712
  %s2204 = scalar_lea.vmem %s1, 200
  %2205 = vst.msk [vmem:[%s2204] sm:$0xff] %vm2203, %v2202
  %s2206 = scalar_lea.vmem %s0, 1858
  %v2207 = vld [vmem:[%s2206] ss:$8 sm:$0xf]
  %s2208 = scalar_lea.vmem %s0, 1858
  %v2209 = vld [vmem:[%s2208] ss:$8 sm:$0xf0]
  %vm2210 = vcmask 1047556
  %v2211 = vsel %vm2210, %v2209, %v2207
  %2212 = vrot.lane.b32.xlu0 %v2211, 16
  %v2213 = vpop.permute.xlu0 %2212
  %vm2214 = vcmask 195712
  %s2215 = scalar_lea.vmem %s1, 232
  %2216 = vst.msk [vmem:[%s2215] sm:$0xff] %vm2214, %v2213
  %s2217 = scalar_lea.vmem %s0, 130
  %v2218 = vld [vmem:[%s2217] ss:$8 sm:$0xf]
  %s2219 = scalar_lea.vmem %s0, 130
  %v2220 = vld [vmem:[%s2219] ss:$8 sm:$0xf0]
  %vm2221 = vcmask 1047556
  %v2222 = vsel %vm2221, %v2220, %v2218
  %2223 = vrot.lane.b32.xlu0 %v2222, 16
  %v2224 = vpop.permute.xlu0 %2223
  %vm2225 = vcmask 195712
  %s2226 = scalar_lea.vmem %s1, 16
  %2227 = vst.msk [vmem:[%s2226] sm:$0xff] %vm2225, %v2224
  %s2228 = scalar_lea.vmem %s0, 386
  %v2229 = vld [vmem:[%s2228] ss:$8 sm:$0xf]
  %s2230 = scalar_lea.vmem %s0, 386
  %v2231 = vld [vmem:[%s2230] ss:$8 sm:$0xf0]
  %vm2232 = vcmask 1047556
  %v2233 = vsel %vm2232, %v2231, %v2229
  %2234 = vrot.lane.b32.xlu0 %v2233, 16
  %v2235 = vpop.permute.xlu0 %2234
  %vm2236 = vcmask 195712
  %s2237 = scalar_lea.vmem %s1, 48
  %2238 = vst.msk [vmem:[%s2237] sm:$0xff] %vm2236, %v2235
  %s2239 = scalar_lea.vmem %s0, 642
  %v2240 = vld [vmem:[%s2239] ss:$8 sm:$0xf]
  %s2241 = scalar_lea.vmem %s0, 642
  %v2242 = vld [vmem:[%s2241] ss:$8 sm:$0xf0]
  %vm2243 = vcmask 1047556
  %v2244 = vsel %vm2243, %v2242, %v2240
  %2245 = vrot.lane.b32.xlu0 %v2244, 16
  %v2246 = vpop.permute.xlu0 %2245
  %vm2247 = vcmask 195712
  %s2248 = scalar_lea.vmem %s1, 80
  %2249 = vst.msk [vmem:[%s2248] sm:$0xff] %vm2247, %v2246
  %s2250 = scalar_lea.vmem %s0, 898
  %v2251 = vld [vmem:[%s2250] ss:$8 sm:$0xf]
  %s2252 = scalar_lea.vmem %s0, 898
  %v2253 = vld [vmem:[%s2252] ss:$8 sm:$0xf0]
  %vm2254 = vcmask 1047556
  %v2255 = vsel %vm2254, %v2253, %v2251
  %2256 = vrot.lane.b32.xlu0 %v2255, 16
  %v2257 = vpop.permute.xlu0 %2256
  %vm2258 = vcmask 195712
  %s2259 = scalar_lea.vmem %s1, 112
  %2260 = vst.msk [vmem:[%s2259] sm:$0xff] %vm2258, %v2257
  %s2261 = scalar_lea.vmem %s0, 1154
  %v2262 = vld [vmem:[%s2261] ss:$8 sm:$0xf]
  %s2263 = scalar_lea.vmem %s0, 1154
  %v2264 = vld [vmem:[%s2263] ss:$8 sm:$0xf0]
  %vm2265 = vcmask 1047556
  %v2266 = vsel %vm2265, %v2264, %v2262
  %2267 = vrot.lane.b32.xlu0 %v2266, 16
  %v2268 = vpop.permute.xlu0 %2267
  %vm2269 = vcmask 195712
  %s2270 = scalar_lea.vmem %s1, 144
  %2271 = vst.msk [vmem:[%s2270] sm:$0xff] %vm2269, %v2268
  %s2272 = scalar_lea.vmem %s0, 1410
  %v2273 = vld [vmem:[%s2272] ss:$8 sm:$0xf]
  %s2274 = scalar_lea.vmem %s0, 1410
  %v2275 = vld [vmem:[%s2274] ss:$8 sm:$0xf0]
  %vm2276 = vcmask 1047556
  %v2277 = vsel %vm2276, %v2275, %v2273
  %2278 = vrot.lane.b32.xlu0 %v2277, 16
  %v2279 = vpop.permute.xlu0 %2278
  %vm2280 = vcmask 195712
  %s2281 = scalar_lea.vmem %s1, 176
  %2282 = vst.msk [vmem:[%s2281] sm:$0xff] %vm2280, %v2279
  %s2283 = scalar_lea.vmem %s0, 1666
  %v2284 = vld [vmem:[%s2283] ss:$8 sm:$0xf]
  %s2285 = scalar_lea.vmem %s0, 1666
  %v2286 = vld [vmem:[%s2285] ss:$8 sm:$0xf0]
  %vm2287 = vcmask 1047556
  %v2288 = vsel %vm2287, %v2286, %v2284
  %2289 = vrot.lane.b32.xlu0 %v2288, 16
  %v2290 = vpop.permute.xlu0 %2289
  %vm2291 = vcmask 195712
  %s2292 = scalar_lea.vmem %s1, 208
  %2293 = vst.msk [vmem:[%s2292] sm:$0xff] %vm2291, %v2290
  %s2294 = scalar_lea.vmem %s0, 1922
  %v2295 = vld [vmem:[%s2294] ss:$8 sm:$0xf]
  %s2296 = scalar_lea.vmem %s0, 1922
  %v2297 = vld [vmem:[%s2296] ss:$8 sm:$0xf0]
  %vm2298 = vcmask 1047556
  %v2299 = vsel %vm2298, %v2297, %v2295
  %2300 = vrot.lane.b32.xlu0 %v2299, 16
  %v2301 = vpop.permute.xlu0 %2300
  %vm2302 = vcmask 195712
  %s2303 = scalar_lea.vmem %s1, 240
  %2304 = vst.msk [vmem:[%s2303] sm:$0xff] %vm2302, %v2301
  %s2305 = scalar_lea.vmem %s0, 194
  %v2306 = vld [vmem:[%s2305] ss:$8 sm:$0xf]
  %s2307 = scalar_lea.vmem %s0, 194
  %v2308 = vld [vmem:[%s2307] ss:$8 sm:$0xf0]
  %vm2309 = vcmask 1047556
  %v2310 = vsel %vm2309, %v2308, %v2306
  %2311 = vrot.lane.b32.xlu0 %v2310, 16
  %v2312 = vpop.permute.xlu0 %2311
  %vm2313 = vcmask 195712
  %s2314 = scalar_lea.vmem %s1, 24
  %2315 = vst.msk [vmem:[%s2314] sm:$0xff] %vm2313, %v2312
  %s2316 = scalar_lea.vmem %s0, 450
  %v2317 = vld [vmem:[%s2316] ss:$8 sm:$0xf]
  %s2318 = scalar_lea.vmem %s0, 450
  %v2319 = vld [vmem:[%s2318] ss:$8 sm:$0xf0]
  %vm2320 = vcmask 1047556
  %v2321 = vsel %vm2320, %v2319, %v2317
  %2322 = vrot.lane.b32.xlu0 %v2321, 16
  %v2323 = vpop.permute.xlu0 %2322
  %vm2324 = vcmask 195712
  %s2325 = scalar_lea.vmem %s1, 56
  %2326 = vst.msk [vmem:[%s2325] sm:$0xff] %vm2324, %v2323
  %s2327 = scalar_lea.vmem %s0, 706
  %v2328 = vld [vmem:[%s2327] ss:$8 sm:$0xf]
  %s2329 = scalar_lea.vmem %s0, 706
  %v2330 = vld [vmem:[%s2329] ss:$8 sm:$0xf0]
  %vm2331 = vcmask 1047556
  %v2332 = vsel %vm2331, %v2330, %v2328
  %2333 = vrot.lane.b32.xlu0 %v2332, 16
  %v2334 = vpop.permute.xlu0 %2333
  %vm2335 = vcmask 195712
  %s2336 = scalar_lea.vmem %s1, 88
  %2337 = vst.msk [vmem:[%s2336] sm:$0xff] %vm2335, %v2334
  %s2338 = scalar_lea.vmem %s0, 962
  %v2339 = vld [vmem:[%s2338] ss:$8 sm:$0xf]
  %s2340 = scalar_lea.vmem %s0, 962
  %v2341 = vld [vmem:[%s2340] ss:$8 sm:$0xf0]
  %vm2342 = vcmask 1047556
  %v2343 = vsel %vm2342, %v2341, %v2339
  %2344 = vrot.lane.b32.xlu0 %v2343, 16
  %v2345 = vpop.permute.xlu0 %2344
  %vm2346 = vcmask 195712
  %s2347 = scalar_lea.vmem %s1, 120
  %2348 = vst.msk [vmem:[%s2347] sm:$0xff] %vm2346, %v2345
  %s2349 = scalar_lea.vmem %s0, 1218
  %v2350 = vld [vmem:[%s2349] ss:$8 sm:$0xf]
  %s2351 = scalar_lea.vmem %s0, 1218
  %v2352 = vld [vmem:[%s2351] ss:$8 sm:$0xf0]
  %vm2353 = vcmask 1047556
  %v2354 = vsel %vm2353, %v2352, %v2350
  %2355 = vrot.lane.b32.xlu0 %v2354, 16
  %v2356 = vpop.permute.xlu0 %2355
  %vm2357 = vcmask 195712
  %s2358 = scalar_lea.vmem %s1, 152
  %2359 = vst.msk [vmem:[%s2358] sm:$0xff] %vm2357, %v2356
  %s2360 = scalar_lea.vmem %s0, 1474
  %v2361 = vld [vmem:[%s2360] ss:$8 sm:$0xf]
  %s2362 = scalar_lea.vmem %s0, 1474
  %v2363 = vld [vmem:[%s2362] ss:$8 sm:$0xf0]
  %vm2364 = vcmask 1047556
  %v2365 = vsel %vm2364, %v2363, %v2361
  %2366 = vrot.lane.b32.xlu0 %v2365, 16
  %v2367 = vpop.permute.xlu0 %2366
  %vm2368 = vcmask 195712
  %s2369 = scalar_lea.vmem %s1, 184
  %2370 = vst.msk [vmem:[%s2369] sm:$0xff] %vm2368, %v2367
  %s2371 = scalar_lea.vmem %s0, 1730
  %v2372 = vld [vmem:[%s2371] ss:$8 sm:$0xf]
  %s2373 = scalar_lea.vmem %s0, 1730
  %v2374 = vld [vmem:[%s2373] ss:$8 sm:$0xf0]
  %vm2375 = vcmask 1047556
  %v2376 = vsel %vm2375, %v2374, %v2372
  %2377 = vrot.lane.b32.xlu0 %v2376, 16
  %v2378 = vpop.permute.xlu0 %2377
  %vm2379 = vcmask 195712
  %s2380 = scalar_lea.vmem %s1, 216
  %2381 = vst.msk [vmem:[%s2380] sm:$0xff] %vm2379, %v2378
  %s2382 = scalar_lea.vmem %s0, 1986
  %v2383 = vld [vmem:[%s2382] ss:$8 sm:$0xf]
  %s2384 = scalar_lea.vmem %s0, 1986
  %v2385 = vld [vmem:[%s2384] ss:$8 sm:$0xf0]
  %vm2386 = vcmask 1047556
  %v2387 = vsel %vm2386, %v2385, %v2383
  %2388 = vrot.lane.b32.xlu0 %v2387, 16
  %v2389 = vpop.permute.xlu0 %2388
  %vm2390 = vcmask 195712
  %s2391 = scalar_lea.vmem %s1, 248
  %2392 = vst.msk [vmem:[%s2391] sm:$0xff] %vm2390, %v2389
  %s2393 = scalar_lea.vmem %s0, 1
  %v2394 = vld [vmem:[%s2393] ss:$8 sm:$0xf]
  %s2395 = scalar_lea.vmem %s0, 1
  %v2396 = vld [vmem:[%s2395] ss:$8 sm:$0xf0]
  %vm2397 = vcmask 1047556
  %v2398 = vsel %vm2397, %v2396, %v2394
  %2399 = vrot.lane.b32.xlu0 %v2398, 8
  %v2400 = vpop.permute.xlu0 %2399
  %vm2401 = vcmask 130112
  %2402 = vst.msk [vmem:[%s1] sm:$0xff] %vm2401, %v2400
  %s2403 = scalar_lea.vmem %s0, 257
  %v2404 = vld [vmem:[%s2403] ss:$8 sm:$0xf]
  %s2405 = scalar_lea.vmem %s0, 257
  %v2406 = vld [vmem:[%s2405] ss:$8 sm:$0xf0]
  %vm2407 = vcmask 1047556
  %v2408 = vsel %vm2407, %v2406, %v2404
  %2409 = vrot.lane.b32.xlu0 %v2408, 8
  %v2410 = vpop.permute.xlu0 %2409
  %vm2411 = vcmask 130112
  %s2412 = scalar_lea.vmem %s1, 32
  %2413 = vst.msk [vmem:[%s2412] sm:$0xff] %vm2411, %v2410
  %s2414 = scalar_lea.vmem %s0, 513
  %v2415 = vld [vmem:[%s2414] ss:$8 sm:$0xf]
  %s2416 = scalar_lea.vmem %s0, 513
  %v2417 = vld [vmem:[%s2416] ss:$8 sm:$0xf0]
  %vm2418 = vcmask 1047556
  %v2419 = vsel %vm2418, %v2417, %v2415
  %2420 = vrot.lane.b32.xlu0 %v2419, 8
  %v2421 = vpop.permute.xlu0 %2420
  %vm2422 = vcmask 130112
  %s2423 = scalar_lea.vmem %s1, 64
  %2424 = vst.msk [vmem:[%s2423] sm:$0xff] %vm2422, %v2421
  %s2425 = scalar_lea.vmem %s0, 769
  %v2426 = vld [vmem:[%s2425] ss:$8 sm:$0xf]
  %s2427 = scalar_lea.vmem %s0, 769
  %v2428 = vld [vmem:[%s2427] ss:$8 sm:$0xf0]
  %vm2429 = vcmask 1047556
  %v2430 = vsel %vm2429, %v2428, %v2426
  %2431 = vrot.lane.b32.xlu0 %v2430, 8
  %v2432 = vpop.permute.xlu0 %2431
  %vm2433 = vcmask 130112
  %s2434 = scalar_lea.vmem %s1, 96
  %2435 = vst.msk [vmem:[%s2434] sm:$0xff] %vm2433, %v2432
  %s2436 = scalar_lea.vmem %s0, 1025
  %v2437 = vld [vmem:[%s2436] ss:$8 sm:$0xf]
  %s2438 = scalar_lea.vmem %s0, 1025
  %v2439 = vld [vmem:[%s2438] ss:$8 sm:$0xf0]
  %vm2440 = vcmask 1047556
  %v2441 = vsel %vm2440, %v2439, %v2437
  %2442 = vrot.lane.b32.xlu0 %v2441, 8
  %v2443 = vpop.permute.xlu0 %2442
  %vm2444 = vcmask 130112
  %s2445 = scalar_lea.vmem %s1, 128
  %2446 = vst.msk [vmem:[%s2445] sm:$0xff] %vm2444, %v2443
  %s2447 = scalar_lea.vmem %s0, 1281
  %v2448 = vld [vmem:[%s2447] ss:$8 sm:$0xf]
  %s2449 = scalar_lea.vmem %s0, 1281
  %v2450 = vld [vmem:[%s2449] ss:$8 sm:$0xf0]
  %vm2451 = vcmask 1047556
  %v2452 = vsel %vm2451, %v2450, %v2448
  %2453 = vrot.lane.b32.xlu0 %v2452, 8
  %v2454 = vpop.permute.xlu0 %2453
  %vm2455 = vcmask 130112
  %s2456 = scalar_lea.vmem %s1, 160
  %2457 = vst.msk [vmem:[%s2456] sm:$0xff] %vm2455, %v2454
  %s2458 = scalar_lea.vmem %s0, 1537
  %v2459 = vld [vmem:[%s2458] ss:$8 sm:$0xf]
  %s2460 = scalar_lea.vmem %s0, 1537
  %v2461 = vld [vmem:[%s2460] ss:$8 sm:$0xf0]
  %vm2462 = vcmask 1047556
  %v2463 = vsel %vm2462, %v2461, %v2459
  %2464 = vrot.lane.b32.xlu0 %v2463, 8
  %v2465 = vpop.permute.xlu0 %2464
  %vm2466 = vcmask 130112
  %s2467 = scalar_lea.vmem %s1, 192
  %2468 = vst.msk [vmem:[%s2467] sm:$0xff] %vm2466, %v2465
  %s2469 = scalar_lea.vmem %s0, 1793
  %v2470 = vld [vmem:[%s2469] ss:$8 sm:$0xf]
  %s2471 = scalar_lea.vmem %s0, 1793
  %v2472 = vld [vmem:[%s2471] ss:$8 sm:$0xf0]
  %vm2473 = vcmask 1047556
  %v2474 = vsel %vm2473, %v2472, %v2470
  %2475 = vrot.lane.b32.xlu0 %v2474, 8
  %v2476 = vpop.permute.xlu0 %2475
  %vm2477 = vcmask 130112
  %s2478 = scalar_lea.vmem %s1, 224
  %2479 = vst.msk [vmem:[%s2478] sm:$0xff] %vm2477, %v2476
  %s2480 = scalar_lea.vmem %s0, 65
  %v2481 = vld [vmem:[%s2480] ss:$8 sm:$0xf]
  %s2482 = scalar_lea.vmem %s0, 65
  %v2483 = vld [vmem:[%s2482] ss:$8 sm:$0xf0]
  %vm2484 = vcmask 1047556
  %v2485 = vsel %vm2484, %v2483, %v2481
  %2486 = vrot.lane.b32.xlu0 %v2485, 8
  %v2487 = vpop.permute.xlu0 %2486
  %vm2488 = vcmask 130112
  %s2489 = scalar_lea.vmem %s1, 8
  %2490 = vst.msk [vmem:[%s2489] sm:$0xff] %vm2488, %v2487
  %s2491 = scalar_lea.vmem %s0, 321
  %v2492 = vld [vmem:[%s2491] ss:$8 sm:$0xf]
  %s2493 = scalar_lea.vmem %s0, 321
  %v2494 = vld [vmem:[%s2493] ss:$8 sm:$0xf0]
  %vm2495 = vcmask 1047556
  %v2496 = vsel %vm2495, %v2494, %v2492
  %2497 = vrot.lane.b32.xlu0 %v2496, 8
  %v2498 = vpop.permute.xlu0 %2497
  %vm2499 = vcmask 130112
  %s2500 = scalar_lea.vmem %s1, 40
  %2501 = vst.msk [vmem:[%s2500] sm:$0xff] %vm2499, %v2498
  %s2502 = scalar_lea.vmem %s0, 577
  %v2503 = vld [vmem:[%s2502] ss:$8 sm:$0xf]
  %s2504 = scalar_lea.vmem %s0, 577
  %v2505 = vld [vmem:[%s2504] ss:$8 sm:$0xf0]
  %vm2506 = vcmask 1047556
  %v2507 = vsel %vm2506, %v2505, %v2503
  %2508 = vrot.lane.b32.xlu0 %v2507, 8
  %v2509 = vpop.permute.xlu0 %2508
  %vm2510 = vcmask 130112
  %s2511 = scalar_lea.vmem %s1, 72
  %2512 = vst.msk [vmem:[%s2511] sm:$0xff] %vm2510, %v2509
  %s2513 = scalar_lea.vmem %s0, 833
  %v2514 = vld [vmem:[%s2513] ss:$8 sm:$0xf]
  %s2515 = scalar_lea.vmem %s0, 833
  %v2516 = vld [vmem:[%s2515] ss:$8 sm:$0xf0]
  %vm2517 = vcmask 1047556
  %v2518 = vsel %vm2517, %v2516, %v2514
  %2519 = vrot.lane.b32.xlu0 %v2518, 8
  %v2520 = vpop.permute.xlu0 %2519
  %vm2521 = vcmask 130112
  %s2522 = scalar_lea.vmem %s1, 104
  %2523 = vst.msk [vmem:[%s2522] sm:$0xff] %vm2521, %v2520
  %s2524 = scalar_lea.vmem %s0, 1089
  %v2525 = vld [vmem:[%s2524] ss:$8 sm:$0xf]
  %s2526 = scalar_lea.vmem %s0, 1089
  %v2527 = vld [vmem:[%s2526] ss:$8 sm:$0xf0]
  %vm2528 = vcmask 1047556
  %v2529 = vsel %vm2528, %v2527, %v2525
  %2530 = vrot.lane.b32.xlu0 %v2529, 8
  %v2531 = vpop.permute.xlu0 %2530
  %vm2532 = vcmask 130112
  %s2533 = scalar_lea.vmem %s1, 136
  %2534 = vst.msk [vmem:[%s2533] sm:$0xff] %vm2532, %v2531
  %s2535 = scalar_lea.vmem %s0, 1345
  %v2536 = vld [vmem:[%s2535] ss:$8 sm:$0xf]
  %s2537 = scalar_lea.vmem %s0, 1345
  %v2538 = vld [vmem:[%s2537] ss:$8 sm:$0xf0]
  %vm2539 = vcmask 1047556
  %v2540 = vsel %vm2539, %v2538, %v2536
  %2541 = vrot.lane.b32.xlu0 %v2540, 8
  %v2542 = vpop.permute.xlu0 %2541
  %vm2543 = vcmask 130112
  %s2544 = scalar_lea.vmem %s1, 168
  %2545 = vst.msk [vmem:[%s2544] sm:$0xff] %vm2543, %v2542
  %s2546 = scalar_lea.vmem %s0, 1601
  %v2547 = vld [vmem:[%s2546] ss:$8 sm:$0xf]
  %s2548 = scalar_lea.vmem %s0, 1601
  %v2549 = vld [vmem:[%s2548] ss:$8 sm:$0xf0]
  %vm2550 = vcmask 1047556
  %v2551 = vsel %vm2550, %v2549, %v2547
  %2552 = vrot.lane.b32.xlu0 %v2551, 8
  %v2553 = vpop.permute.xlu0 %2552
  %vm2554 = vcmask 130112
  %s2555 = scalar_lea.vmem %s1, 200
  %2556 = vst.msk [vmem:[%s2555] sm:$0xff] %vm2554, %v2553
  %s2557 = scalar_lea.vmem %s0, 1857
  %v2558 = vld [vmem:[%s2557] ss:$8 sm:$0xf]
  %s2559 = scalar_lea.vmem %s0, 1857
  %v2560 = vld [vmem:[%s2559] ss:$8 sm:$0xf0]
  %vm2561 = vcmask 1047556
  %v2562 = vsel %vm2561, %v2560, %v2558
  %2563 = vrot.lane.b32.xlu0 %v2562, 8
  %v2564 = vpop.permute.xlu0 %2563
  %vm2565 = vcmask 130112
  %s2566 = scalar_lea.vmem %s1, 232
  %2567 = vst.msk [vmem:[%s2566] sm:$0xff] %vm2565, %v2564
  %s2568 = scalar_lea.vmem %s0, 129
  %v2569 = vld [vmem:[%s2568] ss:$8 sm:$0xf]
  %s2570 = scalar_lea.vmem %s0, 129
  %v2571 = vld [vmem:[%s2570] ss:$8 sm:$0xf0]
  %vm2572 = vcmask 1047556
  %v2573 = vsel %vm2572, %v2571, %v2569
  %2574 = vrot.lane.b32.xlu0 %v2573, 8
  %v2575 = vpop.permute.xlu0 %2574
  %vm2576 = vcmask 130112
  %s2577 = scalar_lea.vmem %s1, 16
  %2578 = vst.msk [vmem:[%s2577] sm:$0xff] %vm2576, %v2575
  %s2579 = scalar_lea.vmem %s0, 385
  %v2580 = vld [vmem:[%s2579] ss:$8 sm:$0xf]
  %s2581 = scalar_lea.vmem %s0, 385
  %v2582 = vld [vmem:[%s2581] ss:$8 sm:$0xf0]
  %vm2583 = vcmask 1047556
  %v2584 = vsel %vm2583, %v2582, %v2580
  %2585 = vrot.lane.b32.xlu0 %v2584, 8
  %v2586 = vpop.permute.xlu0 %2585
  %vm2587 = vcmask 130112
  %s2588 = scalar_lea.vmem %s1, 48
  %2589 = vst.msk [vmem:[%s2588] sm:$0xff] %vm2587, %v2586
  %s2590 = scalar_lea.vmem %s0, 641
  %v2591 = vld [vmem:[%s2590] ss:$8 sm:$0xf]
  %s2592 = scalar_lea.vmem %s0, 641
  %v2593 = vld [vmem:[%s2592] ss:$8 sm:$0xf0]
  %vm2594 = vcmask 1047556
  %v2595 = vsel %vm2594, %v2593, %v2591
  %2596 = vrot.lane.b32.xlu0 %v2595, 8
  %v2597 = vpop.permute.xlu0 %2596
  %vm2598 = vcmask 130112
  %s2599 = scalar_lea.vmem %s1, 80
  %2600 = vst.msk [vmem:[%s2599] sm:$0xff] %vm2598, %v2597
  %s2601 = scalar_lea.vmem %s0, 897
  %v2602 = vld [vmem:[%s2601] ss:$8 sm:$0xf]
  %s2603 = scalar_lea.vmem %s0, 897
  %v2604 = vld [vmem:[%s2603] ss:$8 sm:$0xf0]
  %vm2605 = vcmask 1047556
  %v2606 = vsel %vm2605, %v2604, %v2602
  %2607 = vrot.lane.b32.xlu0 %v2606, 8
  %v2608 = vpop.permute.xlu0 %2607
  %vm2609 = vcmask 130112
  %s2610 = scalar_lea.vmem %s1, 112
  %2611 = vst.msk [vmem:[%s2610] sm:$0xff] %vm2609, %v2608
  %s2612 = scalar_lea.vmem %s0, 1153
  %v2613 = vld [vmem:[%s2612] ss:$8 sm:$0xf]
  %s2614 = scalar_lea.vmem %s0, 1153
  %v2615 = vld [vmem:[%s2614] ss:$8 sm:$0xf0]
  %vm2616 = vcmask 1047556
  %v2617 = vsel %vm2616, %v2615, %v2613
  %2618 = vrot.lane.b32.xlu0 %v2617, 8
  %v2619 = vpop.permute.xlu0 %2618
  %vm2620 = vcmask 130112
  %s2621 = scalar_lea.vmem %s1, 144
  %2622 = vst.msk [vmem:[%s2621] sm:$0xff] %vm2620, %v2619
  %s2623 = scalar_lea.vmem %s0, 1409
  %v2624 = vld [vmem:[%s2623] ss:$8 sm:$0xf]
  %s2625 = scalar_lea.vmem %s0, 1409
  %v2626 = vld [vmem:[%s2625] ss:$8 sm:$0xf0]
  %vm2627 = vcmask 1047556
  %v2628 = vsel %vm2627, %v2626, %v2624
  %2629 = vrot.lane.b32.xlu0 %v2628, 8
  %v2630 = vpop.permute.xlu0 %2629
  %vm2631 = vcmask 130112
  %s2632 = scalar_lea.vmem %s1, 176
  %2633 = vst.msk [vmem:[%s2632] sm:$0xff] %vm2631, %v2630
  %s2634 = scalar_lea.vmem %s0, 1665
  %v2635 = vld [vmem:[%s2634] ss:$8 sm:$0xf]
  %s2636 = scalar_lea.vmem %s0, 1665
  %v2637 = vld [vmem:[%s2636] ss:$8 sm:$0xf0]
  %vm2638 = vcmask 1047556
  %v2639 = vsel %vm2638, %v2637, %v2635
  %2640 = vrot.lane.b32.xlu0 %v2639, 8
  %v2641 = vpop.permute.xlu0 %2640
  %vm2642 = vcmask 130112
  %s2643 = scalar_lea.vmem %s1, 208
  %2644 = vst.msk [vmem:[%s2643] sm:$0xff] %vm2642, %v2641
  %s2645 = scalar_lea.vmem %s0, 1921
  %v2646 = vld [vmem:[%s2645] ss:$8 sm:$0xf]
  %s2647 = scalar_lea.vmem %s0, 1921
  %v2648 = vld [vmem:[%s2647] ss:$8 sm:$0xf0]
  %vm2649 = vcmask 1047556
  %v2650 = vsel %vm2649, %v2648, %v2646
  %2651 = vrot.lane.b32.xlu0 %v2650, 8
  %v2652 = vpop.permute.xlu0 %2651
  %vm2653 = vcmask 130112
  %s2654 = scalar_lea.vmem %s1, 240
  %2655 = vst.msk [vmem:[%s2654] sm:$0xff] %vm2653, %v2652
  %s2656 = scalar_lea.vmem %s0, 193
  %v2657 = vld [vmem:[%s2656] ss:$8 sm:$0xf]
  %s2658 = scalar_lea.vmem %s0, 193
  %v2659 = vld [vmem:[%s2658] ss:$8 sm:$0xf0]
  %vm2660 = vcmask 1047556
  %v2661 = vsel %vm2660, %v2659, %v2657
  %2662 = vrot.lane.b32.xlu0 %v2661, 8
  %v2663 = vpop.permute.xlu0 %2662
  %vm2664 = vcmask 130112
  %s2665 = scalar_lea.vmem %s1, 24
  %2666 = vst.msk [vmem:[%s2665] sm:$0xff] %vm2664, %v2663
  %s2667 = scalar_lea.vmem %s0, 449
  %v2668 = vld [vmem:[%s2667] ss:$8 sm:$0xf]
  %s2669 = scalar_lea.vmem %s0, 449
  %v2670 = vld [vmem:[%s2669] ss:$8 sm:$0xf0]
  %vm2671 = vcmask 1047556
  %v2672 = vsel %vm2671, %v2670, %v2668
  %2673 = vrot.lane.b32.xlu0 %v2672, 8
  %v2674 = vpop.permute.xlu0 %2673
  %vm2675 = vcmask 130112
  %s2676 = scalar_lea.vmem %s1, 56
  %2677 = vst.msk [vmem:[%s2676] sm:$0xff] %vm2675, %v2674
  %s2678 = scalar_lea.vmem %s0, 705
  %v2679 = vld [vmem:[%s2678] ss:$8 sm:$0xf]
  %s2680 = scalar_lea.vmem %s0, 705
  %v2681 = vld [vmem:[%s2680] ss:$8 sm:$0xf0]
  %vm2682 = vcmask 1047556
  %v2683 = vsel %vm2682, %v2681, %v2679
  %2684 = vrot.lane.b32.xlu0 %v2683, 8
  %v2685 = vpop.permute.xlu0 %2684
  %vm2686 = vcmask 130112
  %s2687 = scalar_lea.vmem %s1, 88
  %2688 = vst.msk [vmem:[%s2687] sm:$0xff] %vm2686, %v2685
  %s2689 = scalar_lea.vmem %s0, 961
  %v2690 = vld [vmem:[%s2689] ss:$8 sm:$0xf]
  %s2691 = scalar_lea.vmem %s0, 961
  %v2692 = vld [vmem:[%s2691] ss:$8 sm:$0xf0]
  %vm2693 = vcmask 1047556
  %v2694 = vsel %vm2693, %v2692, %v2690
  %2695 = vrot.lane.b32.xlu0 %v2694, 8
  %v2696 = vpop.permute.xlu0 %2695
  %vm2697 = vcmask 130112
  %s2698 = scalar_lea.vmem %s1, 120
  %2699 = vst.msk [vmem:[%s2698] sm:$0xff] %vm2697, %v2696
  %s2700 = scalar_lea.vmem %s0, 1217
  %v2701 = vld [vmem:[%s2700] ss:$8 sm:$0xf]
  %s2702 = scalar_lea.vmem %s0, 1217
  %v2703 = vld [vmem:[%s2702] ss:$8 sm:$0xf0]
  %vm2704 = vcmask 1047556
  %v2705 = vsel %vm2704, %v2703, %v2701
  %2706 = vrot.lane.b32.xlu0 %v2705, 8
  %v2707 = vpop.permute.xlu0 %2706
  %vm2708 = vcmask 130112
  %s2709 = scalar_lea.vmem %s1, 152
  %2710 = vst.msk [vmem:[%s2709] sm:$0xff] %vm2708, %v2707
  %s2711 = scalar_lea.vmem %s0, 1473
  %v2712 = vld [vmem:[%s2711] ss:$8 sm:$0xf]
  %s2713 = scalar_lea.vmem %s0, 1473
  %v2714 = vld [vmem:[%s2713] ss:$8 sm:$0xf0]
  %vm2715 = vcmask 1047556
  %v2716 = vsel %vm2715, %v2714, %v2712
  %2717 = vrot.lane.b32.xlu0 %v2716, 8
  %v2718 = vpop.permute.xlu0 %2717
  %vm2719 = vcmask 130112
  %s2720 = scalar_lea.vmem %s1, 184
  %2721 = vst.msk [vmem:[%s2720] sm:$0xff] %vm2719, %v2718
  %s2722 = scalar_lea.vmem %s0, 1729
  %v2723 = vld [vmem:[%s2722] ss:$8 sm:$0xf]
  %s2724 = scalar_lea.vmem %s0, 1729
  %v2725 = vld [vmem:[%s2724] ss:$8 sm:$0xf0]
  %vm2726 = vcmask 1047556
  %v2727 = vsel %vm2726, %v2725, %v2723
  %2728 = vrot.lane.b32.xlu0 %v2727, 8
  %v2729 = vpop.permute.xlu0 %2728
  %vm2730 = vcmask 130112
  %s2731 = scalar_lea.vmem %s1, 216
  %2732 = vst.msk [vmem:[%s2731] sm:$0xff] %vm2730, %v2729
  %s2733 = scalar_lea.vmem %s0, 1985
  %v2734 = vld [vmem:[%s2733] ss:$8 sm:$0xf]
  %s2735 = scalar_lea.vmem %s0, 1985
  %v2736 = vld [vmem:[%s2735] ss:$8 sm:$0xf0]
  %vm2737 = vcmask 1047556
  %v2738 = vsel %vm2737, %v2736, %v2734
  %2739 = vrot.lane.b32.xlu0 %v2738, 8
  %v2740 = vpop.permute.xlu0 %2739
  %vm2741 = vcmask 130112
  %s2742 = scalar_lea.vmem %s1, 248
  %2743 = vst.msk [vmem:[%s2742] sm:$0xff] %vm2741, %v2740

// kernel: swt_jsp_forward.1
$region0: #{swt_jsp_forward.1}
  #allocation0 [shape = 'u32[]', space=smem, size = 0x4, offset = 0x4, fixed_abs, tag = 'smem constant byte address 0x4 - core index']
  #allocation1 [shape = 'u32[144,128]{1,0:T(1,128)}', space=vmem, size = 0x12000, scoped, tag = 'internal scratch']
  %s0 = inlined_call_operand.vmem [shape: f32[128,24], index: 0, kind: input, shape index: {}]
  %s1 = inlined_call_operand.vmem [shape: f32[128,24], index: 1, kind: input, shape index: {}]
  %s2 = inlined_call_operand.vmem [shape: bf16[24,32], index: 2, kind: input, shape index: {}]
  %s3 = inlined_call_operand.vmem [shape: f32[1,32], index: 3, kind: input, shape index: {}, may-alias: {3,5,7,9,13,16,20,22}]
  %s4 = inlined_call_operand.vmem [shape: bf16[24,32], index: 4, kind: input, shape index: {}]
  %s5 = inlined_call_operand.vmem [shape: f32[1,32], index: 5, kind: input, shape index: {}, may-alias: {3,5,7,9,13,16,20,22}]
  %s6 = inlined_call_operand.vmem [shape: f32[1,32], index: 6, kind: input, shape index: {}, may-alias: {6,8,15,21}]
  %s7 = inlined_call_operand.vmem [shape: f32[1,32], index: 7, kind: input, shape index: {}, may-alias: {3,5,7,9,13,16,20,22}]
  %s8 = inlined_call_operand.vmem [shape: f32[1,32], index: 8, kind: input, shape index: {}, may-alias: {6,8,15,21}]
  %s9 = inlined_call_operand.vmem [shape: f32[1,32], index: 9, kind: input, shape index: {}, may-alias: {3,5,7,9,13,16,20,22}]
  %s10 = inlined_call_operand.vmem [shape: bf16[4,32,32], index: 10, kind: input, shape index: {}]
  %s11 = inlined_call_operand.vmem [shape: f32[4,1,32], index: 11, kind: input, shape index: {}]
  %s12 = inlined_call_operand.vmem [shape: bf16[4,32,32], index: 12, kind: input, shape index: {}]
  %s13 = inlined_call_operand.vmem [shape: f32[1,32], index: 13, kind: input, shape index: {}, may-alias: {3,5,7,9,13,16,20,22}]
  %s14 = inlined_call_operand.vmem [shape: f32[4,64,64], index: 14, kind: input, shape index: {}]
  %s15 = inlined_call_operand.vmem [shape: f32[1,32], index: 15, kind: input, shape index: {}, may-alias: {6,8,15,21}]
  %s16 = inlined_call_operand.vmem [shape: f32[1,32], index: 16, kind: input, shape index: {}, may-alias: {3,5,7,9,13,16,20,22}]
  %s17 = inlined_call_operand.vmem [shape: bf16[32,128], index: 17, kind: input, shape index: {}]
  %s18 = inlined_call_operand.vmem [shape: f32[1,128], index: 18, kind: input, shape index: {}, may-alias: {18,24}]
  %s19 = inlined_call_operand.vmem [shape: bf16[128,32], index: 19, kind: input, shape index: {}]
  %s20 = inlined_call_operand.vmem [shape: f32[1,32], index: 20, kind: input, shape index: {}, may-alias: {3,5,7,9,13,16,20,22}]
  %s21 = inlined_call_operand.vmem [shape: f32[1,32], index: 21, kind: input, shape index: {}, may-alias: {6,8,15,21}]
  %s22 = inlined_call_operand.vmem [shape: f32[1,32], index: 22, kind: input, shape index: {}, may-alias: {3,5,7,9,13,16,20,22}]
  %s23 = inlined_call_operand.vmem [shape: bf16[32,128], index: 23, kind: input, shape index: {}]
  %s24 = inlined_call_operand.vmem [shape: f32[1,128], index: 24, kind: input, shape index: {}, may-alias: {18,24}]
  %s25 = inlined_call_operand.vmem [shape: f32[128,128], index: 25, kind: output, shape index: {}]
  %s26 = sld [smem:[#allocation0]]
  $region133: #{swt_jsp_forward.1} parent=0
    _
  %s28 = ssub.s32 1, %s26
  %s29 = scalar_select 0, %s28, %s26
  loop: start=0, step=1, limit=4
  $region2: #{swt_jsp_forward.1} parent=0 // loop_pre_header
    _
  $region3: #{swt_jsp_forward.1} parent=0 // loop_header
    %s31 = sphi 0, %s35
    %p32 = scmp.ge.s32.totalorder %s31, 4
    %s41 = sphi 0, %s43
    %s44 = sphi 0, %s41
    %s45 = sphi 0, %s44
    %s61 = sphi 0, %s45
    %s67 = sphi 0, %s69
    %s70 = sphi 0, %s67
    %s71 = sphi 0, %s70
    %s87 = sphi 0, %s71
    %s91 = sphi 0, %s91
    %s93 = sphi 0, %s91
    %s94 = sphi 0, %s93
    %s108 = sphi 0, %s94
    %s112 = sphi 0, %s112
    %s114 = sphi 0, %s112
    %s115 = sphi 0, %s114
    %s129 = sphi 0, %s115
    %s133 = sphi 0, %s133
    %s135 = sphi 0, %s133
    %s136 = sphi 0, %s135
    %s150 = sphi 0, %s136
    %s154 = sphi 0, %s154
    %s156 = sphi 0, %s154
    %s157 = sphi 0, %s156
    %s171 = sphi 0, %s157
    %s175 = sphi 0, %s175
    %s177 = sphi 0, %s175
    %s178 = sphi 0, %s177
    %s192 = sphi 0, %s178
    %s196 = sphi 0, %s196
    %s198 = sphi 0, %s196
    %s199 = sphi 0, %s198
    %s213 = sphi 0, %s199
    %s217 = sphi 0, %s217
    %s219 = sphi 0, %s217
    %s220 = sphi 0, %s219
    %s234 = sphi 0, %s220
    %s238 = sphi 0, %s238
    %s240 = sphi 0, %s238
    %s241 = sphi 0, %s240
    %s255 = sphi 0, %s241
    %s259 = sphi 0, %s259
    %s261 = sphi 0, %s259
    %s262 = sphi 0, %s261
    %s276 = sphi 0, %s262
    %s280 = sphi 0, %s280
    %s282 = sphi 0, %s280
    %s283 = sphi 0, %s282
    %s297 = sphi 0, %s283
    %s301 = sphi 0, %s301
    %s303 = sphi 0, %s301
    %s304 = sphi 0, %s303
    %s318 = sphi 0, %s304
    %s322 = sphi 0, %s322
    %s324 = sphi 0, %s322
    %s325 = sphi 0, %s324
    %s339 = sphi 0, %s325
    %s343 = sphi 0, %s343
    %s345 = sphi 0, %s343
    %s346 = sphi 0, %s345
    %s360 = sphi 0, %s346
    %s364 = sphi 0, %s364
    %s366 = sphi 0, %s364
    %s367 = sphi 0, %s366
    %s381 = sphi 0, %s367
    %s385 = sphi 0, %s385
    %s387 = sphi 0, %s385
    %s388 = sphi 0, %s387
    %s402 = sphi 0, %s388
    %s406 = sphi 0, %s406
    %s408 = sphi 0, %s406
    %s409 = sphi 0, %s408
    %s423 = sphi 0, %s409
    %s427 = sphi 0, %s427
    %s429 = sphi 0, %s427
    %s430 = sphi 0, %s429
    %s444 = sphi 0, %s430
    %s448 = sphi 0, %s448
    %s450 = sphi 0, %s448
    %s451 = sphi 0, %s450
    %s465 = sphi 0, %s451
    %s469 = sphi 0, %s469
    %s471 = sphi 0, %s469
    %s472 = sphi 0, %s471
    %s486 = sphi 0, %s472
    %s490 = sphi 0, %s490
    %s492 = sphi 0, %s490
    %s493 = sphi 0, %s492
    %s507 = sphi 0, %s493
    %s511 = sphi 0, %s511
    %s513 = sphi 0, %s511
    %s514 = sphi 0, %s513
    %s528 = sphi 0, %s514
    %s532 = sphi 0, %s532
    %s534 = sphi 0, %s532
    %s535 = sphi 0, %s534
    %s549 = sphi 0, %s535
    %s553 = sphi 0, %s553
    %s555 = sphi 0, %s553
    %s556 = sphi 0, %s555
    %s570 = sphi 0, %s556
    %s576 = sphi 0, %s578
    %s579 = sphi 0, %s576
    %s580 = sphi 0, %s579
    %s596 = sphi 0, %s580
  $region4: #{swt_jsp_forward.1} parent=0 // loop_header_branch
    %34 = sbr.rel (%p32) target = $region8
  $region5: #{swt_jsp_forward.1} parent=0 // loop_body
    %s36 = ssub.s32 %s31, 1
    %s37 = ssub.s32 %s31, 2
    %s38 = sadd.s32 %s31, 1
    %s39 = ssub.s32 %s31, %s38
    %p40 = scmp.eq.s32.totalorder %s39, 0
    %s42 = sadd.s32 %s41, 1
    %s43 = scalar_select %p40, %s41, %s42
    %p46 = pneg %p40
    %p47 = scmp.eq.s32.totalorder %s31, 1
    %p48 = por %p46, %p47
    %p49 = scmp.ne.s32.totalorder %s41, %s44
    %p50 = scmp.eq.s32.totalorder %s31, 0
    %p51 = por %p49, %p50
    %p52 = scmp.ne.s32.totalorder %s41, %s44
    %p53 = scmp.eq.s32.totalorder %s36, 1
    %p54 = por %p52, %p53
    %p55 = scmp.ne.s32.totalorder %s44, %s45
    %p56 = scmp.eq.s32.totalorder %s36, 0
    %p57 = por %p55, %p56
    %p58 = scmp.ne.s32.totalorder %s44, %s45
    %p59 = scmp.eq.s32.totalorder %s37, 1
    %p60 = por %p58, %p59
    %p62 = scmp.ne.s32.totalorder %s45, %s61
    %p63 = scmp.eq.s32.totalorder %s37, 0
    %p64 = por %p62, %p63
    %s65 = ssub.s32 %s31, %s38
    %p66 = scmp.eq.s32.totalorder %s65, 0
    %s68 = sadd.s32 %s67, 1
    %s69 = scalar_select %p66, %s67, %s68
    %p72 = pneg %p66
    %p73 = scmp.eq.s32.totalorder %s31, 1
    %p74 = por %p72, %p73
    %p75 = scmp.ne.s32.totalorder %s67, %s70
    %p76 = scmp.eq.s32.totalorder %s31, 0
    %p77 = por %p75, %p76
    %p78 = scmp.ne.s32.totalorder %s67, %s70
    %p79 = scmp.eq.s32.totalorder %s36, 1
    %p80 = por %p78, %p79
    %p81 = scmp.ne.s32.totalorder %s70, %s71
    %p82 = scmp.eq.s32.totalorder %s36, 0
    %p83 = por %p81, %p82
    %p84 = scmp.ne.s32.totalorder %s70, %s71
    %p85 = scmp.eq.s32.totalorder %s37, 1
    %p86 = por %p84, %p85
    %p88 = scmp.ne.s32.totalorder %s71, %s87
    %p89 = scmp.eq.s32.totalorder %s37, 0
    %p90 = por %p88, %p89
    %s92 = sadd.s32 %s91, 1
    %p95 = scmp.eq.s32.totalorder %s31, 1
    %p96 = scmp.ne.s32.totalorder %s91, %s93
    %p97 = scmp.eq.s32.totalorder %s31, 0
    %p98 = por %p96, %p97
    %p99 = scmp.ne.s32.totalorder %s91, %s93
    %p100 = scmp.eq.s32.totalorder %s36, 1
    %p101 = por %p99, %p100
    %p102 = scmp.ne.s32.totalorder %s93, %s94
    %p103 = scmp.eq.s32.totalorder %s36, 0
    %p104 = por %p102, %p103
    %p105 = scmp.ne.s32.totalorder %s93, %s94
    %p106 = scmp.eq.s32.totalorder %s37, 1
    %p107 = por %p105, %p106
    %p109 = scmp.ne.s32.totalorder %s94, %s108
    %p110 = scmp.eq.s32.totalorder %s37, 0
    %p111 = por %p109, %p110
    %s113 = sadd.s32 %s112, 1
    %p116 = scmp.eq.s32.totalorder %s31, 1
    %p117 = scmp.ne.s32.totalorder %s112, %s114
    %p118 = scmp.eq.s32.totalorder %s31, 0
    %p119 = por %p117, %p118
    %p120 = scmp.ne.s32.totalorder %s112, %s114
    %p121 = scmp.eq.s32.totalorder %s36, 1
    %p122 = por %p120, %p121
    %p123 = scmp.ne.s32.totalorder %s114, %s115
    %p124 = scmp.eq.s32.totalorder %s36, 0
    %p125 = por %p123, %p124
    %p126 = scmp.ne.s32.totalorder %s114, %s115
    %p127 = scmp.eq.s32.totalorder %s37, 1
    %p128 = por %p126, %p127
    %p130 = scmp.ne.s32.totalorder %s115, %s129
    %p131 = scmp.eq.s32.totalorder %s37, 0
    %p132 = por %p130, %p131
    %s134 = sadd.s32 %s133, 1
    %p137 = scmp.eq.s32.totalorder %s31, 1
    %p138 = scmp.ne.s32.totalorder %s133, %s135
    %p139 = scmp.eq.s32.totalorder %s31, 0
    %p140 = por %p138, %p139
    %p141 = scmp.ne.s32.totalorder %s133, %s135
    %p142 = scmp.eq.s32.totalorder %s36, 1
    %p143 = por %p141, %p142
    %p144 = scmp.ne.s32.totalorder %s135, %s136
    %p145 = scmp.eq.s32.totalorder %s36, 0
    %p146 = por %p144, %p145
    %p147 = scmp.ne.s32.totalorder %s135, %s136
    %p148 = scmp.eq.s32.totalorder %s37, 1
    %p149 = por %p147, %p148
    %p151 = scmp.ne.s32.totalorder %s136, %s150
    %p152 = scmp.eq.s32.totalorder %s37, 0
    %p153 = por %p151, %p152
    %s155 = sadd.s32 %s154, 1
    %p158 = scmp.eq.s32.totalorder %s31, 1
    %p159 = scmp.ne.s32.totalorder %s154, %s156
    %p160 = scmp.eq.s32.totalorder %s31, 0
    %p161 = por %p159, %p160
    %p162 = scmp.ne.s32.totalorder %s154, %s156
    %p163 = scmp.eq.s32.totalorder %s36, 1
    %p164 = por %p162, %p163
    %p165 = scmp.ne.s32.totalorder %s156, %s157
    %p166 = scmp.eq.s32.totalorder %s36, 0
    %p167 = por %p165, %p166
    %p168 = scmp.ne.s32.totalorder %s156, %s157
    %p169 = scmp.eq.s32.totalorder %s37, 1
    %p170 = por %p168, %p169
    %p172 = scmp.ne.s32.totalorder %s157, %s171
    %p173 = scmp.eq.s32.totalorder %s37, 0
    %p174 = por %p172, %p173
    %s176 = sadd.s32 %s175, 1
    %p179 = scmp.eq.s32.totalorder %s31, 1
    %p180 = scmp.ne.s32.totalorder %s175, %s177
    %p181 = scmp.eq.s32.totalorder %s31, 0
    %p182 = por %p180, %p181
    %p183 = scmp.ne.s32.totalorder %s175, %s177
    %p184 = scmp.eq.s32.totalorder %s36, 1
    %p185 = por %p183, %p184
    %p186 = scmp.ne.s32.totalorder %s177, %s178
    %p187 = scmp.eq.s32.totalorder %s36, 0
    %p188 = por %p186, %p187
    %p189 = scmp.ne.s32.totalorder %s177, %s178
    %p190 = scmp.eq.s32.totalorder %s37, 1
    %p191 = por %p189, %p190
    %p193 = scmp.ne.s32.totalorder %s178, %s192
    %p194 = scmp.eq.s32.totalorder %s37, 0
    %p195 = por %p193, %p194
    %s197 = sadd.s32 %s196, 1
    %p200 = scmp.eq.s32.totalorder %s31, 1
    %p201 = scmp.ne.s32.totalorder %s196, %s198
    %p202 = scmp.eq.s32.totalorder %s31, 0
    %p203 = por %p201, %p202
    %p204 = scmp.ne.s32.totalorder %s196, %s198
    %p205 = scmp.eq.s32.totalorder %s36, 1
    %p206 = por %p204, %p205
    %p207 = scmp.ne.s32.totalorder %s198, %s199
    %p208 = scmp.eq.s32.totalorder %s36, 0
    %p209 = por %p207, %p208
    %p210 = scmp.ne.s32.totalorder %s198, %s199
    %p211 = scmp.eq.s32.totalorder %s37, 1
    %p212 = por %p210, %p211
    %p214 = scmp.ne.s32.totalorder %s199, %s213
    %p215 = scmp.eq.s32.totalorder %s37, 0
    %p216 = por %p214, %p215
    %s218 = sadd.s32 %s217, 1
    %p221 = scmp.eq.s32.totalorder %s31, 1
    %p222 = scmp.ne.s32.totalorder %s217, %s219
    %p223 = scmp.eq.s32.totalorder %s31, 0
    %p224 = por %p222, %p223
    %p225 = scmp.ne.s32.totalorder %s217, %s219
    %p226 = scmp.eq.s32.totalorder %s36, 1
    %p227 = por %p225, %p226
    %p228 = scmp.ne.s32.totalorder %s219, %s220
    %p229 = scmp.eq.s32.totalorder %s36, 0
    %p230 = por %p228, %p229
    %p231 = scmp.ne.s32.totalorder %s219, %s220
    %p232 = scmp.eq.s32.totalorder %s37, 1
    %p233 = por %p231, %p232
    %p235 = scmp.ne.s32.totalorder %s220, %s234
    %p236 = scmp.eq.s32.totalorder %s37, 0
    %p237 = por %p235, %p236
    %s239 = sadd.s32 %s238, 1
    %p242 = scmp.eq.s32.totalorder %s31, 1
    %p243 = scmp.ne.s32.totalorder %s238, %s240
    %p244 = scmp.eq.s32.totalorder %s31, 0
    %p245 = por %p243, %p244
    %p246 = scmp.ne.s32.totalorder %s238, %s240
    %p247 = scmp.eq.s32.totalorder %s36, 1
    %p248 = por %p246, %p247
    %p249 = scmp.ne.s32.totalorder %s240, %s241
    %p250 = scmp.eq.s32.totalorder %s36, 0
    %p251 = por %p249, %p250
    %p252 = scmp.ne.s32.totalorder %s240, %s241
    %p253 = scmp.eq.s32.totalorder %s37, 1
    %p254 = por %p252, %p253
    %p256 = scmp.ne.s32.totalorder %s241, %s255
    %p257 = scmp.eq.s32.totalorder %s37, 0
    %p258 = por %p256, %p257
    %s260 = sadd.s32 %s259, 1
    %p263 = scmp.eq.s32.totalorder %s31, 1
    %p264 = scmp.ne.s32.totalorder %s259, %s261
    %p265 = scmp.eq.s32.totalorder %s31, 0
    %p266 = por %p264, %p265
    %p267 = scmp.ne.s32.totalorder %s259, %s261
    %p268 = scmp.eq.s32.totalorder %s36, 1
    %p269 = por %p267, %p268
    %p270 = scmp.ne.s32.totalorder %s261, %s262
    %p271 = scmp.eq.s32.totalorder %s36, 0
    %p272 = por %p270, %p271
    %p273 = scmp.ne.s32.totalorder %s261, %s262
    %p274 = scmp.eq.s32.totalorder %s37, 1
    %p275 = por %p273, %p274
    %p277 = scmp.ne.s32.totalorder %s262, %s276
    %p278 = scmp.eq.s32.totalorder %s37, 0
    %p279 = por %p277, %p278
    %s281 = sadd.s32 %s280, 1
    %p284 = scmp.eq.s32.totalorder %s31, 1
    %p285 = scmp.ne.s32.totalorder %s280, %s282
    %p286 = scmp.eq.s32.totalorder %s31, 0
    %p287 = por %p285, %p286
    %p288 = scmp.ne.s32.totalorder %s280, %s282
    %p289 = scmp.eq.s32.totalorder %s36, 1
    %p290 = por %p288, %p289
    %p291 = scmp.ne.s32.totalorder %s282, %s283
    %p292 = scmp.eq.s32.totalorder %s36, 0
    %p293 = por %p291, %p292
    %p294 = scmp.ne.s32.totalorder %s282, %s283
    %p295 = scmp.eq.s32.totalorder %s37, 1
    %p296 = por %p294, %p295
    %p298 = scmp.ne.s32.totalorder %s283, %s297
    %p299 = scmp.eq.s32.totalorder %s37, 0
    %p300 = por %p298, %p299
    %s302 = sadd.s32 %s301, 1
    %p305 = scmp.eq.s32.totalorder %s31, 1
    %p306 = scmp.ne.s32.totalorder %s301, %s303
    %p307 = scmp.eq.s32.totalorder %s31, 0
    %p308 = por %p306, %p307
    %p309 = scmp.ne.s32.totalorder %s301, %s303
    %p310 = scmp.eq.s32.totalorder %s36, 1
    %p311 = por %p309, %p310
    %p312 = scmp.ne.s32.totalorder %s303, %s304
    %p313 = scmp.eq.s32.totalorder %s36, 0
    %p314 = por %p312, %p313
    %p315 = scmp.ne.s32.totalorder %s303, %s304
    %p316 = scmp.eq.s32.totalorder %s37, 1
    %p317 = por %p315, %p316
    %p319 = scmp.ne.s32.totalorder %s304, %s318
    %p320 = scmp.eq.s32.totalorder %s37, 0
    %p321 = por %p319, %p320
    %s323 = sadd.s32 %s322, 1
    %p326 = scmp.eq.s32.totalorder %s31, 1
    %p327 = scmp.ne.s32.totalorder %s322, %s324
    %p328 = scmp.eq.s32.totalorder %s31, 0
    %p329 = por %p327, %p328
    %p330 = scmp.ne.s32.totalorder %s322, %s324
    %p331 = scmp.eq.s32.totalorder %s36, 1
    %p332 = por %p330, %p331
    %p333 = scmp.ne.s32.totalorder %s324, %s325
    %p334 = scmp.eq.s32.totalorder %s36, 0
    %p335 = por %p333, %p334
    %p336 = scmp.ne.s32.totalorder %s324, %s325
    %p337 = scmp.eq.s32.totalorder %s37, 1
    %p338 = por %p336, %p337
    %p340 = scmp.ne.s32.totalorder %s325, %s339
    %p341 = scmp.eq.s32.totalorder %s37, 0
    %p342 = por %p340, %p341
    %s344 = sadd.s32 %s343, 1
    %p347 = scmp.eq.s32.totalorder %s31, 1
    %p348 = scmp.ne.s32.totalorder %s343, %s345
    %p349 = scmp.eq.s32.totalorder %s31, 0
    %p350 = por %p348, %p349
    %p351 = scmp.ne.s32.totalorder %s343, %s345
    %p352 = scmp.eq.s32.totalorder %s36, 1
    %p353 = por %p351, %p352
    %p354 = scmp.ne.s32.totalorder %s345, %s346
    %p355 = scmp.eq.s32.totalorder %s36, 0
    %p356 = por %p354, %p355
    %p357 = scmp.ne.s32.totalorder %s345, %s346
    %p358 = scmp.eq.s32.totalorder %s37, 1
    %p359 = por %p357, %p358
    %p361 = scmp.ne.s32.totalorder %s346, %s360
    %p362 = scmp.eq.s32.totalorder %s37, 0
    %p363 = por %p361, %p362
    %s365 = sadd.s32 %s364, 1
    %p368 = scmp.eq.s32.totalorder %s31, 1
    %p369 = scmp.ne.s32.totalorder %s364, %s366
    %p370 = scmp.eq.s32.totalorder %s31, 0
    %p371 = por %p369, %p370
    %p372 = scmp.ne.s32.totalorder %s364, %s366
    %p373 = scmp.eq.s32.totalorder %s36, 1
    %p374 = por %p372, %p373
    %p375 = scmp.ne.s32.totalorder %s366, %s367
    %p376 = scmp.eq.s32.totalorder %s36, 0
    %p377 = por %p375, %p376
    %p378 = scmp.ne.s32.totalorder %s366, %s367
    %p379 = scmp.eq.s32.totalorder %s37, 1
    %p380 = por %p378, %p379
    %p382 = scmp.ne.s32.totalorder %s367, %s381
    %p383 = scmp.eq.s32.totalorder %s37, 0
    %p384 = por %p382, %p383
    %s386 = sadd.s32 %s385, 1
    %p389 = scmp.eq.s32.totalorder %s31, 1
    %p390 = scmp.ne.s32.totalorder %s385, %s387
    %p391 = scmp.eq.s32.totalorder %s31, 0
    %p392 = por %p390, %p391
    %p393 = scmp.ne.s32.totalorder %s385, %s387
    %p394 = scmp.eq.s32.totalorder %s36, 1
    %p395 = por %p393, %p394
    %p396 = scmp.ne.s32.totalorder %s387, %s388
    %p397 = scmp.eq.s32.totalorder %s36, 0
    %p398 = por %p396, %p397
    %p399 = scmp.ne.s32.totalorder %s387, %s388
    %p400 = scmp.eq.s32.totalorder %s37, 1
    %p401 = por %p399, %p400
    %p403 = scmp.ne.s32.totalorder %s388, %s402
    %p404 = scmp.eq.s32.totalorder %s37, 0
    %p405 = por %p403, %p404
    %s407 = sadd.s32 %s406, 1
    %p410 = scmp.eq.s32.totalorder %s31, 1
    %p411 = scmp.ne.s32.totalorder %s406, %s408
    %p412 = scmp.eq.s32.totalorder %s31, 0
    %p413 = por %p411, %p412
    %p414 = scmp.ne.s32.totalorder %s406, %s408
    %p415 = scmp.eq.s32.totalorder %s36, 1
    %p416 = por %p414, %p415
    %p417 = scmp.ne.s32.totalorder %s408, %s409
    %p418 = scmp.eq.s32.totalorder %s36, 0
    %p419 = por %p417, %p418
    %p420 = scmp.ne.s32.totalorder %s408, %s409
    %p421 = scmp.eq.s32.totalorder %s37, 1
    %p422 = por %p420, %p421
    %p424 = scmp.ne.s32.totalorder %s409, %s423
    %p425 = scmp.eq.s32.totalorder %s37, 0
    %p426 = por %p424, %p425
    %s428 = sadd.s32 %s427, 1
    %p431 = scmp.eq.s32.totalorder %s31, 1
    %p432 = scmp.ne.s32.totalorder %s427, %s429
    %p433 = scmp.eq.s32.totalorder %s31, 0
    %p434 = por %p432, %p433
    %p435 = scmp.ne.s32.totalorder %s427, %s429
    %p436 = scmp.eq.s32.totalorder %s36, 1
    %p437 = por %p435, %p436
    %p438 = scmp.ne.s32.totalorder %s429, %s430
    %p439 = scmp.eq.s32.totalorder %s36, 0
    %p440 = por %p438, %p439
    %p441 = scmp.ne.s32.totalorder %s429, %s430
    %p442 = scmp.eq.s32.totalorder %s37, 1
    %p443 = por %p441, %p442
    %p445 = scmp.ne.s32.totalorder %s430, %s444
    %p446 = scmp.eq.s32.totalorder %s37, 0
    %p447 = por %p445, %p446
    %s449 = sadd.s32 %s448, 1
    %p452 = scmp.eq.s32.totalorder %s31, 1
    %p453 = scmp.ne.s32.totalorder %s448, %s450
    %p454 = scmp.eq.s32.totalorder %s31, 0
    %p455 = por %p453, %p454
    %p456 = scmp.ne.s32.totalorder %s448, %s450
    %p457 = scmp.eq.s32.totalorder %s36, 1
    %p458 = por %p456, %p457
    %p459 = scmp.ne.s32.totalorder %s450, %s451
    %p460 = scmp.eq.s32.totalorder %s36, 0
    %p461 = por %p459, %p460
    %p462 = scmp.ne.s32.totalorder %s450, %s451
    %p463 = scmp.eq.s32.totalorder %s37, 1
    %p464 = por %p462, %p463
    %p466 = scmp.ne.s32.totalorder %s451, %s465
    %p467 = scmp.eq.s32.totalorder %s37, 0
    %p468 = por %p466, %p467
    %s470 = sadd.s32 %s469, 1
    %p473 = scmp.eq.s32.totalorder %s31, 1
    %p474 = scmp.ne.s32.totalorder %s469, %s471
    %p475 = scmp.eq.s32.totalorder %s31, 0
    %p476 = por %p474, %p475
    %p477 = scmp.ne.s32.totalorder %s469, %s471
    %p478 = scmp.eq.s32.totalorder %s36, 1
    %p479 = por %p477, %p478
    %p480 = scmp.ne.s32.totalorder %s471, %s472
    %p481 = scmp.eq.s32.totalorder %s36, 0
    %p482 = por %p480, %p481
    %p483 = scmp.ne.s32.totalorder %s471, %s472
    %p484 = scmp.eq.s32.totalorder %s37, 1
    %p485 = por %p483, %p484
    %p487 = scmp.ne.s32.totalorder %s472, %s486
    %p488 = scmp.eq.s32.totalorder %s37, 0
    %p489 = por %p487, %p488
    %s491 = sadd.s32 %s490, 1
    %p494 = scmp.eq.s32.totalorder %s31, 1
    %p495 = scmp.ne.s32.totalorder %s490, %s492
    %p496 = scmp.eq.s32.totalorder %s31, 0
    %p497 = por %p495, %p496
    %p498 = scmp.ne.s32.totalorder %s490, %s492
    %p499 = scmp.eq.s32.totalorder %s36, 1
    %p500 = por %p498, %p499
    %p501 = scmp.ne.s32.totalorder %s492, %s493
    %p502 = scmp.eq.s32.totalorder %s36, 0
    %p503 = por %p501, %p502
    %p504 = scmp.ne.s32.totalorder %s492, %s493
    %p505 = scmp.eq.s32.totalorder %s37, 1
    %p506 = por %p504, %p505
    %p508 = scmp.ne.s32.totalorder %s493, %s507
    %p509 = scmp.eq.s32.totalorder %s37, 0
    %p510 = por %p508, %p509
    %s512 = sadd.s32 %s511, 1
    %p515 = scmp.eq.s32.totalorder %s31, 1
    %p516 = scmp.ne.s32.totalorder %s511, %s513
    %p517 = scmp.eq.s32.totalorder %s31, 0
    %p518 = por %p516, %p517
    %p519 = scmp.ne.s32.totalorder %s511, %s513
    %p520 = scmp.eq.s32.totalorder %s36, 1
    %p521 = por %p519, %p520
    %p522 = scmp.ne.s32.totalorder %s513, %s514
    %p523 = scmp.eq.s32.totalorder %s36, 0
    %p524 = por %p522, %p523
    %p525 = scmp.ne.s32.totalorder %s513, %s514
    %p526 = scmp.eq.s32.totalorder %s37, 1
    %p527 = por %p525, %p526
    %p529 = scmp.ne.s32.totalorder %s514, %s528
    %p530 = scmp.eq.s32.totalorder %s37, 0
    %p531 = por %p529, %p530
    %s533 = sadd.s32 %s532, 1
    %p536 = scmp.eq.s32.totalorder %s31, 1
    %p537 = scmp.ne.s32.totalorder %s532, %s534
    %p538 = scmp.eq.s32.totalorder %s31, 0
    %p539 = por %p537, %p538
    %p540 = scmp.ne.s32.totalorder %s532, %s534
    %p541 = scmp.eq.s32.totalorder %s36, 1
    %p542 = por %p540, %p541
    %p543 = scmp.ne.s32.totalorder %s534, %s535
    %p544 = scmp.eq.s32.totalorder %s36, 0
    %p545 = por %p543, %p544
    %p546 = scmp.ne.s32.totalorder %s534, %s535
    %p547 = scmp.eq.s32.totalorder %s37, 1
    %p548 = por %p546, %p547
    %p550 = scmp.ne.s32.totalorder %s535, %s549
    %p551 = scmp.eq.s32.totalorder %s37, 0
    %p552 = por %p550, %p551
    %s554 = sadd.s32 %s553, 1
    %p557 = scmp.eq.s32.totalorder %s31, 1
    %p558 = scmp.ne.s32.totalorder %s553, %s555
    %p559 = scmp.eq.s32.totalorder %s31, 0
    %p560 = por %p558, %p559
    %p561 = scmp.ne.s32.totalorder %s553, %s555
    %p562 = scmp.eq.s32.totalorder %s36, 1
    %p563 = por %p561, %p562
    %p564 = scmp.ne.s32.totalorder %s555, %s556
    %p565 = scmp.eq.s32.totalorder %s36, 0
    %p566 = por %p564, %p565
    %p567 = scmp.ne.s32.totalorder %s555, %s556
    %p568 = scmp.eq.s32.totalorder %s37, 1
    %p569 = por %p567, %p568
    %p571 = scmp.ne.s32.totalorder %s556, %s570
    %p572 = scmp.eq.s32.totalorder %s37, 0
    %p573 = por %p571, %p572
    %s574 = ssub.s32 %s31, %s38
    %p575 = scmp.eq.s32.totalorder %s574, 0
    %s577 = sadd.s32 %s576, 1
    %s578 = scalar_select %p575, %s576, %s577
    %p581 = pneg %p575
    %p582 = scmp.eq.s32.totalorder %s31, 1
    %p583 = por %p581, %p582
    %p584 = scmp.ne.s32.totalorder %s576, %s579
    %p585 = scmp.eq.s32.totalorder %s31, 0
    %p586 = por %p584, %p585
    %p587 = scmp.ne.s32.totalorder %s576, %s579
    %p588 = scmp.eq.s32.totalorder %s36, 1
    %p589 = por %p587, %p588
    %p590 = scmp.ne.s32.totalorder %s579, %s580
    %p591 = scmp.eq.s32.totalorder %s36, 0
    %p592 = por %p590, %p591
    %p593 = scmp.ne.s32.totalorder %s579, %s580
    %p594 = scmp.eq.s32.totalorder %s37, 1
    %p595 = por %p593, %p594
    %p597 = scmp.ne.s32.totalorder %s580, %s596
    %p598 = scmp.eq.s32.totalorder %s37, 0
    %p599 = por %p597, %p598
    %p600 = scmp.le.s32.totalorder 1, %s31
    %p601 = scmp.lt.s32.totalorder %s31, 3
    %p602 = pnand %p600, %p601
    %p603 = pneg %p602
    // Predicated region
    $region9: #{swt_jsp_forward.1} parent=5 // pred_check
      _
    $region10: #{swt_jsp_forward.1} parent=5 // pred_check_branch
      %605 = sbr.rel (%p602) target = $region12
    $region11: #{swt_jsp_forward.1} parent=5 // pred_region
      %s606 = ssub.s32 %s31, 1
      // Predicated region
      $region13: #{swt_jsp_forward.1} parent=11 // pred_check
        %p607 = pneg %p104
      $region14: #{swt_jsp_forward.1} parent=11 // pred_check_branch
        %609 = sbr.rel (%p607) target = $region16
      $region15: #{swt_jsp_forward.1} parent=11 // pred_region
        _
      $region16: #{swt_jsp_forward.1} parent=11 // pred_fallthru
        _
      // Predicated region
      $region17: #{swt_jsp_forward.1} parent=11 // pred_check
        %p610 = pneg %p125
      $region18: #{swt_jsp_forward.1} parent=11 // pred_check_branch
        %612 = sbr.rel (%p610) target = $region20
      $region19: #{swt_jsp_forward.1} parent=11 // pred_region
        _
      $region20: #{swt_jsp_forward.1} parent=11 // pred_fallthru
        _
      // Predicated region
      $region21: #{swt_jsp_forward.1} parent=11 // pred_check
        %p613 = pneg %p146
      $region22: #{swt_jsp_forward.1} parent=11 // pred_check_branch
        %615 = sbr.rel (%p613) target = $region24
      $region23: #{swt_jsp_forward.1} parent=11 // pred_region
        _
      $region24: #{swt_jsp_forward.1} parent=11 // pred_fallthru
        _
      // Predicated region
      $region25: #{swt_jsp_forward.1} parent=11 // pred_check
        %p616 = pneg %p167
      $region26: #{swt_jsp_forward.1} parent=11 // pred_check_branch
        %618 = sbr.rel (%p616) target = $region28
      $region27: #{swt_jsp_forward.1} parent=11 // pred_region
        _
      $region28: #{swt_jsp_forward.1} parent=11 // pred_fallthru
        _
      // Predicated region
      $region29: #{swt_jsp_forward.1} parent=11 // pred_check
        %p619 = pneg %p188
      $region30: #{swt_jsp_forward.1} parent=11 // pred_check_branch
        %621 = sbr.rel (%p619) target = $region32
      $region31: #{swt_jsp_forward.1} parent=11 // pred_region
        _
      $region32: #{swt_jsp_forward.1} parent=11 // pred_fallthru
        _
      // Predicated region
      $region33: #{swt_jsp_forward.1} parent=11 // pred_check
        %p622 = pneg %p209
      $region34: #{swt_jsp_forward.1} parent=11 // pred_check_branch
        %624 = sbr.rel (%p622) target = $region36
      $region35: #{swt_jsp_forward.1} parent=11 // pred_region
        _
      $region36: #{swt_jsp_forward.1} parent=11 // pred_fallthru
        _
      // Predicated region
      $region37: #{swt_jsp_forward.1} parent=11 // pred_check
        %p625 = pneg %p230
      $region38: #{swt_jsp_forward.1} parent=11 // pred_check_branch
        %627 = sbr.rel (%p625) target = $region40
      $region39: #{swt_jsp_forward.1} parent=11 // pred_region
        _
      $region40: #{swt_jsp_forward.1} parent=11 // pred_fallthru
        _
      // Predicated region
      $region41: #{swt_jsp_forward.1} parent=11 // pred_check
        %p628 = pneg %p251
      $region42: #{swt_jsp_forward.1} parent=11 // pred_check_branch
        %630 = sbr.rel (%p628) target = $region44
      $region43: #{swt_jsp_forward.1} parent=11 // pred_region
        _
      $region44: #{swt_jsp_forward.1} parent=11 // pred_fallthru
        _
      // Predicated region
      $region45: #{swt_jsp_forward.1} parent=11 // pred_check
        %p631 = pneg %p272
      $region46: #{swt_jsp_forward.1} parent=11 // pred_check_branch
        %633 = sbr.rel (%p631) target = $region48
      $region47: #{swt_jsp_forward.1} parent=11 // pred_region
        _
      $region48: #{swt_jsp_forward.1} parent=11 // pred_fallthru
        _
      // Predicated region
      $region49: #{swt_jsp_forward.1} parent=11 // pred_check
        %p634 = pneg %p293
      $region50: #{swt_jsp_forward.1} parent=11 // pred_check_branch
        %636 = sbr.rel (%p634) target = $region52
      $region51: #{swt_jsp_forward.1} parent=11 // pred_region
        _
      $region52: #{swt_jsp_forward.1} parent=11 // pred_fallthru
        _
      // Predicated region
      $region53: #{swt_jsp_forward.1} parent=11 // pred_check
        %p637 = pneg %p314
      $region54: #{swt_jsp_forward.1} parent=11 // pred_check_branch
        %639 = sbr.rel (%p637) target = $region56
      $region55: #{swt_jsp_forward.1} parent=11 // pred_region
        _
      $region56: #{swt_jsp_forward.1} parent=11 // pred_fallthru
        _
      // Predicated region
      $region57: #{swt_jsp_forward.1} parent=11 // pred_check
        %p640 = pneg %p335
      $region58: #{swt_jsp_forward.1} parent=11 // pred_check_branch
        %642 = sbr.rel (%p640) target = $region60
      $region59: #{swt_jsp_forward.1} parent=11 // pred_region
        _
      $region60: #{swt_jsp_forward.1} parent=11 // pred_fallthru
        _
      // Predicated region
      $region61: #{swt_jsp_forward.1} parent=11 // pred_check
        %p643 = pneg %p356
      $region62: #{swt_jsp_forward.1} parent=11 // pred_check_branch
        %645 = sbr.rel (%p643) target = $region64
      $region63: #{swt_jsp_forward.1} parent=11 // pred_region
        _
      $region64: #{swt_jsp_forward.1} parent=11 // pred_fallthru
        _
      // Predicated region
      $region65: #{swt_jsp_forward.1} parent=11 // pred_check
        %p646 = pneg %p377
      $region66: #{swt_jsp_forward.1} parent=11 // pred_check_branch
        %648 = sbr.rel (%p646) target = $region68
      $region67: #{swt_jsp_forward.1} parent=11 // pred_region
        _
      $region68: #{swt_jsp_forward.1} parent=11 // pred_fallthru
        _
      // Predicated region
      $region69: #{swt_jsp_forward.1} parent=11 // pred_check
        %p649 = pneg %p398
      $region70: #{swt_jsp_forward.1} parent=11 // pred_check_branch
        %651 = sbr.rel (%p649) target = $region72
      $region71: #{swt_jsp_forward.1} parent=11 // pred_region
        _
      $region72: #{swt_jsp_forward.1} parent=11 // pred_fallthru
        _
      // Predicated region
      $region73: #{swt_jsp_forward.1} parent=11 // pred_check
        %p652 = pneg %p419
      $region74: #{swt_jsp_forward.1} parent=11 // pred_check_branch
        %654 = sbr.rel (%p652) target = $region76
      $region75: #{swt_jsp_forward.1} parent=11 // pred_region
        _
      $region76: #{swt_jsp_forward.1} parent=11 // pred_fallthru
        _
      // Predicated region
      $region77: #{swt_jsp_forward.1} parent=11 // pred_check
        %p655 = pneg %p440
      $region78: #{swt_jsp_forward.1} parent=11 // pred_check_branch
        %657 = sbr.rel (%p655) target = $region80
      $region79: #{swt_jsp_forward.1} parent=11 // pred_region
        _
      $region80: #{swt_jsp_forward.1} parent=11 // pred_fallthru
        _
      // Predicated region
      $region81: #{swt_jsp_forward.1} parent=11 // pred_check
        %p658 = pneg %p461
      $region82: #{swt_jsp_forward.1} parent=11 // pred_check_branch
        %660 = sbr.rel (%p658) target = $region84
      $region83: #{swt_jsp_forward.1} parent=11 // pred_region
        _
      $region84: #{swt_jsp_forward.1} parent=11 // pred_fallthru
        _
      // Predicated region
      $region85: #{swt_jsp_forward.1} parent=11 // pred_check
        %p661 = pneg %p482
      $region86: #{swt_jsp_forward.1} parent=11 // pred_check_branch
        %663 = sbr.rel (%p661) target = $region88
      $region87: #{swt_jsp_forward.1} parent=11 // pred_region
        _
      $region88: #{swt_jsp_forward.1} parent=11 // pred_fallthru
        _
      // Predicated region
      $region89: #{swt_jsp_forward.1} parent=11 // pred_check
        %p664 = pneg %p503
      $region90: #{swt_jsp_forward.1} parent=11 // pred_check_branch
        %666 = sbr.rel (%p664) target = $region92
      $region91: #{swt_jsp_forward.1} parent=11 // pred_region
        _
      $region92: #{swt_jsp_forward.1} parent=11 // pred_fallthru
        _
      // Predicated region
      $region93: #{swt_jsp_forward.1} parent=11 // pred_check
        %p667 = pneg %p524
      $region94: #{swt_jsp_forward.1} parent=11 // pred_check_branch
        %669 = sbr.rel (%p667) target = $region96
      $region95: #{swt_jsp_forward.1} parent=11 // pred_region
        _
      $region96: #{swt_jsp_forward.1} parent=11 // pred_fallthru
        _
      // Predicated region
      $region97: #{swt_jsp_forward.1} parent=11 // pred_check
        %p670 = pneg %p545
      $region98: #{swt_jsp_forward.1} parent=11 // pred_check_branch
        %672 = sbr.rel (%p670) target = $region100
      $region99: #{swt_jsp_forward.1} parent=11 // pred_region
        _
      $region100: #{swt_jsp_forward.1} parent=11 // pred_fallthru
        _
      // Predicated region
      $region101: #{swt_jsp_forward.1} parent=11 // pred_check
        %p673 = pneg %p566
      $region102: #{swt_jsp_forward.1} parent=11 // pred_check_branch
        %675 = sbr.rel (%p673) target = $region104
      $region103: #{swt_jsp_forward.1} parent=11 // pred_region
        _
      $region104: #{swt_jsp_forward.1} parent=11 // pred_fallthru
        _
    $region12: #{swt_jsp_forward.1} parent=5 // pred_fallthru
      _
    %p676 = scmp.lt.s32.totalorder %s31, 2
    // Predicated region
    $region105: #{swt_jsp_forward.1} parent=5 // pred_check
      %p677 = pneg %p676
    $region106: #{swt_jsp_forward.1} parent=5 // pred_check_branch
      %679 = sbr.rel (%p677) target = $region108
    $region107: #{swt_jsp_forward.1} parent=5 // pred_region
      // Predicated region
      $region109: #{swt_jsp_forward.1} parent=107 // pred_check
        %p680 = pneg %p51
      $region110: #{swt_jsp_forward.1} parent=107 // pred_check_branch
        %682 = sbr.rel (%p680) target = $region112
      $region111: #{swt_jsp_forward.1} parent=107 // pred_region
        %s683 = smul.u32 8, %s31
        %p684 = scmp.lt.s32.totalorder %s683, 15
        %s685 = scalar_select %p684, %s683, 15
        %s686 = smul.addr %s685, 8
        %s687 = scalar_lea.vmem %s0, %s686
        %s688 = smul.u32 8, %s31
      $region112: #{swt_jsp_forward.1} parent=107 // pred_fallthru
        _
      // Predicated region
      $region113: #{swt_jsp_forward.1} parent=107 // pred_check
        %p689 = pneg %p77
      $region114: #{swt_jsp_forward.1} parent=107 // pred_check_branch
        %691 = sbr.rel (%p689) target = $region116
      $region115: #{swt_jsp_forward.1} parent=107 // pred_region
        %s692 = smul.u32 8, %s31
        %p693 = scmp.lt.s32.totalorder %s692, 15
        %s694 = scalar_select %p693, %s692, 15
        %s695 = smul.addr %s694, 8
        %s696 = scalar_lea.vmem %s1, %s695
        %s697 = smul.u32 8, %s31
      $region116: #{swt_jsp_forward.1} parent=107 // pred_fallthru
        _
    $region108: #{swt_jsp_forward.1} parent=5 // pred_fallthru
      _
    %p698 = scmp.le.s32.totalorder 1, %s31
    %p699 = scmp.lt.s32.totalorder %s31, 3
    %p700 = pnand %p698, %p699
    %p701 = pneg %p700
    // Predicated region
    $region117: #{swt_jsp_forward.1} parent=5 // pred_check
      _
    $region118: #{swt_jsp_forward.1} parent=5 // pred_check_branch
      %703 = sbr.rel (%p700) target = $region120
    $region119: #{swt_jsp_forward.1} parent=5 // pred_region
      %s704 = ssub.s32 %s31, 1
      %s705 = smul.u32 8, %s36
      %p706 = scmp.lt.s32.totalorder %s705, 15
      %s707 = scalar_select %p706, %s705, 15
      %s708 = smul.addr %s707, 8
      %s709 = scalar_lea.vmem %s0, %s708
      %p710 = pneg %p57
      %p711 = pneg %p54
      %s712 = smul.u32 8, %s36
      %p713 = scmp.lt.s32.totalorder %s712, 15
      %s714 = scalar_select %p713, %s712, 15
      %s715 = smul.addr %s714, 8
      %s716 = scalar_lea.vmem %s1, %s715
      %p717 = pneg %p83
      %p718 = pneg %p80
      %p719 = pneg %p104
      %p720 = pneg %p101
      %p721 = pneg %p125
      %p722 = pneg %p122
      %p723 = pneg %p146
      %p724 = pneg %p143
      %p725 = pneg %p167
      %p726 = pneg %p164
      %p727 = pneg %p188
      %p728 = pneg %p185
      %p729 = pneg %p209
      %p730 = pneg %p206
      %p731 = pneg %p230
      %p732 = pneg %p227
      %p733 = pneg %p251
      %p734 = pneg %p248
      %p735 = pneg %p272
      %p736 = pneg %p269
      %p737 = pneg %p293
      %p738 = pneg %p290
      %p739 = pneg %p314
      %p740 = pneg %p311
      %p741 = pneg %p335
      %p742 = pneg %p332
      %p743 = pneg %p356
      %p744 = pneg %p353
      %p745 = pneg %p377
      %p746 = pneg %p374
      %p747 = pneg %p398
      %p748 = pneg %p395
      %p749 = pneg %p419
      %p750 = pneg %p416
      %p751 = pneg %p440
      %p752 = pneg %p437
      %p753 = pneg %p461
      %p754 = pneg %p458
      %p755 = pneg %p482
      %p756 = pneg %p479
      %p757 = pneg %p503
      %p758 = pneg %p500
      %p759 = pneg %p524
      %p760 = pneg %p521
      %p761 = pneg %p545
      %p762 = pneg %p542
      %p763 = pneg %p566
      %p764 = pneg %p563
      %p765 = pneg %p592
      %p766 = pneg %p589
      %s767 = smul.u32 8, %s36
      %p768 = scmp.lt.s32.totalorder %s767, 15
      %s769 = scalar_select %p768, %s767, 15
      %s770 = smul.addr %s769, 8
      %s771 = scalar_lea.vmem %s25, %s770
      %s772 = smul.u32 8, %s36
      %p773 = scmp.lt.s32.totalorder %s772, 15
      %s774 = scalar_select %p773, %s772, 15
      %s775 = smul.addr %s774, 8
      %s776 = scalar_lea.vmem %s0, %s775
      %s777 = smul.u32 8, %s36
      %s778 = smul.u32 8, %s36
      %p779 = scmp.lt.s32.totalorder %s778, 15
      %s780 = scalar_select %p779, %s778, 15
      %s781 = smul.addr %s780, 8
      %s782 = scalar_lea.vmem %s1, %s781
      %s783 = smul.u32 8, %s36
      %s784 = smul.u32 8, %s36
      %p785 = scmp.lt.s32.totalorder %s784, 15
      %s786 = scalar_select %p785, %s784, 15
      %s787 = smul.addr %s786, 8
      %s788 = scalar_lea.vmem %s25, %s787
      %s789 = smul.u32 8, %s36
      %v791 = vld [vmem:[%s776] sm:$0xff]
      %v792 = vld [vmem:[%s776 + $0x8] sm:$0xff]
      %v793 = vld [vmem:[%s776 + $0x10] sm:$0xff]
      %v794 = vld [vmem:[%s776 + $0x18] sm:$0xff]
      %v795 = vld [vmem:[%s776 + $0x20] sm:$0xff]
      %v796 = vld [vmem:[%s776 + $0x28] sm:$0xff]
      %v797 = vld [vmem:[%s776 + $0x30] sm:$0xff]
      %v798 = vld [vmem:[%s776 + $0x38] sm:$0xff]
      %v799 = vld [vmem:[%s2] sm:$0xf]
      %v800 = vld [vmem:[%s2 + $0x4] sm:$0xf]
      %v801 = vld [vmem:[%s2 + $0x8] sm:$0xf]
      %v802 = vpack.c.bf16 %v792, %v791
      %v803 = vpack.c.bf16 %v794, %v793
      %v804 = vpack.c.bf16 %v796, %v795
      %v805 = vpack.c.bf16 %v798, %v797
      %v806 = vld [vmem:[%s3] sm:$0x1]
      %v808 = vlaneseq
      %v809 = vshrl.u32 %v808, 7
      %v810 = vsub.s32 0, %v809
      %v811 = vrot.slane %v806, %v810
      %v816 = vunpack.c.l.b16 %v799
      %v817 = vunpack.c.l.b16 %v800
      %v818 = vunpack.c.l.b16 %v801
      %v819 = vpack.c.b16 %v817, %v816
      %v820 = vpack.c.b16 %v818, %v818
      %vm822 = vcmask 195584
      %v824 = vsel %vm822, %v802, 0
      %v827 = vsel %vm822, %v803, 0
      %v830 = vsel %vm822, %v804, 0
      %v833 = vsel %vm822, %v805, 0
      %vm835 = vcmask 1043456
      %v837 = vsel %vm835, %v820, 0
      %839 = vmatprep.subr.bf16.mxu0 0
      %840 = vmatpush1.bf16.msra.mxu0 0
      %841 = vmatprep.subr.bf16.mxu0 0
      %842 = vmatpush1.bf16.msra.mxu0 0
      %843 = vmatprep.subr.bf16.mxu0 0
      %844 = vmatpush1.bf16.msra.mxu0 0
      %845 = vmatprep.subr.bf16.mxu0 0
      %846 = vmatpush1.bf16.msra.mxu0 0
      %847 = vmatprep.subr.bf16.mxu0 0
      %848 = vmatpush1.bf16.msra.mxu0 0
      %849 = vmatprep.subr.bf16.mxu0 0
      %850 = vmatpush1.bf16.msra.mxu0 0
      %851 = vmatprep.subr.bf16.mxu0 0
      %852 = vmatpush1.bf16.msra.mxu0 %v837
      %853 = vmatprep.subr.bf16.mxu0 0
      %854 = vmatpush1.bf16.msra.mxu0 %v819
      %855 = vmatprep.subr.bf16.mxu0 0
      %856 = vmatpush2.bf16.msra.mxu0 0
      %857 = vmatprep.subr.bf16.mxu0 0
      %858 = vmatpush2.bf16.msra.mxu0 0
      %859 = vmatprep.subr.bf16.mxu0 0
      %860 = vmatpush2.bf16.msra.mxu0 0
      %861 = vmatprep.subr.bf16.mxu0 0
      %862 = vmatpush2.bf16.msra.mxu0 0
      %863 = vmatprep.subr.bf16.mxu0 0
      %864 = vmatpush2.bf16.msra.mxu0 0
      %865 = vmatprep.subr.bf16.mxu0 0
      %866 = vmatpush2.bf16.msra.mxu0 0
      %867 = vmatprep.subr.bf16.mxu0 0
      %868 = vmatpush2.bf16.msra.mxu0 0
      %869 = vmatprep.subr.bf16.mxu0 0
      %870 = vmatpush2.bf16.msra.mxu0 0
      %871 = vmatprep.mubr.bf16.mxu0 0
      %872 = vmatmul.mubr.bf16.gmra.mxu0 %v824
      %v873 = vpop.f32.mrf.mxu0
      %v874 = vadd.f32 %v811, %v873
      %v875 = vpop.f32.mrf.mxu0
      %v876 = vpop.f32.mrf.mxu0
      %v877 = vadd.f32 %v811, %v876
      %v878 = vpop.f32.mrf.mxu0
      %879 = vmatprep.mubr.bf16.mxu0 0
      %880 = vmatmul.mubr.bf16.gmra.mxu0 %v827
      %v881 = vpop.f32.mrf.mxu0
      %v882 = vadd.f32 %v811, %v881
      %v883 = vpop.f32.mrf.mxu0
      %v884 = vpop.f32.mrf.mxu0
      %v885 = vadd.f32 %v811, %v884
      %v886 = vpop.f32.mrf.mxu0
      %887 = vmatprep.mubr.bf16.mxu0 0
      %888 = vmatmul.mubr.bf16.gmra.mxu0 %v830
      %v889 = vpop.f32.mrf.mxu0
      %v890 = vadd.f32 %v811, %v889
      %v891 = vpop.f32.mrf.mxu0
      %v892 = vpop.f32.mrf.mxu0
      %v893 = vadd.f32 %v811, %v892
      %v894 = vpop.f32.mrf.mxu0
      %895 = vmatprep.mubr.bf16.mxu0 0
      %896 = vmatmul.mubr.bf16.gmra.mxu0 %v833
      %v897 = vpop.f32.mrf.mxu0
      %v898 = vadd.f32 %v811, %v897
      %v899 = vpop.f32.mrf.mxu0
      %v900 = vpop.f32.mrf.mxu0
      %v901 = vadd.f32 %v811, %v900
      %v902 = vpop.f32.mrf.mxu0
      %903 = vdwg.mxu0
      %vm904 = vcmask 261120
      %v905 = vsel %vm904, %v874, 0.0
      %906 = vadd.xlane.f32.xlu0 %v905
      %v907 = vpop.xlane.xlu0 %906
      %v908 = vsel %vm904, %v877, 0.0
      %909 = vadd.xlane.f32.xlu0 %v908
      %v910 = vpop.xlane.xlu0 %909
      %v911 = vsel %vm904, %v882, 0.0
      %912 = vadd.xlane.f32.xlu0 %v911
      %v913 = vpop.xlane.xlu0 %912
      %v914 = vsel %vm904, %v885, 0.0
      %915 = vadd.xlane.f32.xlu0 %v914
      %v916 = vpop.xlane.xlu0 %915
      %v917 = vsel %vm904, %v890, 0.0
      %918 = vadd.xlane.f32.xlu0 %v917
      %v919 = vpop.xlane.xlu0 %918
      %v920 = vsel %vm904, %v893, 0.0
      %921 = vadd.xlane.f32.xlu0 %v920
      %v922 = vpop.xlane.xlu0 %921
      %v923 = vsel %vm904, %v898, 0.0
      %924 = vadd.xlane.f32.xlu0 %v923
      %v925 = vpop.xlane.xlu0 %924
      %v926 = vsel %vm904, %v901, 0.0
      %927 = vadd.xlane.f32.xlu0 %v926
      %v928 = vpop.xlane.xlu0 %927
      %v929 = vrcp.pop 32.0
      %v930 = vmul.f32 %v907, %v929
      %v931 = vmul.f32 %v910, %v929
      %v932 = vmul.f32 %v913, %v929
      %v933 = vmul.f32 %v916, %v929
      %v934 = vmul.f32 %v919, %v929
      %v935 = vmul.f32 %v922, %v929
      %v936 = vmul.f32 %v925, %v929
      %v937 = vmul.f32 %v928, %v929
      %v938 = vsub.f32 %v874, %v930
      %v939 = vsub.f32 %v877, %v931
      %v940 = vsub.f32 %v882, %v932
      %v941 = vsub.f32 %v885, %v933
      %v942 = vsub.f32 %v890, %v934
      %v943 = vsub.f32 %v893, %v935
      %v944 = vsub.f32 %v898, %v936
      %v945 = vsub.f32 %v901, %v937
      %v946 = vmul.f32 %v938, %v938
      %v947 = vmul.f32 %v939, %v939
      %v948 = vmul.f32 %v940, %v940
      %v949 = vmul.f32 %v941, %v941
      %v950 = vmul.f32 %v942, %v942
      %v951 = vmul.f32 %v943, %v943
      %v952 = vmul.f32 %v944, %v944
      %v953 = vmul.f32 %v945, %v945
      %v954 = vsel %vm904, %v946, 0.0
      %955 = vadd.xlane.f32.xlu0 %v954
      %v956 = vpop.xlane.xlu0 %955
      %v957 = vsel %vm904, %v947, 0.0
      %958 = vadd.xlane.f32.xlu0 %v957
      %v959 = vpop.xlane.xlu0 %958
      %v960 = vsel %vm904, %v948, 0.0
      %961 = vadd.xlane.f32.xlu0 %v960
      %v962 = vpop.xlane.xlu0 %961
      %v963 = vsel %vm904, %v949, 0.0
      %964 = vadd.xlane.f32.xlu0 %v963
      %v965 = vpop.xlane.xlu0 %964
      %v966 = vsel %vm904, %v950, 0.0
      %967 = vadd.xlane.f32.xlu0 %v966
      %v968 = vpop.xlane.xlu0 %967
      %v969 = vsel %vm904, %v951, 0.0
      %970 = vadd.xlane.f32.xlu0 %v969
      %v971 = vpop.xlane.xlu0 %970
      %v972 = vsel %vm904, %v952, 0.0
      %973 = vadd.xlane.f32.xlu0 %v972
      %v974 = vpop.xlane.xlu0 %973
      %v975 = vsel %vm904, %v953, 0.0
      %976 = vadd.xlane.f32.xlu0 %v975
      %v977 = vpop.xlane.xlu0 %976
      %v978 = vmul.f32 %v956, %v929
      %v979 = vmul.f32 %v959, %v929
      %v980 = vmul.f32 %v962, %v929
      %v981 = vmul.f32 %v965, %v929
      %v982 = vmul.f32 %v968, %v929
      %v983 = vmul.f32 %v971, %v929
      %v984 = vmul.f32 %v974, %v929
      %v985 = vmul.f32 %v977, %v929
      %v986 = vadd.f32 %v978, 1e-05
      %v987 = vadd.f32 %v979, 1e-05
      %v988 = vadd.f32 %v980, 1e-05
      %v989 = vadd.f32 %v981, 1e-05
      %v990 = vadd.f32 %v982, 1e-05
      %v991 = vadd.f32 %v983, 1e-05
      %v992 = vadd.f32 %v984, 1e-05
      %v993 = vadd.f32 %v985, 1e-05
      %v994 = vrsqrt.pop %v986
      %v995 = vrsqrt.pop %v987
      %v996 = vrsqrt.pop %v988
      %v997 = vrsqrt.pop %v989
      %v998 = vrsqrt.pop %v990
      %v999 = vrsqrt.pop %v991
      %v1000 = vrsqrt.pop %v992
      %v1001 = vrsqrt.pop %v993
      %v1002 = vmul.f32 %v938, %v994
      %v1003 = vmul.f32 %v939, %v995
      %v1004 = vmul.f32 %v940, %v996
      %v1005 = vmul.f32 %v941, %v997
      %v1006 = vmul.f32 %v942, %v998
      %v1007 = vmul.f32 %v943, %v999
      %v1008 = vmul.f32 %v944, %v1000
      %v1009 = vmul.f32 %v945, %v1001
      %v1010 = vld [vmem:[%s6] sm:$0x1]
      %v1012 = vlaneseq
      %v1013 = vshrl.u32 %v1012, 7
      %v1014 = vsub.s32 0, %v1013
      %v1015 = vrot.slane %v1010, %v1014
      %v1017 = vmul.f32 %v1002, %v1015
      %v1018 = vmul.f32 %v1003, %v1015
      %v1019 = vmul.f32 %v1004, %v1015
      %v1020 = vmul.f32 %v1005, %v1015
      %v1021 = vmul.f32 %v1006, %v1015
      %v1022 = vmul.f32 %v1007, %v1015
      %v1023 = vmul.f32 %v1008, %v1015
      %v1024 = vmul.f32 %v1009, %v1015
      %v1025 = vld [vmem:[%s7] sm:$0x1]
      %v1027 = vlaneseq
      %v1028 = vshrl.u32 %v1027, 7
      %v1029 = vsub.s32 0, %v1028
      %v1030 = vrot.slane %v1025, %v1029
      %v1032 = vadd.f32 %v1017, %v1030
      %v1033 = vadd.f32 %v1018, %v1030
      %v1034 = vadd.f32 %v1019, %v1030
      %v1035 = vadd.f32 %v1020, %v1030
      %v1036 = vadd.f32 %v1021, %v1030
      %v1037 = vadd.f32 %v1022, %v1030
      %v1038 = vadd.f32 %v1023, %v1030
      %v1039 = vadd.f32 %v1024, %v1030
      %v1040 = vld [vmem:[%s782] sm:$0xff]
      %v1041 = vld [vmem:[%s782 + $0x8] sm:$0xff]
      %v1042 = vld [vmem:[%s782 + $0x10] sm:$0xff]
      %v1043 = vld [vmem:[%s782 + $0x18] sm:$0xff]
      %v1044 = vld [vmem:[%s782 + $0x20] sm:$0xff]
      %v1045 = vld [vmem:[%s782 + $0x28] sm:$0xff]
      %v1046 = vld [vmem:[%s782 + $0x30] sm:$0xff]
      %v1047 = vld [vmem:[%s782 + $0x38] sm:$0xff]
      %v1048 = vsel %vm822, %v1040, 0.0
      %v1049 = vsel %vm822, %v1041, 0.0
      %v1050 = vadd.f32 %v1048, %v1049
      %v1051 = vsel %vm822, %v1042, 0.0
      %v1052 = vadd.f32 %v1050, %v1051
      %v1053 = vsel %vm822, %v1043, 0.0
      %v1054 = vadd.f32 %v1052, %v1053
      %v1055 = vsel %vm822, %v1044, 0.0
      %v1056 = vadd.f32 %v1054, %v1055
      %v1057 = vsel %vm822, %v1045, 0.0
      %v1058 = vadd.f32 %v1056, %v1057
      %v1059 = vsel %vm822, %v1046, 0.0
      %v1060 = vadd.f32 %v1058, %v1059
      %v1061 = vsel %vm822, %v1047, 0.0
      %v1062 = vadd.f32 %v1060, %v1061
      %v1063 = vrot.slane %v1062, 4
      %v1064 = vadd.f32 %v1062, %v1063
      %v1065 = vrot.slane %v1064, 2
      %v1066 = vadd.f32 %v1064, %v1065
      %v1067 = vrot.slane %v1066, 1
      %v1068 = vadd.f32 %v1066, %v1067
      %v1069 = vrcp.pop 64.0
      %v1070 = vmul.f32 %v1068, %v1069
      %v1071 = vld [vmem:[%s4] sm:$0xf]
      %v1072 = vld [vmem:[%s4 + $0x4] sm:$0xf]
      %v1073 = vld [vmem:[%s4 + $0x8] sm:$0xf]
      %v1074 = vpack.c.bf16 %v1070, %v1070
      %v1078 = vunpack.c.l.b16 %v1071
      %v1079 = vunpack.c.l.b16 %v1072
      %v1080 = vunpack.c.l.b16 %v1073
      %v1081 = vpack.c.b16 %v1079, %v1078
      %v1082 = vpack.c.b16 %v1080, %v1080
      %v1085 = vsel %vm822, %v1074, 0
      %v1088 = vsel %vm835, %v1082, 0
      %1090 = vmatprep.subr.bf16.mxu0 0
      %1091 = vmatpush1.bf16.msra.mxu0 0
      %1092 = vmatprep.subr.bf16.mxu0 0
      %1093 = vmatpush1.bf16.msra.mxu0 0
      %1094 = vmatprep.subr.bf16.mxu0 0
      %1095 = vmatpush1.bf16.msra.mxu0 0
      %1096 = vmatprep.subr.bf16.mxu0 0
      %1097 = vmatpush1.bf16.msra.mxu0 0
      %1098 = vmatprep.subr.bf16.mxu0 0
      %1099 = vmatpush1.bf16.msra.mxu0 0
      %1100 = vmatprep.subr.bf16.mxu0 0
      %1101 = vmatpush1.bf16.msra.mxu0 0
      %1102 = vmatprep.subr.bf16.mxu0 0
      %1103 = vmatpush1.bf16.msra.mxu0 %v1088
      %1104 = vmatprep.subr.bf16.mxu0 0
      %1105 = vmatpush1.bf16.msra.mxu0 %v1081
      %1106 = vmatprep.subr.bf16.mxu0 0
      %1107 = vmatpush2.bf16.msra.mxu0 0
      %1108 = vmatprep.subr.bf16.mxu0 0
      %1109 = vmatpush2.bf16.msra.mxu0 0
      %1110 = vmatprep.subr.bf16.mxu0 0
      %1111 = vmatpush2.bf16.msra.mxu0 0
      %1112 = vmatprep.subr.bf16.mxu0 0
      %1113 = vmatpush2.bf16.msra.mxu0 0
      %1114 = vmatprep.subr.bf16.mxu0 0
      %1115 = vmatpush2.bf16.msra.mxu0 0
      %1116 = vmatprep.subr.bf16.mxu0 0
      %1117 = vmatpush2.bf16.msra.mxu0 0
      %1118 = vmatprep.subr.bf16.mxu0 0
      %1119 = vmatpush2.bf16.msra.mxu0 0
      %1120 = vmatprep.subr.bf16.mxu0 0
      %1121 = vmatpush2.bf16.msra.mxu0 0
      %1122 = vmatprep.mubr.bf16.mxu0 0
      %1123 = vmatmul.mubr.bf16.gmra.mxu0 %v1085
      %v1124 = vpop.f32.mrf.mxu0
      %v1125 = vadd.f32 0.0, %v1124
      %v1126 = vpop.f32.mrf.mxu0
      %v1127 = vpop.f32.mrf.mxu0
      %v1128 = vpop.f32.mrf.mxu0
      %1129 = vdwg.mxu0
      %v1130 = vlaneseq
      %v1131 = vshrl.u32 %v1130, 7
      %v1132 = vsub.s32 0, %v1131
      %v1133 = vrot.slane %v1125, %v1132
      %v1134 = vadd.f32 %v1032, %v1133
      %v1135 = vadd.f32 %v1033, %v1133
      %v1136 = vadd.f32 %v1034, %v1133
      %v1137 = vadd.f32 %v1035, %v1133
      %v1138 = vadd.f32 %v1036, %v1133
      %v1139 = vadd.f32 %v1037, %v1133
      %v1140 = vadd.f32 %v1038, %v1133
      %v1141 = vadd.f32 %v1039, %v1133
      %v1142 = vld [vmem:[%s5] sm:$0x1]
      %v1144 = vlaneseq
      %v1145 = vshrl.u32 %v1144, 7
      %v1146 = vsub.s32 0, %v1145
      %v1147 = vrot.slane %v1142, %v1146
      %v1149 = vadd.f32 %v1134, %v1147
      %v1150 = vadd.f32 %v1135, %v1147
      %v1151 = vadd.f32 %v1136, %v1147
      %v1152 = vadd.f32 %v1137, %v1147
      %v1153 = vadd.f32 %v1138, %v1147
      %v1154 = vadd.f32 %v1139, %v1147
      %v1155 = vadd.f32 %v1140, %v1147
      %v1156 = vadd.f32 %v1141, %v1147
      %v1157 = vsel %vm904, %v1149, 0.0
      %1158 = vadd.xlane.f32.xlu0 %v1157
      %v1159 = vpop.xlane.xlu0 %1158
      %v1160 = vsel %vm904, %v1150, 0.0
      %1161 = vadd.xlane.f32.xlu0 %v1160
      %v1162 = vpop.xlane.xlu0 %1161
      %v1163 = vsel %vm904, %v1151, 0.0
      %1164 = vadd.xlane.f32.xlu0 %v1163
      %v1165 = vpop.xlane.xlu0 %1164
      %v1166 = vsel %vm904, %v1152, 0.0
      %1167 = vadd.xlane.f32.xlu0 %v1166
      %v1168 = vpop.xlane.xlu0 %1167
      %v1169 = vsel %vm904, %v1153, 0.0
      %1170 = vadd.xlane.f32.xlu0 %v1169
      %v1171 = vpop.xlane.xlu0 %1170
      %v1172 = vsel %vm904, %v1154, 0.0
      %1173 = vadd.xlane.f32.xlu0 %v1172
      %v1174 = vpop.xlane.xlu0 %1173
      %v1175 = vsel %vm904, %v1155, 0.0
      %1176 = vadd.xlane.f32.xlu0 %v1175
      %v1177 = vpop.xlane.xlu0 %1176
      %v1178 = vsel %vm904, %v1156, 0.0
      %1179 = vadd.xlane.f32.xlu0 %v1178
      %v1180 = vpop.xlane.xlu0 %1179
      %v1181 = vmul.f32 %v1159, %v929
      %v1182 = vmul.f32 %v1162, %v929
      %v1183 = vmul.f32 %v1165, %v929
      %v1184 = vmul.f32 %v1168, %v929
      %v1185 = vmul.f32 %v1171, %v929
      %v1186 = vmul.f32 %v1174, %v929
      %v1187 = vmul.f32 %v1177, %v929
      %v1188 = vmul.f32 %v1180, %v929
      %v1189 = vsub.f32 %v1149, %v1181
      %v1190 = vsub.f32 %v1150, %v1182
      %v1191 = vsub.f32 %v1151, %v1183
      %v1192 = vsub.f32 %v1152, %v1184
      %v1193 = vsub.f32 %v1153, %v1185
      %v1194 = vsub.f32 %v1154, %v1186
      %v1195 = vsub.f32 %v1155, %v1187
      %v1196 = vsub.f32 %v1156, %v1188
      %v1197 = vmul.f32 %v1189, %v1189
      %v1198 = vmul.f32 %v1190, %v1190
      %v1199 = vmul.f32 %v1191, %v1191
      %v1200 = vmul.f32 %v1192, %v1192
      %v1201 = vmul.f32 %v1193, %v1193
      %v1202 = vmul.f32 %v1194, %v1194
      %v1203 = vmul.f32 %v1195, %v1195
      %v1204 = vmul.f32 %v1196, %v1196
      %v1205 = vsel %vm904, %v1197, 0.0
      %1206 = vadd.xlane.f32.xlu0 %v1205
      %v1207 = vpop.xlane.xlu0 %1206
      %v1208 = vsel %vm904, %v1198, 0.0
      %1209 = vadd.xlane.f32.xlu0 %v1208
      %v1210 = vpop.xlane.xlu0 %1209
      %v1211 = vsel %vm904, %v1199, 0.0
      %1212 = vadd.xlane.f32.xlu0 %v1211
      %v1213 = vpop.xlane.xlu0 %1212
      %v1214 = vsel %vm904, %v1200, 0.0
      %1215 = vadd.xlane.f32.xlu0 %v1214
      %v1216 = vpop.xlane.xlu0 %1215
      %v1217 = vsel %vm904, %v1201, 0.0
      %1218 = vadd.xlane.f32.xlu0 %v1217
      %v1219 = vpop.xlane.xlu0 %1218
      %v1220 = vsel %vm904, %v1202, 0.0
      %1221 = vadd.xlane.f32.xlu0 %v1220
      %v1222 = vpop.xlane.xlu0 %1221
      %v1223 = vsel %vm904, %v1203, 0.0
      %1224 = vadd.xlane.f32.xlu0 %v1223
      %v1225 = vpop.xlane.xlu0 %1224
      %v1226 = vsel %vm904, %v1204, 0.0
      %1227 = vadd.xlane.f32.xlu0 %v1226
      %v1228 = vpop.xlane.xlu0 %1227
      %v1229 = vmul.f32 %v1207, %v929
      %v1230 = vmul.f32 %v1210, %v929
      %v1231 = vmul.f32 %v1213, %v929
      %v1232 = vmul.f32 %v1216, %v929
      %v1233 = vmul.f32 %v1219, %v929
      %v1234 = vmul.f32 %v1222, %v929
      %v1235 = vmul.f32 %v1225, %v929
      %v1236 = vmul.f32 %v1228, %v929
      %v1237 = vadd.f32 %v1229, 1e-05
      %v1238 = vadd.f32 %v1230, 1e-05
      %v1239 = vadd.f32 %v1231, 1e-05
      %v1240 = vadd.f32 %v1232, 1e-05
      %v1241 = vadd.f32 %v1233, 1e-05
      %v1242 = vadd.f32 %v1234, 1e-05
      %v1243 = vadd.f32 %v1235, 1e-05
      %v1244 = vadd.f32 %v1236, 1e-05
      %v1245 = vrsqrt.pop %v1237
      %v1246 = vrsqrt.pop %v1238
      %v1247 = vrsqrt.pop %v1239
      %v1248 = vrsqrt.pop %v1240
      %v1249 = vrsqrt.pop %v1241
      %v1250 = vrsqrt.pop %v1242
      %v1251 = vrsqrt.pop %v1243
      %v1252 = vrsqrt.pop %v1244
      %v1253 = vmul.f32 %v1189, %v1245
      %v1254 = vmul.f32 %v1190, %v1246
      %v1255 = vmul.f32 %v1191, %v1247
      %v1256 = vmul.f32 %v1192, %v1248
      %v1257 = vmul.f32 %v1193, %v1249
      %v1258 = vmul.f32 %v1194, %v1250
      %v1259 = vmul.f32 %v1195, %v1251
      %v1260 = vmul.f32 %v1196, %v1252
      %v1261 = vld [vmem:[%s8] sm:$0x1]
      %v1263 = vlaneseq
      %v1264 = vshrl.u32 %v1263, 7
      %v1265 = vsub.s32 0, %v1264
      %v1266 = vrot.slane %v1261, %v1265
      %v1268 = vmul.f32 %v1253, %v1266
      %v1269 = vmul.f32 %v1254, %v1266
      %v1270 = vmul.f32 %v1255, %v1266
      %v1271 = vmul.f32 %v1256, %v1266
      %v1272 = vmul.f32 %v1257, %v1266
      %v1273 = vmul.f32 %v1258, %v1266
      %v1274 = vmul.f32 %v1259, %v1266
      %v1275 = vmul.f32 %v1260, %v1266
      %v1276 = vld [vmem:[%s9] sm:$0x1]
      %v1278 = vlaneseq
      %v1279 = vshrl.u32 %v1278, 7
      %v1280 = vsub.s32 0, %v1279
      %v1281 = vrot.slane %v1276, %v1280
      %v1283 = vadd.f32 %v1268, %v1281
      %v1284 = vadd.f32 %v1269, %v1281
      %v1285 = vadd.f32 %v1270, %v1281
      %v1286 = vadd.f32 %v1271, %v1281
      %v1287 = vadd.f32 %v1272, %v1281
      %v1288 = vadd.f32 %v1273, %v1281
      %v1289 = vadd.f32 %v1274, %v1281
      %v1290 = vadd.f32 %v1275, %v1281
      %v1291 = vpack.c.bf16 %v1284, %v1283
      %v1292 = vpack.c.bf16 %v1286, %v1285
      %v1293 = vpack.c.bf16 %v1288, %v1287
      %v1294 = vpack.c.bf16 %v1290, %v1289
      %v1295 = vld [vmem:[%s10] sm:$0xf]
      %v1296 = vld [vmem:[%s10 + $0x4] sm:$0xf]
      %v1297 = vld [vmem:[%s10 + $0x8] sm:$0xf]
      %v1298 = vld [vmem:[%s10 + $0xc] sm:$0xf]
      %v1299 = vld [vmem:[%s11] sm:$0x1]
      %v1301 = vlaneseq
      %v1302 = vshrl.u32 %v1301, 7
      %v1303 = vsub.s32 0, %v1302
      %v1304 = vrot.slane %v1299, %v1303
      %v1310 = vunpack.c.l.b16 %v1295
      %v1311 = vunpack.c.l.b16 %v1296
      %v1312 = vunpack.c.l.b16 %v1297
      %v1313 = vunpack.c.l.b16 %v1298
      %v1314 = vpack.c.b16 %v1311, %v1310
      %v1315 = vpack.c.b16 %v1313, %v1312
      %v1319 = vsel %vm904, %v1291, 0
      %v1322 = vsel %vm904, %v1292, 0
      %v1325 = vsel %vm904, %v1293, 0
      %v1328 = vsel %vm904, %v1294, 0
      %1330 = vmatprep.subr.bf16.mxu0 0
      %1331 = vmatpush1.bf16.msra.mxu0 0
      %1332 = vmatprep.subr.bf16.mxu0 0
      %1333 = vmatpush1.bf16.msra.mxu0 0
      %1334 = vmatprep.subr.bf16.mxu0 0
      %1335 = vmatpush1.bf16.msra.mxu0 0
      %1336 = vmatprep.subr.bf16.mxu0 0
      %1337 = vmatpush1.bf16.msra.mxu0 0
      %1338 = vmatprep.subr.bf16.mxu0 0
      %1339 = vmatpush1.bf16.msra.mxu0 0
      %1340 = vmatprep.subr.bf16.mxu0 0
      %1341 = vmatpush1.bf16.msra.mxu0 0
      %1342 = vmatprep.subr.bf16.mxu0 0
      %1343 = vmatpush1.bf16.msra.mxu0 %v1315
      %1344 = vmatprep.subr.bf16.mxu0 0
      %1345 = vmatpush1.bf16.msra.mxu0 %v1314
      %1346 = vmatprep.subr.bf16.mxu0 0
      %1347 = vmatpush2.bf16.msra.mxu0 0
      %1348 = vmatprep.subr.bf16.mxu0 0
      %1349 = vmatpush2.bf16.msra.mxu0 0
      %1350 = vmatprep.subr.bf16.mxu0 0
      %1351 = vmatpush2.bf16.msra.mxu0 0
      %1352 = vmatprep.subr.bf16.mxu0 0
      %1353 = vmatpush2.bf16.msra.mxu0 0
      %1354 = vmatprep.subr.bf16.mxu0 0
      %1355 = vmatpush2.bf16.msra.mxu0 0
      %1356 = vmatprep.subr.bf16.mxu0 0
      %1357 = vmatpush2.bf16.msra.mxu0 0
      %1358 = vmatprep.subr.bf16.mxu0 0
      %1359 = vmatpush2.bf16.msra.mxu0 0
      %1360 = vmatprep.subr.bf16.mxu0 0
      %1361 = vmatpush2.bf16.msra.mxu0 0
      %1362 = vmatprep.mubr.bf16.mxu0 0
      %1363 = vmatmul.mubr.bf16.gmra.mxu0 %v1319
      %v1364 = vpop.f32.mrf.mxu0
      %v1365 = vadd.f32 %v1304, %v1364
      %v1366 = vpop.f32.mrf.mxu0
      %v1367 = vpop.f32.mrf.mxu0
      %v1368 = vadd.f32 %v1304, %v1367
      %v1369 = vpop.f32.mrf.mxu0
      %1370 = vmatprep.mubr.bf16.mxu0 0
      %1371 = vmatmul.mubr.bf16.gmra.mxu0 %v1322
      %v1372 = vpop.f32.mrf.mxu0
      %v1373 = vadd.f32 %v1304, %v1372
      %v1374 = vpop.f32.mrf.mxu0
      %v1375 = vpop.f32.mrf.mxu0
      %v1376 = vadd.f32 %v1304, %v1375
      %v1377 = vpop.f32.mrf.mxu0
      %1378 = vmatprep.mubr.bf16.mxu0 0
      %1379 = vmatmul.mubr.bf16.gmra.mxu0 %v1325
      %v1380 = vpop.f32.mrf.mxu0
      %v1381 = vadd.f32 %v1304, %v1380
      %v1382 = vpop.f32.mrf.mxu0
      %v1383 = vpop.f32.mrf.mxu0
      %v1384 = vadd.f32 %v1304, %v1383
      %v1385 = vpop.f32.mrf.mxu0
      %1386 = vmatprep.mubr.bf16.mxu0 0
      %1387 = vmatmul.mubr.bf16.gmra.mxu0 %v1328
      %v1388 = vpop.f32.mrf.mxu0
      %v1389 = vadd.f32 %v1304, %v1388
      %v1390 = vpop.f32.mrf.mxu0
      %v1391 = vpop.f32.mrf.mxu0
      %v1392 = vadd.f32 %v1304, %v1391
      %v1393 = vpop.f32.mrf.mxu0
      %1394 = vdwg.mxu0
      %v1395 = vpack.c.bf16 %v1368, %v1365
      %v1396 = vpack.c.bf16 %v1376, %v1373
      %v1397 = vpack.c.bf16 %v1384, %v1381
      %v1398 = vpack.c.bf16 %v1392, %v1389
      %v1399 = vld [vmem:[%s14] sm:$0xff]
      %v1400 = vld [vmem:[%s14 + $0x8] sm:$0xff]
      %v1401 = vld [vmem:[%s14 + $0x10] sm:$0xff]
      %v1402 = vld [vmem:[%s14 + $0x18] sm:$0xff]
      %v1403 = vld [vmem:[%s14 + $0x20] sm:$0xff]
      %v1404 = vld [vmem:[%s14 + $0x28] sm:$0xff]
      %v1405 = vld [vmem:[%s14 + $0x30] sm:$0xff]
      %v1406 = vld [vmem:[%s14 + $0x38] sm:$0xff]
      %v1408 = vsel %vm904, %v1395, 0
      %v1411 = vsel %vm904, %v1396, 0
      %v1414 = vsel %vm904, %v1397, 0
      %v1417 = vsel %vm904, %v1398, 0
      %1419 = vmatprep.subr.bf16.mxu0 0
      %1420 = vmatpush1.bf16.xpose.msra.mxu0 0
      %1421 = vmatprep.subr.bf16.mxu0 0
      %1422 = vmatpush1.bf16.xpose.msra.mxu0 0
      %1423 = vmatprep.subr.bf16.mxu0 0
      %1424 = vmatpush1.bf16.xpose.msra.mxu0 0
      %1425 = vmatprep.subr.bf16.mxu0 0
      %1426 = vmatpush1.bf16.xpose.msra.mxu0 0
      %1427 = vmatprep.subr.bf16.mxu0 0
      %1428 = vmatpush1.bf16.xpose.msra.mxu0 %v1328
      %1429 = vmatprep.subr.bf16.mxu0 0
      %1430 = vmatpush1.bf16.xpose.msra.mxu0 %v1325
      %1431 = vmatprep.subr.bf16.mxu0 0
      %1432 = vmatpush1.bf16.xpose.msra.mxu0 %v1322
      %1433 = vmatprep.subr.bf16.mxu0 0
      %1434 = vmatpush1.bf16.xpose.msra.mxu0 %v1319
      %1435 = vmatprep.subr.bf16.mxu0 0
      %1436 = vmatpush2.bf16.xpose.msra.mxu0 0
      %1437 = vmatprep.subr.bf16.mxu0 0
      %1438 = vmatpush2.bf16.xpose.msra.mxu0 0
      %1439 = vmatprep.subr.bf16.mxu0 0
      %1440 = vmatpush2.bf16.xpose.msra.mxu0 0
      %1441 = vmatprep.subr.bf16.mxu0 0
      %1442 = vmatpush2.bf16.xpose.msra.mxu0 0
      %1443 = vmatprep.subr.bf16.mxu0 0
      %1444 = vmatpush2.bf16.xpose.msra.mxu0 0
      %1445 = vmatprep.subr.bf16.mxu0 0
      %1446 = vmatpush2.bf16.xpose.msra.mxu0 0
      %1447 = vmatprep.subr.bf16.mxu0 0
      %1448 = vmatpush2.bf16.xpose.msra.mxu0 0
      %1449 = vmatprep.subr.bf16.mxu0 0
      %1450 = vmatpush2.bf16.xpose.msra.mxu0 0
      %1451 = vmatprep.mubr.bf16.mxu0 0
      %1452 = vmatmul.mubr.bf16.gmra.mxu0 %v1408
      %v1453 = vpop.f32.mrf.mxu0
      %v1454 = vadd.f32 %v1399, %v1453
      %v1455 = vpop.f32.mrf.mxu0
      %v1456 = vpop.f32.mrf.mxu0
      %v1457 = vadd.f32 %v1400, %v1456
      %v1458 = vpop.f32.mrf.mxu0
      %1459 = vmatprep.mubr.bf16.mxu0 0
      %1460 = vmatmul.mubr.bf16.gmra.mxu0 %v1411
      %v1461 = vpop.f32.mrf.mxu0
      %v1462 = vadd.f32 %v1401, %v1461
      %v1463 = vpop.f32.mrf.mxu0
      %v1464 = vpop.f32.mrf.mxu0
      %v1465 = vadd.f32 %v1402, %v1464
      %v1466 = vpop.f32.mrf.mxu0
      %1467 = vmatprep.mubr.bf16.mxu0 0
      %1468 = vmatmul.mubr.bf16.gmra.mxu0 %v1414
      %v1469 = vpop.f32.mrf.mxu0
      %v1470 = vadd.f32 %v1403, %v1469
      %v1471 = vpop.f32.mrf.mxu0
      %v1472 = vpop.f32.mrf.mxu0
      %v1473 = vadd.f32 %v1404, %v1472
      %v1474 = vpop.f32.mrf.mxu0
      %1475 = vmatprep.mubr.bf16.mxu0 0
      %1476 = vmatmul.mubr.bf16.gmra.mxu0 %v1417
      %v1477 = vpop.f32.mrf.mxu0
      %v1478 = vadd.f32 %v1405, %v1477
      %v1479 = vpop.f32.mrf.mxu0
      %v1480 = vpop.f32.mrf.mxu0
      %v1481 = vadd.f32 %v1406, %v1480
      %v1482 = vpop.f32.mrf.mxu0
      %1483 = vdwg.mxu0
      %vm1484 = vcmask 523264
      %v1485 = vsel %vm1484, %v1454, -inf
      %1486 = vmax.xlane.f32.xlu0 %v1485
      %v1487 = vpop.xlane.xlu0 %1486
      %v1488 = vsel %vm1484, %v1457, -inf
      %1489 = vmax.xlane.f32.xlu0 %v1488
      %v1490 = vpop.xlane.xlu0 %1489
      %v1491 = vsel %vm1484, %v1462, -inf
      %1492 = vmax.xlane.f32.xlu0 %v1491
      %v1493 = vpop.xlane.xlu0 %1492
      %v1494 = vsel %vm1484, %v1465, -inf
      %1495 = vmax.xlane.f32.xlu0 %v1494
      %v1496 = vpop.xlane.xlu0 %1495
      %v1497 = vsel %vm1484, %v1470, -inf
      %1498 = vmax.xlane.f32.xlu0 %v1497
      %v1499 = vpop.xlane.xlu0 %1498
      %v1500 = vsel %vm1484, %v1473, -inf
      %1501 = vmax.xlane.f32.xlu0 %v1500
      %v1502 = vpop.xlane.xlu0 %1501
      %v1503 = vsel %vm1484, %v1478, -inf
      %1504 = vmax.xlane.f32.xlu0 %v1503
      %v1505 = vpop.xlane.xlu0 %1504
      %v1506 = vsel %vm1484, %v1481, -inf
      %1507 = vmax.xlane.f32.xlu0 %v1506
      %v1508 = vpop.xlane.xlu0 %1507
      %v1509 = vsub.f32 %v1454, %v1487
      %v1510 = vsub.f32 %v1457, %v1490
      %v1511 = vsub.f32 %v1462, %v1493
      %v1512 = vsub.f32 %v1465, %v1496
      %v1513 = vsub.f32 %v1470, %v1499
      %v1514 = vsub.f32 %v1473, %v1502
      %v1515 = vsub.f32 %v1478, %v1505
      %v1516 = vsub.f32 %v1481, %v1508
      %v1517 = vmul.f32 %v1509, 1.442695
      %v1518 = vpow.pop %v1517
      %v1519 = vmul.f32 %v1510, 1.442695
      %v1520 = vpow.pop %v1519
      %v1521 = vmul.f32 %v1511, 1.442695
      %v1522 = vpow.pop %v1521
      %v1523 = vmul.f32 %v1512, 1.442695
      %v1524 = vpow.pop %v1523
      %v1525 = vmul.f32 %v1513, 1.442695
      %v1526 = vpow.pop %v1525
      %v1527 = vmul.f32 %v1514, 1.442695
      %v1528 = vpow.pop %v1527
      %v1529 = vmul.f32 %v1515, 1.442695
      %v1530 = vpow.pop %v1529
      %v1531 = vmul.f32 %v1516, 1.442695
      %v1532 = vpow.pop %v1531
      %v1533 = vsel %vm1484, %v1518, 0.0
      %1534 = vadd.xlane.f32.xlu0 %v1533
      %v1535 = vpop.xlane.xlu0 %1534
      %v1536 = vsel %vm1484, %v1520, 0.0
      %1537 = vadd.xlane.f32.xlu0 %v1536
      %v1538 = vpop.xlane.xlu0 %1537
      %v1539 = vsel %vm1484, %v1522, 0.0
      %1540 = vadd.xlane.f32.xlu0 %v1539
      %v1541 = vpop.xlane.xlu0 %1540
      %v1542 = vsel %vm1484, %v1524, 0.0
      %1543 = vadd.xlane.f32.xlu0 %v1542
      %v1544 = vpop.xlane.xlu0 %1543
      %v1545 = vsel %vm1484, %v1526, 0.0
      %1546 = vadd.xlane.f32.xlu0 %v1545
      %v1547 = vpop.xlane.xlu0 %1546
      %v1548 = vsel %vm1484, %v1528, 0.0
      %1549 = vadd.xlane.f32.xlu0 %v1548
      %v1550 = vpop.xlane.xlu0 %1549
      %v1551 = vsel %vm1484, %v1530, 0.0
      %1552 = vadd.xlane.f32.xlu0 %v1551
      %v1553 = vpop.xlane.xlu0 %1552
      %v1554 = vsel %vm1484, %v1532, 0.0
      %1555 = vadd.xlane.f32.xlu0 %v1554
      %v1556 = vpop.xlane.xlu0 %1555
      %v1557 = vrcp.pop %v1535
      %v1558 = vrcp.pop %v1538
      %v1559 = vrcp.pop %v1541
      %v1560 = vrcp.pop %v1544
      %v1561 = vrcp.pop %v1547
      %v1562 = vrcp.pop %v1550
      %v1563 = vrcp.pop %v1553
      %v1564 = vrcp.pop %v1556
      %v1565 = vmul.f32 %v1518, %v1557
      %v1566 = vmul.f32 %v1520, %v1558
      %v1567 = vmul.f32 %v1522, %v1559
      %v1568 = vmul.f32 %v1524, %v1560
      %v1569 = vmul.f32 %v1526, %v1561
      %v1570 = vmul.f32 %v1528, %v1562
      %v1571 = vmul.f32 %v1530, %v1563
      %v1572 = vmul.f32 %v1532, %v1564
      %v1573 = vld [vmem:[%s12] sm:$0xf]
      %v1574 = vld [vmem:[%s12 + $0x4] sm:$0xf]
      %v1575 = vld [vmem:[%s12 + $0x8] sm:$0xf]
      %v1576 = vld [vmem:[%s12 + $0xc] sm:$0xf]
      %v1581 = vunpack.c.l.b16 %v1573
      %v1582 = vunpack.c.l.b16 %v1574
      %v1583 = vunpack.c.l.b16 %v1575
      %v1584 = vunpack.c.l.b16 %v1576
      %v1585 = vpack.c.b16 %v1582, %v1581
      %v1586 = vpack.c.b16 %v1584, %v1583
      %1589 = vmatprep.subr.bf16.mxu0 0
      %1590 = vmatpush1.bf16.msra.mxu0 0
      %1591 = vmatprep.subr.bf16.mxu0 0
      %1592 = vmatpush1.bf16.msra.mxu0 0
      %1593 = vmatprep.subr.bf16.mxu0 0
      %1594 = vmatpush1.bf16.msra.mxu0 0
      %1595 = vmatprep.subr.bf16.mxu0 0
      %1596 = vmatpush1.bf16.msra.mxu0 0
      %1597 = vmatprep.subr.bf16.mxu0 0
      %1598 = vmatpush1.bf16.msra.mxu0 0
      %1599 = vmatprep.subr.bf16.mxu0 0
      %1600 = vmatpush1.bf16.msra.mxu0 0
      %1601 = vmatprep.subr.bf16.mxu0 0
      %1602 = vmatpush1.bf16.msra.mxu0 %v1586
      %1603 = vmatprep.subr.bf16.mxu0 0
      %1604 = vmatpush1.bf16.msra.mxu0 %v1585
      %1605 = vmatprep.subr.bf16.mxu0 0
      %1606 = vmatpush2.bf16.msra.mxu0 0
      %1607 = vmatprep.subr.bf16.mxu0 0
      %1608 = vmatpush2.bf16.msra.mxu0 0
      %1609 = vmatprep.subr.bf16.mxu0 0
      %1610 = vmatpush2.bf16.msra.mxu0 0
      %1611 = vmatprep.subr.bf16.mxu0 0
      %1612 = vmatpush2.bf16.msra.mxu0 0
      %1613 = vmatprep.subr.bf16.mxu0 0
      %1614 = vmatpush2.bf16.msra.mxu0 0
      %1615 = vmatprep.subr.bf16.mxu0 0
      %1616 = vmatpush2.bf16.msra.mxu0 0
      %1617 = vmatprep.subr.bf16.mxu0 0
      %1618 = vmatpush2.bf16.msra.mxu0 0
      %1619 = vmatprep.subr.bf16.mxu0 0
      %1620 = vmatpush2.bf16.msra.mxu0 0
      %1621 = vmatprep.mubr.bf16.mxu0 0
      %1622 = vmatmul.mubr.bf16.gmra.mxu0 %v1319
      %v1623 = vpop.f32.mrf.mxu0
      %v1624 = vadd.f32 0.0, %v1623
      %v1625 = vpop.f32.mrf.mxu0
      %v1626 = vpop.f32.mrf.mxu0
      %v1627 = vadd.f32 0.0, %v1626
      %v1628 = vpop.f32.mrf.mxu0
      %1629 = vmatprep.mubr.bf16.mxu0 0
      %1630 = vmatmul.mubr.bf16.gmra.mxu0 %v1322
      %v1631 = vpop.f32.mrf.mxu0
      %v1632 = vadd.f32 0.0, %v1631
      %v1633 = vpop.f32.mrf.mxu0
      %v1634 = vpop.f32.mrf.mxu0
      %v1635 = vadd.f32 0.0, %v1634
      %v1636 = vpop.f32.mrf.mxu0
      %1637 = vmatprep.mubr.bf16.mxu0 0
      %1638 = vmatmul.mubr.bf16.gmra.mxu0 %v1325
      %v1639 = vpop.f32.mrf.mxu0
      %v1640 = vadd.f32 0.0, %v1639
      %v1641 = vpop.f32.mrf.mxu0
      %v1642 = vpop.f32.mrf.mxu0
      %v1643 = vadd.f32 0.0, %v1642
      %v1644 = vpop.f32.mrf.mxu0
      %1645 = vmatprep.mubr.bf16.mxu0 0
      %1646 = vmatmul.mubr.bf16.gmra.mxu0 %v1328
      %v1647 = vpop.f32.mrf.mxu0
      %v1648 = vadd.f32 0.0, %v1647
      %v1649 = vpop.f32.mrf.mxu0
      %v1650 = vpop.f32.mrf.mxu0
      %v1651 = vadd.f32 0.0, %v1650
      %v1652 = vpop.f32.mrf.mxu0
      %1653 = vdwg.mxu0
      %v1654 = vpack.c.bf16 %v1566, %v1565
      %v1655 = vpack.c.bf16 %v1568, %v1567
      %v1656 = vpack.c.bf16 %v1570, %v1569
      %v1657 = vpack.c.bf16 %v1572, %v1571
      %v1658 = vpack.c.bf16 %v1627, %v1624
      %v1659 = vpack.c.bf16 %v1635, %v1632
      %v1660 = vpack.c.bf16 %v1643, %v1640
      %v1661 = vpack.c.bf16 %v1651, %v1648
      %s1662 = scalar_lea.vmem %s10, 16
      %v1663 = vld [vmem:[%s1662] sm:$0xf]
      %v1664 = vld [vmem:[%s1662 + $0x4] sm:$0xf]
      %v1665 = vld [vmem:[%s1662 + $0x8] sm:$0xf]
      %v1666 = vld [vmem:[%s1662 + $0xc] sm:$0xf]
      %s1667 = scalar_lea.vmem %s11, 1
      %v1668 = vld [vmem:[%s1667] sm:$0x1]
      %v1670 = vlaneseq
      %v1671 = vshrl.u32 %v1670, 7
      %v1672 = vsub.s32 0, %v1671
      %v1673 = vrot.slane %v1668, %v1672
      %v1679 = vunpack.c.l.b16 %v1663
      %v1680 = vunpack.c.l.b16 %v1664
      %v1681 = vunpack.c.l.b16 %v1665
      %v1682 = vunpack.c.l.b16 %v1666
      %v1683 = vpack.c.b16 %v1680, %v1679
      %v1684 = vpack.c.b16 %v1682, %v1681
      %1687 = vmatprep.subr.bf16.mxu0 0
      %1688 = vmatpush1.bf16.msra.mxu0 0
      %1689 = vmatprep.subr.bf16.mxu0 0
      %1690 = vmatpush1.bf16.msra.mxu0 0
      %1691 = vmatprep.subr.bf16.mxu0 0
      %1692 = vmatpush1.bf16.msra.mxu0 0
      %1693 = vmatprep.subr.bf16.mxu0 0
      %1694 = vmatpush1.bf16.msra.mxu0 0
      %1695 = vmatprep.subr.bf16.mxu0 0
      %1696 = vmatpush1.bf16.msra.mxu0 0
      %1697 = vmatprep.subr.bf16.mxu0 0
      %1698 = vmatpush1.bf16.msra.mxu0 0
      %1699 = vmatprep.subr.bf16.mxu0 0
      %1700 = vmatpush1.bf16.msra.mxu0 %v1684
      %1701 = vmatprep.subr.bf16.mxu0 0
      %1702 = vmatpush1.bf16.msra.mxu0 %v1683
      %1703 = vmatprep.subr.bf16.mxu0 0
      %1704 = vmatpush2.bf16.msra.mxu0 0
      %1705 = vmatprep.subr.bf16.mxu0 0
      %1706 = vmatpush2.bf16.msra.mxu0 0
      %1707 = vmatprep.subr.bf16.mxu0 0
      %1708 = vmatpush2.bf16.msra.mxu0 0
      %1709 = vmatprep.subr.bf16.mxu0 0
      %1710 = vmatpush2.bf16.msra.mxu0 0
      %1711 = vmatprep.subr.bf16.mxu0 0
      %1712 = vmatpush2.bf16.msra.mxu0 0
      %1713 = vmatprep.subr.bf16.mxu0 0
      %1714 = vmatpush2.bf16.msra.mxu0 0
      %1715 = vmatprep.subr.bf16.mxu0 0
      %1716 = vmatpush2.bf16.msra.mxu0 0
      %1717 = vmatprep.subr.bf16.mxu0 0
      %1718 = vmatpush2.bf16.msra.mxu0 0
      %1719 = vmatprep.mubr.bf16.mxu0 0
      %1720 = vmatmul.mubr.bf16.gmra.mxu0 %v1319
      %v1721 = vpop.f32.mrf.mxu0
      %v1722 = vadd.f32 %v1673, %v1721
      %v1723 = vpop.f32.mrf.mxu0
      %v1724 = vpop.f32.mrf.mxu0
      %v1725 = vadd.f32 %v1673, %v1724
      %v1726 = vpop.f32.mrf.mxu0
      %1727 = vmatprep.mubr.bf16.mxu0 0
      %1728 = vmatmul.mubr.bf16.gmra.mxu0 %v1322
      %v1729 = vpop.f32.mrf.mxu0
      %v1730 = vadd.f32 %v1673, %v1729
      %v1731 = vpop.f32.mrf.mxu0
      %v1732 = vpop.f32.mrf.mxu0
      %v1733 = vadd.f32 %v1673, %v1732
      %v1734 = vpop.f32.mrf.mxu0
      %1735 = vmatprep.mubr.bf16.mxu0 0
      %1736 = vmatmul.mubr.bf16.gmra.mxu0 %v1325
      %v1737 = vpop.f32.mrf.mxu0
      %v1738 = vadd.f32 %v1673, %v1737
      %v1739 = vpop.f32.mrf.mxu0
      %v1740 = vpop.f32.mrf.mxu0
      %v1741 = vadd.f32 %v1673, %v1740
      %v1742 = vpop.f32.mrf.mxu0
      %1743 = vmatprep.mubr.bf16.mxu0 0
      %1744 = vmatmul.mubr.bf16.gmra.mxu0 %v1328
      %v1745 = vpop.f32.mrf.mxu0
      %v1746 = vadd.f32 %v1673, %v1745
      %v1747 = vpop.f32.mrf.mxu0
      %v1748 = vpop.f32.mrf.mxu0
      %v1749 = vadd.f32 %v1673, %v1748
      %v1750 = vpop.f32.mrf.mxu0
      %1751 = vdwg.mxu0
      %v1752 = vpack.c.bf16 %v1725, %v1722
      %v1753 = vpack.c.bf16 %v1733, %v1730
      %v1754 = vpack.c.bf16 %v1741, %v1738
      %v1755 = vpack.c.bf16 %v1749, %v1746
      %s1756 = scalar_lea.vmem %s14, 64
      %v1757 = vld [vmem:[%s1756] sm:$0xff]
      %v1758 = vld [vmem:[%s1756 + $0x8] sm:$0xff]
      %v1759 = vld [vmem:[%s1756 + $0x10] sm:$0xff]
      %v1760 = vld [vmem:[%s1756 + $0x18] sm:$0xff]
      %v1761 = vld [vmem:[%s1756 + $0x20] sm:$0xff]
      %v1762 = vld [vmem:[%s1756 + $0x28] sm:$0xff]
      %v1763 = vld [vmem:[%s1756 + $0x30] sm:$0xff]
      %v1764 = vld [vmem:[%s1756 + $0x38] sm:$0xff]
      %v1766 = vsel %vm904, %v1752, 0
      %v1769 = vsel %vm904, %v1753, 0
      %v1772 = vsel %vm904, %v1754, 0
      %v1775 = vsel %vm904, %v1755, 0
      %1777 = vmatprep.subr.bf16.mxu0 0
      %1778 = vmatpush1.bf16.xpose.msra.mxu0 0
      %1779 = vmatprep.subr.bf16.mxu0 0
      %1780 = vmatpush1.bf16.xpose.msra.mxu0 0
      %1781 = vmatprep.subr.bf16.mxu0 0
      %1782 = vmatpush1.bf16.xpose.msra.mxu0 0
      %1783 = vmatprep.subr.bf16.mxu0 0
      %1784 = vmatpush1.bf16.xpose.msra.mxu0 0
      %1785 = vmatprep.subr.bf16.mxu0 0
      %1786 = vmatpush1.bf16.xpose.msra.mxu0 %v1328
      %1787 = vmatprep.subr.bf16.mxu0 0
      %1788 = vmatpush1.bf16.xpose.msra.mxu0 %v1325
      %1789 = vmatprep.subr.bf16.mxu0 0
      %1790 = vmatpush1.bf16.xpose.msra.mxu0 %v1322
      %1791 = vmatprep.subr.bf16.mxu0 0
      %1792 = vmatpush1.bf16.xpose.msra.mxu0 %v1319
      %1793 = vmatprep.subr.bf16.mxu0 0
      %1794 = vmatpush2.bf16.xpose.msra.mxu0 0
      %1795 = vmatprep.subr.bf16.mxu0 0
      %1796 = vmatpush2.bf16.xpose.msra.mxu0 0
      %1797 = vmatprep.subr.bf16.mxu0 0
      %1798 = vmatpush2.bf16.xpose.msra.mxu0 0
      %1799 = vmatprep.subr.bf16.mxu0 0
      %1800 = vmatpush2.bf16.xpose.msra.mxu0 0
      %1801 = vmatprep.subr.bf16.mxu0 0
      %1802 = vmatpush2.bf16.xpose.msra.mxu0 0
      %1803 = vmatprep.subr.bf16.mxu0 0
      %1804 = vmatpush2.bf16.xpose.msra.mxu0 0
      %1805 = vmatprep.subr.bf16.mxu0 0
      %1806 = vmatpush2.bf16.xpose.msra.mxu0 0
      %1807 = vmatprep.subr.bf16.mxu0 0
      %1808 = vmatpush2.bf16.xpose.msra.mxu0 0
      %1809 = vmatprep.mubr.bf16.mxu0 0
      %1810 = vmatmul.mubr.bf16.gmra.mxu0 %v1766
      %v1811 = vpop.f32.mrf.mxu0
      %v1812 = vadd.f32 %v1757, %v1811
      %v1813 = vpop.f32.mrf.mxu0
      %v1814 = vpop.f32.mrf.mxu0
      %v1815 = vadd.f32 %v1758, %v1814
      %v1816 = vpop.f32.mrf.mxu0
      %1817 = vmatprep.mubr.bf16.mxu0 0
      %1818 = vmatmul.mubr.bf16.gmra.mxu0 %v1769
      %v1819 = vpop.f32.mrf.mxu0
      %v1820 = vadd.f32 %v1759, %v1819
      %v1821 = vpop.f32.mrf.mxu0
      %v1822 = vpop.f32.mrf.mxu0
      %v1823 = vadd.f32 %v1760, %v1822
      %v1824 = vpop.f32.mrf.mxu0
      %1825 = vmatprep.mubr.bf16.mxu0 0
      %1826 = vmatmul.mubr.bf16.gmra.mxu0 %v1772
      %v1827 = vpop.f32.mrf.mxu0
      %v1828 = vadd.f32 %v1761, %v1827
      %v1829 = vpop.f32.mrf.mxu0
      %v1830 = vpop.f32.mrf.mxu0
      %v1831 = vadd.f32 %v1762, %v1830
      %v1832 = vpop.f32.mrf.mxu0
      %1833 = vmatprep.mubr.bf16.mxu0 0
      %1834 = vmatmul.mubr.bf16.gmra.mxu0 %v1775
      %v1835 = vpop.f32.mrf.mxu0
      %v1836 = vadd.f32 %v1763, %v1835
      %v1837 = vpop.f32.mrf.mxu0
      %v1838 = vpop.f32.mrf.mxu0
      %v1839 = vadd.f32 %v1764, %v1838
      %v1840 = vpop.f32.mrf.mxu0
      %1841 = vdwg.mxu0
      %v1842 = vsel %vm1484, %v1812, -inf
      %1843 = vmax.xlane.f32.xlu0 %v1842
      %v1844 = vpop.xlane.xlu0 %1843
      %v1845 = vsel %vm1484, %v1815, -inf
      %1846 = vmax.xlane.f32.xlu0 %v1845
      %v1847 = vpop.xlane.xlu0 %1846
      %v1848 = vsel %vm1484, %v1820, -inf
      %1849 = vmax.xlane.f32.xlu0 %v1848
      %v1850 = vpop.xlane.xlu0 %1849
      %v1851 = vsel %vm1484, %v1823, -inf
      %1852 = vmax.xlane.f32.xlu0 %v1851
      %v1853 = vpop.xlane.xlu0 %1852
      %v1854 = vsel %vm1484, %v1828, -inf
      %1855 = vmax.xlane.f32.xlu0 %v1854
      %v1856 = vpop.xlane.xlu0 %1855
      %v1857 = vsel %vm1484, %v1831, -inf
      %1858 = vmax.xlane.f32.xlu0 %v1857
      %v1859 = vpop.xlane.xlu0 %1858
      %v1860 = vsel %vm1484, %v1836, -inf
      %1861 = vmax.xlane.f32.xlu0 %v1860
      %v1862 = vpop.xlane.xlu0 %1861
      %v1863 = vsel %vm1484, %v1839, -inf
      %1864 = vmax.xlane.f32.xlu0 %v1863
      %v1865 = vpop.xlane.xlu0 %1864
      %v1866 = vsub.f32 %v1812, %v1844
      %v1867 = vsub.f32 %v1815, %v1847
      %v1868 = vsub.f32 %v1820, %v1850
      %v1869 = vsub.f32 %v1823, %v1853
      %v1870 = vsub.f32 %v1828, %v1856
      %v1871 = vsub.f32 %v1831, %v1859
      %v1872 = vsub.f32 %v1836, %v1862
      %v1873 = vsub.f32 %v1839, %v1865
      %v1874 = vmul.f32 %v1866, 1.442695
      %v1875 = vpow.pop %v1874
      %v1876 = vmul.f32 %v1867, 1.442695
      %v1877 = vpow.pop %v1876
      %v1878 = vmul.f32 %v1868, 1.442695
      %v1879 = vpow.pop %v1878
      %v1880 = vmul.f32 %v1869, 1.442695
      %v1881 = vpow.pop %v1880
      %v1882 = vmul.f32 %v1870, 1.442695
      %v1883 = vpow.pop %v1882
      %v1884 = vmul.f32 %v1871, 1.442695
      %v1885 = vpow.pop %v1884
      %v1886 = vmul.f32 %v1872, 1.442695
      %v1887 = vpow.pop %v1886
      %v1888 = vmul.f32 %v1873, 1.442695
      %v1889 = vpow.pop %v1888
      %v1890 = vsel %vm1484, %v1875, 0.0
      %1891 = vadd.xlane.f32.xlu0 %v1890
      %v1892 = vpop.xlane.xlu0 %1891
      %v1893 = vsel %vm1484, %v1877, 0.0
      %1894 = vadd.xlane.f32.xlu0 %v1893
      %v1895 = vpop.xlane.xlu0 %1894
      %v1896 = vsel %vm1484, %v1879, 0.0
      %1897 = vadd.xlane.f32.xlu0 %v1896
      %v1898 = vpop.xlane.xlu0 %1897
      %v1899 = vsel %vm1484, %v1881, 0.0
      %1900 = vadd.xlane.f32.xlu0 %v1899
      %v1901 = vpop.xlane.xlu0 %1900
      %v1902 = vsel %vm1484, %v1883, 0.0
      %1903 = vadd.xlane.f32.xlu0 %v1902
      %v1904 = vpop.xlane.xlu0 %1903
      %v1905 = vsel %vm1484, %v1885, 0.0
      %1906 = vadd.xlane.f32.xlu0 %v1905
      %v1907 = vpop.xlane.xlu0 %1906
      %v1908 = vsel %vm1484, %v1887, 0.0
      %1909 = vadd.xlane.f32.xlu0 %v1908
      %v1910 = vpop.xlane.xlu0 %1909
      %v1911 = vsel %vm1484, %v1889, 0.0
      %1912 = vadd.xlane.f32.xlu0 %v1911
      %v1913 = vpop.xlane.xlu0 %1912
      %v1914 = vrcp.pop %v1892
      %v1915 = vrcp.pop %v1895
      %v1916 = vrcp.pop %v1898
      %v1917 = vrcp.pop %v1901
      %v1918 = vrcp.pop %v1904
      %v1919 = vrcp.pop %v1907
      %v1920 = vrcp.pop %v1910
      %v1921 = vrcp.pop %v1913
      %v1922 = vmul.f32 %v1875, %v1914
      %v1923 = vmul.f32 %v1877, %v1915
      %v1924 = vmul.f32 %v1879, %v1916
      %v1925 = vmul.f32 %v1881, %v1917
      %v1926 = vmul.f32 %v1883, %v1918
      %v1927 = vmul.f32 %v1885, %v1919
      %v1928 = vmul.f32 %v1887, %v1920
      %v1929 = vmul.f32 %v1889, %v1921
      %s1930 = scalar_lea.vmem %s12, 16
      %v1931 = vld [vmem:[%s1930] sm:$0xf]
      %v1932 = vld [vmem:[%s1930 + $0x4] sm:$0xf]
      %v1933 = vld [vmem:[%s1930 + $0x8] sm:$0xf]
      %v1934 = vld [vmem:[%s1930 + $0xc] sm:$0xf]
      %v1939 = vunpack.c.l.b16 %v1931
      %v1940 = vunpack.c.l.b16 %v1932
      %v1941 = vunpack.c.l.b16 %v1933
      %v1942 = vunpack.c.l.b16 %v1934
      %v1943 = vpack.c.b16 %v1940, %v1939
      %v1944 = vpack.c.b16 %v1942, %v1941
      %1947 = vmatprep.subr.bf16.mxu0 0
      %1948 = vmatpush1.bf16.msra.mxu0 0
      %1949 = vmatprep.subr.bf16.mxu0 0
      %1950 = vmatpush1.bf16.msra.mxu0 0
      %1951 = vmatprep.subr.bf16.mxu0 0
      %1952 = vmatpush1.bf16.msra.mxu0 0
      %1953 = vmatprep.subr.bf16.mxu0 0
      %1954 = vmatpush1.bf16.msra.mxu0 0
      %1955 = vmatprep.subr.bf16.mxu0 0
      %1956 = vmatpush1.bf16.msra.mxu0 0
      %1957 = vmatprep.subr.bf16.mxu0 0
      %1958 = vmatpush1.bf16.msra.mxu0 0
      %1959 = vmatprep.subr.bf16.mxu0 0
      %1960 = vmatpush1.bf16.msra.mxu0 %v1944
      %1961 = vmatprep.subr.bf16.mxu0 0
      %1962 = vmatpush1.bf16.msra.mxu0 %v1943
      %1963 = vmatprep.subr.bf16.mxu0 0
      %1964 = vmatpush2.bf16.msra.mxu0 0
      %1965 = vmatprep.subr.bf16.mxu0 0
      %1966 = vmatpush2.bf16.msra.mxu0 0
      %1967 = vmatprep.subr.bf16.mxu0 0
      %1968 = vmatpush2.bf16.msra.mxu0 0
      %1969 = vmatprep.subr.bf16.mxu0 0
      %1970 = vmatpush2.bf16.msra.mxu0 0
      %1971 = vmatprep.subr.bf16.mxu0 0
      %1972 = vmatpush2.bf16.msra.mxu0 0
      %1973 = vmatprep.subr.bf16.mxu0 0
      %1974 = vmatpush2.bf16.msra.mxu0 0
      %1975 = vmatprep.subr.bf16.mxu0 0
      %1976 = vmatpush2.bf16.msra.mxu0 0
      %1977 = vmatprep.subr.bf16.mxu0 0
      %1978 = vmatpush2.bf16.msra.mxu0 0
      %1979 = vmatprep.mubr.bf16.mxu0 0
      %1980 = vmatmul.mubr.bf16.gmra.mxu0 %v1319
      %v1981 = vpop.f32.mrf.mxu0
      %v1982 = vadd.f32 0.0, %v1981
      %v1983 = vpop.f32.mrf.mxu0
      %v1984 = vpop.f32.mrf.mxu0
      %v1985 = vadd.f32 0.0, %v1984
      %v1986 = vpop.f32.mrf.mxu0
      %1987 = vmatprep.mubr.bf16.mxu0 0
      %1988 = vmatmul.mubr.bf16.gmra.mxu0 %v1322
      %v1989 = vpop.f32.mrf.mxu0
      %v1990 = vadd.f32 0.0, %v1989
      %v1991 = vpop.f32.mrf.mxu0
      %v1992 = vpop.f32.mrf.mxu0
      %v1993 = vadd.f32 0.0, %v1992
      %v1994 = vpop.f32.mrf.mxu0
      %1995 = vmatprep.mubr.bf16.mxu0 0
      %1996 = vmatmul.mubr.bf16.gmra.mxu0 %v1325
      %v1997 = vpop.f32.mrf.mxu0
      %v1998 = vadd.f32 0.0, %v1997
      %v1999 = vpop.f32.mrf.mxu0
      %v2000 = vpop.f32.mrf.mxu0
      %v2001 = vadd.f32 0.0, %v2000
      %v2002 = vpop.f32.mrf.mxu0
      %2003 = vmatprep.mubr.bf16.mxu0 0
      %2004 = vmatmul.mubr.bf16.gmra.mxu0 %v1328
      %v2005 = vpop.f32.mrf.mxu0
      %v2006 = vadd.f32 0.0, %v2005
      %v2007 = vpop.f32.mrf.mxu0
      %v2008 = vpop.f32.mrf.mxu0
      %v2009 = vadd.f32 0.0, %v2008
      %v2010 = vpop.f32.mrf.mxu0
      %2011 = vdwg.mxu0
      %v2012 = vpack.c.bf16 %v1923, %v1922
      %v2013 = vpack.c.bf16 %v1925, %v1924
      %v2014 = vpack.c.bf16 %v1927, %v1926
      %v2015 = vpack.c.bf16 %v1929, %v1928
      %v2016 = vpack.c.bf16 %v1985, %v1982
      %v2017 = vpack.c.bf16 %v1993, %v1990
      %v2018 = vpack.c.bf16 %v2001, %v1998
      %v2019 = vpack.c.bf16 %v2009, %v2006
      %v2021 = vsel %vm1484, %v2012, 0
      %v2024 = vsel %vm1484, %v2013, 0
      %v2027 = vsel %vm1484, %v2014, 0
      %v2030 = vsel %vm1484, %v2015, 0
      %2032 = vmatprep.subr.bf16.mxu0 0
      %2033 = vmatpush1.bf16.msra.mxu0 0
      %2034 = vmatprep.subr.bf16.mxu0 0
      %2035 = vmatpush1.bf16.msra.mxu0 0
      %2036 = vmatprep.subr.bf16.mxu0 0
      %2037 = vmatpush1.bf16.msra.mxu0 0
      %2038 = vmatprep.subr.bf16.mxu0 0
      %2039 = vmatpush1.bf16.msra.mxu0 0
      %2040 = vmatprep.subr.bf16.mxu0 0
      %2041 = vmatpush1.bf16.msra.mxu0 %v2019
      %2042 = vmatprep.subr.bf16.mxu0 0
      %2043 = vmatpush1.bf16.msra.mxu0 %v2018
      %2044 = vmatprep.subr.bf16.mxu0 0
      %2045 = vmatpush1.bf16.msra.mxu0 %v2017
      %2046 = vmatprep.subr.bf16.mxu0 0
      %2047 = vmatpush1.bf16.msra.mxu0 %v2016
      %2048 = vmatprep.subr.bf16.mxu0 0
      %2049 = vmatpush2.bf16.msra.mxu0 0
      %2050 = vmatprep.subr.bf16.mxu0 0
      %2051 = vmatpush2.bf16.msra.mxu0 0
      %2052 = vmatprep.subr.bf16.mxu0 0
      %2053 = vmatpush2.bf16.msra.mxu0 0
      %2054 = vmatprep.subr.bf16.mxu0 0
      %2055 = vmatpush2.bf16.msra.mxu0 0
      %2056 = vmatprep.subr.bf16.mxu0 0
      %2057 = vmatpush2.bf16.msra.mxu0 0
      %2058 = vmatprep.subr.bf16.mxu0 0
      %2059 = vmatpush2.bf16.msra.mxu0 0
      %2060 = vmatprep.subr.bf16.mxu0 0
      %2061 = vmatpush2.bf16.msra.mxu0 0
      %2062 = vmatprep.subr.bf16.mxu0 0
      %2063 = vmatpush2.bf16.msra.mxu0 0
      %2064 = vmatprep.mubr.bf16.mxu0 0
      %2065 = vmatmul.mubr.bf16.gmra.mxu0 %v2021
      %v2066 = vpop.f32.mrf.mxu0
      %v2067 = vadd.f32 0.0, %v2066
      %v2068 = vpop.f32.mrf.mxu0
      %v2069 = vpop.f32.mrf.mxu0
      %v2070 = vadd.f32 0.0, %v2069
      %v2071 = vpop.f32.mrf.mxu0
      %2072 = vmatprep.mubr.bf16.mxu0 0
      %2073 = vmatmul.mubr.bf16.gmra.mxu0 %v2024
      %v2074 = vpop.f32.mrf.mxu0
      %v2075 = vadd.f32 0.0, %v2074
      %v2076 = vpop.f32.mrf.mxu0
      %v2077 = vpop.f32.mrf.mxu0
      %v2078 = vadd.f32 0.0, %v2077
      %v2079 = vpop.f32.mrf.mxu0
      %2080 = vmatprep.mubr.bf16.mxu0 0
      %2081 = vmatmul.mubr.bf16.gmra.mxu0 %v2027
      %v2082 = vpop.f32.mrf.mxu0
      %v2083 = vadd.f32 0.0, %v2082
      %v2084 = vpop.f32.mrf.mxu0
      %v2085 = vpop.f32.mrf.mxu0
      %v2086 = vadd.f32 0.0, %v2085
      %v2087 = vpop.f32.mrf.mxu0
      %2088 = vmatprep.mubr.bf16.mxu0 0
      %2089 = vmatmul.mubr.bf16.gmra.mxu0 %v2030
      %v2090 = vpop.f32.mrf.mxu0
      %v2091 = vadd.f32 0.0, %v2090
      %v2092 = vpop.f32.mrf.mxu0
      %v2093 = vpop.f32.mrf.mxu0
      %v2094 = vadd.f32 0.0, %v2093
      %v2095 = vpop.f32.mrf.mxu0
      %2096 = vdwg.mxu0
      %v2098 = vsel %vm1484, %v1654, 0
      %v2101 = vsel %vm1484, %v1655, 0
      %v2104 = vsel %vm1484, %v1656, 0
      %v2107 = vsel %vm1484, %v1657, 0
      %2109 = vmatprep.subr.bf16.mxu0 0
      %2110 = vmatpush1.bf16.msra.mxu0 0
      %2111 = vmatprep.subr.bf16.mxu0 0
      %2112 = vmatpush1.bf16.msra.mxu0 0
      %2113 = vmatprep.subr.bf16.mxu0 0
      %2114 = vmatpush1.bf16.msra.mxu0 0
      %2115 = vmatprep.subr.bf16.mxu0 0
      %2116 = vmatpush1.bf16.msra.mxu0 0
      %2117 = vmatprep.subr.bf16.mxu0 0
      %2118 = vmatpush1.bf16.msra.mxu0 %v1661
      %2119 = vmatprep.subr.bf16.mxu0 0
      %2120 = vmatpush1.bf16.msra.mxu0 %v1660
      %2121 = vmatprep.subr.bf16.mxu0 0
      %2122 = vmatpush1.bf16.msra.mxu0 %v1659
      %2123 = vmatprep.subr.bf16.mxu0 0
      %2124 = vmatpush1.bf16.msra.mxu0 %v1658
      %2125 = vmatprep.subr.bf16.mxu0 0
      %2126 = vmatpush2.bf16.msra.mxu0 0
      %2127 = vmatprep.subr.bf16.mxu0 0
      %2128 = vmatpush2.bf16.msra.mxu0 0
      %2129 = vmatprep.subr.bf16.mxu0 0
      %2130 = vmatpush2.bf16.msra.mxu0 0
      %2131 = vmatprep.subr.bf16.mxu0 0
      %2132 = vmatpush2.bf16.msra.mxu0 0
      %2133 = vmatprep.subr.bf16.mxu0 0
      %2134 = vmatpush2.bf16.msra.mxu0 0
      %2135 = vmatprep.subr.bf16.mxu0 0
      %2136 = vmatpush2.bf16.msra.mxu0 0
      %2137 = vmatprep.subr.bf16.mxu0 0
      %2138 = vmatpush2.bf16.msra.mxu0 0
      %2139 = vmatprep.subr.bf16.mxu0 0
      %2140 = vmatpush2.bf16.msra.mxu0 0
      %2141 = vmatprep.mubr.bf16.mxu0 0
      %2142 = vmatmul.mubr.bf16.gmra.mxu0 %v2098
      %v2143 = vpop.f32.mrf.mxu0
      %v2144 = vadd.f32 %v2067, %v2143
      %v2145 = vpop.f32.mrf.mxu0
      %v2146 = vpop.f32.mrf.mxu0
      %v2147 = vadd.f32 %v2070, %v2146
      %v2148 = vpop.f32.mrf.mxu0
      %2149 = vmatprep.mubr.bf16.mxu0 0
      %2150 = vmatmul.mubr.bf16.gmra.mxu0 %v2101
      %v2151 = vpop.f32.mrf.mxu0
      %v2152 = vadd.f32 %v2075, %v2151
      %v2153 = vpop.f32.mrf.mxu0
      %v2154 = vpop.f32.mrf.mxu0
      %v2155 = vadd.f32 %v2078, %v2154
      %v2156 = vpop.f32.mrf.mxu0
      %2157 = vmatprep.mubr.bf16.mxu0 0
      %2158 = vmatmul.mubr.bf16.gmra.mxu0 %v2104
      %v2159 = vpop.f32.mrf.mxu0
      %v2160 = vadd.f32 %v2083, %v2159
      %v2161 = vpop.f32.mrf.mxu0
      %v2162 = vpop.f32.mrf.mxu0
      %v2163 = vadd.f32 %v2086, %v2162
      %v2164 = vpop.f32.mrf.mxu0
      %2165 = vmatprep.mubr.bf16.mxu0 0
      %2166 = vmatmul.mubr.bf16.gmra.mxu0 %v2107
      %v2167 = vpop.f32.mrf.mxu0
      %v2168 = vadd.f32 %v2091, %v2167
      %v2169 = vpop.f32.mrf.mxu0
      %v2170 = vpop.f32.mrf.mxu0
      %v2171 = vadd.f32 %v2094, %v2170
      %v2172 = vpop.f32.mrf.mxu0
      %2173 = vdwg.mxu0
      %s2174 = scalar_lea.vmem %s10, 32
      %v2175 = vld [vmem:[%s2174] sm:$0xf]
      %v2176 = vld [vmem:[%s2174 + $0x4] sm:$0xf]
      %v2177 = vld [vmem:[%s2174 + $0x8] sm:$0xf]
      %v2178 = vld [vmem:[%s2174 + $0xc] sm:$0xf]
      %s2179 = scalar_lea.vmem %s11, 2
      %v2180 = vld [vmem:[%s2179] sm:$0x1]
      %v2182 = vlaneseq
      %v2183 = vshrl.u32 %v2182, 7
      %v2184 = vsub.s32 0, %v2183
      %v2185 = vrot.slane %v2180, %v2184
      %v2191 = vunpack.c.l.b16 %v2175
      %v2192 = vunpack.c.l.b16 %v2176
      %v2193 = vunpack.c.l.b16 %v2177
      %v2194 = vunpack.c.l.b16 %v2178
      %v2195 = vpack.c.b16 %v2192, %v2191
      %v2196 = vpack.c.b16 %v2194, %v2193
      %2199 = vmatprep.subr.bf16.mxu0 0
      %2200 = vmatpush1.bf16.msra.mxu0 0
      %2201 = vmatprep.subr.bf16.mxu0 0
      %2202 = vmatpush1.bf16.msra.mxu0 0
      %2203 = vmatprep.subr.bf16.mxu0 0
      %2204 = vmatpush1.bf16.msra.mxu0 0
      %2205 = vmatprep.subr.bf16.mxu0 0
      %2206 = vmatpush1.bf16.msra.mxu0 0
      %2207 = vmatprep.subr.bf16.mxu0 0
      %2208 = vmatpush1.bf16.msra.mxu0 0
      %2209 = vmatprep.subr.bf16.mxu0 0
      %2210 = vmatpush1.bf16.msra.mxu0 0
      %2211 = vmatprep.subr.bf16.mxu0 0
      %2212 = vmatpush1.bf16.msra.mxu0 %v2196
      %2213 = vmatprep.subr.bf16.mxu0 0
      %2214 = vmatpush1.bf16.msra.mxu0 %v2195
      %2215 = vmatprep.subr.bf16.mxu0 0
      %2216 = vmatpush2.bf16.msra.mxu0 0
      %2217 = vmatprep.subr.bf16.mxu0 0
      %2218 = vmatpush2.bf16.msra.mxu0 0
      %2219 = vmatprep.subr.bf16.mxu0 0
      %2220 = vmatpush2.bf16.msra.mxu0 0
      %2221 = vmatprep.subr.bf16.mxu0 0
      %2222 = vmatpush2.bf16.msra.mxu0 0
      %2223 = vmatprep.subr.bf16.mxu0 0
      %2224 = vmatpush2.bf16.msra.mxu0 0
      %2225 = vmatprep.subr.bf16.mxu0 0
      %2226 = vmatpush2.bf16.msra.mxu0 0
      %2227 = vmatprep.subr.bf16.mxu0 0
      %2228 = vmatpush2.bf16.msra.mxu0 0
      %2229 = vmatprep.subr.bf16.mxu0 0
      %2230 = vmatpush2.bf16.msra.mxu0 0
      %2231 = vmatprep.mubr.bf16.mxu0 0
      %2232 = vmatmul.mubr.bf16.gmra.mxu0 %v1319
      %v2233 = vpop.f32.mrf.mxu0
      %v2234 = vadd.f32 %v2185, %v2233
      %v2235 = vpop.f32.mrf.mxu0
      %v2236 = vpop.f32.mrf.mxu0
      %v2237 = vadd.f32 %v2185, %v2236
      %v2238 = vpop.f32.mrf.mxu0
      %2239 = vmatprep.mubr.bf16.mxu0 0
      %2240 = vmatmul.mubr.bf16.gmra.mxu0 %v1322
      %v2241 = vpop.f32.mrf.mxu0
      %v2242 = vadd.f32 %v2185, %v2241
      %v2243 = vpop.f32.mrf.mxu0
      %v2244 = vpop.f32.mrf.mxu0
      %v2245 = vadd.f32 %v2185, %v2244
      %v2246 = vpop.f32.mrf.mxu0
      %2247 = vmatprep.mubr.bf16.mxu0 0
      %2248 = vmatmul.mubr.bf16.gmra.mxu0 %v1325
      %v2249 = vpop.f32.mrf.mxu0
      %v2250 = vadd.f32 %v2185, %v2249
      %v2251 = vpop.f32.mrf.mxu0
      %v2252 = vpop.f32.mrf.mxu0
      %v2253 = vadd.f32 %v2185, %v2252
      %v2254 = vpop.f32.mrf.mxu0
      %2255 = vmatprep.mubr.bf16.mxu0 0
      %2256 = vmatmul.mubr.bf16.gmra.mxu0 %v1328
      %v2257 = vpop.f32.mrf.mxu0
      %v2258 = vadd.f32 %v2185, %v2257
      %v2259 = vpop.f32.mrf.mxu0
      %v2260 = vpop.f32.mrf.mxu0
      %v2261 = vadd.f32 %v2185, %v2260
      %v2262 = vpop.f32.mrf.mxu0
      %2263 = vdwg.mxu0
      %v2264 = vpack.c.bf16 %v2237, %v2234
      %v2265 = vpack.c.bf16 %v2245, %v2242
      %v2266 = vpack.c.bf16 %v2253, %v2250
      %v2267 = vpack.c.bf16 %v2261, %v2258
      %s2268 = scalar_lea.vmem %s14, 128
      %v2269 = vld [vmem:[%s2268] sm:$0xff]
      %v2270 = vld [vmem:[%s2268 + $0x8] sm:$0xff]
      %v2271 = vld [vmem:[%s2268 + $0x10] sm:$0xff]
      %v2272 = vld [vmem:[%s2268 + $0x18] sm:$0xff]
      %v2273 = vld [vmem:[%s2268 + $0x20] sm:$0xff]
      %v2274 = vld [vmem:[%s2268 + $0x28] sm:$0xff]
      %v2275 = vld [vmem:[%s2268 + $0x30] sm:$0xff]
      %v2276 = vld [vmem:[%s2268 + $0x38] sm:$0xff]
      %v2278 = vsel %vm904, %v2264, 0
      %v2281 = vsel %vm904, %v2265, 0
      %v2284 = vsel %vm904, %v2266, 0
      %v2287 = vsel %vm904, %v2267, 0
      %2289 = vmatprep.subr.bf16.mxu0 0
      %2290 = vmatpush1.bf16.xpose.msra.mxu0 0
      %2291 = vmatprep.subr.bf16.mxu0 0
      %2292 = vmatpush1.bf16.xpose.msra.mxu0 0
      %2293 = vmatprep.subr.bf16.mxu0 0
      %2294 = vmatpush1.bf16.xpose.msra.mxu0 0
      %2295 = vmatprep.subr.bf16.mxu0 0
      %2296 = vmatpush1.bf16.xpose.msra.mxu0 0
      %2297 = vmatprep.subr.bf16.mxu0 0
      %2298 = vmatpush1.bf16.xpose.msra.mxu0 %v1328
      %2299 = vmatprep.subr.bf16.mxu0 0
      %2300 = vmatpush1.bf16.xpose.msra.mxu0 %v1325
      %2301 = vmatprep.subr.bf16.mxu0 0
      %2302 = vmatpush1.bf16.xpose.msra.mxu0 %v1322
      %2303 = vmatprep.subr.bf16.mxu0 0
      %2304 = vmatpush1.bf16.xpose.msra.mxu0 %v1319
      %2305 = vmatprep.subr.bf16.mxu0 0
      %2306 = vmatpush2.bf16.xpose.msra.mxu0 0
      %2307 = vmatprep.subr.bf16.mxu0 0
      %2308 = vmatpush2.bf16.xpose.msra.mxu0 0
      %2309 = vmatprep.subr.bf16.mxu0 0
      %2310 = vmatpush2.bf16.xpose.msra.mxu0 0
      %2311 = vmatprep.subr.bf16.mxu0 0
      %2312 = vmatpush2.bf16.xpose.msra.mxu0 0
      %2313 = vmatprep.subr.bf16.mxu0 0
      %2314 = vmatpush2.bf16.xpose.msra.mxu0 0
      %2315 = vmatprep.subr.bf16.mxu0 0
      %2316 = vmatpush2.bf16.xpose.msra.mxu0 0
      %2317 = vmatprep.subr.bf16.mxu0 0
      %2318 = vmatpush2.bf16.xpose.msra.mxu0 0
      %2319 = vmatprep.subr.bf16.mxu0 0
      %2320 = vmatpush2.bf16.xpose.msra.mxu0 0
      %2321 = vmatprep.mubr.bf16.mxu0 0
      %2322 = vmatmul.mubr.bf16.gmra.mxu0 %v2278
      %v2323 = vpop.f32.mrf.mxu0
      %v2324 = vadd.f32 %v2269, %v2323
      %v2325 = vpop.f32.mrf.mxu0
      %v2326 = vpop.f32.mrf.mxu0
      %v2327 = vadd.f32 %v2270, %v2326
      %v2328 = vpop.f32.mrf.mxu0
      %2329 = vmatprep.mubr.bf16.mxu0 0
      %2330 = vmatmul.mubr.bf16.gmra.mxu0 %v2281
      %v2331 = vpop.f32.mrf.mxu0
      %v2332 = vadd.f32 %v2271, %v2331
      %v2333 = vpop.f32.mrf.mxu0
      %v2334 = vpop.f32.mrf.mxu0
      %v2335 = vadd.f32 %v2272, %v2334
      %v2336 = vpop.f32.mrf.mxu0
      %2337 = vmatprep.mubr.bf16.mxu0 0
      %2338 = vmatmul.mubr.bf16.gmra.mxu0 %v2284
      %v2339 = vpop.f32.mrf.mxu0
      %v2340 = vadd.f32 %v2273, %v2339
      %v2341 = vpop.f32.mrf.mxu0
      %v2342 = vpop.f32.mrf.mxu0
      %v2343 = vadd.f32 %v2274, %v2342
      %v2344 = vpop.f32.mrf.mxu0
      %2345 = vmatprep.mubr.bf16.mxu0 0
      %2346 = vmatmul.mubr.bf16.gmra.mxu0 %v2287
      %v2347 = vpop.f32.mrf.mxu0
      %v2348 = vadd.f32 %v2275, %v2347
      %v2349 = vpop.f32.mrf.mxu0
      %v2350 = vpop.f32.mrf.mxu0
      %v2351 = vadd.f32 %v2276, %v2350
      %v2352 = vpop.f32.mrf.mxu0
      %2353 = vdwg.mxu0
      %v2354 = vsel %vm1484, %v2324, -inf
      %2355 = vmax.xlane.f32.xlu0 %v2354
      %v2356 = vpop.xlane.xlu0 %2355
      %v2357 = vsel %vm1484, %v2327, -inf
      %2358 = vmax.xlane.f32.xlu0 %v2357
      %v2359 = vpop.xlane.xlu0 %2358
      %v2360 = vsel %vm1484, %v2332, -inf
      %2361 = vmax.xlane.f32.xlu0 %v2360
      %v2362 = vpop.xlane.xlu0 %2361
      %v2363 = vsel %vm1484, %v2335, -inf
      %2364 = vmax.xlane.f32.xlu0 %v2363
      %v2365 = vpop.xlane.xlu0 %2364
      %v2366 = vsel %vm1484, %v2340, -inf
      %2367 = vmax.xlane.f32.xlu0 %v2366
      %v2368 = vpop.xlane.xlu0 %2367
      %v2369 = vsel %vm1484, %v2343, -inf
      %2370 = vmax.xlane.f32.xlu0 %v2369
      %v2371 = vpop.xlane.xlu0 %2370
      %v2372 = vsel %vm1484, %v2348, -inf
      %2373 = vmax.xlane.f32.xlu0 %v2372
      %v2374 = vpop.xlane.xlu0 %2373
      %v2375 = vsel %vm1484, %v2351, -inf
      %2376 = vmax.xlane.f32.xlu0 %v2375
      %v2377 = vpop.xlane.xlu0 %2376
      %v2378 = vsub.f32 %v2324, %v2356
      %v2379 = vsub.f32 %v2327, %v2359
      %v2380 = vsub.f32 %v2332, %v2362
      %v2381 = vsub.f32 %v2335, %v2365
      %v2382 = vsub.f32 %v2340, %v2368
      %v2383 = vsub.f32 %v2343, %v2371
      %v2384 = vsub.f32 %v2348, %v2374
      %v2385 = vsub.f32 %v2351, %v2377
      %v2386 = vmul.f32 %v2378, 1.442695
      %v2387 = vpow.pop %v2386
      %v2388 = vmul.f32 %v2379, 1.442695
      %v2389 = vpow.pop %v2388
      %v2390 = vmul.f32 %v2380, 1.442695
      %v2391 = vpow.pop %v2390
      %v2392 = vmul.f32 %v2381, 1.442695
      %v2393 = vpow.pop %v2392
      %v2394 = vmul.f32 %v2382, 1.442695
      %v2395 = vpow.pop %v2394
      %v2396 = vmul.f32 %v2383, 1.442695
      %v2397 = vpow.pop %v2396
      %v2398 = vmul.f32 %v2384, 1.442695
      %v2399 = vpow.pop %v2398
      %v2400 = vmul.f32 %v2385, 1.442695
      %v2401 = vpow.pop %v2400
      %v2402 = vsel %vm1484, %v2387, 0.0
      %2403 = vadd.xlane.f32.xlu0 %v2402
      %v2404 = vpop.xlane.xlu0 %2403
      %v2405 = vsel %vm1484, %v2389, 0.0
      %2406 = vadd.xlane.f32.xlu0 %v2405
      %v2407 = vpop.xlane.xlu0 %2406
      %v2408 = vsel %vm1484, %v2391, 0.0
      %2409 = vadd.xlane.f32.xlu0 %v2408
      %v2410 = vpop.xlane.xlu0 %2409
      %v2411 = vsel %vm1484, %v2393, 0.0
      %2412 = vadd.xlane.f32.xlu0 %v2411
      %v2413 = vpop.xlane.xlu0 %2412
      %v2414 = vsel %vm1484, %v2395, 0.0
      %2415 = vadd.xlane.f32.xlu0 %v2414
      %v2416 = vpop.xlane.xlu0 %2415
      %v2417 = vsel %vm1484, %v2397, 0.0
      %2418 = vadd.xlane.f32.xlu0 %v2417
      %v2419 = vpop.xlane.xlu0 %2418
      %v2420 = vsel %vm1484, %v2399, 0.0
      %2421 = vadd.xlane.f32.xlu0 %v2420
      %v2422 = vpop.xlane.xlu0 %2421
      %v2423 = vsel %vm1484, %v2401, 0.0
      %2424 = vadd.xlane.f32.xlu0 %v2423
      %v2425 = vpop.xlane.xlu0 %2424
      %v2426 = vrcp.pop %v2404
      %v2427 = vrcp.pop %v2407
      %v2428 = vrcp.pop %v2410
      %v2429 = vrcp.pop %v2413
      %v2430 = vrcp.pop %v2416
      %v2431 = vrcp.pop %v2419
      %v2432 = vrcp.pop %v2422
      %v2433 = vrcp.pop %v2425
      %v2434 = vmul.f32 %v2387, %v2426
      %v2435 = vmul.f32 %v2389, %v2427
      %v2436 = vmul.f32 %v2391, %v2428
      %v2437 = vmul.f32 %v2393, %v2429
      %v2438 = vmul.f32 %v2395, %v2430
      %v2439 = vmul.f32 %v2397, %v2431
      %v2440 = vmul.f32 %v2399, %v2432
      %v2441 = vmul.f32 %v2401, %v2433
      %s2442 = scalar_lea.vmem %s12, 32
      %v2443 = vld [vmem:[%s2442] sm:$0xf]
      %v2444 = vld [vmem:[%s2442 + $0x4] sm:$0xf]
      %v2445 = vld [vmem:[%s2442 + $0x8] sm:$0xf]
      %v2446 = vld [vmem:[%s2442 + $0xc] sm:$0xf]
      %v2451 = vunpack.c.l.b16 %v2443
      %v2452 = vunpack.c.l.b16 %v2444
      %v2453 = vunpack.c.l.b16 %v2445
      %v2454 = vunpack.c.l.b16 %v2446
      %v2455 = vpack.c.b16 %v2452, %v2451
      %v2456 = vpack.c.b16 %v2454, %v2453
      %2459 = vmatprep.subr.bf16.mxu0 0
      %2460 = vmatpush1.bf16.msra.mxu0 0
      %2461 = vmatprep.subr.bf16.mxu0 0
      %2462 = vmatpush1.bf16.msra.mxu0 0
      %2463 = vmatprep.subr.bf16.mxu0 0
      %2464 = vmatpush1.bf16.msra.mxu0 0
      %2465 = vmatprep.subr.bf16.mxu0 0
      %2466 = vmatpush1.bf16.msra.mxu0 0
      %2467 = vmatprep.subr.bf16.mxu0 0
      %2468 = vmatpush1.bf16.msra.mxu0 0
      %2469 = vmatprep.subr.bf16.mxu0 0
      %2470 = vmatpush1.bf16.msra.mxu0 0
      %2471 = vmatprep.subr.bf16.mxu0 0
      %2472 = vmatpush1.bf16.msra.mxu0 %v2456
      %2473 = vmatprep.subr.bf16.mxu0 0
      %2474 = vmatpush1.bf16.msra.mxu0 %v2455
      %2475 = vmatprep.subr.bf16.mxu0 0
      %2476 = vmatpush2.bf16.msra.mxu0 0
      %2477 = vmatprep.subr.bf16.mxu0 0
      %2478 = vmatpush2.bf16.msra.mxu0 0
      %2479 = vmatprep.subr.bf16.mxu0 0
      %2480 = vmatpush2.bf16.msra.mxu0 0
      %2481 = vmatprep.subr.bf16.mxu0 0
      %2482 = vmatpush2.bf16.msra.mxu0 0
      %2483 = vmatprep.subr.bf16.mxu0 0
      %2484 = vmatpush2.bf16.msra.mxu0 0
      %2485 = vmatprep.subr.bf16.mxu0 0
      %2486 = vmatpush2.bf16.msra.mxu0 0
      %2487 = vmatprep.subr.bf16.mxu0 0
      %2488 = vmatpush2.bf16.msra.mxu0 0
      %2489 = vmatprep.subr.bf16.mxu0 0
      %2490 = vmatpush2.bf16.msra.mxu0 0
      %2491 = vmatprep.mubr.bf16.mxu0 0
      %2492 = vmatmul.mubr.bf16.gmra.mxu0 %v1319
      %v2493 = vpop.f32.mrf.mxu0
      %v2494 = vadd.f32 0.0, %v2493
      %v2495 = vpop.f32.mrf.mxu0
      %v2496 = vpop.f32.mrf.mxu0
      %v2497 = vadd.f32 0.0, %v2496
      %v2498 = vpop.f32.mrf.mxu0
      %2499 = vmatprep.mubr.bf16.mxu0 0
      %2500 = vmatmul.mubr.bf16.gmra.mxu0 %v1322
      %v2501 = vpop.f32.mrf.mxu0
      %v2502 = vadd.f32 0.0, %v2501
      %v2503 = vpop.f32.mrf.mxu0
      %v2504 = vpop.f32.mrf.mxu0
      %v2505 = vadd.f32 0.0, %v2504
      %v2506 = vpop.f32.mrf.mxu0
      %2507 = vmatprep.mubr.bf16.mxu0 0
      %2508 = vmatmul.mubr.bf16.gmra.mxu0 %v1325
      %v2509 = vpop.f32.mrf.mxu0
      %v2510 = vadd.f32 0.0, %v2509
      %v2511 = vpop.f32.mrf.mxu0
      %v2512 = vpop.f32.mrf.mxu0
      %v2513 = vadd.f32 0.0, %v2512
      %v2514 = vpop.f32.mrf.mxu0
      %2515 = vmatprep.mubr.bf16.mxu0 0
      %2516 = vmatmul.mubr.bf16.gmra.mxu0 %v1328
      %v2517 = vpop.f32.mrf.mxu0
      %v2518 = vadd.f32 0.0, %v2517
      %v2519 = vpop.f32.mrf.mxu0
      %v2520 = vpop.f32.mrf.mxu0
      %v2521 = vadd.f32 0.0, %v2520
      %v2522 = vpop.f32.mrf.mxu0
      %2523 = vdwg.mxu0
      %v2524 = vpack.c.bf16 %v2435, %v2434
      %v2525 = vpack.c.bf16 %v2437, %v2436
      %v2526 = vpack.c.bf16 %v2439, %v2438
      %v2527 = vpack.c.bf16 %v2441, %v2440
      %v2528 = vpack.c.bf16 %v2497, %v2494
      %v2529 = vpack.c.bf16 %v2505, %v2502
      %v2530 = vpack.c.bf16 %v2513, %v2510
      %v2531 = vpack.c.bf16 %v2521, %v2518
      %v2533 = vsel %vm1484, %v2524, 0
      %v2536 = vsel %vm1484, %v2525, 0
      %v2539 = vsel %vm1484, %v2526, 0
      %v2542 = vsel %vm1484, %v2527, 0
      %2544 = vmatprep.subr.bf16.mxu0 0
      %2545 = vmatpush1.bf16.msra.mxu0 0
      %2546 = vmatprep.subr.bf16.mxu0 0
      %2547 = vmatpush1.bf16.msra.mxu0 0
      %2548 = vmatprep.subr.bf16.mxu0 0
      %2549 = vmatpush1.bf16.msra.mxu0 0
      %2550 = vmatprep.subr.bf16.mxu0 0
      %2551 = vmatpush1.bf16.msra.mxu0 0
      %2552 = vmatprep.subr.bf16.mxu0 0
      %2553 = vmatpush1.bf16.msra.mxu0 %v2531
      %2554 = vmatprep.subr.bf16.mxu0 0
      %2555 = vmatpush1.bf16.msra.mxu0 %v2530
      %2556 = vmatprep.subr.bf16.mxu0 0
      %2557 = vmatpush1.bf16.msra.mxu0 %v2529
      %2558 = vmatprep.subr.bf16.mxu0 0
      %2559 = vmatpush1.bf16.msra.mxu0 %v2528
      %2560 = vmatprep.subr.bf16.mxu0 0
      %2561 = vmatpush2.bf16.msra.mxu0 0
      %2562 = vmatprep.subr.bf16.mxu0 0
      %2563 = vmatpush2.bf16.msra.mxu0 0
      %2564 = vmatprep.subr.bf16.mxu0 0
      %2565 = vmatpush2.bf16.msra.mxu0 0
      %2566 = vmatprep.subr.bf16.mxu0 0
      %2567 = vmatpush2.bf16.msra.mxu0 0
      %2568 = vmatprep.subr.bf16.mxu0 0
      %2569 = vmatpush2.bf16.msra.mxu0 0
      %2570 = vmatprep.subr.bf16.mxu0 0
      %2571 = vmatpush2.bf16.msra.mxu0 0
      %2572 = vmatprep.subr.bf16.mxu0 0
      %2573 = vmatpush2.bf16.msra.mxu0 0
      %2574 = vmatprep.subr.bf16.mxu0 0
      %2575 = vmatpush2.bf16.msra.mxu0 0
      %2576 = vmatprep.mubr.bf16.mxu0 0
      %2577 = vmatmul.mubr.bf16.gmra.mxu0 %v2533
      %v2578 = vpop.f32.mrf.mxu0
      %v2579 = vadd.f32 0.0, %v2578
      %v2580 = vpop.f32.mrf.mxu0
      %v2581 = vpop.f32.mrf.mxu0
      %v2582 = vadd.f32 0.0, %v2581
      %v2583 = vpop.f32.mrf.mxu0
      %2584 = vmatprep.mubr.bf16.mxu0 0
      %2585 = vmatmul.mubr.bf16.gmra.mxu0 %v2536
      %v2586 = vpop.f32.mrf.mxu0
      %v2587 = vadd.f32 0.0, %v2586
      %v2588 = vpop.f32.mrf.mxu0
      %v2589 = vpop.f32.mrf.mxu0
      %v2590 = vadd.f32 0.0, %v2589
      %v2591 = vpop.f32.mrf.mxu0
      %2592 = vmatprep.mubr.bf16.mxu0 0
      %2593 = vmatmul.mubr.bf16.gmra.mxu0 %v2539
      %v2594 = vpop.f32.mrf.mxu0
      %v2595 = vadd.f32 0.0, %v2594
      %v2596 = vpop.f32.mrf.mxu0
      %v2597 = vpop.f32.mrf.mxu0
      %v2598 = vadd.f32 0.0, %v2597
      %v2599 = vpop.f32.mrf.mxu0
      %2600 = vmatprep.mubr.bf16.mxu0 0
      %2601 = vmatmul.mubr.bf16.gmra.mxu0 %v2542
      %v2602 = vpop.f32.mrf.mxu0
      %v2603 = vadd.f32 0.0, %v2602
      %v2604 = vpop.f32.mrf.mxu0
      %v2605 = vpop.f32.mrf.mxu0
      %v2606 = vadd.f32 0.0, %v2605
      %v2607 = vpop.f32.mrf.mxu0
      %2608 = vdwg.mxu0
      %v2609 = vadd.f32 %v2144, %v2579
      %v2610 = vadd.f32 %v2147, %v2582
      %v2611 = vadd.f32 %v2152, %v2587
      %v2612 = vadd.f32 %v2155, %v2590
      %v2613 = vadd.f32 %v2160, %v2595
      %v2614 = vadd.f32 %v2163, %v2598
      %v2615 = vadd.f32 %v2168, %v2603
      %v2616 = vadd.f32 %v2171, %v2606
      %s2617 = scalar_lea.vmem %s10, 48
      %v2618 = vld [vmem:[%s2617] sm:$0xf]
      %v2619 = vld [vmem:[%s2617 + $0x4] sm:$0xf]
      %v2620 = vld [vmem:[%s2617 + $0x8] sm:$0xf]
      %v2621 = vld [vmem:[%s2617 + $0xc] sm:$0xf]
      %s2622 = scalar_lea.vmem %s11, 3
      %v2623 = vld [vmem:[%s2622] sm:$0x1]
      %v2625 = vlaneseq
      %v2626 = vshrl.u32 %v2625, 7
      %v2627 = vsub.s32 0, %v2626
      %v2628 = vrot.slane %v2623, %v2627
      %v2634 = vunpack.c.l.b16 %v2618
      %v2635 = vunpack.c.l.b16 %v2619
      %v2636 = vunpack.c.l.b16 %v2620
      %v2637 = vunpack.c.l.b16 %v2621
      %v2638 = vpack.c.b16 %v2635, %v2634
      %v2639 = vpack.c.b16 %v2637, %v2636
      %2642 = vmatprep.subr.bf16.mxu0 0
      %2643 = vmatpush1.bf16.msra.mxu0 0
      %2644 = vmatprep.subr.bf16.mxu0 0
      %2645 = vmatpush1.bf16.msra.mxu0 0
      %2646 = vmatprep.subr.bf16.mxu0 0
      %2647 = vmatpush1.bf16.msra.mxu0 0
      %2648 = vmatprep.subr.bf16.mxu0 0
      %2649 = vmatpush1.bf16.msra.mxu0 0
      %2650 = vmatprep.subr.bf16.mxu0 0
      %2651 = vmatpush1.bf16.msra.mxu0 0
      %2652 = vmatprep.subr.bf16.mxu0 0
      %2653 = vmatpush1.bf16.msra.mxu0 0
      %2654 = vmatprep.subr.bf16.mxu0 0
      %2655 = vmatpush1.bf16.msra.mxu0 %v2639
      %2656 = vmatprep.subr.bf16.mxu0 0
      %2657 = vmatpush1.bf16.msra.mxu0 %v2638
      %2658 = vmatprep.subr.bf16.mxu0 0
      %2659 = vmatpush2.bf16.msra.mxu0 0
      %2660 = vmatprep.subr.bf16.mxu0 0
      %2661 = vmatpush2.bf16.msra.mxu0 0
      %2662 = vmatprep.subr.bf16.mxu0 0
      %2663 = vmatpush2.bf16.msra.mxu0 0
      %2664 = vmatprep.subr.bf16.mxu0 0
      %2665 = vmatpush2.bf16.msra.mxu0 0
      %2666 = vmatprep.subr.bf16.mxu0 0
      %2667 = vmatpush2.bf16.msra.mxu0 0
      %2668 = vmatprep.subr.bf16.mxu0 0
      %2669 = vmatpush2.bf16.msra.mxu0 0
      %2670 = vmatprep.subr.bf16.mxu0 0
      %2671 = vmatpush2.bf16.msra.mxu0 0
      %2672 = vmatprep.subr.bf16.mxu0 0
      %2673 = vmatpush2.bf16.msra.mxu0 0
      %2674 = vmatprep.mubr.bf16.mxu0 0
      %2675 = vmatmul.mubr.bf16.gmra.mxu0 %v1319
      %v2676 = vpop.f32.mrf.mxu0
      %v2677 = vadd.f32 %v2628, %v2676
      %v2678 = vpop.f32.mrf.mxu0
      %v2679 = vpop.f32.mrf.mxu0
      %v2680 = vadd.f32 %v2628, %v2679
      %v2681 = vpop.f32.mrf.mxu0
      %2682 = vmatprep.mubr.bf16.mxu0 0
      %2683 = vmatmul.mubr.bf16.gmra.mxu0 %v1322
      %v2684 = vpop.f32.mrf.mxu0
      %v2685 = vadd.f32 %v2628, %v2684
      %v2686 = vpop.f32.mrf.mxu0
      %v2687 = vpop.f32.mrf.mxu0
      %v2688 = vadd.f32 %v2628, %v2687
      %v2689 = vpop.f32.mrf.mxu0
      %2690 = vmatprep.mubr.bf16.mxu0 0
      %2691 = vmatmul.mubr.bf16.gmra.mxu0 %v1325
      %v2692 = vpop.f32.mrf.mxu0
      %v2693 = vadd.f32 %v2628, %v2692
      %v2694 = vpop.f32.mrf.mxu0
      %v2695 = vpop.f32.mrf.mxu0
      %v2696 = vadd.f32 %v2628, %v2695
      %v2697 = vpop.f32.mrf.mxu0
      %2698 = vmatprep.mubr.bf16.mxu0 0
      %2699 = vmatmul.mubr.bf16.gmra.mxu0 %v1328
      %v2700 = vpop.f32.mrf.mxu0
      %v2701 = vadd.f32 %v2628, %v2700
      %v2702 = vpop.f32.mrf.mxu0
      %v2703 = vpop.f32.mrf.mxu0
      %v2704 = vadd.f32 %v2628, %v2703
      %v2705 = vpop.f32.mrf.mxu0
      %2706 = vdwg.mxu0
      %v2707 = vpack.c.bf16 %v2680, %v2677
      %v2708 = vpack.c.bf16 %v2688, %v2685
      %v2709 = vpack.c.bf16 %v2696, %v2693
      %v2710 = vpack.c.bf16 %v2704, %v2701
      %s2711 = scalar_lea.vmem %s14, 192
      %v2712 = vld [vmem:[%s2711] sm:$0xff]
      %v2713 = vld [vmem:[%s2711 + $0x8] sm:$0xff]
      %v2714 = vld [vmem:[%s2711 + $0x10] sm:$0xff]
      %v2715 = vld [vmem:[%s2711 + $0x18] sm:$0xff]
      %v2716 = vld [vmem:[%s2711 + $0x20] sm:$0xff]
      %v2717 = vld [vmem:[%s2711 + $0x28] sm:$0xff]
      %v2718 = vld [vmem:[%s2711 + $0x30] sm:$0xff]
      %v2719 = vld [vmem:[%s2711 + $0x38] sm:$0xff]
      %v2721 = vsel %vm904, %v2707, 0
      %v2724 = vsel %vm904, %v2708, 0
      %v2727 = vsel %vm904, %v2709, 0
      %v2730 = vsel %vm904, %v2710, 0
      %2732 = vmatprep.subr.bf16.mxu0 0
      %2733 = vmatpush1.bf16.xpose.msra.mxu0 0
      %2734 = vmatprep.subr.bf16.mxu0 0
      %2735 = vmatpush1.bf16.xpose.msra.mxu0 0
      %2736 = vmatprep.subr.bf16.mxu0 0
      %2737 = vmatpush1.bf16.xpose.msra.mxu0 0
      %2738 = vmatprep.subr.bf16.mxu0 0
      %2739 = vmatpush1.bf16.xpose.msra.mxu0 0
      %2740 = vmatprep.subr.bf16.mxu0 0
      %2741 = vmatpush1.bf16.xpose.msra.mxu0 %v1328
      %2742 = vmatprep.subr.bf16.mxu0 0
      %2743 = vmatpush1.bf16.xpose.msra.mxu0 %v1325
      %2744 = vmatprep.subr.bf16.mxu0 0
      %2745 = vmatpush1.bf16.xpose.msra.mxu0 %v1322
      %2746 = vmatprep.subr.bf16.mxu0 0
      %2747 = vmatpush1.bf16.xpose.msra.mxu0 %v1319
      %2748 = vmatprep.subr.bf16.mxu0 0
      %2749 = vmatpush2.bf16.xpose.msra.mxu0 0
      %2750 = vmatprep.subr.bf16.mxu0 0
      %2751 = vmatpush2.bf16.xpose.msra.mxu0 0
      %2752 = vmatprep.subr.bf16.mxu0 0
      %2753 = vmatpush2.bf16.xpose.msra.mxu0 0
      %2754 = vmatprep.subr.bf16.mxu0 0
      %2755 = vmatpush2.bf16.xpose.msra.mxu0 0
      %2756 = vmatprep.subr.bf16.mxu0 0
      %2757 = vmatpush2.bf16.xpose.msra.mxu0 0
      %2758 = vmatprep.subr.bf16.mxu0 0
      %2759 = vmatpush2.bf16.xpose.msra.mxu0 0
      %2760 = vmatprep.subr.bf16.mxu0 0
      %2761 = vmatpush2.bf16.xpose.msra.mxu0 0
      %2762 = vmatprep.subr.bf16.mxu0 0
      %2763 = vmatpush2.bf16.xpose.msra.mxu0 0
      %2764 = vmatprep.mubr.bf16.mxu0 0
      %2765 = vmatmul.mubr.bf16.gmra.mxu0 %v2721
      %v2766 = vpop.f32.mrf.mxu0
      %v2767 = vadd.f32 %v2712, %v2766
      %v2768 = vpop.f32.mrf.mxu0
      %v2769 = vpop.f32.mrf.mxu0
      %v2770 = vadd.f32 %v2713, %v2769
      %v2771 = vpop.f32.mrf.mxu0
      %2772 = vmatprep.mubr.bf16.mxu0 0
      %2773 = vmatmul.mubr.bf16.gmra.mxu0 %v2724
      %v2774 = vpop.f32.mrf.mxu0
      %v2775 = vadd.f32 %v2714, %v2774
      %v2776 = vpop.f32.mrf.mxu0
      %v2777 = vpop.f32.mrf.mxu0
      %v2778 = vadd.f32 %v2715, %v2777
      %v2779 = vpop.f32.mrf.mxu0
      %2780 = vmatprep.mubr.bf16.mxu0 0
      %2781 = vmatmul.mubr.bf16.gmra.mxu0 %v2727
      %v2782 = vpop.f32.mrf.mxu0
      %v2783 = vadd.f32 %v2716, %v2782
      %v2784 = vpop.f32.mrf.mxu0
      %v2785 = vpop.f32.mrf.mxu0
      %v2786 = vadd.f32 %v2717, %v2785
      %v2787 = vpop.f32.mrf.mxu0
      %2788 = vmatprep.mubr.bf16.mxu0 0
      %2789 = vmatmul.mubr.bf16.gmra.mxu0 %v2730
      %v2790 = vpop.f32.mrf.mxu0
      %v2791 = vadd.f32 %v2718, %v2790
      %v2792 = vpop.f32.mrf.mxu0
      %v2793 = vpop.f32.mrf.mxu0
      %v2794 = vadd.f32 %v2719, %v2793
      %v2795 = vpop.f32.mrf.mxu0
      %2796 = vdwg.mxu0
      %v2797 = vsel %vm1484, %v2767, -inf
      %2798 = vmax.xlane.f32.xlu0 %v2797
      %v2799 = vpop.xlane.xlu0 %2798
      %v2800 = vsel %vm1484, %v2770, -inf
      %2801 = vmax.xlane.f32.xlu0 %v2800
      %v2802 = vpop.xlane.xlu0 %2801
      %v2803 = vsel %vm1484, %v2775, -inf
      %2804 = vmax.xlane.f32.xlu0 %v2803
      %v2805 = vpop.xlane.xlu0 %2804
      %v2806 = vsel %vm1484, %v2778, -inf
      %2807 = vmax.xlane.f32.xlu0 %v2806
      %v2808 = vpop.xlane.xlu0 %2807
      %v2809 = vsel %vm1484, %v2783, -inf
      %2810 = vmax.xlane.f32.xlu0 %v2809
      %v2811 = vpop.xlane.xlu0 %2810
      %v2812 = vsel %vm1484, %v2786, -inf
      %2813 = vmax.xlane.f32.xlu0 %v2812
      %v2814 = vpop.xlane.xlu0 %2813
      %v2815 = vsel %vm1484, %v2791, -inf
      %2816 = vmax.xlane.f32.xlu0 %v2815
      %v2817 = vpop.xlane.xlu0 %2816
      %v2818 = vsel %vm1484, %v2794, -inf
      %2819 = vmax.xlane.f32.xlu0 %v2818
      %v2820 = vpop.xlane.xlu0 %2819
      %v2821 = vsub.f32 %v2767, %v2799
      %v2822 = vsub.f32 %v2770, %v2802
      %v2823 = vsub.f32 %v2775, %v2805
      %v2824 = vsub.f32 %v2778, %v2808
      %v2825 = vsub.f32 %v2783, %v2811
      %v2826 = vsub.f32 %v2786, %v2814
      %v2827 = vsub.f32 %v2791, %v2817
      %v2828 = vsub.f32 %v2794, %v2820
      %v2829 = vmul.f32 %v2821, 1.442695
      %v2830 = vpow.pop %v2829
      %v2831 = vmul.f32 %v2822, 1.442695
      %v2832 = vpow.pop %v2831
      %v2833 = vmul.f32 %v2823, 1.442695
      %v2834 = vpow.pop %v2833
      %v2835 = vmul.f32 %v2824, 1.442695
      %v2836 = vpow.pop %v2835
      %v2837 = vmul.f32 %v2825, 1.442695
      %v2838 = vpow.pop %v2837
      %v2839 = vmul.f32 %v2826, 1.442695
      %v2840 = vpow.pop %v2839
      %v2841 = vmul.f32 %v2827, 1.442695
      %v2842 = vpow.pop %v2841
      %v2843 = vmul.f32 %v2828, 1.442695
      %v2844 = vpow.pop %v2843
      %v2845 = vsel %vm1484, %v2830, 0.0
      %2846 = vadd.xlane.f32.xlu0 %v2845
      %v2847 = vpop.xlane.xlu0 %2846
      %v2848 = vsel %vm1484, %v2832, 0.0
      %2849 = vadd.xlane.f32.xlu0 %v2848
      %v2850 = vpop.xlane.xlu0 %2849
      %v2851 = vsel %vm1484, %v2834, 0.0
      %2852 = vadd.xlane.f32.xlu0 %v2851
      %v2853 = vpop.xlane.xlu0 %2852
      %v2854 = vsel %vm1484, %v2836, 0.0
      %2855 = vadd.xlane.f32.xlu0 %v2854
      %v2856 = vpop.xlane.xlu0 %2855
      %v2857 = vsel %vm1484, %v2838, 0.0
      %2858 = vadd.xlane.f32.xlu0 %v2857
      %v2859 = vpop.xlane.xlu0 %2858
      %v2860 = vsel %vm1484, %v2840, 0.0
      %2861 = vadd.xlane.f32.xlu0 %v2860
      %v2862 = vpop.xlane.xlu0 %2861
      %v2863 = vsel %vm1484, %v2842, 0.0
      %2864 = vadd.xlane.f32.xlu0 %v2863
      %v2865 = vpop.xlane.xlu0 %2864
      %v2866 = vsel %vm1484, %v2844, 0.0
      %2867 = vadd.xlane.f32.xlu0 %v2866
      %v2868 = vpop.xlane.xlu0 %2867
      %v2869 = vrcp.pop %v2847
      %v2870 = vrcp.pop %v2850
      %v2871 = vrcp.pop %v2853
      %v2872 = vrcp.pop %v2856
      %v2873 = vrcp.pop %v2859
      %v2874 = vrcp.pop %v2862
      %v2875 = vrcp.pop %v2865
      %v2876 = vrcp.pop %v2868
      %v2877 = vmul.f32 %v2830, %v2869
      %v2878 = vmul.f32 %v2832, %v2870
      %v2879 = vmul.f32 %v2834, %v2871
      %v2880 = vmul.f32 %v2836, %v2872
      %v2881 = vmul.f32 %v2838, %v2873
      %v2882 = vmul.f32 %v2840, %v2874
      %v2883 = vmul.f32 %v2842, %v2875
      %v2884 = vmul.f32 %v2844, %v2876
      %s2885 = scalar_lea.vmem %s12, 48
      %v2886 = vld [vmem:[%s2885] sm:$0xf]
      %v2887 = vld [vmem:[%s2885 + $0x4] sm:$0xf]
      %v2888 = vld [vmem:[%s2885 + $0x8] sm:$0xf]
      %v2889 = vld [vmem:[%s2885 + $0xc] sm:$0xf]
      %v2894 = vunpack.c.l.b16 %v2886
      %v2895 = vunpack.c.l.b16 %v2887
      %v2896 = vunpack.c.l.b16 %v2888
      %v2897 = vunpack.c.l.b16 %v2889
      %v2898 = vpack.c.b16 %v2895, %v2894
      %v2899 = vpack.c.b16 %v2897, %v2896
      %2902 = vmatprep.subr.bf16.mxu0 0
      %2903 = vmatpush1.bf16.msra.mxu0 0
      %2904 = vmatprep.subr.bf16.mxu0 0
      %2905 = vmatpush1.bf16.msra.mxu0 0
      %2906 = vmatprep.subr.bf16.mxu0 0
      %2907 = vmatpush1.bf16.msra.mxu0 0
      %2908 = vmatprep.subr.bf16.mxu0 0
      %2909 = vmatpush1.bf16.msra.mxu0 0
      %2910 = vmatprep.subr.bf16.mxu0 0
      %2911 = vmatpush1.bf16.msra.mxu0 0
      %2912 = vmatprep.subr.bf16.mxu0 0
      %2913 = vmatpush1.bf16.msra.mxu0 0
      %2914 = vmatprep.subr.bf16.mxu0 0
      %2915 = vmatpush1.bf16.msra.mxu0 %v2899
      %2916 = vmatprep.subr.bf16.mxu0 0
      %2917 = vmatpush1.bf16.msra.mxu0 %v2898
      %2918 = vmatprep.subr.bf16.mxu0 0
      %2919 = vmatpush2.bf16.msra.mxu0 0
      %2920 = vmatprep.subr.bf16.mxu0 0
      %2921 = vmatpush2.bf16.msra.mxu0 0
      %2922 = vmatprep.subr.bf16.mxu0 0
      %2923 = vmatpush2.bf16.msra.mxu0 0
      %2924 = vmatprep.subr.bf16.mxu0 0
      %2925 = vmatpush2.bf16.msra.mxu0 0
      %2926 = vmatprep.subr.bf16.mxu0 0
      %2927 = vmatpush2.bf16.msra.mxu0 0
      %2928 = vmatprep.subr.bf16.mxu0 0
      %2929 = vmatpush2.bf16.msra.mxu0 0
      %2930 = vmatprep.subr.bf16.mxu0 0
      %2931 = vmatpush2.bf16.msra.mxu0 0
      %2932 = vmatprep.subr.bf16.mxu0 0
      %2933 = vmatpush2.bf16.msra.mxu0 0
      %2934 = vmatprep.mubr.bf16.mxu0 0
      %2935 = vmatmul.mubr.bf16.gmra.mxu0 %v1319
      %v2936 = vpop.f32.mrf.mxu0
      %v2937 = vadd.f32 0.0, %v2936
      %v2938 = vpop.f32.mrf.mxu0
      %v2939 = vpop.f32.mrf.mxu0
      %v2940 = vadd.f32 0.0, %v2939
      %v2941 = vpop.f32.mrf.mxu0
      %2942 = vmatprep.mubr.bf16.mxu0 0
      %2943 = vmatmul.mubr.bf16.gmra.mxu0 %v1322
      %v2944 = vpop.f32.mrf.mxu0
      %v2945 = vadd.f32 0.0, %v2944
      %v2946 = vpop.f32.mrf.mxu0
      %v2947 = vpop.f32.mrf.mxu0
      %v2948 = vadd.f32 0.0, %v2947
      %v2949 = vpop.f32.mrf.mxu0
      %2950 = vmatprep.mubr.bf16.mxu0 0
      %2951 = vmatmul.mubr.bf16.gmra.mxu0 %v1325
      %v2952 = vpop.f32.mrf.mxu0
      %v2953 = vadd.f32 0.0, %v2952
      %v2954 = vpop.f32.mrf.mxu0
      %v2955 = vpop.f32.mrf.mxu0
      %v2956 = vadd.f32 0.0, %v2955
      %v2957 = vpop.f32.mrf.mxu0
      %2958 = vmatprep.mubr.bf16.mxu0 0
      %2959 = vmatmul.mubr.bf16.gmra.mxu0 %v1328
      %v2960 = vpop.f32.mrf.mxu0
      %v2961 = vadd.f32 0.0, %v2960
      %v2962 = vpop.f32.mrf.mxu0
      %v2963 = vpop.f32.mrf.mxu0
      %v2964 = vadd.f32 0.0, %v2963
      %v2965 = vpop.f32.mrf.mxu0
      %2966 = vdwg.mxu0
      %v2967 = vpack.c.bf16 %v2878, %v2877
      %v2968 = vpack.c.bf16 %v2880, %v2879
      %v2969 = vpack.c.bf16 %v2882, %v2881
      %v2970 = vpack.c.bf16 %v2884, %v2883
      %v2971 = vpack.c.bf16 %v2940, %v2937
      %v2972 = vpack.c.bf16 %v2948, %v2945
      %v2973 = vpack.c.bf16 %v2956, %v2953
      %v2974 = vpack.c.bf16 %v2964, %v2961
      %v2976 = vsel %vm1484, %v2967, 0
      %v2979 = vsel %vm1484, %v2968, 0
      %v2982 = vsel %vm1484, %v2969, 0
      %v2985 = vsel %vm1484, %v2970, 0
      %2987 = vmatprep.subr.bf16.mxu0 0
      %2988 = vmatpush1.bf16.msra.mxu0 0
      %2989 = vmatprep.subr.bf16.mxu0 0
      %2990 = vmatpush1.bf16.msra.mxu0 0
      %2991 = vmatprep.subr.bf16.mxu0 0
      %2992 = vmatpush1.bf16.msra.mxu0 0
      %2993 = vmatprep.subr.bf16.mxu0 0
      %2994 = vmatpush1.bf16.msra.mxu0 0
      %2995 = vmatprep.subr.bf16.mxu0 0
      %2996 = vmatpush1.bf16.msra.mxu0 %v2974
      %2997 = vmatprep.subr.bf16.mxu0 0
      %2998 = vmatpush1.bf16.msra.mxu0 %v2973
      %2999 = vmatprep.subr.bf16.mxu0 0
      %3000 = vmatpush1.bf16.msra.mxu0 %v2972
      %3001 = vmatprep.subr.bf16.mxu0 0
      %3002 = vmatpush1.bf16.msra.mxu0 %v2971
      %3003 = vmatprep.subr.bf16.mxu0 0
      %3004 = vmatpush2.bf16.msra.mxu0 0
      %3005 = vmatprep.subr.bf16.mxu0 0
      %3006 = vmatpush2.bf16.msra.mxu0 0
      %3007 = vmatprep.subr.bf16.mxu0 0
      %3008 = vmatpush2.bf16.msra.mxu0 0
      %3009 = vmatprep.subr.bf16.mxu0 0
      %3010 = vmatpush2.bf16.msra.mxu0 0
      %3011 = vmatprep.subr.bf16.mxu0 0
      %3012 = vmatpush2.bf16.msra.mxu0 0
      %3013 = vmatprep.subr.bf16.mxu0 0
      %3014 = vmatpush2.bf16.msra.mxu0 0
      %3015 = vmatprep.subr.bf16.mxu0 0
      %3016 = vmatpush2.bf16.msra.mxu0 0
      %3017 = vmatprep.subr.bf16.mxu0 0
      %3018 = vmatpush2.bf16.msra.mxu0 0
      %3019 = vmatprep.mubr.bf16.mxu0 0
      %3020 = vmatmul.mubr.bf16.gmra.mxu0 %v2976
      %v3021 = vpop.f32.mrf.mxu0
      %v3022 = vadd.f32 0.0, %v3021
      %v3023 = vpop.f32.mrf.mxu0
      %v3024 = vpop.f32.mrf.mxu0
      %v3025 = vadd.f32 0.0, %v3024
      %v3026 = vpop.f32.mrf.mxu0
      %3027 = vmatprep.mubr.bf16.mxu0 0
      %3028 = vmatmul.mubr.bf16.gmra.mxu0 %v2979
      %v3029 = vpop.f32.mrf.mxu0
      %v3030 = vadd.f32 0.0, %v3029
      %v3031 = vpop.f32.mrf.mxu0
      %v3032 = vpop.f32.mrf.mxu0
      %v3033 = vadd.f32 0.0, %v3032
      %v3034 = vpop.f32.mrf.mxu0
      %3035 = vmatprep.mubr.bf16.mxu0 0
      %3036 = vmatmul.mubr.bf16.gmra.mxu0 %v2982
      %v3037 = vpop.f32.mrf.mxu0
      %v3038 = vadd.f32 0.0, %v3037
      %v3039 = vpop.f32.mrf.mxu0
      %v3040 = vpop.f32.mrf.mxu0
      %v3041 = vadd.f32 0.0, %v3040
      %v3042 = vpop.f32.mrf.mxu0
      %3043 = vmatprep.mubr.bf16.mxu0 0
      %3044 = vmatmul.mubr.bf16.gmra.mxu0 %v2985
      %v3045 = vpop.f32.mrf.mxu0
      %v3046 = vadd.f32 0.0, %v3045
      %v3047 = vpop.f32.mrf.mxu0
      %v3048 = vpop.f32.mrf.mxu0
      %v3049 = vadd.f32 0.0, %v3048
      %v3050 = vpop.f32.mrf.mxu0
      %3051 = vdwg.mxu0
      %v3052 = vadd.f32 %v2609, %v3022
      %v3053 = vadd.f32 %v2610, %v3025
      %v3054 = vadd.f32 %v2611, %v3030
      %v3055 = vadd.f32 %v2612, %v3033
      %v3056 = vadd.f32 %v2613, %v3038
      %v3057 = vadd.f32 %v2614, %v3041
      %v3058 = vadd.f32 %v2615, %v3046
      %v3059 = vadd.f32 %v2616, %v3049
      %v3060 = vadd.f32 %v1149, %v3052
      %v3061 = vadd.f32 %v1150, %v3053
      %v3062 = vadd.f32 %v1151, %v3054
      %v3063 = vadd.f32 %v1152, %v3055
      %v3064 = vadd.f32 %v1153, %v3056
      %v3065 = vadd.f32 %v1154, %v3057
      %v3066 = vadd.f32 %v1155, %v3058
      %v3067 = vadd.f32 %v1156, %v3059
      %v3068 = vld [vmem:[%s13] sm:$0x1]
      %v3070 = vlaneseq
      %v3071 = vshrl.u32 %v3070, 7
      %v3072 = vsub.s32 0, %v3071
      %v3073 = vrot.slane %v3068, %v3072
      %v3075 = vadd.f32 %v3060, %v3073
      %v3076 = vadd.f32 %v3061, %v3073
      %v3077 = vadd.f32 %v3062, %v3073
      %v3078 = vadd.f32 %v3063, %v3073
      %v3079 = vadd.f32 %v3064, %v3073
      %v3080 = vadd.f32 %v3065, %v3073
      %v3081 = vadd.f32 %v3066, %v3073
      %v3082 = vadd.f32 %v3067, %v3073
      %v3083 = vsel %vm904, %v3075, 0.0
      %3084 = vadd.xlane.f32.xlu0 %v3083
      %v3085 = vpop.xlane.xlu0 %3084
      %v3086 = vsel %vm904, %v3076, 0.0
      %3087 = vadd.xlane.f32.xlu0 %v3086
      %v3088 = vpop.xlane.xlu0 %3087
      %v3089 = vsel %vm904, %v3077, 0.0
      %3090 = vadd.xlane.f32.xlu0 %v3089
      %v3091 = vpop.xlane.xlu0 %3090
      %v3092 = vsel %vm904, %v3078, 0.0
      %3093 = vadd.xlane.f32.xlu0 %v3092
      %v3094 = vpop.xlane.xlu0 %3093
      %v3095 = vsel %vm904, %v3079, 0.0
      %3096 = vadd.xlane.f32.xlu0 %v3095
      %v3097 = vpop.xlane.xlu0 %3096
      %v3098 = vsel %vm904, %v3080, 0.0
      %3099 = vadd.xlane.f32.xlu0 %v3098
      %v3100 = vpop.xlane.xlu0 %3099
      %v3101 = vsel %vm904, %v3081, 0.0
      %3102 = vadd.xlane.f32.xlu0 %v3101
      %v3103 = vpop.xlane.xlu0 %3102
      %v3104 = vsel %vm904, %v3082, 0.0
      %3105 = vadd.xlane.f32.xlu0 %v3104
      %v3106 = vpop.xlane.xlu0 %3105
      %v3107 = vmul.f32 %v3085, %v929
      %v3108 = vmul.f32 %v3088, %v929
      %v3109 = vmul.f32 %v3091, %v929
      %v3110 = vmul.f32 %v3094, %v929
      %v3111 = vmul.f32 %v3097, %v929
      %v3112 = vmul.f32 %v3100, %v929
      %v3113 = vmul.f32 %v3103, %v929
      %v3114 = vmul.f32 %v3106, %v929
      %v3115 = vsub.f32 %v3075, %v3107
      %v3116 = vsub.f32 %v3076, %v3108
      %v3117 = vsub.f32 %v3077, %v3109
      %v3118 = vsub.f32 %v3078, %v3110
      %v3119 = vsub.f32 %v3079, %v3111
      %v3120 = vsub.f32 %v3080, %v3112
      %v3121 = vsub.f32 %v3081, %v3113
      %v3122 = vsub.f32 %v3082, %v3114
      %v3123 = vmul.f32 %v3115, %v3115
      %v3124 = vmul.f32 %v3116, %v3116
      %v3125 = vmul.f32 %v3117, %v3117
      %v3126 = vmul.f32 %v3118, %v3118
      %v3127 = vmul.f32 %v3119, %v3119
      %v3128 = vmul.f32 %v3120, %v3120
      %v3129 = vmul.f32 %v3121, %v3121
      %v3130 = vmul.f32 %v3122, %v3122
      %v3131 = vsel %vm904, %v3123, 0.0
      %3132 = vadd.xlane.f32.xlu0 %v3131
      %v3133 = vpop.xlane.xlu0 %3132
      %v3134 = vsel %vm904, %v3124, 0.0
      %3135 = vadd.xlane.f32.xlu0 %v3134
      %v3136 = vpop.xlane.xlu0 %3135
      %v3137 = vsel %vm904, %v3125, 0.0
      %3138 = vadd.xlane.f32.xlu0 %v3137
      %v3139 = vpop.xlane.xlu0 %3138
      %v3140 = vsel %vm904, %v3126, 0.0
      %3141 = vadd.xlane.f32.xlu0 %v3140
      %v3142 = vpop.xlane.xlu0 %3141
      %v3143 = vsel %vm904, %v3127, 0.0
      %3144 = vadd.xlane.f32.xlu0 %v3143
      %v3145 = vpop.xlane.xlu0 %3144
      %v3146 = vsel %vm904, %v3128, 0.0
      %3147 = vadd.xlane.f32.xlu0 %v3146
      %v3148 = vpop.xlane.xlu0 %3147
      %v3149 = vsel %vm904, %v3129, 0.0
      %3150 = vadd.xlane.f32.xlu0 %v3149
      %v3151 = vpop.xlane.xlu0 %3150
      %v3152 = vsel %vm904, %v3130, 0.0
      %3153 = vadd.xlane.f32.xlu0 %v3152
      %v3154 = vpop.xlane.xlu0 %3153
      %v3155 = vmul.f32 %v3133, %v929
      %v3156 = vmul.f32 %v3136, %v929
      %v3157 = vmul.f32 %v3139, %v929
      %v3158 = vmul.f32 %v3142, %v929
      %v3159 = vmul.f32 %v3145, %v929
      %v3160 = vmul.f32 %v3148, %v929
      %v3161 = vmul.f32 %v3151, %v929
      %v3162 = vmul.f32 %v3154, %v929
      %v3163 = vadd.f32 %v3155, 1e-05
      %v3164 = vadd.f32 %v3156, 1e-05
      %v3165 = vadd.f32 %v3157, 1e-05
      %v3166 = vadd.f32 %v3158, 1e-05
      %v3167 = vadd.f32 %v3159, 1e-05
      %v3168 = vadd.f32 %v3160, 1e-05
      %v3169 = vadd.f32 %v3161, 1e-05
      %v3170 = vadd.f32 %v3162, 1e-05
      %v3171 = vrsqrt.pop %v3163
      %v3172 = vrsqrt.pop %v3164
      %v3173 = vrsqrt.pop %v3165
      %v3174 = vrsqrt.pop %v3166
      %v3175 = vrsqrt.pop %v3167
      %v3176 = vrsqrt.pop %v3168
      %v3177 = vrsqrt.pop %v3169
      %v3178 = vrsqrt.pop %v3170
      %v3179 = vmul.f32 %v3115, %v3171
      %v3180 = vmul.f32 %v3116, %v3172
      %v3181 = vmul.f32 %v3117, %v3173
      %v3182 = vmul.f32 %v3118, %v3174
      %v3183 = vmul.f32 %v3119, %v3175
      %v3184 = vmul.f32 %v3120, %v3176
      %v3185 = vmul.f32 %v3121, %v3177
      %v3186 = vmul.f32 %v3122, %v3178
      %v3187 = vld [vmem:[%s15] sm:$0x1]
      %v3189 = vlaneseq
      %v3190 = vshrl.u32 %v3189, 7
      %v3191 = vsub.s32 0, %v3190
      %v3192 = vrot.slane %v3187, %v3191
      %v3194 = vmul.f32 %v3179, %v3192
      %v3195 = vmul.f32 %v3180, %v3192
      %v3196 = vmul.f32 %v3181, %v3192
      %v3197 = vmul.f32 %v3182, %v3192
      %v3198 = vmul.f32 %v3183, %v3192
      %v3199 = vmul.f32 %v3184, %v3192
      %v3200 = vmul.f32 %v3185, %v3192
      %v3201 = vmul.f32 %v3186, %v3192
      %v3202 = vld [vmem:[%s16] sm:$0x1]
      %v3204 = vlaneseq
      %v3205 = vshrl.u32 %v3204, 7
      %v3206 = vsub.s32 0, %v3205
      %v3207 = vrot.slane %v3202, %v3206
      %v3209 = vadd.f32 %v3194, %v3207
      %v3210 = vadd.f32 %v3195, %v3207
      %v3211 = vadd.f32 %v3196, %v3207
      %v3212 = vadd.f32 %v3197, %v3207
      %v3213 = vadd.f32 %v3198, %v3207
      %v3214 = vadd.f32 %v3199, %v3207
      %v3215 = vadd.f32 %v3200, %v3207
      %v3216 = vadd.f32 %v3201, %v3207
      %v3217 = vld [vmem:[%s17] sm:$0xf]
      %v3218 = vld [vmem:[%s17 + $0x4] sm:$0xf]
      %v3219 = vld [vmem:[%s17 + $0x8] sm:$0xf]
      %v3220 = vld [vmem:[%s17 + $0xc] sm:$0xf]
      %v3221 = vpack.c.bf16 %v3210, %v3209
      %v3222 = vpack.c.bf16 %v3212, %v3211
      %v3223 = vpack.c.bf16 %v3214, %v3213
      %v3224 = vpack.c.bf16 %v3216, %v3215
      %v3225 = vld [vmem:[%s18] sm:$0x1]
      %v3227 = vlaneseq
      %v3228 = vshrl.u32 %v3227, 7
      %v3229 = vsub.s32 0, %v3228
      %v3230 = vrot.slane %v3225, %v3229
      %v3236 = vunpack.c.l.b16 %v3217
      %v3237 = vunpack.c.l.b16 %v3218
      %v3238 = vunpack.c.l.b16 %v3219
      %v3239 = vunpack.c.l.b16 %v3220
      %v3240 = vpack.c.b16 %v3237, %v3236
      %v3241 = vpack.c.b16 %v3239, %v3238
      %v3245 = vsel %vm904, %v3221, 0
      %v3248 = vsel %vm904, %v3222, 0
      %v3251 = vsel %vm904, %v3223, 0
      %v3254 = vsel %vm904, %v3224, 0
      %3256 = vmatprep.subr.bf16.mxu0 0
      %3257 = vmatpush1.bf16.msra.mxu0 0
      %3258 = vmatprep.subr.bf16.mxu0 0
      %3259 = vmatpush1.bf16.msra.mxu0 0
      %3260 = vmatprep.subr.bf16.mxu0 0
      %3261 = vmatpush1.bf16.msra.mxu0 0
      %3262 = vmatprep.subr.bf16.mxu0 0
      %3263 = vmatpush1.bf16.msra.mxu0 0
      %3264 = vmatprep.subr.bf16.mxu0 0
      %3265 = vmatpush1.bf16.msra.mxu0 0
      %3266 = vmatprep.subr.bf16.mxu0 0
      %3267 = vmatpush1.bf16.msra.mxu0 0
      %3268 = vmatprep.subr.bf16.mxu0 0
      %3269 = vmatpush1.bf16.msra.mxu0 %v3241
      %3270 = vmatprep.subr.bf16.mxu0 0
      %3271 = vmatpush1.bf16.msra.mxu0 %v3240
      %3272 = vmatprep.subr.bf16.mxu0 0
      %3273 = vmatpush2.bf16.msra.mxu0 0
      %3274 = vmatprep.subr.bf16.mxu0 0
      %3275 = vmatpush2.bf16.msra.mxu0 0
      %3276 = vmatprep.subr.bf16.mxu0 0
      %3277 = vmatpush2.bf16.msra.mxu0 0
      %3278 = vmatprep.subr.bf16.mxu0 0
      %3279 = vmatpush2.bf16.msra.mxu0 0
      %3280 = vmatprep.subr.bf16.mxu0 0
      %3281 = vmatpush2.bf16.msra.mxu0 0
      %3282 = vmatprep.subr.bf16.mxu0 0
      %3283 = vmatpush2.bf16.msra.mxu0 0
      %3284 = vmatprep.subr.bf16.mxu0 0
      %3285 = vmatpush2.bf16.msra.mxu0 0
      %3286 = vmatprep.subr.bf16.mxu0 0
      %3287 = vmatpush2.bf16.msra.mxu0 0
      %3288 = vmatprep.mubr.bf16.mxu0 0
      %3289 = vmatmul.mubr.bf16.gmra.mxu0 %v3245
      %v3290 = vpop.f32.mrf.mxu0
      %v3291 = vadd.f32 %v3230, %v3290
      %v3292 = vpop.f32.mrf.mxu0
      %v3293 = vpop.f32.mrf.mxu0
      %v3294 = vadd.f32 %v3230, %v3293
      %v3295 = vpop.f32.mrf.mxu0
      %3296 = vmatprep.mubr.bf16.mxu0 0
      %3297 = vmatmul.mubr.bf16.gmra.mxu0 %v3248
      %v3298 = vpop.f32.mrf.mxu0
      %v3299 = vadd.f32 %v3230, %v3298
      %v3300 = vpop.f32.mrf.mxu0
      %v3301 = vpop.f32.mrf.mxu0
      %v3302 = vadd.f32 %v3230, %v3301
      %v3303 = vpop.f32.mrf.mxu0
      %3304 = vmatprep.mubr.bf16.mxu0 0
      %3305 = vmatmul.mubr.bf16.gmra.mxu0 %v3251
      %v3306 = vpop.f32.mrf.mxu0
      %v3307 = vadd.f32 %v3230, %v3306
      %v3308 = vpop.f32.mrf.mxu0
      %v3309 = vpop.f32.mrf.mxu0
      %v3310 = vadd.f32 %v3230, %v3309
      %v3311 = vpop.f32.mrf.mxu0
      %3312 = vmatprep.mubr.bf16.mxu0 0
      %3313 = vmatmul.mubr.bf16.gmra.mxu0 %v3254
      %v3314 = vpop.f32.mrf.mxu0
      %v3315 = vadd.f32 %v3230, %v3314
      %v3316 = vpop.f32.mrf.mxu0
      %v3317 = vpop.f32.mrf.mxu0
      %v3318 = vadd.f32 %v3230, %v3317
      %v3319 = vpop.f32.mrf.mxu0
      %3320 = vdwg.mxu0
      %v3321 = vmul.f32 %v3291, %v3291
      %v3322 = vmul.f32 %v3294, %v3294
      %v3323 = vmul.f32 %v3299, %v3299
      %v3324 = vmul.f32 %v3302, %v3302
      %v3325 = vmul.f32 %v3307, %v3307
      %v3326 = vmul.f32 %v3310, %v3310
      %v3327 = vmul.f32 %v3315, %v3315
      %v3328 = vmul.f32 %v3318, %v3318
      %v3329 = vmul.f32 %v3291, %v3321
      %v3330 = vmul.f32 %v3294, %v3322
      %v3331 = vmul.f32 %v3299, %v3323
      %v3332 = vmul.f32 %v3302, %v3324
      %v3333 = vmul.f32 %v3307, %v3325
      %v3334 = vmul.f32 %v3310, %v3326
      %v3335 = vmul.f32 %v3315, %v3327
      %v3336 = vmul.f32 %v3318, %v3328
      %v3337 = vmul.f32 %v3329, 0.044715
      %v3338 = vmul.f32 %v3330, 0.044715
      %v3339 = vmul.f32 %v3331, 0.044715
      %v3340 = vmul.f32 %v3332, 0.044715
      %v3341 = vmul.f32 %v3333, 0.044715
      %v3342 = vmul.f32 %v3334, 0.044715
      %v3343 = vmul.f32 %v3335, 0.044715
      %v3344 = vmul.f32 %v3336, 0.044715
      %v3345 = vadd.f32 %v3291, %v3337
      %v3346 = vadd.f32 %v3294, %v3338
      %v3347 = vadd.f32 %v3299, %v3339
      %v3348 = vadd.f32 %v3302, %v3340
      %v3349 = vadd.f32 %v3307, %v3341
      %v3350 = vadd.f32 %v3310, %v3342
      %v3351 = vadd.f32 %v3315, %v3343
      %v3352 = vadd.f32 %v3318, %v3344
      %v3353 = vmul.f32 %v3345, 0.7978846
      %v3354 = vmul.f32 %v3346, 0.7978846
      %v3355 = vmul.f32 %v3347, 0.7978846
      %v3356 = vmul.f32 %v3348, 0.7978846
      %v3357 = vmul.f32 %v3349, 0.7978846
      %v3358 = vmul.f32 %v3350, 0.7978846
      %v3359 = vmul.f32 %v3351, 0.7978846
      %v3360 = vmul.f32 %v3352, 0.7978846
      %v3361 = vtanh.pop %v3353
      %v3362 = vtanh.pop %v3354
      %v3363 = vtanh.pop %v3355
      %v3364 = vtanh.pop %v3356
      %v3365 = vtanh.pop %v3357
      %v3366 = vtanh.pop %v3358
      %v3367 = vtanh.pop %v3359
      %v3368 = vtanh.pop %v3360
      %v3369 = vadd.f32 %v3361, 1.0
      %v3370 = vadd.f32 %v3362, 1.0
      %v3371 = vadd.f32 %v3363, 1.0
      %v3372 = vadd.f32 %v3364, 1.0
      %v3373 = vadd.f32 %v3365, 1.0
      %v3374 = vadd.f32 %v3366, 1.0
      %v3375 = vadd.f32 %v3367, 1.0
      %v3376 = vadd.f32 %v3368, 1.0
      %v3377 = vmul.f32 %v3369, 0.5
      %v3378 = vmul.f32 %v3370, 0.5
      %v3379 = vmul.f32 %v3371, 0.5
      %v3380 = vmul.f32 %v3372, 0.5
      %v3381 = vmul.f32 %v3373, 0.5
      %v3382 = vmul.f32 %v3374, 0.5
      %v3383 = vmul.f32 %v3375, 0.5
      %v3384 = vmul.f32 %v3376, 0.5
      %v3385 = vmul.f32 %v3291, %v3377
      %v3386 = vmul.f32 %v3294, %v3378
      %v3387 = vmul.f32 %v3299, %v3379
      %v3388 = vmul.f32 %v3302, %v3380
      %v3389 = vmul.f32 %v3307, %v3381
      %v3390 = vmul.f32 %v3310, %v3382
      %v3391 = vmul.f32 %v3315, %v3383
      %v3392 = vmul.f32 %v3318, %v3384
      %v3393 = vld [vmem:[%s19] sm:$0xf]
      %v3394 = vld [vmem:[%s19 + $0x4] sm:$0xf]
      %v3395 = vld [vmem:[%s19 + $0x8] sm:$0xf]
      %v3396 = vld [vmem:[%s19 + $0xc] sm:$0xf]
      %v3397 = vld [vmem:[%s19 + $0x10] sm:$0xf]
      %v3398 = vld [vmem:[%s19 + $0x14] sm:$0xf]
      %v3399 = vld [vmem:[%s19 + $0x18] sm:$0xf]
      %v3400 = vld [vmem:[%s19 + $0x1c] sm:$0xf]
      %v3401 = vld [vmem:[%s19 + $0x20] sm:$0xf]
      %v3402 = vld [vmem:[%s19 + $0x24] sm:$0xf]
      %v3403 = vld [vmem:[%s19 + $0x28] sm:$0xf]
      %v3404 = vld [vmem:[%s19 + $0x2c] sm:$0xf]
      %v3405 = vld [vmem:[%s19 + $0x30] sm:$0xf]
      %v3406 = vld [vmem:[%s19 + $0x34] sm:$0xf]
      %v3407 = vld [vmem:[%s19 + $0x38] sm:$0xf]
      %v3408 = vld [vmem:[%s19 + $0x3c] sm:$0xf]
      %v3409 = vpack.c.bf16 %v3386, %v3385
      %v3410 = vpack.c.bf16 %v3388, %v3387
      %v3411 = vpack.c.bf16 %v3390, %v3389
      %v3412 = vpack.c.bf16 %v3392, %v3391
      %v3429 = vunpack.c.l.b16 %v3393
      %v3430 = vunpack.c.l.b16 %v3394
      %v3431 = vunpack.c.l.b16 %v3395
      %v3432 = vunpack.c.l.b16 %v3396
      %v3433 = vunpack.c.l.b16 %v3397
      %v3434 = vunpack.c.l.b16 %v3398
      %v3435 = vunpack.c.l.b16 %v3399
      %v3436 = vunpack.c.l.b16 %v3400
      %v3437 = vunpack.c.l.b16 %v3401
      %v3438 = vunpack.c.l.b16 %v3402
      %v3439 = vunpack.c.l.b16 %v3403
      %v3440 = vunpack.c.l.b16 %v3404
      %v3441 = vunpack.c.l.b16 %v3405
      %v3442 = vunpack.c.l.b16 %v3406
      %v3443 = vunpack.c.l.b16 %v3407
      %v3444 = vunpack.c.l.b16 %v3408
      %v3445 = vpack.c.b16 %v3430, %v3429
      %v3446 = vpack.c.b16 %v3432, %v3431
      %v3447 = vpack.c.b16 %v3434, %v3433
      %v3448 = vpack.c.b16 %v3436, %v3435
      %v3449 = vpack.c.b16 %v3438, %v3437
      %v3450 = vpack.c.b16 %v3440, %v3439
      %v3451 = vpack.c.b16 %v3442, %v3441
      %v3452 = vpack.c.b16 %v3444, %v3443
      %3461 = vmatprep.subr.bf16.mxu0 0
      %3462 = vmatpush1.bf16.msra.mxu0 %v3452
      %3463 = vmatprep.subr.bf16.mxu0 0
      %3464 = vmatpush1.bf16.msra.mxu0 %v3451
      %3465 = vmatprep.subr.bf16.mxu0 0
      %3466 = vmatpush1.bf16.msra.mxu0 %v3450
      %3467 = vmatprep.subr.bf16.mxu0 0
      %3468 = vmatpush1.bf16.msra.mxu0 %v3449
      %3469 = vmatprep.subr.bf16.mxu0 0
      %3470 = vmatpush1.bf16.msra.mxu0 %v3448
      %3471 = vmatprep.subr.bf16.mxu0 0
      %3472 = vmatpush1.bf16.msra.mxu0 %v3447
      %3473 = vmatprep.subr.bf16.mxu0 0
      %3474 = vmatpush1.bf16.msra.mxu0 %v3446
      %3475 = vmatprep.subr.bf16.mxu0 0
      %3476 = vmatpush1.bf16.msra.mxu0 %v3445
      %3477 = vmatprep.subr.bf16.mxu0 0
      %3478 = vmatpush2.bf16.msra.mxu0 0
      %3479 = vmatprep.subr.bf16.mxu0 0
      %3480 = vmatpush2.bf16.msra.mxu0 0
      %3481 = vmatprep.subr.bf16.mxu0 0
      %3482 = vmatpush2.bf16.msra.mxu0 0
      %3483 = vmatprep.subr.bf16.mxu0 0
      %3484 = vmatpush2.bf16.msra.mxu0 0
      %3485 = vmatprep.subr.bf16.mxu0 0
      %3486 = vmatpush2.bf16.msra.mxu0 0
      %3487 = vmatprep.subr.bf16.mxu0 0
      %3488 = vmatpush2.bf16.msra.mxu0 0
      %3489 = vmatprep.subr.bf16.mxu0 0
      %3490 = vmatpush2.bf16.msra.mxu0 0
      %3491 = vmatprep.subr.bf16.mxu0 0
      %3492 = vmatpush2.bf16.msra.mxu0 0
      %3493 = vmatprep.mubr.bf16.mxu0 0
      %3494 = vmatmul.mubr.bf16.gmra.mxu0 %v3409
      %v3495 = vpop.f32.mrf.mxu0
      %v3496 = vadd.f32 0.0, %v3495
      %v3497 = vpop.f32.mrf.mxu0
      %v3498 = vpop.f32.mrf.mxu0
      %v3499 = vadd.f32 0.0, %v3498
      %v3500 = vpop.f32.mrf.mxu0
      %3501 = vmatprep.mubr.bf16.mxu0 0
      %3502 = vmatmul.mubr.bf16.gmra.mxu0 %v3410
      %v3503 = vpop.f32.mrf.mxu0
      %v3504 = vadd.f32 0.0, %v3503
      %v3505 = vpop.f32.mrf.mxu0
      %v3506 = vpop.f32.mrf.mxu0
      %v3507 = vadd.f32 0.0, %v3506
      %v3508 = vpop.f32.mrf.mxu0
      %3509 = vmatprep.mubr.bf16.mxu0 0
      %3510 = vmatmul.mubr.bf16.gmra.mxu0 %v3411
      %v3511 = vpop.f32.mrf.mxu0
      %v3512 = vadd.f32 0.0, %v3511
      %v3513 = vpop.f32.mrf.mxu0
      %v3514 = vpop.f32.mrf.mxu0
      %v3515 = vadd.f32 0.0, %v3514
      %v3516 = vpop.f32.mrf.mxu0
      %3517 = vmatprep.mubr.bf16.mxu0 0
      %3518 = vmatmul.mubr.bf16.gmra.mxu0 %v3412
      %v3519 = vpop.f32.mrf.mxu0
      %v3520 = vadd.f32 0.0, %v3519
      %v3521 = vpop.f32.mrf.mxu0
      %v3522 = vpop.f32.mrf.mxu0
      %v3523 = vadd.f32 0.0, %v3522
      %v3524 = vpop.f32.mrf.mxu0
      %3525 = vdwg.mxu0
      %v3526 = vadd.f32 %v3075, %v3496
      %v3527 = vadd.f32 %v3076, %v3499
      %v3528 = vadd.f32 %v3077, %v3504
      %v3529 = vadd.f32 %v3078, %v3507
      %v3530 = vadd.f32 %v3079, %v3512
      %v3531 = vadd.f32 %v3080, %v3515
      %v3532 = vadd.f32 %v3081, %v3520
      %v3533 = vadd.f32 %v3082, %v3523
      %v3534 = vld [vmem:[%s20] sm:$0x1]
      %v3536 = vlaneseq
      %v3537 = vshrl.u32 %v3536, 7
      %v3538 = vsub.s32 0, %v3537
      %v3539 = vrot.slane %v3534, %v3538
      %v3541 = vadd.f32 %v3526, %v3539
      %v3542 = vadd.f32 %v3527, %v3539
      %v3543 = vadd.f32 %v3528, %v3539
      %v3544 = vadd.f32 %v3529, %v3539
      %v3545 = vadd.f32 %v3530, %v3539
      %v3546 = vadd.f32 %v3531, %v3539
      %v3547 = vadd.f32 %v3532, %v3539
      %v3548 = vadd.f32 %v3533, %v3539
      %v3549 = vsel %vm904, %v3541, 0.0
      %3550 = vadd.xlane.f32.xlu0 %v3549
      %v3551 = vpop.xlane.xlu0 %3550
      %v3552 = vsel %vm904, %v3542, 0.0
      %3553 = vadd.xlane.f32.xlu0 %v3552
      %v3554 = vpop.xlane.xlu0 %3553
      %v3555 = vsel %vm904, %v3543, 0.0
      %3556 = vadd.xlane.f32.xlu0 %v3555
      %v3557 = vpop.xlane.xlu0 %3556
      %v3558 = vsel %vm904, %v3544, 0.0
      %3559 = vadd.xlane.f32.xlu0 %v3558
      %v3560 = vpop.xlane.xlu0 %3559
      %v3561 = vsel %vm904, %v3545, 0.0
      %3562 = vadd.xlane.f32.xlu0 %v3561
      %v3563 = vpop.xlane.xlu0 %3562
      %v3564 = vsel %vm904, %v3546, 0.0
      %3565 = vadd.xlane.f32.xlu0 %v3564
      %v3566 = vpop.xlane.xlu0 %3565
      %v3567 = vsel %vm904, %v3547, 0.0
      %3568 = vadd.xlane.f32.xlu0 %v3567
      %v3569 = vpop.xlane.xlu0 %3568
      %v3570 = vsel %vm904, %v3548, 0.0
      %3571 = vadd.xlane.f32.xlu0 %v3570
      %v3572 = vpop.xlane.xlu0 %3571
      %v3573 = vmul.f32 %v3551, %v929
      %v3574 = vmul.f32 %v3554, %v929
      %v3575 = vmul.f32 %v3557, %v929
      %v3576 = vmul.f32 %v3560, %v929
      %v3577 = vmul.f32 %v3563, %v929
      %v3578 = vmul.f32 %v3566, %v929
      %v3579 = vmul.f32 %v3569, %v929
      %v3580 = vmul.f32 %v3572, %v929
      %v3581 = vsub.f32 %v3541, %v3573
      %v3582 = vsub.f32 %v3542, %v3574
      %v3583 = vsub.f32 %v3543, %v3575
      %v3584 = vsub.f32 %v3544, %v3576
      %v3585 = vsub.f32 %v3545, %v3577
      %v3586 = vsub.f32 %v3546, %v3578
      %v3587 = vsub.f32 %v3547, %v3579
      %v3588 = vsub.f32 %v3548, %v3580
      %v3589 = vmul.f32 %v3581, %v3581
      %v3590 = vmul.f32 %v3582, %v3582
      %v3591 = vmul.f32 %v3583, %v3583
      %v3592 = vmul.f32 %v3584, %v3584
      %v3593 = vmul.f32 %v3585, %v3585
      %v3594 = vmul.f32 %v3586, %v3586
      %v3595 = vmul.f32 %v3587, %v3587
      %v3596 = vmul.f32 %v3588, %v3588
      %v3597 = vsel %vm904, %v3589, 0.0
      %3598 = vadd.xlane.f32.xlu0 %v3597
      %v3599 = vpop.xlane.xlu0 %3598
      %v3600 = vsel %vm904, %v3590, 0.0
      %3601 = vadd.xlane.f32.xlu0 %v3600
      %v3602 = vpop.xlane.xlu0 %3601
      %v3603 = vsel %vm904, %v3591, 0.0
      %3604 = vadd.xlane.f32.xlu0 %v3603
      %v3605 = vpop.xlane.xlu0 %3604
      %v3606 = vsel %vm904, %v3592, 0.0
      %3607 = vadd.xlane.f32.xlu0 %v3606
      %v3608 = vpop.xlane.xlu0 %3607
      %v3609 = vsel %vm904, %v3593, 0.0
      %3610 = vadd.xlane.f32.xlu0 %v3609
      %v3611 = vpop.xlane.xlu0 %3610
      %v3612 = vsel %vm904, %v3594, 0.0
      %3613 = vadd.xlane.f32.xlu0 %v3612
      %v3614 = vpop.xlane.xlu0 %3613
      %v3615 = vsel %vm904, %v3595, 0.0
      %3616 = vadd.xlane.f32.xlu0 %v3615
      %v3617 = vpop.xlane.xlu0 %3616
      %v3618 = vsel %vm904, %v3596, 0.0
      %3619 = vadd.xlane.f32.xlu0 %v3618
      %v3620 = vpop.xlane.xlu0 %3619
      %v3621 = vmul.f32 %v3599, %v929
      %v3622 = vmul.f32 %v3602, %v929
      %v3623 = vmul.f32 %v3605, %v929
      %v3624 = vmul.f32 %v3608, %v929
      %v3625 = vmul.f32 %v3611, %v929
      %v3626 = vmul.f32 %v3614, %v929
      %v3627 = vmul.f32 %v3617, %v929
      %v3628 = vmul.f32 %v3620, %v929
      %v3629 = vadd.f32 %v3621, 1e-05
      %v3630 = vadd.f32 %v3622, 1e-05
      %v3631 = vadd.f32 %v3623, 1e-05
      %v3632 = vadd.f32 %v3624, 1e-05
      %v3633 = vadd.f32 %v3625, 1e-05
      %v3634 = vadd.f32 %v3626, 1e-05
      %v3635 = vadd.f32 %v3627, 1e-05
      %v3636 = vadd.f32 %v3628, 1e-05
      %v3637 = vrsqrt.pop %v3629
      %v3638 = vrsqrt.pop %v3630
      %v3639 = vrsqrt.pop %v3631
      %v3640 = vrsqrt.pop %v3632
      %v3641 = vrsqrt.pop %v3633
      %v3642 = vrsqrt.pop %v3634
      %v3643 = vrsqrt.pop %v3635
      %v3644 = vrsqrt.pop %v3636
      %v3645 = vmul.f32 %v3581, %v3637
      %v3646 = vmul.f32 %v3582, %v3638
      %v3647 = vmul.f32 %v3583, %v3639
      %v3648 = vmul.f32 %v3584, %v3640
      %v3649 = vmul.f32 %v3585, %v3641
      %v3650 = vmul.f32 %v3586, %v3642
      %v3651 = vmul.f32 %v3587, %v3643
      %v3652 = vmul.f32 %v3588, %v3644
      %v3653 = vld [vmem:[%s21] sm:$0x1]
      %v3655 = vlaneseq
      %v3656 = vshrl.u32 %v3655, 7
      %v3657 = vsub.s32 0, %v3656
      %v3658 = vrot.slane %v3653, %v3657
      %v3660 = vmul.f32 %v3645, %v3658
      %v3661 = vmul.f32 %v3646, %v3658
      %v3662 = vmul.f32 %v3647, %v3658
      %v3663 = vmul.f32 %v3648, %v3658
      %v3664 = vmul.f32 %v3649, %v3658
      %v3665 = vmul.f32 %v3650, %v3658
      %v3666 = vmul.f32 %v3651, %v3658
      %v3667 = vmul.f32 %v3652, %v3658
      %v3668 = vld [vmem:[%s22] sm:$0x1]
      %v3670 = vlaneseq
      %v3671 = vshrl.u32 %v3670, 7
      %v3672 = vsub.s32 0, %v3671
      %v3673 = vrot.slane %v3668, %v3672
      %v3675 = vadd.f32 %v3660, %v3673
      %v3676 = vadd.f32 %v3661, %v3673
      %v3677 = vadd.f32 %v3662, %v3673
      %v3678 = vadd.f32 %v3663, %v3673
      %v3679 = vadd.f32 %v3664, %v3673
      %v3680 = vadd.f32 %v3665, %v3673
      %v3681 = vadd.f32 %v3666, %v3673
      %v3682 = vadd.f32 %v3667, %v3673
      %v3683 = vld [vmem:[%s23] sm:$0xf]
      %v3684 = vld [vmem:[%s23 + $0x4] sm:$0xf]
      %v3685 = vld [vmem:[%s23 + $0x8] sm:$0xf]
      %v3686 = vld [vmem:[%s23 + $0xc] sm:$0xf]
      %v3687 = vpack.c.bf16 %v3676, %v3675
      %v3688 = vpack.c.bf16 %v3678, %v3677
      %v3689 = vpack.c.bf16 %v3680, %v3679
      %v3690 = vpack.c.bf16 %v3682, %v3681
      %v3691 = vld [vmem:[%s24] sm:$0x1]
      %v3693 = vlaneseq
      %v3694 = vshrl.u32 %v3693, 7
      %v3695 = vsub.s32 0, %v3694
      %v3696 = vrot.slane %v3691, %v3695
      %v3702 = vunpack.c.l.b16 %v3683
      %v3703 = vunpack.c.l.b16 %v3684
      %v3704 = vunpack.c.l.b16 %v3685
      %v3705 = vunpack.c.l.b16 %v3686
      %v3706 = vpack.c.b16 %v3703, %v3702
      %v3707 = vpack.c.b16 %v3705, %v3704
      %v3711 = vsel %vm904, %v3687, 0
      %v3714 = vsel %vm904, %v3688, 0
      %v3717 = vsel %vm904, %v3689, 0
      %v3720 = vsel %vm904, %v3690, 0
      %3722 = vmatprep.subr.bf16.mxu0 0
      %3723 = vmatpush1.bf16.msra.mxu0 0
      %3724 = vmatprep.subr.bf16.mxu0 0
      %3725 = vmatpush1.bf16.msra.mxu0 0
      %3726 = vmatprep.subr.bf16.mxu0 0
      %3727 = vmatpush1.bf16.msra.mxu0 0
      %3728 = vmatprep.subr.bf16.mxu0 0
      %3729 = vmatpush1.bf16.msra.mxu0 0
      %3730 = vmatprep.subr.bf16.mxu0 0
      %3731 = vmatpush1.bf16.msra.mxu0 0
      %3732 = vmatprep.subr.bf16.mxu0 0
      %3733 = vmatpush1.bf16.msra.mxu0 0
      %3734 = vmatprep.subr.bf16.mxu0 0
      %3735 = vmatpush1.bf16.msra.mxu0 %v3707
      %3736 = vmatprep.subr.bf16.mxu0 0
      %3737 = vmatpush1.bf16.msra.mxu0 %v3706
      %3738 = vmatprep.subr.bf16.mxu0 0
      %3739 = vmatpush2.bf16.msra.mxu0 0
      %3740 = vmatprep.subr.bf16.mxu0 0
      %3741 = vmatpush2.bf16.msra.mxu0 0
      %3742 = vmatprep.subr.bf16.mxu0 0
      %3743 = vmatpush2.bf16.msra.mxu0 0
      %3744 = vmatprep.subr.bf16.mxu0 0
      %3745 = vmatpush2.bf16.msra.mxu0 0
      %3746 = vmatprep.subr.bf16.mxu0 0
      %3747 = vmatpush2.bf16.msra.mxu0 0
      %3748 = vmatprep.subr.bf16.mxu0 0
      %3749 = vmatpush2.bf16.msra.mxu0 0
      %3750 = vmatprep.subr.bf16.mxu0 0
      %3751 = vmatpush2.bf16.msra.mxu0 0
      %3752 = vmatprep.subr.bf16.mxu0 0
      %3753 = vmatpush2.bf16.msra.mxu0 0
      %3754 = vmatprep.mubr.bf16.mxu0 0
      %3755 = vmatmul.mubr.bf16.gmra.mxu0 %v3711
      %v3756 = vpop.f32.mrf.mxu0
      %v3757 = vadd.f32 %v3696, %v3756
      %v3758 = vpop.f32.mrf.mxu0
      %v3759 = vpop.f32.mrf.mxu0
      %v3760 = vadd.f32 %v3696, %v3759
      %v3761 = vpop.f32.mrf.mxu0
      %3762 = vmatprep.mubr.bf16.mxu0 0
      %3763 = vmatmul.mubr.bf16.gmra.mxu0 %v3714
      %v3764 = vpop.f32.mrf.mxu0
      %v3765 = vadd.f32 %v3696, %v3764
      %v3766 = vpop.f32.mrf.mxu0
      %v3767 = vpop.f32.mrf.mxu0
      %v3768 = vadd.f32 %v3696, %v3767
      %v3769 = vpop.f32.mrf.mxu0
      %3770 = vmatprep.mubr.bf16.mxu0 0
      %3771 = vmatmul.mubr.bf16.gmra.mxu0 %v3717
      %v3772 = vpop.f32.mrf.mxu0
      %v3773 = vadd.f32 %v3696, %v3772
      %v3774 = vpop.f32.mrf.mxu0
      %v3775 = vpop.f32.mrf.mxu0
      %v3776 = vadd.f32 %v3696, %v3775
      %v3777 = vpop.f32.mrf.mxu0
      %3778 = vmatprep.mubr.bf16.mxu0 0
      %3779 = vmatmul.mubr.bf16.gmra.mxu0 %v3720
      %v3780 = vpop.f32.mrf.mxu0
      %v3781 = vadd.f32 %v3696, %v3780
      %v3782 = vpop.f32.mrf.mxu0
      %v3783 = vpop.f32.mrf.mxu0
      %v3784 = vadd.f32 %v3696, %v3783
      %v3785 = vpop.f32.mrf.mxu0
      %3786 = vdwg.mxu0
      %3787 = vst [vmem:[%s788] sm:$0xff] %v3757
      %3788 = vst [vmem:[%s788 + $0x8] sm:$0xff] %v3760
      %3789 = vst [vmem:[%s788 + $0x10] sm:$0xff] %v3765
      %3790 = vst [vmem:[%s788 + $0x18] sm:$0xff] %v3768
      %3791 = vst [vmem:[%s788 + $0x20] sm:$0xff] %v3773
      %3792 = vst [vmem:[%s788 + $0x28] sm:$0xff] %v3776
      %3793 = vst [vmem:[%s788 + $0x30] sm:$0xff] %v3781
      %3794 = vst [vmem:[%s788 + $0x38] sm:$0xff] %v3784
      %s3795 = smul.u32 8, %s36
      %p3796 = scmp.lt.s32.totalorder %s3795, 15
      %s3797 = scalar_select %p3796, %s3795, 15
      %s3798 = smul.addr %s3797, 8
      %s3799 = scalar_lea.vmem %s25, %s3798
      // Predicated region
      $region121: #{swt_jsp_forward.1} parent=119 // pred_check
        %p3800 = pneg %p589
      $region122: #{swt_jsp_forward.1} parent=119 // pred_check_branch
        %3802 = sbr.rel (%p3800) target = $region124
      $region123: #{swt_jsp_forward.1} parent=119 // pred_region
        %s3803 = smul.u32 8, %s36
      $region124: #{swt_jsp_forward.1} parent=119 // pred_fallthru
        _
    $region120: #{swt_jsp_forward.1} parent=5 // pred_fallthru
      _
    %p3804 = scmp.le.s32.totalorder 2, %s31
    // Predicated region
    $region125: #{swt_jsp_forward.1} parent=5 // pred_check
      %p3805 = pneg %p3804
    $region126: #{swt_jsp_forward.1} parent=5 // pred_check_branch
      %3807 = sbr.rel (%p3805) target = $region128
    $region127: #{swt_jsp_forward.1} parent=5 // pred_region
      %s3808 = ssub.s32 %s31, 2
      // Predicated region
      $region129: #{swt_jsp_forward.1} parent=127 // pred_check
        %p3809 = pneg %p595
      $region130: #{swt_jsp_forward.1} parent=127 // pred_check_branch
        %3811 = sbr.rel (%p3809) target = $region132
      $region131: #{swt_jsp_forward.1} parent=127 // pred_region
        %s3812 = smul.u32 8, %s37
        %p3813 = scmp.lt.s32.totalorder %s3812, 15
        %s3814 = scalar_select %p3813, %s3812, 15
        %s3815 = smul.addr %s3814, 8
        %s3816 = scalar_lea.vmem %s25, %s3815
      $region132: #{swt_jsp_forward.1} parent=127 // pred_fallthru
        _
    $region128: #{swt_jsp_forward.1} parent=5 // pred_fallthru
      _
  $region6: #{swt_jsp_forward.1} parent=0 // loop_footer
    %s35 = sadd.s32 1, %s31
  $region7: #{swt_jsp_forward.1} parent=0 // loop_footer_branch
    %30 = sbr.rel target = $region3
  $region8: #{swt_jsp_forward.1} parent=0 // loop_exit
    _

</llo_original>
